<compile_context>
chip_gen: v6e
topology: v6e:2x2x1
jax: 0.10.0
libtpu: 0.0.40
codegen_flags: <defaults>
</compile_context>

<pallas_src>
import functools

import jax
import jax.numpy as jnp
import numpy as np
from jax import lax
from jax.experimental import pallas as pl
from jax.experimental.pallas import tpu as pltpu

EPS = 1e-5
LANE = 128


# --------------------------- in-kernel helpers ------------------------------
def _conv3x3(pad_ref, w_ref, n, H, W, Cp):
    """3x3 / stride-1 conv over a zero-padded (n, H+2, W+2, Cp) ref.

    For each dy the three dx taps are concatenated along the channel (lane)
    axis, so the MXU sees 3 matmuls with contraction depth 3*Cp instead of 9
    matmuls with depth Cp.  Accumulation is f32.
    """
    acc = jnp.zeros((n * H * W, Cp), jnp.float32)
    for dy in range(3):
        rows = pad_ref[:, dy:dy + H, :, :]                       # (n, H, W+2, Cp)
        patch = jnp.concatenate(
            [rows[:, :, dx:dx + W, :] for dx in range(3)], axis=-1)
        acc = acc + jnp.dot(patch.reshape(n * H * W, 3 * Cp), w_ref[dy],
                            preferred_element_type=jnp.float32)
    return acc


def _channel_stats(acc):
    """Single-pass per-channel sum and sum-of-squares of a (rows, Cp) f32 acc."""
    s = jnp.sum(acc, axis=0, keepdims=True)
    ss = jnp.sum(acc * acc, axis=0, keepdims=True)
    return jnp.concatenate([s, ss], axis=0)[None]                # (1, 2, Cp)


# ------------------------------- kernels ------------------------------------
def _conv1_kernel(xpad_ref, w_ref, out_ref, stats_ref):
    n, Hp, Wp, Cp = xpad_ref.shape
    H, W = Hp - 2, Wp - 2
    acc = _conv3x3(xpad_ref, w_ref, n, H, W, Cp)
    out_ref[...] = acc.reshape(n, H, W, Cp)
    stats_ref[...] = _channel_stats(acc)


def _bn1_relu_conv2_kernel(a1_ref, scale_ref, shift_ref, w_ref,
                           out_ref, stats_ref, ypad):
    n, H, W, Cp = a1_ref.shape
    dt = ypad.dtype
    # bn1 (stats folded into scale/shift in the wrapper) + relu, all in f32.
    y = jnp.maximum(a1_ref[...].astype(jnp.float32)
                    * scale_ref[...].reshape(1, 1, 1, Cp)
                    + shift_ref[...].reshape(1, 1, 1, Cp), 0.0)
    # Zero only the 1-pixel halo of the padded scratch, then store the interior.
    ypad[:, 0:1, :, :] = jnp.zeros((n, 1, W + 2, Cp), dt)
    ypad[:, H + 1:H + 2, :, :] = jnp.zeros((n, 1, W + 2, Cp), dt)
    ypad[:, :, 0:1, :] = jnp.zeros((n, H + 2, 1, Cp), dt)
    ypad[:, :, W + 1:W + 2, :] = jnp.zeros((n, H + 2, 1, Cp), dt)
    ypad[:, 1:H + 1, 1:W + 1, :] = y.astype(dt)
    acc = _conv3x3(ypad, w_ref, n, H, W, Cp)
    out_ref[...] = acc.reshape(n, H, W, Cp)
    stats_ref[...] = _channel_stats(acc)


def _bn2_residual_kernel(a2_ref, x_ref, scale_ref, shift_ref, o_ref):
    Cp = a2_ref.shape[-1]
    z = (a2_ref[...].astype(jnp.float32) * scale_ref[...].reshape(1, 1, 1, Cp)
         + shift_ref[...].reshape(1, 1, 1, Cp)
         + x_ref[...])
    o_ref[...] = jnp.maximum(z, 0.0).astype(o_ref.dtype)


# ------------------------------ host helpers --------------------------------
def _prep_weight(w_oihw, Cp, dtype):
    """PyTorch OIHW -> (3, 3*Cp, Cp) slabs; row index inside a slab = dx*Cp + cin."""
    _, I, KH, KW = w_oihw.shape
    O = w_oihw.shape[0]
    w = jnp.transpose(w_oihw, (2, 3, 1, 0))                     # OIHW -> HWIO
    w = jnp.pad(w, ((0, 0), (0, 0), (0, Cp - I), (0, Cp - O)))
    return w.reshape(KH, KW * Cp, Cp).astype(dtype)


def _pad_vec(v, Cp):
    return jnp.pad(v.astype(jnp.float32), (0, Cp - v.shape[0]))


def _fold_bn(partial_stats, count, gamma, beta):
    """(tiles, 2, Cp) per-tile {sum, sumsq} -> per-channel affine scale/shift."""
    s = jnp.sum(partial_stats, axis=0)                          # (2, Cp)
    mean = s[0] / count
    var = jnp.maximum(s[1] / count - mean * mean, 0.0)          # biased, clamped
    scale = gamma * lax.rsqrt(var + EPS)
    shift = beta - mean * scale
    return scale.reshape(1, -1), shift.reshape(1, -1)


def basic_block_pallas(x_nchw, w1_oihw, w2_oihw, g1, b1, g2, b2, *,
                       compute_dtype=jnp.bfloat16, block_n=1,
                       vmem_limit_bytes=48 * 1024 * 1024):
    """BasicBlock forward.  x_nchw: (N, C, H, W) float32.  Returns (N, C, H, W)."""
    N, C, H, W = x_nchw.shape
    assert C == w1_oihw.shape[0], \
        "stride=1 / downsample=None BasicBlock requires inplanes == planes"
    assert N % block_n == 0
    T = N // block_n                                   # batch tiles == grid size
    Cp = ((C + LANE - 1) // LANE) * LANE               # lane-dense channel count
    count = N * H * W                                  # BN reduction extent
    csize = jnp.dtype(compute_dtype).itemsize

    # ---- layout prep (plain XLA): NCHW->NHWC, channel pad, conv1 halo pad ----
    x_nhwc = jnp.transpose(x_nchw, (0, 2, 3, 1)).astype(jnp.float32)
    x_id = jnp.pad(x_nhwc, ((0, 0), (0, 0), (0, 0), (0, Cp - C)))   # f32 identity
    x_pad = jnp.pad(x_id, ((0, 0), (1, 1), (1, 1), (0, 0))).astype(compute_dtype)

    w1s = _prep_weight(w1_oihw, Cp, compute_dtype)
    w2s = _prep_weight(w2_oihw, Cp, compute_dtype)
    g1p, b1p = _pad_vec(g1, Cp), _pad_vec(b1, Cp)
    g2p, b2p = _pad_vec(g2, Cp), _pad_vec(b2, Cp)

    cparams = pltpu.CompilerParams(dimension_semantics=("parallel",),
                                   vmem_limit_bytes=vmem_limit_bytes)

    act_spec = pl.BlockSpec((block_n, H, W, Cp), lambda t: (t, 0, 0, 0))
    pad_spec = pl.BlockSpec((block_n, H + 2, W + 2, Cp), lambda t: (t, 0, 0, 0))
    w_spec = pl.BlockSpec((3, 3 * Cp, Cp), lambda t: (0, 0, 0))
    vec_spec = pl.BlockSpec((1, Cp), lambda t: (0, 0))
    stats_spec = pl.BlockSpec((1, 2, Cp), lambda t: (t, 0, 0))

    act_f32 = jax.ShapeDtypeStruct((N, H, W, Cp), jnp.float32)
    stats_sh = jax.ShapeDtypeStruct((T, 2, Cp), jnp.float32)

    conv_flops = 2 * 9 * N * H * W * Cp * Cp
    act_bytes = N * H * W * Cp * 4
    pad_bytes = N * (H + 2) * (W + 2) * Cp * csize
    w_bytes = 3 * 3 * Cp * Cp * csize
    stats_bytes = T * 2 * Cp * 4

    # ---- pass 1: conv1 + per-tile channel stats ------------------------------
    acc1, st1 = pl.pallas_call(
        _conv1_kernel,
        grid=(T,),
        in_specs=[pad_spec, w_spec],
        out_specs=(act_spec, stats_spec),
        out_shape=(act_f32, stats_sh),
        compiler_params=cparams,
        cost_estimate=pl.CostEstimate(
            flops=conv_flops, transcendentals=0,
            bytes_accessed=pad_bytes + w_bytes + act_bytes + stats_bytes),
    )(x_pad, w1s)

    scale1, shift1 = _fold_bn(st1, count, g1p, b1p)

    # ---- pass 2: bn1 + relu + conv2 + per-tile channel stats -----------------
    acc2, st2 = pl.pallas_call(
        _bn1_relu_conv2_kernel,
        grid=(T,),
        in_specs=[act_spec, vec_spec, vec_spec, w_spec],
        out_specs=(act_spec, stats_spec),
        out_shape=(act_f32, stats_sh),
        scratch_shapes=[pltpu.VMEM((block_n, H + 2, W + 2, Cp), compute_dtype)],
        compiler_params=cparams,
        cost_estimate=pl.CostEstimate(
            flops=conv_flops + 4 * N * H * W * Cp, transcendentals=0,
            bytes_accessed=2 * act_bytes + w_bytes + stats_bytes),
    )(acc1, scale1, shift1, w2s)

    scale2, shift2 = _fold_bn(st2, count, g2p, b2p)

    # ---- pass 3: bn2 + residual add + relu -----------------------------------
    out_nhwc = pl.pallas_call(
        _bn2_residual_kernel,
        grid=(T,),
        in_specs=[act_spec, act_spec, vec_spec, vec_spec],
        out_specs=act_spec,
        out_shape=jax.ShapeDtypeStruct((N, H, W, Cp), x_nchw.dtype),
        compiler_params=cparams,
        cost_estimate=pl.CostEstimate(
            flops=4 * N * H * W * Cp, transcendentals=0,
            bytes_accessed=3 * act_bytes),
    )(acc2, x_id, scale2, shift2)

    return jnp.transpose(out_nhwc[..., :C], (0, 3, 1, 2))       # NHWC -> NCHW


# ---------------- pure-JAX reference (for the correctness check) -------------
def _ref_forward(x_nchw, w1, w2, g1, b1, g2, b2):
    def conv(x, w):
        return lax.conv_general_dilated(
            x, w, window_strides=(1, 1), padding=((1, 1), (1, 1)),
            dimension_numbers=("NCHW", "OIHW", "NCHW"),
            precision=lax.Precision.HIGHEST)

    def bn(x, g, b):
        mean = jnp.mean(x, axis=(0, 2, 3), keepdims=True)
        var = jnp.mean((x - mean) ** 2, axis=(0, 2, 3), keepdims=True)
        return (x - mean) * lax.rsqrt(var + EPS) * g.reshape(1, -1, 1, 1) \
            + b.reshape(1, -1, 1, 1)

    out = jnp.maximum(bn(conv(x_nchw, w1), g1, b1), 0.0)
    out = bn(conv(out, w2), g2, b2)
    return jnp.maximum(out + x_nchw, 0.0)


if __name__ == "__main__":
    # Small, conv-consistent shapes: batch=2, inplanes=planes=4, spatial=16.
    N, C, H, W = 2, 4, 16, 16

    key = jax.random.PRNGKey(0)
    kx, kw1, kw2 = jax.random.split(key, 3)

    x = jax.random.normal(kx, (N, C, H, W), jnp.float32)
    # conv weights (PyTorch OIHW), deterministic kaiming-ish scale
    w1 = jax.random.normal(kw1, (C, C, 3, 3), jnp.float32) * (2.0 / (C * 9)) ** 0.5
    w2 = jax.random.normal(kw2, (C, C, 3, 3), jnp.float32) * (2.0 / (C * 9)) ** 0.5
    # BatchNorm affine params at PyTorch init values
    g1 = jnp.ones((C,), jnp.float32)
    b1 = jnp.zeros((C,), jnp.float32)
    g2 = jnp.ones((C,), jnp.float32)
    b2 = jnp.zeros((C,), jnp.float32)

    ref = jax.block_until_ready(_ref_forward(x, w1, w2, g1, b1, g2, b2))

    # f32 compute path: exact structural check (tight tolerance).
    run_f32 = jax.jit(functools.partial(basic_block_pallas,
                                        compute_dtype=jnp.float32))
    out_f32 = jax.block_until_ready(run_f32(x, w1, w2, g1, b1, g2, b2))
    np.testing.assert_allclose(np.asarray(out_f32), np.asarray(ref),
                               rtol=1e-4, atol=1e-4)

    # bf16 matmul-input path (v6e/v7x perf default): looser tolerance, as the
    # reference is full f32.
    run_bf16 = jax.jit(functools.partial(basic_block_pallas,
                                         compute_dtype=jnp.bfloat16))
    out_bf16 = jax.block_until_ready(run_bf16(x, w1, w2, g1, b1, g2, b2))
    np.testing.assert_allclose(np.asarray(out_bf16), np.asarray(ref),
                               rtol=5e-2, atol=7.5e-2)

    print("KERNEL_OK")
</pallas_src>

<mosaic_0001>
module attributes {stable_mosaic.version = 11 : i64} {
  func.func @_bn1_relu_conv2_kernel(%arg0: i32, %arg1: memref<1x16x16x128xf32, #tpu.memory_space<vmem>>, %arg2: memref<1x128xf32, #tpu.memory_space<vmem>>, %arg3: memref<1x128xf32, #tpu.memory_space<vmem>>, %arg4: memref<3x384x128xf32, #tpu.memory_space<vmem>>, %arg5: memref<1x16x16x128xf32, #tpu.memory_space<vmem>>, %arg6: memref<1x2x128xf32, #tpu.memory_space<vmem>>, %arg7: memref<1x18x18x128xf32, #tpu.memory_space<vmem>>) attributes {dimension_semantics = [#tpu.dimension_semantics<parallel>], iteration_bounds = array<i64: 2>, scalar_prefetch = 0 : i64, scratch_operands = 1 : i64, tpu.core_type = #tpu.core_type<tc>, window_params = [{transform_indices = @transform_0, window_bounds = array<i64: 1, 16, 16, 128>}, {pipeline_mode = #tpu.pipeline_mode<synchronous>, transform_indices = @transform_1, window_bounds = array<i64: 1, 128>}, {pipeline_mode = #tpu.pipeline_mode<synchronous>, transform_indices = @transform_2, window_bounds = array<i64: 1, 128>}, {pipeline_mode = #tpu.pipeline_mode<synchronous>, transform_indices = @transform_3, window_bounds = array<i64: 3, 384, 128>}, {transform_indices = @transform_4, window_bounds = array<i64: 1, 16, 16, 128>}, {transform_indices = @transform_5, window_bounds = array<i64: 1, 2, 128>}]} {
    %c0 = arith.constant 0 : index
    %c0_0 = arith.constant 0 : index
    %c0_1 = arith.constant 0 : index
    %c0_2 = arith.constant 0 : index
    %0 = vector.load %arg1[%c0, %c0_0, %c0_1, %c0_2] : memref<1x16x16x128xf32, #tpu.memory_space<vmem>>, vector<1x16x16x128xf32>
    %c0_3 = arith.constant 0 : index
    %c0_4 = arith.constant 0 : index
    %1 = vector.load %arg2[%c0_3, %c0_4] : memref<1x128xf32, #tpu.memory_space<vmem>>, vector<1x128xf32>
    %2 = vector.shape_cast %1 : vector<1x128xf32> to vector<1x1x1x128xf32>
    %3 = vector.broadcast %2 : vector<1x1x1x128xf32> to vector<1x16x16x128xf32>
    %4 = arith.mulf %0, %3 : vector<1x16x16x128xf32>
    %c0_5 = arith.constant 0 : index
    %c0_6 = arith.constant 0 : index
    %5 = vector.load %arg3[%c0_5, %c0_6] : memref<1x128xf32, #tpu.memory_space<vmem>>, vector<1x128xf32>
    %6 = vector.shape_cast %5 : vector<1x128xf32> to vector<1x1x1x128xf32>
    %7 = vector.broadcast %6 : vector<1x1x1x128xf32> to vector<1x16x16x128xf32>
    %8 = arith.addf %4, %7 : vector<1x16x16x128xf32>
    %cst = arith.constant 0.000000e+00 : f32
    %9 = vector.broadcast %cst : f32 to vector<1x16x16x128xf32>
    %10 = arith.maximumf %8, %9 : vector<1x16x16x128xf32>
    %cst_7 = arith.constant 0.000000e+00 : f32
    %11 = vector.broadcast %cst_7 : f32 to vector<1x1x18x128xf32>
    %c0_8 = arith.constant 0 : index
    %c0_9 = arith.constant 0 : index
    %c0_10 = arith.constant 0 : index
    %c0_11 = arith.constant 0 : index
    %12 = vector.load %arg7[%c0_8, %c0_9, %c0_10, %c0_11] : memref<1x18x18x128xf32, #tpu.memory_space<vmem>>, vector<1x1x18x128xf32>
    tpu.vector_store %arg7[%c0_8, %c0_9, %c0_10, %c0_11], %11 {strides = array<i32>} : memref<1x18x18x128xf32, #tpu.memory_space<vmem>>, vector<1x1x18x128xf32>,
    %cst_12 = arith.constant 0.000000e+00 : f32
    %13 = vector.broadcast %cst_12 : f32 to vector<1x1x18x128xf32>
    %c0_13 = arith.constant 0 : index
    %c17 = arith.constant 17 : index
    %c0_14 = arith.constant 0 : index
    %c0_15 = arith.constant 0 : index
    %14 = vector.load %arg7[%c0_13, %c17, %c0_14, %c0_15] : memref<1x18x18x128xf32, #tpu.memory_space<vmem>>, vector<1x1x18x128xf32>
    tpu.vector_store %arg7[%c0_13, %c17, %c0_14, %c0_15], %13 {strides = array<i32>} : memref<1x18x18x128xf32, #tpu.memory_space<vmem>>, vector<1x1x18x128xf32>,
    %cst_16 = arith.constant 0.000000e+00 : f32
    %15 = vector.broadcast %cst_16 : f32 to vector<1x18x1x128xf32>
    %c0_17 = arith.constant 0 : index
    %c0_18 = arith.constant 0 : index
    %c0_19 = arith.constant 0 : index
    %c0_20 = arith.constant 0 : index
    %16 = vector.load %arg7[%c0_17, %c0_18, %c0_19, %c0_20] : memref<1x18x18x128xf32, #tpu.memory_space<vmem>>, vector<1x18x1x128xf32>
    tpu.vector_store %arg7[%c0_17, %c0_18, %c0_19, %c0_20], %15 {strides = array<i32>} : memref<1x18x18x128xf32, #tpu.memory_space<vmem>>, vector<1x18x1x128xf32>,
    %cst_21 = arith.constant 0.000000e+00 : f32
    %17 = vector.broadcast %cst_21 : f32 to vector<1x18x1x128xf32>
    %c0_22 = arith.constant 0 : index
    %c0_23 = arith.constant 0 : index
    %c17_24 = arith.constant 17 : index
    %c0_25 = arith.constant 0 : index
    %18 = vector.load %arg7[%c0_22, %c0_23, %c17_24, %c0_25] : memref<1x18x18x128xf32, #tpu.memory_space<vmem>>, vector<1x18x1x128xf32>
    tpu.vector_store %arg7[%c0_22, %c0_23, %c17_24, %c0_25], %17 {strides = array<i32>} : memref<1x18x18x128xf32, #tpu.memory_space<vmem>>, vector<1x18x1x128xf32>,
    %c0_26 = arith.constant 0 : index
    %c1 = arith.constant 1 : index
    %c1_27 = arith.constant 1 : index
    %c0_28 = arith.constant 0 : index
    %19 = vector.load %arg7[%c0_26, %c1, %c1_27, %c0_28] : memref<1x18x18x128xf32, #tpu.memory_space<vmem>>, vector<1x16x16x128xf32>
    tpu.vector_store %arg7[%c0_26, %c1, %c1_27, %c0_28], %10 {strides = array<i32>} : memref<1x18x18x128xf32, #tpu.memory_space<vmem>>, vector<1x16x16x128xf32>,
    %cst_29 = arith.constant 0.000000e+00 : f32
    %20 = vector.broadcast %cst_29 : f32 to vector<256x128xf32>
    %c0_30 = arith.constant 0 : index
    %c0_31 = arith.constant 0 : index
    %c0_32 = arith.constant 0 : index
    %c0_33 = arith.constant 0 : index
    %21 = vector.load %arg7[%c0_30, %c0_31, %c0_32, %c0_33] : memref<1x18x18x128xf32, #tpu.memory_space<vmem>>, vector<1x16x18x128xf32>
    %22 = vector.extract_strided_slice %21 {offsets = [0, 0, 0, 0], sizes = [1, 16, 16, 128], strides = [1, 1, 1, 1]} : vector<1x16x18x128xf32> to vector<1x16x16x128xf32>
    %23 = vector.extract_strided_slice %21 {offsets = [0, 0, 1, 0], sizes = [1, 16, 16, 128], strides = [1, 1, 1, 1]} : vector<1x16x18x128xf32> to vector<1x16x16x128xf32>
    %24 = vector.extract_strided_slice %21 {offsets = [0, 0, 2, 0], sizes = [1, 16, 16, 128], strides = [1, 1, 1, 1]} : vector<1x16x18x128xf32> to vector<1x16x16x128xf32>
    %25 = tpu.concatenate %22, %23, %24 in 3 : vector<1x16x16x128xf32>, vector<1x16x16x128xf32>, vector<1x16x16x128xf32> -> vector<1x16x16x384xf32>
    %26 = vector.shape_cast %25 : vector<1x16x16x384xf32> to vector<256x384xf32>
    %c0_34 = arith.constant 0 : index
    %c0_35 = arith.constant 0 : index
    %c0_36 = arith.constant 0 : index
    %27 = vector.load %arg4[%c0_34, %c0_35, %c0_36] : memref<3x384x128xf32, #tpu.memory_space<vmem>>, vector<1x384x128xf32>
    %28 = vector.shape_cast %27 : vector<1x384x128xf32> to vector<384x128xf32>
    %cst_37 = arith.constant dense<0.000000e+00> : vector<256x128xf32>
    %29 = tpu.matmul %26, %28, %cst_37 {dimension_numbers = #tpu.dot_dimension_numbers<[1], [0], [0], [1], [0, 0, 1, 1], [], []>} : vector<256x384xf32>, vector<384x128xf32>, vector<256x128xf32> -> vector<256x128xf32>
    %30 = arith.addf %20, %29 : vector<256x128xf32>
    %c0_38 = arith.constant 0 : index
    %c1_39 = arith.constant 1 : index
    %c0_40 = arith.constant 0 : index
    %c0_41 = arith.constant 0 : index
    %31 = vector.load %arg7[%c0_38, %c1_39, %c0_40, %c0_41] : memref<1x18x18x128xf32, #tpu.memory_space<vmem>>, vector<1x16x18x128xf32>
    %32 = vector.extract_strided_slice %31 {offsets = [0, 0, 0, 0], sizes = [1, 16, 16, 128], strides = [1, 1, 1, 1]} : vector<1x16x18x128xf32> to vector<1x16x16x128xf32>
    %33 = vector.extract_strided_slice %31 {offsets = [0, 0, 1, 0], sizes = [1, 16, 16, 128], strides = [1, 1, 1, 1]} : vector<1x16x18x128xf32> to vector<1x16x16x128xf32>
    %34 = vector.extract_strided_slice %31 {offsets = [0, 0, 2, 0], sizes = [1, 16, 16, 128], strides = [1, 1, 1, 1]} : vector<1x16x18x128xf32> to vector<1x16x16x128xf32>
    %35 = tpu.concatenate %32, %33, %34 in 3 : vector<1x16x16x128xf32>, vector<1x16x16x128xf32>, vector<1x16x16x128xf32> -> vector<1x16x16x384xf32>
    %36 = vector.shape_cast %35 : vector<1x16x16x384xf32> to vector<256x384xf32>
    %c1_42 = arith.constant 1 : index
    %c0_43 = arith.constant 0 : index
    %c0_44 = arith.constant 0 : index
    %37 = vector.load %arg4[%c1_42, %c0_43, %c0_44] : memref<3x384x128xf32, #tpu.memory_space<vmem>>, vector<1x384x128xf32>
    %38 = vector.shape_cast %37 : vector<1x384x128xf32> to vector<384x128xf32>
    %cst_45 = arith.constant dense<0.000000e+00> : vector<256x128xf32>
    %39 = tpu.matmul %36, %38, %cst_45 {dimension_numbers = #tpu.dot_dimension_numbers<[1], [0], [0], [1], [0, 0, 1, 1], [], []>} : vector<256x384xf32>, vector<384x128xf32>, vector<256x128xf32> -> vector<256x128xf32>
    %40 = arith.addf %30, %39 : vector<256x128xf32>
    %c0_46 = arith.constant 0 : index
    %c2 = arith.constant 2 : index
    %c0_47 = arith.constant 0 : index
    %c0_48 = arith.constant 0 : index
    %41 = vector.load %arg7[%c0_46, %c2, %c0_47, %c0_48] : memref<1x18x18x128xf32, #tpu.memory_space<vmem>>, vector<1x16x18x128xf32>
    %42 = vector.extract_strided_slice %41 {offsets = [0, 0, 0, 0], sizes = [1, 16, 16, 128], strides = [1, 1, 1, 1]} : vector<1x16x18x128xf32> to vector<1x16x16x128xf32>
    %43 = vector.extract_strided_slice %41 {offsets = [0, 0, 1, 0], sizes = [1, 16, 16, 128], strides = [1, 1, 1, 1]} : vector<1x16x18x128xf32> to vector<1x16x16x128xf32>
    %44 = vector.extract_strided_slice %41 {offsets = [0, 0, 2, 0], sizes = [1, 16, 16, 128], strides = [1, 1, 1, 1]} : vector<1x16x18x128xf32> to vector<1x16x16x128xf32>
    %45 = tpu.concatenate %42, %43, %44 in 3 : vector<1x16x16x128xf32>, vector<1x16x16x128xf32>, vector<1x16x16x128xf32> -> vector<1x16x16x384xf32>
    %46 = vector.shape_cast %45 : vector<1x16x16x384xf32> to vector<256x384xf32>
    %c2_49 = arith.constant 2 : index
    %c0_50 = arith.constant 0 : index
    %c0_51 = arith.constant 0 : index
    %47 = vector.load %arg4[%c2_49, %c0_50, %c0_51] : memref<3x384x128xf32, #tpu.memory_space<vmem>>, vector<1x384x128xf32>
    %48 = vector.shape_cast %47 : vector<1x384x128xf32> to vector<384x128xf32>
    %cst_52 = arith.constant dense<0.000000e+00> : vector<256x128xf32>
    %49 = tpu.matmul %46, %48, %cst_52 {dimension_numbers = #tpu.dot_dimension_numbers<[1], [0], [0], [1], [0, 0, 1, 1], [], []>} : vector<256x384xf32>, vector<384x128xf32>, vector<256x128xf32> -> vector<256x128xf32>
    %50 = arith.addf %40, %49 : vector<256x128xf32>
    %51 = vector.shape_cast %50 : vector<256x128xf32> to vector<1x16x16x128xf32>
    %c0_53 = arith.constant 0 : index
    %c0_54 = arith.constant 0 : index
    %c0_55 = arith.constant 0 : index
    %c0_56 = arith.constant 0 : index
    %52 = vector.load %arg5[%c0_53, %c0_54, %c0_55, %c0_56] : memref<1x16x16x128xf32, #tpu.memory_space<vmem>>, vector<1x16x16x128xf32>
    tpu.vector_store %arg5[%c0_53, %c0_54, %c0_55, %c0_56], %51 {strides = array<i32>} : memref<1x16x16x128xf32, #tpu.memory_space<vmem>>, vector<1x16x16x128xf32>,
    %cst_57 = arith.constant dense<0.000000e+00> : vector<128xf32>
    %53 = vector.multi_reduction <add>, %50, %cst_57 [0] : vector<256x128xf32> to vector<128xf32>
    %54 = vector.shape_cast %53 : vector<128xf32> to vector<1x128xf32>
    %55 = arith.mulf %50, %50 : vector<256x128xf32>
    %cst_58 = arith.constant dense<0.000000e+00> : vector<128xf32>
    %56 = vector.multi_reduction <add>, %55, %cst_58 [0] : vector<256x128xf32> to vector<128xf32>
    %57 = vector.shape_cast %56 : vector<128xf32> to vector<1x128xf32>
    %58 = tpu.concatenate %54, %57 in 0 : vector<1x128xf32>, vector<1x128xf32> -> vector<2x128xf32>
    %59 = vector.shape_cast %58 : vector<2x128xf32> to vector<1x2x128xf32>
    %c0_59 = arith.constant 0 : index
    %c0_60 = arith.constant 0 : index
    %c0_61 = arith.constant 0 : index
    %60 = vector.load %arg6[%c0_59, %c0_60, %c0_61] : memref<1x2x128xf32, #tpu.memory_space<vmem>>, vector<1x2x128xf32>
    tpu.vector_store %arg6[%c0_59, %c0_60, %c0_61], %59 {strides = array<i32>} : memref<1x2x128xf32, #tpu.memory_space<vmem>>, vector<1x2x128xf32>,
    return
  }
  func.func @transform_0(%arg0: i32) -> (i32, i32, i32, i32) {
    %c0_i32 = arith.constant 0 : i32
    %c0_i32_0 = arith.constant 0 : i32
    %c0_i32_1 = arith.constant 0 : i32
    %c0_i32_2 = arith.constant 0 : i32
    return %arg0, %c0_i32, %c0_i32_0, %c0_i32_1 : i32, i32, i32, i32
  }
  func.func @transform_1(%arg0: i32) -> (i32, i32) {
    %c0_i32 = arith.constant 0 : i32
    %c0_i32_0 = arith.constant 0 : i32
    %c0_i32_1 = arith.constant 0 : i32
    return %c0_i32, %c0_i32_0 : i32, i32
  }
  func.func @transform_2(%arg0: i32) -> (i32, i32) {
    %c0_i32 = arith.constant 0 : i32
    %c0_i32_0 = arith.constant 0 : i32
    %c0_i32_1 = arith.constant 0 : i32
    return %c0_i32, %c0_i32_0 : i32, i32
  }
  func.func @transform_3(%arg0: i32) -> (i32, i32, i32) {
    %c0_i32 = arith.constant 0 : i32
    %c0_i32_0 = arith.constant 0 : i32
    %c0_i32_1 = arith.constant 0 : i32
    %c0_i32_2 = arith.constant 0 : i32
    return %c0_i32, %c0_i32_0, %c0_i32_1 : i32, i32, i32
  }
  func.func @transform_4(%arg0: i32) -> (i32, i32, i32, i32) {
    %c0_i32 = arith.constant 0 : i32
    %c0_i32_0 = arith.constant 0 : i32
    %c0_i32_1 = arith.constant 0 : i32
    %c0_i32_2 = arith.constant 0 : i32
    return %arg0, %c0_i32, %c0_i32_0, %c0_i32_1 : i32, i32, i32, i32
  }
  func.func @transform_5(%arg0: i32) -> (i32, i32, i32) {
    %c0_i32 = arith.constant 0 : i32
    %c0_i32_0 = arith.constant 0 : i32
    %c0_i32_1 = arith.constant 0 : i32
    return %arg0, %c0_i32, %c0_i32_0 : i32, i32, i32
  }
}

module attributes {stable_mosaic.version = 11 : i64} {
  func.func @_conv1_kernel(%arg0: i32, %arg1: memref<1x18x18x128xf32, #tpu.memory_space<vmem>>, %arg2: memref<3x384x128xf32, #tpu.memory_space<vmem>>, %arg3: memref<1x16x16x128xf32, #tpu.memory_space<vmem>>, %arg4: memref<1x2x128xf32, #tpu.memory_space<vmem>>) attributes {dimension_semantics = [#tpu.dimension_semantics<parallel>], iteration_bounds = array<i64: 2>, scalar_prefetch = 0 : i64, scratch_operands = 0 : i64, tpu.core_type = #tpu.core_type<tc>, window_params = [{transform_indices = @transform_0, window_bounds = array<i64: 1, 18, 18, 128>}, {pipeline_mode = #tpu.pipeline_mode<synchronous>, transform_indices = @transform_1, window_bounds = array<i64: 3, 384, 128>}, {transform_indices = @transform_2, window_bounds = array<i64: 1, 16, 16, 128>}, {transform_indices = @transform_3, window_bounds = array<i64: 1, 2, 128>}]} {
    %cst = arith.constant 0.000000e+00 : f32
    %0 = vector.broadcast %cst : f32 to vector<256x128xf32>
    %c0 = arith.constant 0 : index
    %c0_0 = arith.constant 0 : index
    %c0_1 = arith.constant 0 : index
    %c0_2 = arith.constant 0 : index
    %1 = vector.load %arg1[%c0, %c0_0, %c0_1, %c0_2] : memref<1x18x18x128xf32, #tpu.memory_space<vmem>>, vector<1x16x18x128xf32>
    %2 = vector.extract_strided_slice %1 {offsets = [0, 0, 0, 0], sizes = [1, 16, 16, 128], strides = [1, 1, 1, 1]} : vector<1x16x18x128xf32> to vector<1x16x16x128xf32>
    %3 = vector.extract_strided_slice %1 {offsets = [0, 0, 1, 0], sizes = [1, 16, 16, 128], strides = [1, 1, 1, 1]} : vector<1x16x18x128xf32> to vector<1x16x16x128xf32>
    %4 = vector.extract_strided_slice %1 {offsets = [0, 0, 2, 0], sizes = [1, 16, 16, 128], strides = [1, 1, 1, 1]} : vector<1x16x18x128xf32> to vector<1x16x16x128xf32>
    %5 = tpu.concatenate %2, %3, %4 in 3 : vector<1x16x16x128xf32>, vector<1x16x16x128xf32>, vector<1x16x16x128xf32> -> vector<1x16x16x384xf32>
    %6 = vector.shape_cast %5 : vector<1x16x16x384xf32> to vector<256x384xf32>
    %c0_3 = arith.constant 0 : index
    %c0_4 = arith.constant 0 : index
    %c0_5 = arith.constant 0 : index
    %7 = vector.load %arg2[%c0_3, %c0_4, %c0_5] : memref<3x384x128xf32, #tpu.memory_space<vmem>>, vector<1x384x128xf32>
    %8 = vector.shape_cast %7 : vector<1x384x128xf32> to vector<384x128xf32>
    %cst_6 = arith.constant dense<0.000000e+00> : vector<256x128xf32>
    %9 = tpu.matmul %6, %8, %cst_6 {dimension_numbers = #tpu.dot_dimension_numbers<[1], [0], [0], [1], [0, 0, 1, 1], [], []>} : vector<256x384xf32>, vector<384x128xf32>, vector<256x128xf32> -> vector<256x128xf32>
    %10 = arith.addf %0, %9 : vector<256x128xf32>
    %c0_7 = arith.constant 0 : index
    %c1 = arith.constant 1 : index
    %c0_8 = arith.constant 0 : index
    %c0_9 = arith.constant 0 : index
    %11 = vector.load %arg1[%c0_7, %c1, %c0_8, %c0_9] : memref<1x18x18x128xf32, #tpu.memory_space<vmem>>, vector<1x16x18x128xf32>
    %12 = vector.extract_strided_slice %11 {offsets = [0, 0, 0, 0], sizes = [1, 16, 16, 128], strides = [1, 1, 1, 1]} : vector<1x16x18x128xf32> to vector<1x16x16x128xf32>
    %13 = vector.extract_strided_slice %11 {offsets = [0, 0, 1, 0], sizes = [1, 16, 16, 128], strides = [1, 1, 1, 1]} : vector<1x16x18x128xf32> to vector<1x16x16x128xf32>
    %14 = vector.extract_strided_slice %11 {offsets = [0, 0, 2, 0], sizes = [1, 16, 16, 128], strides = [1, 1, 1, 1]} : vector<1x16x18x128xf32> to vector<1x16x16x128xf32>
    %15 = tpu.concatenate %12, %13, %14 in 3 : vector<1x16x16x128xf32>, vector<1x16x16x128xf32>, vector<1x16x16x128xf32> -> vector<1x16x16x384xf32>
    %16 = vector.shape_cast %15 : vector<1x16x16x384xf32> to vector<256x384xf32>
    %c1_10 = arith.constant 1 : index
    %c0_11 = arith.constant 0 : index
    %c0_12 = arith.constant 0 : index
    %17 = vector.load %arg2[%c1_10, %c0_11, %c0_12] : memref<3x384x128xf32, #tpu.memory_space<vmem>>, vector<1x384x128xf32>
    %18 = vector.shape_cast %17 : vector<1x384x128xf32> to vector<384x128xf32>
    %cst_13 = arith.constant dense<0.000000e+00> : vector<256x128xf32>
    %19 = tpu.matmul %16, %18, %cst_13 {dimension_numbers = #tpu.dot_dimension_numbers<[1], [0], [0], [1], [0, 0, 1, 1], [], []>} : vector<256x384xf32>, vector<384x128xf32>, vector<256x128xf32> -> vector<256x128xf32>
    %20 = arith.addf %10, %19 : vector<256x128xf32>
    %c0_14 = arith.constant 0 : index
    %c2 = arith.constant 2 : index
    %c0_15 = arith.constant 0 : index
    %c0_16 = arith.constant 0 : index
    %21 = vector.load %arg1[%c0_14, %c2, %c0_15, %c0_16] : memref<1x18x18x128xf32, #tpu.memory_space<vmem>>, vector<1x16x18x128xf32>
    %22 = vector.extract_strided_slice %21 {offsets = [0, 0, 0, 0], sizes = [1, 16, 16, 128], strides = [1, 1, 1, 1]} : vector<1x16x18x128xf32> to vector<1x16x16x128xf32>
    %23 = vector.extract_strided_slice %21 {offsets = [0, 0, 1, 0], sizes = [1, 16, 16, 128], strides = [1, 1, 1, 1]} : vector<1x16x18x128xf32> to vector<1x16x16x128xf32>
    %24 = vector.extract_strided_slice %21 {offsets = [0, 0, 2, 0], sizes = [1, 16, 16, 128], strides = [1, 1, 1, 1]} : vector<1x16x18x128xf32> to vector<1x16x16x128xf32>
    %25 = tpu.concatenate %22, %23, %24 in 3 : vector<1x16x16x128xf32>, vector<1x16x16x128xf32>, vector<1x16x16x128xf32> -> vector<1x16x16x384xf32>
    %26 = vector.shape_cast %25 : vector<1x16x16x384xf32> to vector<256x384xf32>
    %c2_17 = arith.constant 2 : index
    %c0_18 = arith.constant 0 : index
    %c0_19 = arith.constant 0 : index
    %27 = vector.load %arg2[%c2_17, %c0_18, %c0_19] : memref<3x384x128xf32, #tpu.memory_space<vmem>>, vector<1x384x128xf32>
    %28 = vector.shape_cast %27 : vector<1x384x128xf32> to vector<384x128xf32>
    %cst_20 = arith.constant dense<0.000000e+00> : vector<256x128xf32>
    %29 = tpu.matmul %26, %28, %cst_20 {dimension_numbers = #tpu.dot_dimension_numbers<[1], [0], [0], [1], [0, 0, 1, 1], [], []>} : vector<256x384xf32>, vector<384x128xf32>, vector<256x128xf32> -> vector<256x128xf32>
    %30 = arith.addf %20, %29 : vector<256x128xf32>
    %31 = vector.shape_cast %30 : vector<256x128xf32> to vector<1x16x16x128xf32>
    %c0_21 = arith.constant 0 : index
    %c0_22 = arith.constant 0 : index
    %c0_23 = arith.constant 0 : index
    %c0_24 = arith.constant 0 : index
    %32 = vector.load %arg3[%c0_21, %c0_22, %c0_23, %c0_24] : memref<1x16x16x128xf32, #tpu.memory_space<vmem>>, vector<1x16x16x128xf32>
    tpu.vector_store %arg3[%c0_21, %c0_22, %c0_23, %c0_24], %31 {strides = array<i32>} : memref<1x16x16x128xf32, #tpu.memory_space<vmem>>, vector<1x16x16x128xf32>,
    %cst_25 = arith.constant dense<0.000000e+00> : vector<128xf32>
    %33 = vector.multi_reduction <add>, %30, %cst_25 [0] : vector<256x128xf32> to vector<128xf32>
    %34 = vector.shape_cast %33 : vector<128xf32> to vector<1x128xf32>
    %35 = arith.mulf %30, %30 : vector<256x128xf32>
    %cst_26 = arith.constant dense<0.000000e+00> : vector<128xf32>
    %36 = vector.multi_reduction <add>, %35, %cst_26 [0] : vector<256x128xf32> to vector<128xf32>
    %37 = vector.shape_cast %36 : vector<128xf32> to vector<1x128xf32>
    %38 = tpu.concatenate %34, %37 in 0 : vector<1x128xf32>, vector<1x128xf32> -> vector<2x128xf32>
    %39 = vector.shape_cast %38 : vector<2x128xf32> to vector<1x2x128xf32>
    %c0_27 = arith.constant 0 : index
    %c0_28 = arith.constant 0 : index
    %c0_29 = arith.constant 0 : index
    %40 = vector.load %arg4[%c0_27, %c0_28, %c0_29] : memref<1x2x128xf32, #tpu.memory_space<vmem>>, vector<1x2x128xf32>
    tpu.vector_store %arg4[%c0_27, %c0_28, %c0_29], %39 {strides = array<i32>} : memref<1x2x128xf32, #tpu.memory_space<vmem>>, vector<1x2x128xf32>,
    return
  }
  func.func @transform_0(%arg0: i32) -> (i32, i32, i32, i32) {
    %c0_i32 = arith.constant 0 : i32
    %c0_i32_0 = arith.constant 0 : i32
    %c0_i32_1 = arith.constant 0 : i32
    %c0_i32_2 = arith.constant 0 : i32
    return %arg0, %c0_i32, %c0_i32_0, %c0_i32_1 : i32, i32, i32, i32
  }
  func.func @transform_1(%arg0: i32) -> (i32, i32, i32) {
    %c0_i32 = arith.constant 0 : i32
    %c0_i32_0 = arith.constant 0 : i32
    %c0_i32_1 = arith.constant 0 : i32
    %c0_i32_2 = arith.constant 0 : i32
    return %c0_i32, %c0_i32_0, %c0_i32_1 : i32, i32, i32
  }
  func.func @transform_2(%arg0: i32) -> (i32, i32, i32, i32) {
    %c0_i32 = arith.constant 0 : i32
    %c0_i32_0 = arith.constant 0 : i32
    %c0_i32_1 = arith.constant 0 : i32
    %c0_i32_2 = arith.constant 0 : i32
    return %arg0, %c0_i32, %c0_i32_0, %c0_i32_1 : i32, i32, i32, i32
  }
  func.func @transform_3(%arg0: i32) -> (i32, i32, i32) {
    %c0_i32 = arith.constant 0 : i32
    %c0_i32_0 = arith.constant 0 : i32
    %c0_i32_1 = arith.constant 0 : i32
    return %arg0, %c0_i32, %c0_i32_0 : i32, i32, i32
  }
}

module attributes {stable_mosaic.version = 11 : i64} {
  func.func @_bn2_residual_kernel(%arg0: i32, %arg1: memref<1x16x16x128xf32, #tpu.memory_space<vmem>>, %arg2: memref<1x16x16x128xf32, #tpu.memory_space<vmem>>, %arg3: memref<1x128xf32, #tpu.memory_space<vmem>>, %arg4: memref<1x128xf32, #tpu.memory_space<vmem>>, %arg5: memref<1x16x16x128xf32, #tpu.memory_space<vmem>>) attributes {dimension_semantics = [#tpu.dimension_semantics<parallel>], iteration_bounds = array<i64: 2>, scalar_prefetch = 0 : i64, scratch_operands = 0 : i64, tpu.core_type = #tpu.core_type<tc>, window_params = [{transform_indices = @transform_0, window_bounds = array<i64: 1, 16, 16, 128>}, {transform_indices = @transform_1, window_bounds = array<i64: 1, 16, 16, 128>}, {pipeline_mode = #tpu.pipeline_mode<synchronous>, transform_indices = @transform_2, window_bounds = array<i64: 1, 128>}, {pipeline_mode = #tpu.pipeline_mode<synchronous>, transform_indices = @transform_3, window_bounds = array<i64: 1, 128>}, {transform_indices = @transform_4, window_bounds = array<i64: 1, 16, 16, 128>}]} {
    %c0 = arith.constant 0 : index
    %c0_0 = arith.constant 0 : index
    %c0_1 = arith.constant 0 : index
    %c0_2 = arith.constant 0 : index
    %0 = vector.load %arg1[%c0, %c0_0, %c0_1, %c0_2] : memref<1x16x16x128xf32, #tpu.memory_space<vmem>>, vector<1x16x16x128xf32>
    %c0_3 = arith.constant 0 : index
    %c0_4 = arith.constant 0 : index
    %1 = vector.load %arg3[%c0_3, %c0_4] : memref<1x128xf32, #tpu.memory_space<vmem>>, vector<1x128xf32>
    %2 = vector.shape_cast %1 : vector<1x128xf32> to vector<1x1x1x128xf32>
    %3 = vector.broadcast %2 : vector<1x1x1x128xf32> to vector<1x16x16x128xf32>
    %4 = arith.mulf %0, %3 : vector<1x16x16x128xf32>
    %c0_5 = arith.constant 0 : index
    %c0_6 = arith.constant 0 : index
    %5 = vector.load %arg4[%c0_5, %c0_6] : memref<1x128xf32, #tpu.memory_space<vmem>>, vector<1x128xf32>
    %6 = vector.shape_cast %5 : vector<1x128xf32> to vector<1x1x1x128xf32>
    %7 = vector.broadcast %6 : vector<1x1x1x128xf32> to vector<1x16x16x128xf32>
    %8 = arith.addf %4, %7 : vector<1x16x16x128xf32>
    %c0_7 = arith.constant 0 : index
    %c0_8 = arith.constant 0 : index
    %c0_9 = arith.constant 0 : index
    %c0_10 = arith.constant 0 : index
    %9 = vector.load %arg2[%c0_7, %c0_8, %c0_9, %c0_10] : memref<1x16x16x128xf32, #tpu.memory_space<vmem>>, vector<1x16x16x128xf32>
    %10 = arith.addf %8, %9 : vector<1x16x16x128xf32>
    %cst = arith.constant 0.000000e+00 : f32
    %11 = vector.broadcast %cst : f32 to vector<1x16x16x128xf32>
    %12 = arith.maximumf %10, %11 : vector<1x16x16x128xf32>
    %c0_11 = arith.constant 0 : index
    %c0_12 = arith.constant 0 : index
    %c0_13 = arith.constant 0 : index
    %c0_14 = arith.constant 0 : index
    %13 = vector.load %arg5[%c0_11, %c0_12, %c0_13, %c0_14] : memref<1x16x16x128xf32, #tpu.memory_space<vmem>>, vector<1x16x16x128xf32>
    tpu.vector_store %arg5[%c0_11, %c0_12, %c0_13, %c0_14], %12 {strides = array<i32>} : memref<1x16x16x128xf32, #tpu.memory_space<vmem>>, vector<1x16x16x128xf32>,
    return
  }
  func.func @transform_0(%arg0: i32) -> (i32, i32, i32, i32) {
    %c0_i32 = arith.constant 0 : i32
    %c0_i32_0 = arith.constant 0 : i32
    %c0_i32_1 = arith.constant 0 : i32
    %c0_i32_2 = arith.constant 0 : i32
    return %arg0, %c0_i32, %c0_i32_0, %c0_i32_1 : i32, i32, i32, i32
  }
  func.func @transform_1(%arg0: i32) -> (i32, i32, i32, i32) {
    %c0_i32 = arith.constant 0 : i32
    %c0_i32_0 = arith.constant 0 : i32
    %c0_i32_1 = arith.constant 0 : i32
    %c0_i32_2 = arith.constant 0 : i32
    return %arg0, %c0_i32, %c0_i32_0, %c0_i32_1 : i32, i32, i32, i32
  }
  func.func @transform_2(%arg0: i32) -> (i32, i32) {
    %c0_i32 = arith.constant 0 : i32
    %c0_i32_0 = arith.constant 0 : i32
    %c0_i32_1 = arith.constant 0 : i32
    return %c0_i32, %c0_i32_0 : i32, i32
  }
  func.func @transform_3(%arg0: i32) -> (i32, i32) {
    %c0_i32 = arith.constant 0 : i32
    %c0_i32_0 = arith.constant 0 : i32
    %c0_i32_1 = arith.constant 0 : i32
    return %c0_i32, %c0_i32_0 : i32, i32
  }
  func.func @transform_4(%arg0: i32) -> (i32, i32, i32, i32) {
    %c0_i32 = arith.constant 0 : i32
    %c0_i32_0 = arith.constant 0 : i32
    %c0_i32_1 = arith.constant 0 : i32
    %c0_i32_2 = arith.constant 0 : i32
    return %arg0, %c0_i32, %c0_i32_0, %c0_i32_1 : i32, i32, i32, i32
  }
}

</mosaic_0001>

<llo_original>
// kernel: basic_block_pallas.5
$region0: #{basic_block_pallas.5}
  #allocation0 [shape = 'u32[]', space=smem, size = 0x4, offset = 0x4, fixed_abs, tag = 'smem constant byte address 0x4 - core index']
  #allocation1 [shape = 'u32[144,128]{1,0:T(1,128)}', space=vmem, size = 0x12000, scoped, tag = 'internal scratch']
  %s0 = inlined_call_operand.vmem [shape: f32[2,16,16,128], index: 0, kind: input, shape index: {}]
  %s1 = inlined_call_operand.vmem [shape: f32[2,16,16,128], index: 1, kind: input, shape index: {}]
  %s2 = inlined_call_operand.vmem [shape: f32[1,128], index: 2, kind: input, shape index: {}]
  %s3 = inlined_call_operand.vmem [shape: f32[1,128], index: 3, kind: input, shape index: {}]
  %s4 = inlined_call_operand.vmem [shape: f32[2,16,16,128], index: 4, kind: output, shape index: {}]
  %s5 = sld [smem:[#allocation0]]
  $region49: #{basic_block_pallas.5} parent=0
    _
  %s7 = ssub.s32 1, %s5
  %s8 = scalar_select 0, %s7, %s5
  loop: start=0, step=1, limit=4
  $region2: #{basic_block_pallas.5} parent=0 // loop_pre_header
    _
  $region3: #{basic_block_pallas.5} parent=0 // loop_header
    %s10 = sphi 0, %s14
    %p11 = scmp.ge.s32.totalorder %s10, 4
    %s20 = sphi 0, %s22
    %s23 = sphi 0, %s20
    %s24 = sphi 0, %s23
    %s40 = sphi 0, %s24
    %s46 = sphi 0, %s48
    %s49 = sphi 0, %s46
    %s50 = sphi 0, %s49
    %s66 = sphi 0, %s50
    %s70 = sphi 0, %s70
    %s72 = sphi 0, %s70
    %s73 = sphi 0, %s72
    %s87 = sphi 0, %s73
    %s91 = sphi 0, %s91
    %s93 = sphi 0, %s91
    %s94 = sphi 0, %s93
    %s108 = sphi 0, %s94
    %s114 = sphi 0, %s116
    %s117 = sphi 0, %s114
    %s118 = sphi 0, %s117
    %s134 = sphi 0, %s118
  $region4: #{basic_block_pallas.5} parent=0 // loop_header_branch
    %13 = sbr.rel (%p11) target = $region8
  $region5: #{basic_block_pallas.5} parent=0 // loop_body
    %s15 = ssub.s32 %s10, 1
    %s16 = ssub.s32 %s10, 2
    %s17 = sadd.s32 %s10, 1
    %s18 = ssub.s32 %s10, %s17
    %p19 = scmp.eq.s32.totalorder %s18, 0
    %s21 = sadd.s32 %s20, 1
    %s22 = scalar_select %p19, %s20, %s21
    %p25 = pneg %p19
    %p26 = scmp.eq.s32.totalorder %s10, 1
    %p27 = por %p25, %p26
    %p28 = scmp.ne.s32.totalorder %s20, %s23
    %p29 = scmp.eq.s32.totalorder %s10, 0
    %p30 = por %p28, %p29
    %p31 = scmp.ne.s32.totalorder %s20, %s23
    %p32 = scmp.eq.s32.totalorder %s15, 1
    %p33 = por %p31, %p32
    %p34 = scmp.ne.s32.totalorder %s23, %s24
    %p35 = scmp.eq.s32.totalorder %s15, 0
    %p36 = por %p34, %p35
    %p37 = scmp.ne.s32.totalorder %s23, %s24
    %p38 = scmp.eq.s32.totalorder %s16, 1
    %p39 = por %p37, %p38
    %p41 = scmp.ne.s32.totalorder %s24, %s40
    %p42 = scmp.eq.s32.totalorder %s16, 0
    %p43 = por %p41, %p42
    %s44 = ssub.s32 %s10, %s17
    %p45 = scmp.eq.s32.totalorder %s44, 0
    %s47 = sadd.s32 %s46, 1
    %s48 = scalar_select %p45, %s46, %s47
    %p51 = pneg %p45
    %p52 = scmp.eq.s32.totalorder %s10, 1
    %p53 = por %p51, %p52
    %p54 = scmp.ne.s32.totalorder %s46, %s49
    %p55 = scmp.eq.s32.totalorder %s10, 0
    %p56 = por %p54, %p55
    %p57 = scmp.ne.s32.totalorder %s46, %s49
    %p58 = scmp.eq.s32.totalorder %s15, 1
    %p59 = por %p57, %p58
    %p60 = scmp.ne.s32.totalorder %s49, %s50
    %p61 = scmp.eq.s32.totalorder %s15, 0
    %p62 = por %p60, %p61
    %p63 = scmp.ne.s32.totalorder %s49, %s50
    %p64 = scmp.eq.s32.totalorder %s16, 1
    %p65 = por %p63, %p64
    %p67 = scmp.ne.s32.totalorder %s50, %s66
    %p68 = scmp.eq.s32.totalorder %s16, 0
    %p69 = por %p67, %p68
    %s71 = sadd.s32 %s70, 1
    %p74 = scmp.eq.s32.totalorder %s10, 1
    %p75 = scmp.ne.s32.totalorder %s70, %s72
    %p76 = scmp.eq.s32.totalorder %s10, 0
    %p77 = por %p75, %p76
    %p78 = scmp.ne.s32.totalorder %s70, %s72
    %p79 = scmp.eq.s32.totalorder %s15, 1
    %p80 = por %p78, %p79
    %p81 = scmp.ne.s32.totalorder %s72, %s73
    %p82 = scmp.eq.s32.totalorder %s15, 0
    %p83 = por %p81, %p82
    %p84 = scmp.ne.s32.totalorder %s72, %s73
    %p85 = scmp.eq.s32.totalorder %s16, 1
    %p86 = por %p84, %p85
    %p88 = scmp.ne.s32.totalorder %s73, %s87
    %p89 = scmp.eq.s32.totalorder %s16, 0
    %p90 = por %p88, %p89
    %s92 = sadd.s32 %s91, 1
    %p95 = scmp.eq.s32.totalorder %s10, 1
    %p96 = scmp.ne.s32.totalorder %s91, %s93
    %p97 = scmp.eq.s32.totalorder %s10, 0
    %p98 = por %p96, %p97
    %p99 = scmp.ne.s32.totalorder %s91, %s93
    %p100 = scmp.eq.s32.totalorder %s15, 1
    %p101 = por %p99, %p100
    %p102 = scmp.ne.s32.totalorder %s93, %s94
    %p103 = scmp.eq.s32.totalorder %s15, 0
    %p104 = por %p102, %p103
    %p105 = scmp.ne.s32.totalorder %s93, %s94
    %p106 = scmp.eq.s32.totalorder %s16, 1
    %p107 = por %p105, %p106
    %p109 = scmp.ne.s32.totalorder %s94, %s108
    %p110 = scmp.eq.s32.totalorder %s16, 0
    %p111 = por %p109, %p110
    %s112 = ssub.s32 %s10, %s17
    %p113 = scmp.eq.s32.totalorder %s112, 0
    %s115 = sadd.s32 %s114, 1
    %s116 = scalar_select %p113, %s114, %s115
    %p119 = pneg %p113
    %p120 = scmp.eq.s32.totalorder %s10, 1
    %p121 = por %p119, %p120
    %p122 = scmp.ne.s32.totalorder %s114, %s117
    %p123 = scmp.eq.s32.totalorder %s10, 0
    %p124 = por %p122, %p123
    %p125 = scmp.ne.s32.totalorder %s114, %s117
    %p126 = scmp.eq.s32.totalorder %s15, 1
    %p127 = por %p125, %p126
    %p128 = scmp.ne.s32.totalorder %s117, %s118
    %p129 = scmp.eq.s32.totalorder %s15, 0
    %p130 = por %p128, %p129
    %p131 = scmp.ne.s32.totalorder %s117, %s118
    %p132 = scmp.eq.s32.totalorder %s16, 1
    %p133 = por %p131, %p132
    %p135 = scmp.ne.s32.totalorder %s118, %s134
    %p136 = scmp.eq.s32.totalorder %s16, 0
    %p137 = por %p135, %p136
    %p138 = scmp.le.s32.totalorder 1, %s10
    %p139 = scmp.lt.s32.totalorder %s10, 3
    %p140 = pnand %p138, %p139
    %p141 = pneg %p140
    // Predicated region
    $region9: #{basic_block_pallas.5} parent=5 // pred_check
      _
    $region10: #{basic_block_pallas.5} parent=5 // pred_check_branch
      %143 = sbr.rel (%p140) target = $region12
    $region11: #{basic_block_pallas.5} parent=5 // pred_region
      %s144 = ssub.s32 %s10, 1
      // Predicated region
      $region13: #{basic_block_pallas.5} parent=11 // pred_check
        %p145 = pneg %p83
      $region14: #{basic_block_pallas.5} parent=11 // pred_check_branch
        %147 = sbr.rel (%p145) target = $region16
      $region15: #{basic_block_pallas.5} parent=11 // pred_region
        _
      $region16: #{basic_block_pallas.5} parent=11 // pred_fallthru
        _
      // Predicated region
      $region17: #{basic_block_pallas.5} parent=11 // pred_check
        %p148 = pneg %p104
      $region18: #{basic_block_pallas.5} parent=11 // pred_check_branch
        %150 = sbr.rel (%p148) target = $region20
      $region19: #{basic_block_pallas.5} parent=11 // pred_region
        _
      $region20: #{basic_block_pallas.5} parent=11 // pred_fallthru
        _
    $region12: #{basic_block_pallas.5} parent=5 // pred_fallthru
      _
    %p151 = scmp.lt.s32.totalorder %s10, 2
    // Predicated region
    $region21: #{basic_block_pallas.5} parent=5 // pred_check
      %p152 = pneg %p151
    $region22: #{basic_block_pallas.5} parent=5 // pred_check_branch
      %154 = sbr.rel (%p152) target = $region24
    $region23: #{basic_block_pallas.5} parent=5 // pred_region
      // Predicated region
      $region25: #{basic_block_pallas.5} parent=23 // pred_check
        %p155 = pneg %p30
      $region26: #{basic_block_pallas.5} parent=23 // pred_check_branch
        %157 = sbr.rel (%p155) target = $region28
      $region27: #{basic_block_pallas.5} parent=23 // pred_region
        %p158 = scmp.lt.s32.totalorder %s10, 1
        %s159 = scalar_select %p158, %s10, 1
        %s160 = smul.addr %s159, 32
        %s161 = smul.addr %s160, 8
        %s162 = scalar_lea.vmem %s0, %s161
      $region28: #{basic_block_pallas.5} parent=23 // pred_fallthru
        _
      // Predicated region
      $region29: #{basic_block_pallas.5} parent=23 // pred_check
        %p163 = pneg %p56
      $region30: #{basic_block_pallas.5} parent=23 // pred_check_branch
        %165 = sbr.rel (%p163) target = $region32
      $region31: #{basic_block_pallas.5} parent=23 // pred_region
        %p166 = scmp.lt.s32.totalorder %s10, 1
        %s167 = scalar_select %p166, %s10, 1
        %s168 = smul.addr %s167, 32
        %s169 = smul.addr %s168, 8
        %s170 = scalar_lea.vmem %s1, %s169
      $region32: #{basic_block_pallas.5} parent=23 // pred_fallthru
        _
    $region24: #{basic_block_pallas.5} parent=5 // pred_fallthru
      _
    %p171 = scmp.le.s32.totalorder 1, %s10
    %p172 = scmp.lt.s32.totalorder %s10, 3
    %p173 = pnand %p171, %p172
    %p174 = pneg %p173
    // Predicated region
    $region33: #{basic_block_pallas.5} parent=5 // pred_check
      _
    $region34: #{basic_block_pallas.5} parent=5 // pred_check_branch
      %176 = sbr.rel (%p173) target = $region36
    $region35: #{basic_block_pallas.5} parent=5 // pred_region
      %s177 = ssub.s32 %s10, 1
      %p178 = scmp.lt.s32.totalorder %s15, 1
      %s179 = scalar_select %p178, %s15, 1
      %s180 = smul.addr %s179, 32
      %s181 = smul.addr %s180, 8
      %s182 = scalar_lea.vmem %s0, %s181
      %p183 = pneg %p36
      %p184 = pneg %p33
      %p185 = scmp.lt.s32.totalorder %s15, 1
      %s186 = scalar_select %p185, %s15, 1
      %s187 = smul.addr %s186, 32
      %s188 = smul.addr %s187, 8
      %s189 = scalar_lea.vmem %s1, %s188
      %p190 = pneg %p62
      %p191 = pneg %p59
      %p192 = pneg %p83
      %p193 = pneg %p80
      %p194 = pneg %p104
      %p195 = pneg %p101
      %p196 = pneg %p130
      %p197 = pneg %p127
      %p198 = scmp.lt.s32.totalorder %s15, 1
      %s199 = scalar_select %p198, %s15, 1
      %s200 = smul.addr %s199, 32
      %s201 = smul.addr %s200, 8
      %s202 = scalar_lea.vmem %s4, %s201
      %p203 = scmp.lt.s32.totalorder %s15, 1
      %s204 = scalar_select %p203, %s15, 1
      %s205 = smul.addr %s204, 32
      %s206 = smul.addr %s205, 8
      %s207 = scalar_lea.vmem %s0, %s206
      %p208 = scmp.lt.s32.totalorder %s15, 1
      %s209 = scalar_select %p208, %s15, 1
      %s210 = smul.addr %s209, 32
      %s211 = smul.addr %s210, 8
      %s212 = scalar_lea.vmem %s1, %s211
      %p213 = scmp.lt.s32.totalorder %s15, 1
      %s214 = scalar_select %p213, %s15, 1
      %s215 = smul.addr %s214, 32
      %s216 = smul.addr %s215, 8
      %s217 = scalar_lea.vmem %s4, %s216
      %v218 = vld [vmem:[%s207] sm:$0xff]
      %v219 = vld [vmem:[%s207 + $0x8] sm:$0xff]
      %v220 = vld [vmem:[%s207 + $0x10] sm:$0xff]
      %v221 = vld [vmem:[%s207 + $0x18] sm:$0xff]
      %v222 = vld [vmem:[%s207 + $0x20] sm:$0xff]
      %v223 = vld [vmem:[%s207 + $0x28] sm:$0xff]
      %v224 = vld [vmem:[%s207 + $0x30] sm:$0xff]
      %v225 = vld [vmem:[%s207 + $0x38] sm:$0xff]
      %v226 = vld [vmem:[%s207 + $0x40] sm:$0xff]
      %v227 = vld [vmem:[%s207 + $0x48] sm:$0xff]
      %v228 = vld [vmem:[%s207 + $0x50] sm:$0xff]
      %v229 = vld [vmem:[%s207 + $0x58] sm:$0xff]
      %v230 = vld [vmem:[%s207 + $0x60] sm:$0xff]
      %v231 = vld [vmem:[%s207 + $0x68] sm:$0xff]
      %v232 = vld [vmem:[%s207 + $0x70] sm:$0xff]
      %v233 = vld [vmem:[%s207 + $0x78] sm:$0xff]
      %v234 = vld [vmem:[%s207 + $0x80] sm:$0xff]
      %v235 = vld [vmem:[%s207 + $0x88] sm:$0xff]
      %v236 = vld [vmem:[%s207 + $0x90] sm:$0xff]
      %v237 = vld [vmem:[%s207 + $0x98] sm:$0xff]
      %v238 = vld [vmem:[%s207 + $0xa0] sm:$0xff]
      %v239 = vld [vmem:[%s207 + $0xa8] sm:$0xff]
      %v240 = vld [vmem:[%s207 + $0xb0] sm:$0xff]
      %v241 = vld [vmem:[%s207 + $0xb8] sm:$0xff]
      %v242 = vld [vmem:[%s207 + $0xc0] sm:$0xff]
      %v243 = vld [vmem:[%s207 + $0xc8] sm:$0xff]
      %v244 = vld [vmem:[%s207 + $0xd0] sm:$0xff]
      %v245 = vld [vmem:[%s207 + $0xd8] sm:$0xff]
      %v246 = vld [vmem:[%s207 + $0xe0] sm:$0xff]
      %v247 = vld [vmem:[%s207 + $0xe8] sm:$0xff]
      %v248 = vld [vmem:[%s207 + $0xf0] sm:$0xff]
      %v249 = vld [vmem:[%s207 + $0xf8] sm:$0xff]
      %v250 = vld [vmem:[%s2] sm:$0x1]
      %v252 = vlaneseq
      %v253 = vshrl.u32 %v252, 7
      %v254 = vsub.s32 0, %v253
      %v255 = vrot.slane %v250, %v254
      %v257 = vmul.f32 %v218, %v255
      %v258 = vmul.f32 %v219, %v255
      %v259 = vmul.f32 %v220, %v255
      %v260 = vmul.f32 %v221, %v255
      %v261 = vmul.f32 %v222, %v255
      %v262 = vmul.f32 %v223, %v255
      %v263 = vmul.f32 %v224, %v255
      %v264 = vmul.f32 %v225, %v255
      %v265 = vmul.f32 %v226, %v255
      %v266 = vmul.f32 %v227, %v255
      %v267 = vmul.f32 %v228, %v255
      %v268 = vmul.f32 %v229, %v255
      %v269 = vmul.f32 %v230, %v255
      %v270 = vmul.f32 %v231, %v255
      %v271 = vmul.f32 %v232, %v255
      %v272 = vmul.f32 %v233, %v255
      %v273 = vmul.f32 %v234, %v255
      %v274 = vmul.f32 %v235, %v255
      %v275 = vmul.f32 %v236, %v255
      %v276 = vmul.f32 %v237, %v255
      %v277 = vmul.f32 %v238, %v255
      %v278 = vmul.f32 %v239, %v255
      %v279 = vmul.f32 %v240, %v255
      %v280 = vmul.f32 %v241, %v255
      %v281 = vmul.f32 %v242, %v255
      %v282 = vmul.f32 %v243, %v255
      %v283 = vmul.f32 %v244, %v255
      %v284 = vmul.f32 %v245, %v255
      %v285 = vmul.f32 %v246, %v255
      %v286 = vmul.f32 %v247, %v255
      %v287 = vmul.f32 %v248, %v255
      %v288 = vmul.f32 %v249, %v255
      %v289 = vld [vmem:[%s3] sm:$0x1]
      %v291 = vlaneseq
      %v292 = vshrl.u32 %v291, 7
      %v293 = vsub.s32 0, %v292
      %v294 = vrot.slane %v289, %v293
      %v296 = vadd.f32 %v257, %v294
      %v297 = vadd.f32 %v258, %v294
      %v298 = vadd.f32 %v259, %v294
      %v299 = vadd.f32 %v260, %v294
      %v300 = vadd.f32 %v261, %v294
      %v301 = vadd.f32 %v262, %v294
      %v302 = vadd.f32 %v263, %v294
      %v303 = vadd.f32 %v264, %v294
      %v304 = vadd.f32 %v265, %v294
      %v305 = vadd.f32 %v266, %v294
      %v306 = vadd.f32 %v267, %v294
      %v307 = vadd.f32 %v268, %v294
      %v308 = vadd.f32 %v269, %v294
      %v309 = vadd.f32 %v270, %v294
      %v310 = vadd.f32 %v271, %v294
      %v311 = vadd.f32 %v272, %v294
      %v312 = vadd.f32 %v273, %v294
      %v313 = vadd.f32 %v274, %v294
      %v314 = vadd.f32 %v275, %v294
      %v315 = vadd.f32 %v276, %v294
      %v316 = vadd.f32 %v277, %v294
      %v317 = vadd.f32 %v278, %v294
      %v318 = vadd.f32 %v279, %v294
      %v319 = vadd.f32 %v280, %v294
      %v320 = vadd.f32 %v281, %v294
      %v321 = vadd.f32 %v282, %v294
      %v322 = vadd.f32 %v283, %v294
      %v323 = vadd.f32 %v284, %v294
      %v324 = vadd.f32 %v285, %v294
      %v325 = vadd.f32 %v286, %v294
      %v326 = vadd.f32 %v287, %v294
      %v327 = vadd.f32 %v288, %v294
      %v328 = vld [vmem:[%s212] sm:$0xff]
      %v329 = vld [vmem:[%s212 + $0x8] sm:$0xff]
      %v330 = vld [vmem:[%s212 + $0x10] sm:$0xff]
      %v331 = vld [vmem:[%s212 + $0x18] sm:$0xff]
      %v332 = vld [vmem:[%s212 + $0x20] sm:$0xff]
      %v333 = vld [vmem:[%s212 + $0x28] sm:$0xff]
      %v334 = vld [vmem:[%s212 + $0x30] sm:$0xff]
      %v335 = vld [vmem:[%s212 + $0x38] sm:$0xff]
      %v336 = vld [vmem:[%s212 + $0x40] sm:$0xff]
      %v337 = vld [vmem:[%s212 + $0x48] sm:$0xff]
      %v338 = vld [vmem:[%s212 + $0x50] sm:$0xff]
      %v339 = vld [vmem:[%s212 + $0x58] sm:$0xff]
      %v340 = vld [vmem:[%s212 + $0x60] sm:$0xff]
      %v341 = vld [vmem:[%s212 + $0x68] sm:$0xff]
      %v342 = vld [vmem:[%s212 + $0x70] sm:$0xff]
      %v343 = vld [vmem:[%s212 + $0x78] sm:$0xff]
      %v344 = vld [vmem:[%s212 + $0x80] sm:$0xff]
      %v345 = vld [vmem:[%s212 + $0x88] sm:$0xff]
      %v346 = vld [vmem:[%s212 + $0x90] sm:$0xff]
      %v347 = vld [vmem:[%s212 + $0x98] sm:$0xff]
      %v348 = vld [vmem:[%s212 + $0xa0] sm:$0xff]
      %v349 = vld [vmem:[%s212 + $0xa8] sm:$0xff]
      %v350 = vld [vmem:[%s212 + $0xb0] sm:$0xff]
      %v351 = vld [vmem:[%s212 + $0xb8] sm:$0xff]
      %v352 = vld [vmem:[%s212 + $0xc0] sm:$0xff]
      %v353 = vld [vmem:[%s212 + $0xc8] sm:$0xff]
      %v354 = vld [vmem:[%s212 + $0xd0] sm:$0xff]
      %v355 = vld [vmem:[%s212 + $0xd8] sm:$0xff]
      %v356 = vld [vmem:[%s212 + $0xe0] sm:$0xff]
      %v357 = vld [vmem:[%s212 + $0xe8] sm:$0xff]
      %v358 = vld [vmem:[%s212 + $0xf0] sm:$0xff]
      %v359 = vld [vmem:[%s212 + $0xf8] sm:$0xff]
      %v360 = vadd.f32 %v296, %v328
      %v361 = vadd.f32 %v297, %v329
      %v362 = vadd.f32 %v298, %v330
      %v363 = vadd.f32 %v299, %v331
      %v364 = vadd.f32 %v300, %v332
      %v365 = vadd.f32 %v301, %v333
      %v366 = vadd.f32 %v302, %v334
      %v367 = vadd.f32 %v303, %v335
      %v368 = vadd.f32 %v304, %v336
      %v369 = vadd.f32 %v305, %v337
      %v370 = vadd.f32 %v306, %v338
      %v371 = vadd.f32 %v307, %v339
      %v372 = vadd.f32 %v308, %v340
      %v373 = vadd.f32 %v309, %v341
      %v374 = vadd.f32 %v310, %v342
      %v375 = vadd.f32 %v311, %v343
      %v376 = vadd.f32 %v312, %v344
      %v377 = vadd.f32 %v313, %v345
      %v378 = vadd.f32 %v314, %v346
      %v379 = vadd.f32 %v315, %v347
      %v380 = vadd.f32 %v316, %v348
      %v381 = vadd.f32 %v317, %v349
      %v382 = vadd.f32 %v318, %v350
      %v383 = vadd.f32 %v319, %v351
      %v384 = vadd.f32 %v320, %v352
      %v385 = vadd.f32 %v321, %v353
      %v386 = vadd.f32 %v322, %v354
      %v387 = vadd.f32 %v323, %v355
      %v388 = vadd.f32 %v324, %v356
      %v389 = vadd.f32 %v325, %v357
      %v390 = vadd.f32 %v326, %v358
      %v391 = vadd.f32 %v327, %v359
      %v392 = vmax.f32 %v360, 0.0
      %v393 = vmax.f32 %v361, 0.0
      %v394 = vmax.f32 %v362, 0.0
      %v395 = vmax.f32 %v363, 0.0
      %v396 = vmax.f32 %v364, 0.0
      %v397 = vmax.f32 %v365, 0.0
      %v398 = vmax.f32 %v366, 0.0
      %v399 = vmax.f32 %v367, 0.0
      %v400 = vmax.f32 %v368, 0.0
      %v401 = vmax.f32 %v369, 0.0
      %v402 = vmax.f32 %v370, 0.0
      %v403 = vmax.f32 %v371, 0.0
      %v404 = vmax.f32 %v372, 0.0
      %v405 = vmax.f32 %v373, 0.0
      %v406 = vmax.f32 %v374, 0.0
      %v407 = vmax.f32 %v375, 0.0
      %v408 = vmax.f32 %v376, 0.0
      %v409 = vmax.f32 %v377, 0.0
      %v410 = vmax.f32 %v378, 0.0
      %v411 = vmax.f32 %v379, 0.0
      %v412 = vmax.f32 %v380, 0.0
      %v413 = vmax.f32 %v381, 0.0
      %v414 = vmax.f32 %v382, 0.0
      %v415 = vmax.f32 %v383, 0.0
      %v416 = vmax.f32 %v384, 0.0
      %v417 = vmax.f32 %v385, 0.0
      %v418 = vmax.f32 %v386, 0.0
      %v419 = vmax.f32 %v387, 0.0
      %v420 = vmax.f32 %v388, 0.0
      %v421 = vmax.f32 %v389, 0.0
      %v422 = vmax.f32 %v390, 0.0
      %v423 = vmax.f32 %v391, 0.0
      %424 = vst [vmem:[%s217] sm:$0xff] %v392
      %425 = vst [vmem:[%s217 + $0x8] sm:$0xff] %v393
      %426 = vst [vmem:[%s217 + $0x10] sm:$0xff] %v394
      %427 = vst [vmem:[%s217 + $0x18] sm:$0xff] %v395
      %428 = vst [vmem:[%s217 + $0x20] sm:$0xff] %v396
      %429 = vst [vmem:[%s217 + $0x28] sm:$0xff] %v397
      %430 = vst [vmem:[%s217 + $0x30] sm:$0xff] %v398
      %431 = vst [vmem:[%s217 + $0x38] sm:$0xff] %v399
      %432 = vst [vmem:[%s217 + $0x40] sm:$0xff] %v400
      %433 = vst [vmem:[%s217 + $0x48] sm:$0xff] %v401
      %434 = vst [vmem:[%s217 + $0x50] sm:$0xff] %v402
      %435 = vst [vmem:[%s217 + $0x58] sm:$0xff] %v403
      %436 = vst [vmem:[%s217 + $0x60] sm:$0xff] %v404
      %437 = vst [vmem:[%s217 + $0x68] sm:$0xff] %v405
      %438 = vst [vmem:[%s217 + $0x70] sm:$0xff] %v406
      %439 = vst [vmem:[%s217 + $0x78] sm:$0xff] %v407
      %440 = vst [vmem:[%s217 + $0x80] sm:$0xff] %v408
      %441 = vst [vmem:[%s217 + $0x88] sm:$0xff] %v409
      %442 = vst [vmem:[%s217 + $0x90] sm:$0xff] %v410
      %443 = vst [vmem:[%s217 + $0x98] sm:$0xff] %v411
      %444 = vst [vmem:[%s217 + $0xa0] sm:$0xff] %v412
      %445 = vst [vmem:[%s217 + $0xa8] sm:$0xff] %v413
      %446 = vst [vmem:[%s217 + $0xb0] sm:$0xff] %v414
      %447 = vst [vmem:[%s217 + $0xb8] sm:$0xff] %v415
      %448 = vst [vmem:[%s217 + $0xc0] sm:$0xff] %v416
      %449 = vst [vmem:[%s217 + $0xc8] sm:$0xff] %v417
      %450 = vst [vmem:[%s217 + $0xd0] sm:$0xff] %v418
      %451 = vst [vmem:[%s217 + $0xd8] sm:$0xff] %v419
      %452 = vst [vmem:[%s217 + $0xe0] sm:$0xff] %v420
      %453 = vst [vmem:[%s217 + $0xe8] sm:$0xff] %v421
      %454 = vst [vmem:[%s217 + $0xf0] sm:$0xff] %v422
      %455 = vst [vmem:[%s217 + $0xf8] sm:$0xff] %v423
      %p456 = scmp.lt.s32.totalorder %s15, 1
      %s457 = scalar_select %p456, %s15, 1
      %s458 = smul.addr %s457, 32
      %s459 = smul.addr %s458, 8
      %s460 = scalar_lea.vmem %s4, %s459
      // Predicated region
      $region37: #{basic_block_pallas.5} parent=35 // pred_check
        %p461 = pneg %p127
      $region38: #{basic_block_pallas.5} parent=35 // pred_check_branch
        %463 = sbr.rel (%p461) target = $region40
      $region39: #{basic_block_pallas.5} parent=35 // pred_region
        _
      $region40: #{basic_block_pallas.5} parent=35 // pred_fallthru
        _
    $region36: #{basic_block_pallas.5} parent=5 // pred_fallthru
      _
    %p464 = scmp.le.s32.totalorder 2, %s10
    // Predicated region
    $region41: #{basic_block_pallas.5} parent=5 // pred_check
      %p465 = pneg %p464
    $region42: #{basic_block_pallas.5} parent=5 // pred_check_branch
      %467 = sbr.rel (%p465) target = $region44
    $region43: #{basic_block_pallas.5} parent=5 // pred_region
      %s468 = ssub.s32 %s10, 2
      // Predicated region
      $region45: #{basic_block_pallas.5} parent=43 // pred_check
        %p469 = pneg %p133
      $region46: #{basic_block_pallas.5} parent=43 // pred_check_branch
        %471 = sbr.rel (%p469) target = $region48
      $region47: #{basic_block_pallas.5} parent=43 // pred_region
        %p472 = scmp.lt.s32.totalorder %s16, 1
        %s473 = scalar_select %p472, %s16, 1
        %s474 = smul.addr %s473, 32
        %s475 = smul.addr %s474, 8
        %s476 = scalar_lea.vmem %s4, %s475
      $region48: #{basic_block_pallas.5} parent=43 // pred_fallthru
        _
    $region44: #{basic_block_pallas.5} parent=5 // pred_fallthru
      _
  $region6: #{basic_block_pallas.5} parent=0 // loop_footer
    %s14 = sadd.s32 1, %s10
  $region7: #{basic_block_pallas.5} parent=0 // loop_footer_branch
    %9 = sbr.rel target = $region3
  $region8: #{basic_block_pallas.5} parent=0 // loop_exit
    _

// kernel: basic_block_pallas.3
$region0: #{basic_block_pallas.3}
  #allocation0 [shape = 'u32[]', space=smem, size = 0x4, offset = 0x4, fixed_abs, tag = 'smem constant byte address 0x4 - core index']
  #allocation1 [shape = 'u32[144,128]{1,0:T(1,128)}', space=vmem, size = 0x12000, scoped, tag = 'internal scratch']
  %s0 = inlined_call_operand.vmem [shape: f32[2,18,18,128], index: 0, kind: input, shape index: {}]
  %s1 = inlined_call_operand.vmem [shape: f32[3,384,128], index: 1, kind: input, shape index: {}]
  %s2 = inlined_call_operand.vmem [shape: f32[2,16,16,128], index: 2, kind: output, shape index: {0}]
  %s3 = inlined_call_operand.vmem [shape: f32[2,2,128], index: 3, kind: output, shape index: {1}]
  %4 = xla_tuple %s2, %s3
  %s5 = sld [smem:[#allocation0]]
  $region49: #{basic_block_pallas.3} parent=0
    _
  %s7 = ssub.s32 1, %s5
  %s8 = scalar_select 0, %s7, %s5
  loop: start=0, step=1, limit=4
  $region2: #{basic_block_pallas.3} parent=0 // loop_pre_header
    _
  $region3: #{basic_block_pallas.3} parent=0 // loop_header
    %s10 = sphi 0, %s14
    %p11 = scmp.ge.s32.totalorder %s10, 4
    %s20 = sphi 0, %s22
    %s23 = sphi 0, %s20
    %s24 = sphi 0, %s23
    %s40 = sphi 0, %s24
    %s44 = sphi 0, %s44
    %s46 = sphi 0, %s44
    %s47 = sphi 0, %s46
    %s61 = sphi 0, %s47
    %s67 = sphi 0, %s69
    %s70 = sphi 0, %s67
    %s71 = sphi 0, %s70
    %s87 = sphi 0, %s71
    %s93 = sphi 0, %s95
    %s96 = sphi 0, %s93
    %s97 = sphi 0, %s96
    %s113 = sphi 0, %s97
  $region4: #{basic_block_pallas.3} parent=0 // loop_header_branch
    %13 = sbr.rel (%p11) target = $region8
  $region5: #{basic_block_pallas.3} parent=0 // loop_body
    %s15 = ssub.s32 %s10, 1
    %s16 = ssub.s32 %s10, 2
    %s17 = sadd.s32 %s10, 1
    %s18 = ssub.s32 %s10, %s17
    %p19 = scmp.eq.s32.totalorder %s18, 0
    %s21 = sadd.s32 %s20, 1
    %s22 = scalar_select %p19, %s20, %s21
    %p25 = pneg %p19
    %p26 = scmp.eq.s32.totalorder %s10, 1
    %p27 = por %p25, %p26
    %p28 = scmp.ne.s32.totalorder %s20, %s23
    %p29 = scmp.eq.s32.totalorder %s10, 0
    %p30 = por %p28, %p29
    %p31 = scmp.ne.s32.totalorder %s20, %s23
    %p32 = scmp.eq.s32.totalorder %s15, 1
    %p33 = por %p31, %p32
    %p34 = scmp.ne.s32.totalorder %s23, %s24
    %p35 = scmp.eq.s32.totalorder %s15, 0
    %p36 = por %p34, %p35
    %p37 = scmp.ne.s32.totalorder %s23, %s24
    %p38 = scmp.eq.s32.totalorder %s16, 1
    %p39 = por %p37, %p38
    %p41 = scmp.ne.s32.totalorder %s24, %s40
    %p42 = scmp.eq.s32.totalorder %s16, 0
    %p43 = por %p41, %p42
    %s45 = sadd.s32 %s44, 1
    %p48 = scmp.eq.s32.totalorder %s10, 1
    %p49 = scmp.ne.s32.totalorder %s44, %s46
    %p50 = scmp.eq.s32.totalorder %s10, 0
    %p51 = por %p49, %p50
    %p52 = scmp.ne.s32.totalorder %s44, %s46
    %p53 = scmp.eq.s32.totalorder %s15, 1
    %p54 = por %p52, %p53
    %p55 = scmp.ne.s32.totalorder %s46, %s47
    %p56 = scmp.eq.s32.totalorder %s15, 0
    %p57 = por %p55, %p56
    %p58 = scmp.ne.s32.totalorder %s46, %s47
    %p59 = scmp.eq.s32.totalorder %s16, 1
    %p60 = por %p58, %p59
    %p62 = scmp.ne.s32.totalorder %s47, %s61
    %p63 = scmp.eq.s32.totalorder %s16, 0
    %p64 = por %p62, %p63
    %s65 = ssub.s32 %s10, %s17
    %p66 = scmp.eq.s32.totalorder %s65, 0
    %s68 = sadd.s32 %s67, 1
    %s69 = scalar_select %p66, %s67, %s68
    %p72 = pneg %p66
    %p73 = scmp.eq.s32.totalorder %s10, 1
    %p74 = por %p72, %p73
    %p75 = scmp.ne.s32.totalorder %s67, %s70
    %p76 = scmp.eq.s32.totalorder %s10, 0
    %p77 = por %p75, %p76
    %p78 = scmp.ne.s32.totalorder %s67, %s70
    %p79 = scmp.eq.s32.totalorder %s15, 1
    %p80 = por %p78, %p79
    %p81 = scmp.ne.s32.totalorder %s70, %s71
    %p82 = scmp.eq.s32.totalorder %s15, 0
    %p83 = por %p81, %p82
    %p84 = scmp.ne.s32.totalorder %s70, %s71
    %p85 = scmp.eq.s32.totalorder %s16, 1
    %p86 = por %p84, %p85
    %p88 = scmp.ne.s32.totalorder %s71, %s87
    %p89 = scmp.eq.s32.totalorder %s16, 0
    %p90 = por %p88, %p89
    %s91 = ssub.s32 %s10, %s17
    %p92 = scmp.eq.s32.totalorder %s91, 0
    %s94 = sadd.s32 %s93, 1
    %s95 = scalar_select %p92, %s93, %s94
    %p98 = pneg %p92
    %p99 = scmp.eq.s32.totalorder %s10, 1
    %p100 = por %p98, %p99
    %p101 = scmp.ne.s32.totalorder %s93, %s96
    %p102 = scmp.eq.s32.totalorder %s10, 0
    %p103 = por %p101, %p102
    %p104 = scmp.ne.s32.totalorder %s93, %s96
    %p105 = scmp.eq.s32.totalorder %s15, 1
    %p106 = por %p104, %p105
    %p107 = scmp.ne.s32.totalorder %s96, %s97
    %p108 = scmp.eq.s32.totalorder %s15, 0
    %p109 = por %p107, %p108
    %p110 = scmp.ne.s32.totalorder %s96, %s97
    %p111 = scmp.eq.s32.totalorder %s16, 1
    %p112 = por %p110, %p111
    %p114 = scmp.ne.s32.totalorder %s97, %s113
    %p115 = scmp.eq.s32.totalorder %s16, 0
    %p116 = por %p114, %p115
    %p117 = scmp.le.s32.totalorder 1, %s10
    %p118 = scmp.lt.s32.totalorder %s10, 3
    %p119 = pnand %p117, %p118
    %p120 = pneg %p119
    // Predicated region
    $region9: #{basic_block_pallas.3} parent=5 // pred_check
      _
    $region10: #{basic_block_pallas.3} parent=5 // pred_check_branch
      %122 = sbr.rel (%p119) target = $region12
    $region11: #{basic_block_pallas.3} parent=5 // pred_region
      %s123 = ssub.s32 %s10, 1
      // Predicated region
      $region13: #{basic_block_pallas.3} parent=11 // pred_check
        %p124 = pneg %p57
      $region14: #{basic_block_pallas.3} parent=11 // pred_check_branch
        %126 = sbr.rel (%p124) target = $region16
      $region15: #{basic_block_pallas.3} parent=11 // pred_region
        _
      $region16: #{basic_block_pallas.3} parent=11 // pred_fallthru
        _
    $region12: #{basic_block_pallas.3} parent=5 // pred_fallthru
      _
    %p127 = scmp.lt.s32.totalorder %s10, 2
    // Predicated region
    $region17: #{basic_block_pallas.3} parent=5 // pred_check
      %p128 = pneg %p127
    $region18: #{basic_block_pallas.3} parent=5 // pred_check_branch
      %130 = sbr.rel (%p128) target = $region20
    $region19: #{basic_block_pallas.3} parent=5 // pred_region
      // Predicated region
      $region21: #{basic_block_pallas.3} parent=19 // pred_check
        %p131 = pneg %p30
      $region22: #{basic_block_pallas.3} parent=19 // pred_check_branch
        %133 = sbr.rel (%p131) target = $region24
      $region23: #{basic_block_pallas.3} parent=19 // pred_region
        %p134 = scmp.lt.s32.totalorder %s10, 1
        %s135 = scalar_select %p134, %s10, 1
        %s136 = smul.addr %s135, 54
        %s137 = smul.addr %s136, 8
        %s138 = scalar_lea.vmem %s0, %s137
      $region24: #{basic_block_pallas.3} parent=19 // pred_fallthru
        _
    $region20: #{basic_block_pallas.3} parent=5 // pred_fallthru
      _
    %p139 = scmp.le.s32.totalorder 1, %s10
    %p140 = scmp.lt.s32.totalorder %s10, 3
    %p141 = pnand %p139, %p140
    %p142 = pneg %p141
    // Predicated region
    $region25: #{basic_block_pallas.3} parent=5 // pred_check
      _
    $region26: #{basic_block_pallas.3} parent=5 // pred_check_branch
      %144 = sbr.rel (%p141) target = $region28
    $region27: #{basic_block_pallas.3} parent=5 // pred_region
      %s145 = ssub.s32 %s10, 1
      %p146 = scmp.lt.s32.totalorder %s15, 1
      %s147 = scalar_select %p146, %s15, 1
      %s148 = smul.addr %s147, 54
      %s149 = smul.addr %s148, 8
      %s150 = scalar_lea.vmem %s0, %s149
      %p151 = pneg %p36
      %p152 = pneg %p33
      %p153 = pneg %p57
      %p154 = pneg %p54
      %p155 = pneg %p83
      %p156 = pneg %p80
      %p157 = scmp.lt.s32.totalorder %s15, 1
      %s158 = scalar_select %p157, %s15, 1
      %s159 = smul.addr %s158, 32
      %s160 = smul.addr %s159, 8
      %s161 = scalar_lea.vmem %s2, %s160
      %p162 = pneg %p109
      %p163 = pneg %p106
      %p164 = scmp.lt.s32.totalorder %s15, 1
      %s165 = scalar_select %p164, %s15, 1
      %s166 = smul.addr %s165, 2
      %s167 = scalar_lea.vmem %s3, %s166
      %p168 = scmp.lt.s32.totalorder %s15, 1
      %s169 = scalar_select %p168, %s15, 1
      %s170 = smul.addr %s169, 54
      %s171 = smul.addr %s170, 8
      %s172 = scalar_lea.vmem %s0, %s171
      %p173 = scmp.lt.s32.totalorder %s15, 1
      %s174 = scalar_select %p173, %s15, 1
      %s175 = smul.addr %s174, 32
      %s176 = smul.addr %s175, 8
      %s177 = scalar_lea.vmem %s2, %s176
      %p178 = scmp.lt.s32.totalorder %s15, 1
      %s179 = scalar_select %p178, %s15, 1
      %s180 = smul.addr %s179, 2
      %s181 = scalar_lea.vmem %s3, %s180
      %v182 = vld [vmem:[%s172] sm:$0xff]
      %v183 = vld [vmem:[%s172 + $0x8] sm:$0xff]
      %v184 = vld [vmem:[%s172 + $0x10] sm:$0x3]
      %v185 = vld [vmem:[%s172 + $0x18] sm:$0xff]
      %v186 = vld [vmem:[%s172 + $0x20] sm:$0xff]
      %v187 = vld [vmem:[%s172 + $0x28] sm:$0x3]
      %v188 = vld [vmem:[%s172 + $0x30] sm:$0xff]
      %v189 = vld [vmem:[%s172 + $0x38] sm:$0xff]
      %v190 = vld [vmem:[%s172 + $0x40] sm:$0x3]
      %v191 = vld [vmem:[%s172 + $0x48] sm:$0xff]
      %v192 = vld [vmem:[%s172 + $0x50] sm:$0xff]
      %v193 = vld [vmem:[%s172 + $0x58] sm:$0x3]
      %v194 = vld [vmem:[%s172 + $0x60] sm:$0xff]
      %v195 = vld [vmem:[%s172 + $0x68] sm:$0xff]
      %v196 = vld [vmem:[%s172 + $0x70] sm:$0x3]
      %v197 = vld [vmem:[%s172 + $0x78] sm:$0xff]
      %v198 = vld [vmem:[%s172 + $0x80] sm:$0xff]
      %v199 = vld [vmem:[%s172 + $0x88] sm:$0x3]
      %v200 = vld [vmem:[%s172 + $0x90] sm:$0xff]
      %v201 = vld [vmem:[%s172 + $0x98] sm:$0xff]
      %v202 = vld [vmem:[%s172 + $0xa0] sm:$0x3]
      %v203 = vld [vmem:[%s172 + $0xa8] sm:$0xff]
      %v204 = vld [vmem:[%s172 + $0xb0] sm:$0xff]
      %v205 = vld [vmem:[%s172 + $0xb8] sm:$0x3]
      %v206 = vld [vmem:[%s172 + $0xc0] sm:$0xff]
      %v207 = vld [vmem:[%s172 + $0xc8] sm:$0xff]
      %v208 = vld [vmem:[%s172 + $0xd0] sm:$0x3]
      %v209 = vld [vmem:[%s172 + $0xd8] sm:$0xff]
      %v210 = vld [vmem:[%s172 + $0xe0] sm:$0xff]
      %v211 = vld [vmem:[%s172 + $0xe8] sm:$0x3]
      %v212 = vld [vmem:[%s172 + $0xf0] sm:$0xff]
      %v213 = vld [vmem:[%s172 + $0xf8] sm:$0xff]
      %v214 = vld [vmem:[%s172 + $0x100] sm:$0x3]
      %v215 = vld [vmem:[%s172 + $0x108] sm:$0xff]
      %v216 = vld [vmem:[%s172 + $0x110] sm:$0xff]
      %v217 = vld [vmem:[%s172 + $0x118] sm:$0x3]
      %v218 = vld [vmem:[%s172 + $0x120] sm:$0xff]
      %v219 = vld [vmem:[%s172 + $0x128] sm:$0xff]
      %v220 = vld [vmem:[%s172 + $0x130] sm:$0x3]
      %v221 = vld [vmem:[%s172 + $0x138] sm:$0xff]
      %v222 = vld [vmem:[%s172 + $0x140] sm:$0xff]
      %v223 = vld [vmem:[%s172 + $0x148] sm:$0x3]
      %v224 = vld [vmem:[%s172 + $0x150] sm:$0xff]
      %v225 = vld [vmem:[%s172 + $0x158] sm:$0xff]
      %v226 = vld [vmem:[%s172 + $0x160] sm:$0x3]
      %v227 = vld [vmem:[%s172 + $0x168] sm:$0xff]
      %v228 = vld [vmem:[%s172 + $0x170] sm:$0xff]
      %v229 = vld [vmem:[%s172 + $0x178] sm:$0x3]
      %vm278 = vcmask 1046528
      %v279 = vrot.slane %v182, 1
      %v280 = vrot.slane %v183, 1
      %v281 = vsel %vm278, %v279, %v280
      %v282 = vrot.slane %v184, 1
      %v283 = vsel %vm278, %v280, %v282
      %v284 = vrot.slane %v185, 1
      %v285 = vrot.slane %v186, 1
      %v286 = vsel %vm278, %v284, %v285
      %v287 = vrot.slane %v187, 1
      %v288 = vsel %vm278, %v285, %v287
      %v289 = vrot.slane %v188, 1
      %v290 = vrot.slane %v189, 1
      %v291 = vsel %vm278, %v289, %v290
      %v292 = vrot.slane %v190, 1
      %v293 = vsel %vm278, %v290, %v292
      %v294 = vrot.slane %v191, 1
      %v295 = vrot.slane %v192, 1
      %v296 = vsel %vm278, %v294, %v295
      %v297 = vrot.slane %v193, 1
      %v298 = vsel %vm278, %v295, %v297
      %v299 = vrot.slane %v194, 1
      %v300 = vrot.slane %v195, 1
      %v301 = vsel %vm278, %v299, %v300
      %v302 = vrot.slane %v196, 1
      %v303 = vsel %vm278, %v300, %v302
      %v304 = vrot.slane %v197, 1
      %v305 = vrot.slane %v198, 1
      %v306 = vsel %vm278, %v304, %v305
      %v307 = vrot.slane %v199, 1
      %v308 = vsel %vm278, %v305, %v307
      %v309 = vrot.slane %v200, 1
      %v310 = vrot.slane %v201, 1
      %v311 = vsel %vm278, %v309, %v310
      %v312 = vrot.slane %v202, 1
      %v313 = vsel %vm278, %v310, %v312
      %v314 = vrot.slane %v203, 1
      %v315 = vrot.slane %v204, 1
      %v316 = vsel %vm278, %v314, %v315
      %v317 = vrot.slane %v205, 1
      %v318 = vsel %vm278, %v315, %v317
      %v319 = vrot.slane %v206, 1
      %v320 = vrot.slane %v207, 1
      %v321 = vsel %vm278, %v319, %v320
      %v322 = vrot.slane %v208, 1
      %v323 = vsel %vm278, %v320, %v322
      %v324 = vrot.slane %v209, 1
      %v325 = vrot.slane %v210, 1
      %v326 = vsel %vm278, %v324, %v325
      %v327 = vrot.slane %v211, 1
      %v328 = vsel %vm278, %v325, %v327
      %v329 = vrot.slane %v212, 1
      %v330 = vrot.slane %v213, 1
      %v331 = vsel %vm278, %v329, %v330
      %v332 = vrot.slane %v214, 1
      %v333 = vsel %vm278, %v330, %v332
      %v334 = vrot.slane %v215, 1
      %v335 = vrot.slane %v216, 1
      %v336 = vsel %vm278, %v334, %v335
      %v337 = vrot.slane %v217, 1
      %v338 = vsel %vm278, %v335, %v337
      %v339 = vrot.slane %v218, 1
      %v340 = vrot.slane %v219, 1
      %v341 = vsel %vm278, %v339, %v340
      %v342 = vrot.slane %v220, 1
      %v343 = vsel %vm278, %v340, %v342
      %v344 = vrot.slane %v221, 1
      %v345 = vrot.slane %v222, 1
      %v346 = vsel %vm278, %v344, %v345
      %v347 = vrot.slane %v223, 1
      %v348 = vsel %vm278, %v345, %v347
      %v349 = vrot.slane %v224, 1
      %v350 = vrot.slane %v225, 1
      %v351 = vsel %vm278, %v349, %v350
      %v352 = vrot.slane %v226, 1
      %v353 = vsel %vm278, %v350, %v352
      %v354 = vrot.slane %v227, 1
      %v355 = vrot.slane %v228, 1
      %v356 = vsel %vm278, %v354, %v355
      %v357 = vrot.slane %v229, 1
      %v358 = vsel %vm278, %v355, %v357
      %vm391 = vcmask 1045504
      %v392 = vrot.slane %v182, 2
      %v393 = vrot.slane %v183, 2
      %v394 = vsel %vm391, %v392, %v393
      %v395 = vrot.slane %v184, 2
      %v396 = vsel %vm391, %v393, %v395
      %v397 = vrot.slane %v185, 2
      %v398 = vrot.slane %v186, 2
      %v399 = vsel %vm391, %v397, %v398
      %v400 = vrot.slane %v187, 2
      %v401 = vsel %vm391, %v398, %v400
      %v402 = vrot.slane %v188, 2
      %v403 = vrot.slane %v189, 2
      %v404 = vsel %vm391, %v402, %v403
      %v405 = vrot.slane %v190, 2
      %v406 = vsel %vm391, %v403, %v405
      %v407 = vrot.slane %v191, 2
      %v408 = vrot.slane %v192, 2
      %v409 = vsel %vm391, %v407, %v408
      %v410 = vrot.slane %v193, 2
      %v411 = vsel %vm391, %v408, %v410
      %v412 = vrot.slane %v194, 2
      %v413 = vrot.slane %v195, 2
      %v414 = vsel %vm391, %v412, %v413
      %v415 = vrot.slane %v196, 2
      %v416 = vsel %vm391, %v413, %v415
      %v417 = vrot.slane %v197, 2
      %v418 = vrot.slane %v198, 2
      %v419 = vsel %vm391, %v417, %v418
      %v420 = vrot.slane %v199, 2
      %v421 = vsel %vm391, %v418, %v420
      %v422 = vrot.slane %v200, 2
      %v423 = vrot.slane %v201, 2
      %v424 = vsel %vm391, %v422, %v423
      %v425 = vrot.slane %v202, 2
      %v426 = vsel %vm391, %v423, %v425
      %v427 = vrot.slane %v203, 2
      %v428 = vrot.slane %v204, 2
      %v429 = vsel %vm391, %v427, %v428
      %v430 = vrot.slane %v205, 2
      %v431 = vsel %vm391, %v428, %v430
      %v432 = vrot.slane %v206, 2
      %v433 = vrot.slane %v207, 2
      %v434 = vsel %vm391, %v432, %v433
      %v435 = vrot.slane %v208, 2
      %v436 = vsel %vm391, %v433, %v435
      %v437 = vrot.slane %v209, 2
      %v438 = vrot.slane %v210, 2
      %v439 = vsel %vm391, %v437, %v438
      %v440 = vrot.slane %v211, 2
      %v441 = vsel %vm391, %v438, %v440
      %v442 = vrot.slane %v212, 2
      %v443 = vrot.slane %v213, 2
      %v444 = vsel %vm391, %v442, %v443
      %v445 = vrot.slane %v214, 2
      %v446 = vsel %vm391, %v443, %v445
      %v447 = vrot.slane %v215, 2
      %v448 = vrot.slane %v216, 2
      %v449 = vsel %vm391, %v447, %v448
      %v450 = vrot.slane %v217, 2
      %v451 = vsel %vm391, %v448, %v450
      %v452 = vrot.slane %v218, 2
      %v453 = vrot.slane %v219, 2
      %v454 = vsel %vm391, %v452, %v453
      %v455 = vrot.slane %v220, 2
      %v456 = vsel %vm391, %v453, %v455
      %v457 = vrot.slane %v221, 2
      %v458 = vrot.slane %v222, 2
      %v459 = vsel %vm391, %v457, %v458
      %v460 = vrot.slane %v223, 2
      %v461 = vsel %vm391, %v458, %v460
      %v462 = vrot.slane %v224, 2
      %v463 = vrot.slane %v225, 2
      %v464 = vsel %vm391, %v462, %v463
      %v465 = vrot.slane %v226, 2
      %v466 = vsel %vm391, %v463, %v465
      %v467 = vrot.slane %v227, 2
      %v468 = vrot.slane %v228, 2
      %v469 = vsel %vm391, %v467, %v468
      %v470 = vrot.slane %v229, 2
      %v471 = vsel %vm391, %v468, %v470
      %v504 = vld [vmem:[%s1] sm:$0xff]
      %v505 = vld [vmem:[%s1 + $0x8] sm:$0xff]
      %v506 = vld [vmem:[%s1 + $0x10] sm:$0xff]
      %v507 = vld [vmem:[%s1 + $0x18] sm:$0xff]
      %v508 = vld [vmem:[%s1 + $0x20] sm:$0xff]
      %v509 = vld [vmem:[%s1 + $0x28] sm:$0xff]
      %v510 = vld [vmem:[%s1 + $0x30] sm:$0xff]
      %v511 = vld [vmem:[%s1 + $0x38] sm:$0xff]
      %v512 = vld [vmem:[%s1 + $0x40] sm:$0xff]
      %v513 = vld [vmem:[%s1 + $0x48] sm:$0xff]
      %v514 = vld [vmem:[%s1 + $0x50] sm:$0xff]
      %v515 = vld [vmem:[%s1 + $0x58] sm:$0xff]
      %v516 = vld [vmem:[%s1 + $0x60] sm:$0xff]
      %v517 = vld [vmem:[%s1 + $0x68] sm:$0xff]
      %v518 = vld [vmem:[%s1 + $0x70] sm:$0xff]
      %v519 = vld [vmem:[%s1 + $0x78] sm:$0xff]
      %v520 = vld [vmem:[%s1 + $0x80] sm:$0xff]
      %v521 = vld [vmem:[%s1 + $0x88] sm:$0xff]
      %v522 = vld [vmem:[%s1 + $0x90] sm:$0xff]
      %v523 = vld [vmem:[%s1 + $0x98] sm:$0xff]
      %v524 = vld [vmem:[%s1 + $0xa0] sm:$0xff]
      %v525 = vld [vmem:[%s1 + $0xa8] sm:$0xff]
      %v526 = vld [vmem:[%s1 + $0xb0] sm:$0xff]
      %v527 = vld [vmem:[%s1 + $0xb8] sm:$0xff]
      %v528 = vld [vmem:[%s1 + $0xc0] sm:$0xff]
      %v529 = vld [vmem:[%s1 + $0xc8] sm:$0xff]
      %v530 = vld [vmem:[%s1 + $0xd0] sm:$0xff]
      %v531 = vld [vmem:[%s1 + $0xd8] sm:$0xff]
      %v532 = vld [vmem:[%s1 + $0xe0] sm:$0xff]
      %v533 = vld [vmem:[%s1 + $0xe8] sm:$0xff]
      %v534 = vld [vmem:[%s1 + $0xf0] sm:$0xff]
      %v535 = vld [vmem:[%s1 + $0xf8] sm:$0xff]
      %v536 = vld [vmem:[%s1 + $0x100] sm:$0xff]
      %v537 = vld [vmem:[%s1 + $0x108] sm:$0xff]
      %v538 = vld [vmem:[%s1 + $0x110] sm:$0xff]
      %v539 = vld [vmem:[%s1 + $0x118] sm:$0xff]
      %v540 = vld [vmem:[%s1 + $0x120] sm:$0xff]
      %v541 = vld [vmem:[%s1 + $0x128] sm:$0xff]
      %v542 = vld [vmem:[%s1 + $0x130] sm:$0xff]
      %v543 = vld [vmem:[%s1 + $0x138] sm:$0xff]
      %v544 = vld [vmem:[%s1 + $0x140] sm:$0xff]
      %v545 = vld [vmem:[%s1 + $0x148] sm:$0xff]
      %v546 = vld [vmem:[%s1 + $0x150] sm:$0xff]
      %v547 = vld [vmem:[%s1 + $0x158] sm:$0xff]
      %v548 = vld [vmem:[%s1 + $0x160] sm:$0xff]
      %v549 = vld [vmem:[%s1 + $0x168] sm:$0xff]
      %v550 = vld [vmem:[%s1 + $0x170] sm:$0xff]
      %v551 = vld [vmem:[%s1 + $0x178] sm:$0xff]
      %s552 = scalar_lea.vmem %s172, 24
      %v553 = vld [vmem:[%s552] sm:$0xff]
      %v554 = vld [vmem:[%s552 + $0x8] sm:$0xff]
      %v555 = vld [vmem:[%s552 + $0x10] sm:$0x3]
      %v556 = vld [vmem:[%s552 + $0x18] sm:$0xff]
      %v557 = vld [vmem:[%s552 + $0x20] sm:$0xff]
      %v558 = vld [vmem:[%s552 + $0x28] sm:$0x3]
      %v559 = vld [vmem:[%s552 + $0x30] sm:$0xff]
      %v560 = vld [vmem:[%s552 + $0x38] sm:$0xff]
      %v561 = vld [vmem:[%s552 + $0x40] sm:$0x3]
      %v562 = vld [vmem:[%s552 + $0x48] sm:$0xff]
      %v563 = vld [vmem:[%s552 + $0x50] sm:$0xff]
      %v564 = vld [vmem:[%s552 + $0x58] sm:$0x3]
      %v565 = vld [vmem:[%s552 + $0x60] sm:$0xff]
      %v566 = vld [vmem:[%s552 + $0x68] sm:$0xff]
      %v567 = vld [vmem:[%s552 + $0x70] sm:$0x3]
      %v568 = vld [vmem:[%s552 + $0x78] sm:$0xff]
      %v569 = vld [vmem:[%s552 + $0x80] sm:$0xff]
      %v570 = vld [vmem:[%s552 + $0x88] sm:$0x3]
      %v571 = vld [vmem:[%s552 + $0x90] sm:$0xff]
      %v572 = vld [vmem:[%s552 + $0x98] sm:$0xff]
      %v573 = vld [vmem:[%s552 + $0xa0] sm:$0x3]
      %v574 = vld [vmem:[%s552 + $0xa8] sm:$0xff]
      %v575 = vld [vmem:[%s552 + $0xb0] sm:$0xff]
      %v576 = vld [vmem:[%s552 + $0xb8] sm:$0x3]
      %v577 = vld [vmem:[%s552 + $0xc0] sm:$0xff]
      %v578 = vld [vmem:[%s552 + $0xc8] sm:$0xff]
      %v579 = vld [vmem:[%s552 + $0xd0] sm:$0x3]
      %v580 = vld [vmem:[%s552 + $0xd8] sm:$0xff]
      %v581 = vld [vmem:[%s552 + $0xe0] sm:$0xff]
      %v582 = vld [vmem:[%s552 + $0xe8] sm:$0x3]
      %v583 = vld [vmem:[%s552 + $0xf0] sm:$0xff]
      %v584 = vld [vmem:[%s552 + $0xf8] sm:$0xff]
      %v585 = vld [vmem:[%s552 + $0x100] sm:$0x3]
      %v586 = vld [vmem:[%s552 + $0x108] sm:$0xff]
      %v587 = vld [vmem:[%s552 + $0x110] sm:$0xff]
      %v588 = vld [vmem:[%s552 + $0x118] sm:$0x3]
      %v589 = vld [vmem:[%s552 + $0x120] sm:$0xff]
      %v590 = vld [vmem:[%s552 + $0x128] sm:$0xff]
      %v591 = vld [vmem:[%s552 + $0x130] sm:$0x3]
      %v592 = vld [vmem:[%s552 + $0x138] sm:$0xff]
      %v593 = vld [vmem:[%s552 + $0x140] sm:$0xff]
      %v594 = vld [vmem:[%s552 + $0x148] sm:$0x3]
      %v595 = vld [vmem:[%s552 + $0x150] sm:$0xff]
      %v596 = vld [vmem:[%s552 + $0x158] sm:$0xff]
      %v597 = vld [vmem:[%s552 + $0x160] sm:$0x3]
      %v598 = vld [vmem:[%s552 + $0x168] sm:$0xff]
      %v599 = vld [vmem:[%s552 + $0x170] sm:$0xff]
      %v600 = vld [vmem:[%s552 + $0x178] sm:$0x3]
      %v649 = vrot.slane %v553, 1
      %v650 = vrot.slane %v554, 1
      %v651 = vsel %vm278, %v649, %v650
      %v652 = vrot.slane %v555, 1
      %v653 = vsel %vm278, %v650, %v652
      %v654 = vrot.slane %v556, 1
      %v655 = vrot.slane %v557, 1
      %v656 = vsel %vm278, %v654, %v655
      %v657 = vrot.slane %v558, 1
      %v658 = vsel %vm278, %v655, %v657
      %v659 = vrot.slane %v559, 1
      %v660 = vrot.slane %v560, 1
      %v661 = vsel %vm278, %v659, %v660
      %v662 = vrot.slane %v561, 1
      %v663 = vsel %vm278, %v660, %v662
      %v664 = vrot.slane %v562, 1
      %v665 = vrot.slane %v563, 1
      %v666 = vsel %vm278, %v664, %v665
      %v667 = vrot.slane %v564, 1
      %v668 = vsel %vm278, %v665, %v667
      %v669 = vrot.slane %v565, 1
      %v670 = vrot.slane %v566, 1
      %v671 = vsel %vm278, %v669, %v670
      %v672 = vrot.slane %v567, 1
      %v673 = vsel %vm278, %v670, %v672
      %v674 = vrot.slane %v568, 1
      %v675 = vrot.slane %v569, 1
      %v676 = vsel %vm278, %v674, %v675
      %v677 = vrot.slane %v570, 1
      %v678 = vsel %vm278, %v675, %v677
      %v679 = vrot.slane %v571, 1
      %v680 = vrot.slane %v572, 1
      %v681 = vsel %vm278, %v679, %v680
      %v682 = vrot.slane %v573, 1
      %v683 = vsel %vm278, %v680, %v682
      %v684 = vrot.slane %v574, 1
      %v685 = vrot.slane %v575, 1
      %v686 = vsel %vm278, %v684, %v685
      %v687 = vrot.slane %v576, 1
      %v688 = vsel %vm278, %v685, %v687
      %v689 = vrot.slane %v577, 1
      %v690 = vrot.slane %v578, 1
      %v691 = vsel %vm278, %v689, %v690
      %v692 = vrot.slane %v579, 1
      %v693 = vsel %vm278, %v690, %v692
      %v694 = vrot.slane %v580, 1
      %v695 = vrot.slane %v581, 1
      %v696 = vsel %vm278, %v694, %v695
      %v697 = vrot.slane %v582, 1
      %v698 = vsel %vm278, %v695, %v697
      %v699 = vrot.slane %v583, 1
      %v700 = vrot.slane %v584, 1
      %v701 = vsel %vm278, %v699, %v700
      %v702 = vrot.slane %v585, 1
      %v703 = vsel %vm278, %v700, %v702
      %v704 = vrot.slane %v586, 1
      %v705 = vrot.slane %v587, 1
      %v706 = vsel %vm278, %v704, %v705
      %v707 = vrot.slane %v588, 1
      %v708 = vsel %vm278, %v705, %v707
      %v709 = vrot.slane %v589, 1
      %v710 = vrot.slane %v590, 1
      %v711 = vsel %vm278, %v709, %v710
      %v712 = vrot.slane %v591, 1
      %v713 = vsel %vm278, %v710, %v712
      %v714 = vrot.slane %v592, 1
      %v715 = vrot.slane %v593, 1
      %v716 = vsel %vm278, %v714, %v715
      %v717 = vrot.slane %v594, 1
      %v718 = vsel %vm278, %v715, %v717
      %v719 = vrot.slane %v595, 1
      %v720 = vrot.slane %v596, 1
      %v721 = vsel %vm278, %v719, %v720
      %v722 = vrot.slane %v597, 1
      %v723 = vsel %vm278, %v720, %v722
      %v724 = vrot.slane %v598, 1
      %v725 = vrot.slane %v599, 1
      %v726 = vsel %vm278, %v724, %v725
      %v727 = vrot.slane %v600, 1
      %v728 = vsel %vm278, %v725, %v727
      %v761 = vrot.slane %v553, 2
      %v762 = vrot.slane %v554, 2
      %v763 = vsel %vm391, %v761, %v762
      %v764 = vrot.slane %v555, 2
      %v765 = vsel %vm391, %v762, %v764
      %v766 = vrot.slane %v556, 2
      %v767 = vrot.slane %v557, 2
      %v768 = vsel %vm391, %v766, %v767
      %v769 = vrot.slane %v558, 2
      %v770 = vsel %vm391, %v767, %v769
      %v771 = vrot.slane %v559, 2
      %v772 = vrot.slane %v560, 2
      %v773 = vsel %vm391, %v771, %v772
      %v774 = vrot.slane %v561, 2
      %v775 = vsel %vm391, %v772, %v774
      %v776 = vrot.slane %v562, 2
      %v777 = vrot.slane %v563, 2
      %v778 = vsel %vm391, %v776, %v777
      %v779 = vrot.slane %v564, 2
      %v780 = vsel %vm391, %v777, %v779
      %v781 = vrot.slane %v565, 2
      %v782 = vrot.slane %v566, 2
      %v783 = vsel %vm391, %v781, %v782
      %v784 = vrot.slane %v567, 2
      %v785 = vsel %vm391, %v782, %v784
      %v786 = vrot.slane %v568, 2
      %v787 = vrot.slane %v569, 2
      %v788 = vsel %vm391, %v786, %v787
      %v789 = vrot.slane %v570, 2
      %v790 = vsel %vm391, %v787, %v789
      %v791 = vrot.slane %v571, 2
      %v792 = vrot.slane %v572, 2
      %v793 = vsel %vm391, %v791, %v792
      %v794 = vrot.slane %v573, 2
      %v795 = vsel %vm391, %v792, %v794
      %v796 = vrot.slane %v574, 2
      %v797 = vrot.slane %v575, 2
      %v798 = vsel %vm391, %v796, %v797
      %v799 = vrot.slane %v576, 2
      %v800 = vsel %vm391, %v797, %v799
      %v801 = vrot.slane %v577, 2
      %v802 = vrot.slane %v578, 2
      %v803 = vsel %vm391, %v801, %v802
      %v804 = vrot.slane %v579, 2
      %v805 = vsel %vm391, %v802, %v804
      %v806 = vrot.slane %v580, 2
      %v807 = vrot.slane %v581, 2
      %v808 = vsel %vm391, %v806, %v807
      %v809 = vrot.slane %v582, 2
      %v810 = vsel %vm391, %v807, %v809
      %v811 = vrot.slane %v583, 2
      %v812 = vrot.slane %v584, 2
      %v813 = vsel %vm391, %v811, %v812
      %v814 = vrot.slane %v585, 2
      %v815 = vsel %vm391, %v812, %v814
      %v816 = vrot.slane %v586, 2
      %v817 = vrot.slane %v587, 2
      %v818 = vsel %vm391, %v816, %v817
      %v819 = vrot.slane %v588, 2
      %v820 = vsel %vm391, %v817, %v819
      %v821 = vrot.slane %v589, 2
      %v822 = vrot.slane %v590, 2
      %v823 = vsel %vm391, %v821, %v822
      %v824 = vrot.slane %v591, 2
      %v825 = vsel %vm391, %v822, %v824
      %v826 = vrot.slane %v592, 2
      %v827 = vrot.slane %v593, 2
      %v828 = vsel %vm391, %v826, %v827
      %v829 = vrot.slane %v594, 2
      %v830 = vsel %vm391, %v827, %v829
      %v831 = vrot.slane %v595, 2
      %v832 = vrot.slane %v596, 2
      %v833 = vsel %vm391, %v831, %v832
      %v834 = vrot.slane %v597, 2
      %v835 = vsel %vm391, %v832, %v834
      %v836 = vrot.slane %v598, 2
      %v837 = vrot.slane %v599, 2
      %v838 = vsel %vm391, %v836, %v837
      %v839 = vrot.slane %v600, 2
      %v840 = vsel %vm391, %v837, %v839
      %s873 = scalar_lea.vmem %s1, 384
      %v874 = vld [vmem:[%s873] sm:$0xff]
      %v875 = vld [vmem:[%s873 + $0x8] sm:$0xff]
      %v876 = vld [vmem:[%s873 + $0x10] sm:$0xff]
      %v877 = vld [vmem:[%s873 + $0x18] sm:$0xff]
      %v878 = vld [vmem:[%s873 + $0x20] sm:$0xff]
      %v879 = vld [vmem:[%s873 + $0x28] sm:$0xff]
      %v880 = vld [vmem:[%s873 + $0x30] sm:$0xff]
      %v881 = vld [vmem:[%s873 + $0x38] sm:$0xff]
      %v882 = vld [vmem:[%s873 + $0x40] sm:$0xff]
      %v883 = vld [vmem:[%s873 + $0x48] sm:$0xff]
      %v884 = vld [vmem:[%s873 + $0x50] sm:$0xff]
      %v885 = vld [vmem:[%s873 + $0x58] sm:$0xff]
      %v886 = vld [vmem:[%s873 + $0x60] sm:$0xff]
      %v887 = vld [vmem:[%s873 + $0x68] sm:$0xff]
      %v888 = vld [vmem:[%s873 + $0x70] sm:$0xff]
      %v889 = vld [vmem:[%s873 + $0x78] sm:$0xff]
      %v890 = vld [vmem:[%s873 + $0x80] sm:$0xff]
      %v891 = vld [vmem:[%s873 + $0x88] sm:$0xff]
      %v892 = vld [vmem:[%s873 + $0x90] sm:$0xff]
      %v893 = vld [vmem:[%s873 + $0x98] sm:$0xff]
      %v894 = vld [vmem:[%s873 + $0xa0] sm:$0xff]
      %v895 = vld [vmem:[%s873 + $0xa8] sm:$0xff]
      %v896 = vld [vmem:[%s873 + $0xb0] sm:$0xff]
      %v897 = vld [vmem:[%s873 + $0xb8] sm:$0xff]
      %v898 = vld [vmem:[%s873 + $0xc0] sm:$0xff]
      %v899 = vld [vmem:[%s873 + $0xc8] sm:$0xff]
      %v900 = vld [vmem:[%s873 + $0xd0] sm:$0xff]
      %v901 = vld [vmem:[%s873 + $0xd8] sm:$0xff]
      %v902 = vld [vmem:[%s873 + $0xe0] sm:$0xff]
      %v903 = vld [vmem:[%s873 + $0xe8] sm:$0xff]
      %v904 = vld [vmem:[%s873 + $0xf0] sm:$0xff]
      %v905 = vld [vmem:[%s873 + $0xf8] sm:$0xff]
      %v906 = vld [vmem:[%s873 + $0x100] sm:$0xff]
      %v907 = vld [vmem:[%s873 + $0x108] sm:$0xff]
      %v908 = vld [vmem:[%s873 + $0x110] sm:$0xff]
      %v909 = vld [vmem:[%s873 + $0x118] sm:$0xff]
      %v910 = vld [vmem:[%s873 + $0x120] sm:$0xff]
      %v911 = vld [vmem:[%s873 + $0x128] sm:$0xff]
      %v912 = vld [vmem:[%s873 + $0x130] sm:$0xff]
      %v913 = vld [vmem:[%s873 + $0x138] sm:$0xff]
      %v914 = vld [vmem:[%s873 + $0x140] sm:$0xff]
      %v915 = vld [vmem:[%s873 + $0x148] sm:$0xff]
      %v916 = vld [vmem:[%s873 + $0x150] sm:$0xff]
      %v917 = vld [vmem:[%s873 + $0x158] sm:$0xff]
      %v918 = vld [vmem:[%s873 + $0x160] sm:$0xff]
      %v919 = vld [vmem:[%s873 + $0x168] sm:$0xff]
      %v920 = vld [vmem:[%s873 + $0x170] sm:$0xff]
      %v921 = vld [vmem:[%s873 + $0x178] sm:$0xff]
      %922 = vmatprep.subr.mxu0 0.0
      %923 = vmatpush1.msra.mxu0 %v889
      %924 = vmatprep.subr.mxu0 0.0
      %925 = vmatpush1.msra.mxu0 %v888
      %926 = vmatprep.subr.mxu0 0.0
      %927 = vmatpush1.msra.mxu0 %v887
      %928 = vmatprep.subr.mxu0 0.0
      %929 = vmatpush1.msra.mxu0 %v886
      %930 = vmatprep.subr.mxu0 0.0
      %931 = vmatpush1.msra.mxu0 %v885
      %932 = vmatprep.subr.mxu0 0.0
      %933 = vmatpush1.msra.mxu0 %v884
      %934 = vmatprep.subr.mxu0 0.0
      %935 = vmatpush1.msra.mxu0 %v883
      %936 = vmatprep.subr.mxu0 0.0
      %937 = vmatpush1.msra.mxu0 %v882
      %938 = vmatprep.subr.mxu0 0.0
      %939 = vmatpush1.msra.mxu0 %v881
      %940 = vmatprep.subr.mxu0 0.0
      %941 = vmatpush1.msra.mxu0 %v880
      %942 = vmatprep.subr.mxu0 0.0
      %943 = vmatpush1.msra.mxu0 %v879
      %944 = vmatprep.subr.mxu0 0.0
      %945 = vmatpush1.msra.mxu0 %v878
      %946 = vmatprep.subr.mxu0 0.0
      %947 = vmatpush1.msra.mxu0 %v877
      %948 = vmatprep.subr.mxu0 0.0
      %949 = vmatpush1.msra.mxu0 %v876
      %950 = vmatprep.subr.mxu0 0.0
      %951 = vmatpush1.msra.mxu0 %v875
      %952 = vmatprep.subr.mxu0 0.0
      %953 = vmatpush1.msra.mxu0 %v874
      %954 = vmatprep.subr.mxu0 0.0
      %955 = vmatpush2.msra.mxu0 %v905
      %956 = vmatprep.subr.mxu0 0.0
      %957 = vmatpush2.msra.mxu0 %v904
      %958 = vmatprep.subr.mxu0 0.0
      %959 = vmatpush2.msra.mxu0 %v903
      %960 = vmatprep.subr.mxu0 0.0
      %961 = vmatpush2.msra.mxu0 %v902
      %962 = vmatprep.subr.mxu0 0.0
      %963 = vmatpush2.msra.mxu0 %v901
      %964 = vmatprep.subr.mxu0 0.0
      %965 = vmatpush2.msra.mxu0 %v900
      %966 = vmatprep.subr.mxu0 0.0
      %967 = vmatpush2.msra.mxu0 %v899
      %968 = vmatprep.subr.mxu0 0.0
      %969 = vmatpush2.msra.mxu0 %v898
      %970 = vmatprep.subr.mxu0 0.0
      %971 = vmatpush2.msra.mxu0 %v897
      %972 = vmatprep.subr.mxu0 0.0
      %973 = vmatpush2.msra.mxu0 %v896
      %974 = vmatprep.subr.mxu0 0.0
      %975 = vmatpush2.msra.mxu0 %v895
      %976 = vmatprep.subr.mxu0 0.0
      %977 = vmatpush2.msra.mxu0 %v894
      %978 = vmatprep.subr.mxu0 0.0
      %979 = vmatpush2.msra.mxu0 %v893
      %980 = vmatprep.subr.mxu0 0.0
      %981 = vmatpush2.msra.mxu0 %v892
      %982 = vmatprep.subr.mxu0 0.0
      %983 = vmatpush2.msra.mxu0 %v891
      %984 = vmatprep.subr.mxu0 0.0
      %985 = vmatpush2.msra.mxu0 %v890
      %986 = vmatprep.mubr.f32.mxu0 %v651
      %987 = vmatmul.mubr.f32.gmra.mxu0 %v553
      %v988 = vpop.f32.mrf.mxu0
      %v989 = vadd.f32 0.0, %v988
      %v990 = vpop.f32.mrf.mxu0
      %991 = vmatprep.mubr.f32.mxu0 %v653
      %992 = vmatmul.mubr.f32.gmra.mxu0 %v554
      %v993 = vpop.f32.mrf.mxu0
      %v994 = vadd.f32 0.0, %v993
      %v995 = vpop.f32.mrf.mxu0
      %996 = vmatprep.mubr.f32.mxu0 %v656
      %997 = vmatmul.mubr.f32.gmra.mxu0 %v556
      %v998 = vpop.f32.mrf.mxu0
      %v999 = vadd.f32 0.0, %v998
      %v1000 = vpop.f32.mrf.mxu0
      %1001 = vmatprep.mubr.f32.mxu0 %v658
      %1002 = vmatmul.mubr.f32.gmra.mxu0 %v557
      %v1003 = vpop.f32.mrf.mxu0
      %v1004 = vadd.f32 0.0, %v1003
      %v1005 = vpop.f32.mrf.mxu0
      %1006 = vmatprep.mubr.f32.mxu0 %v661
      %1007 = vmatmul.mubr.f32.gmra.mxu0 %v559
      %v1008 = vpop.f32.mrf.mxu0
      %v1009 = vadd.f32 0.0, %v1008
      %v1010 = vpop.f32.mrf.mxu0
      %1011 = vmatprep.mubr.f32.mxu0 %v663
      %1012 = vmatmul.mubr.f32.gmra.mxu0 %v560
      %v1013 = vpop.f32.mrf.mxu0
      %v1014 = vadd.f32 0.0, %v1013
      %v1015 = vpop.f32.mrf.mxu0
      %1016 = vmatprep.mubr.f32.mxu0 %v666
      %1017 = vmatmul.mubr.f32.gmra.mxu0 %v562
      %v1018 = vpop.f32.mrf.mxu0
      %v1019 = vadd.f32 0.0, %v1018
      %v1020 = vpop.f32.mrf.mxu0
      %1021 = vmatprep.mubr.f32.mxu0 %v668
      %1022 = vmatmul.mubr.f32.gmra.mxu0 %v563
      %v1023 = vpop.f32.mrf.mxu0
      %v1024 = vadd.f32 0.0, %v1023
      %v1025 = vpop.f32.mrf.mxu0
      %1026 = vmatprep.mubr.f32.mxu0 %v671
      %1027 = vmatmul.mubr.f32.gmra.mxu0 %v565
      %v1028 = vpop.f32.mrf.mxu0
      %v1029 = vadd.f32 0.0, %v1028
      %v1030 = vpop.f32.mrf.mxu0
      %1031 = vmatprep.mubr.f32.mxu0 %v673
      %1032 = vmatmul.mubr.f32.gmra.mxu0 %v566
      %v1033 = vpop.f32.mrf.mxu0
      %v1034 = vadd.f32 0.0, %v1033
      %v1035 = vpop.f32.mrf.mxu0
      %1036 = vmatprep.mubr.f32.mxu0 %v676
      %1037 = vmatmul.mubr.f32.gmra.mxu0 %v568
      %v1038 = vpop.f32.mrf.mxu0
      %v1039 = vadd.f32 0.0, %v1038
      %v1040 = vpop.f32.mrf.mxu0
      %1041 = vmatprep.mubr.f32.mxu0 %v678
      %1042 = vmatmul.mubr.f32.gmra.mxu0 %v569
      %v1043 = vpop.f32.mrf.mxu0
      %v1044 = vadd.f32 0.0, %v1043
      %v1045 = vpop.f32.mrf.mxu0
      %1046 = vmatprep.mubr.f32.mxu0 %v681
      %1047 = vmatmul.mubr.f32.gmra.mxu0 %v571
      %v1048 = vpop.f32.mrf.mxu0
      %v1049 = vadd.f32 0.0, %v1048
      %v1050 = vpop.f32.mrf.mxu0
      %1051 = vmatprep.mubr.f32.mxu0 %v683
      %1052 = vmatmul.mubr.f32.gmra.mxu0 %v572
      %v1053 = vpop.f32.mrf.mxu0
      %v1054 = vadd.f32 0.0, %v1053
      %v1055 = vpop.f32.mrf.mxu0
      %1056 = vmatprep.mubr.f32.mxu0 %v686
      %1057 = vmatmul.mubr.f32.gmra.mxu0 %v574
      %v1058 = vpop.f32.mrf.mxu0
      %v1059 = vadd.f32 0.0, %v1058
      %v1060 = vpop.f32.mrf.mxu0
      %1061 = vmatprep.mubr.f32.mxu0 %v688
      %1062 = vmatmul.mubr.f32.gmra.mxu0 %v575
      %v1063 = vpop.f32.mrf.mxu0
      %v1064 = vadd.f32 0.0, %v1063
      %v1065 = vpop.f32.mrf.mxu0
      %1066 = vmatprep.mubr.f32.mxu0 %v691
      %1067 = vmatmul.mubr.f32.gmra.mxu0 %v577
      %v1068 = vpop.f32.mrf.mxu0
      %v1069 = vadd.f32 0.0, %v1068
      %v1070 = vpop.f32.mrf.mxu0
      %1071 = vmatprep.mubr.f32.mxu0 %v693
      %1072 = vmatmul.mubr.f32.gmra.mxu0 %v578
      %v1073 = vpop.f32.mrf.mxu0
      %v1074 = vadd.f32 0.0, %v1073
      %v1075 = vpop.f32.mrf.mxu0
      %1076 = vmatprep.mubr.f32.mxu0 %v696
      %1077 = vmatmul.mubr.f32.gmra.mxu0 %v580
      %v1078 = vpop.f32.mrf.mxu0
      %v1079 = vadd.f32 0.0, %v1078
      %v1080 = vpop.f32.mrf.mxu0
      %1081 = vmatprep.mubr.f32.mxu0 %v698
      %1082 = vmatmul.mubr.f32.gmra.mxu0 %v581
      %v1083 = vpop.f32.mrf.mxu0
      %v1084 = vadd.f32 0.0, %v1083
      %v1085 = vpop.f32.mrf.mxu0
      %1086 = vmatprep.mubr.f32.mxu0 %v701
      %1087 = vmatmul.mubr.f32.gmra.mxu0 %v583
      %v1088 = vpop.f32.mrf.mxu0
      %v1089 = vadd.f32 0.0, %v1088
      %v1090 = vpop.f32.mrf.mxu0
      %1091 = vmatprep.mubr.f32.mxu0 %v703
      %1092 = vmatmul.mubr.f32.gmra.mxu0 %v584
      %v1093 = vpop.f32.mrf.mxu0
      %v1094 = vadd.f32 0.0, %v1093
      %v1095 = vpop.f32.mrf.mxu0
      %1096 = vmatprep.mubr.f32.mxu0 %v706
      %1097 = vmatmul.mubr.f32.gmra.mxu0 %v586
      %v1098 = vpop.f32.mrf.mxu0
      %v1099 = vadd.f32 0.0, %v1098
      %v1100 = vpop.f32.mrf.mxu0
      %1101 = vmatprep.mubr.f32.mxu0 %v708
      %1102 = vmatmul.mubr.f32.gmra.mxu0 %v587
      %v1103 = vpop.f32.mrf.mxu0
      %v1104 = vadd.f32 0.0, %v1103
      %v1105 = vpop.f32.mrf.mxu0
      %1106 = vmatprep.mubr.f32.mxu0 %v711
      %1107 = vmatmul.mubr.f32.gmra.mxu0 %v589
      %v1108 = vpop.f32.mrf.mxu0
      %v1109 = vadd.f32 0.0, %v1108
      %v1110 = vpop.f32.mrf.mxu0
      %1111 = vmatprep.mubr.f32.mxu0 %v713
      %1112 = vmatmul.mubr.f32.gmra.mxu0 %v590
      %v1113 = vpop.f32.mrf.mxu0
      %v1114 = vadd.f32 0.0, %v1113
      %v1115 = vpop.f32.mrf.mxu0
      %1116 = vmatprep.mubr.f32.mxu0 %v716
      %1117 = vmatmul.mubr.f32.gmra.mxu0 %v592
      %v1118 = vpop.f32.mrf.mxu0
      %v1119 = vadd.f32 0.0, %v1118
      %v1120 = vpop.f32.mrf.mxu0
      %1121 = vmatprep.mubr.f32.mxu0 %v718
      %1122 = vmatmul.mubr.f32.gmra.mxu0 %v593
      %v1123 = vpop.f32.mrf.mxu0
      %v1124 = vadd.f32 0.0, %v1123
      %v1125 = vpop.f32.mrf.mxu0
      %1126 = vmatprep.mubr.f32.mxu0 %v721
      %1127 = vmatmul.mubr.f32.gmra.mxu0 %v595
      %v1128 = vpop.f32.mrf.mxu0
      %v1129 = vadd.f32 0.0, %v1128
      %v1130 = vpop.f32.mrf.mxu0
      %1131 = vmatprep.mubr.f32.mxu0 %v723
      %1132 = vmatmul.mubr.f32.gmra.mxu0 %v596
      %v1133 = vpop.f32.mrf.mxu0
      %v1134 = vadd.f32 0.0, %v1133
      %v1135 = vpop.f32.mrf.mxu0
      %1136 = vmatprep.mubr.f32.mxu0 %v726
      %1137 = vmatmul.mubr.f32.gmra.mxu0 %v598
      %v1138 = vpop.f32.mrf.mxu0
      %v1139 = vadd.f32 0.0, %v1138
      %v1140 = vpop.f32.mrf.mxu0
      %1141 = vmatprep.mubr.f32.mxu0 %v728
      %1142 = vmatmul.mubr.f32.gmra.mxu0 %v599
      %v1143 = vpop.f32.mrf.mxu0
      %v1144 = vadd.f32 0.0, %v1143
      %v1145 = vpop.f32.mrf.mxu0
      %1146 = vdwg.mxu0
      %1147 = vmatprep.subr.mxu0 0.0
      %1148 = vmatpush1.msra.mxu0 %v921
      %1149 = vmatprep.subr.mxu0 0.0
      %1150 = vmatpush1.msra.mxu0 %v920
      %1151 = vmatprep.subr.mxu0 0.0
      %1152 = vmatpush1.msra.mxu0 %v919
      %1153 = vmatprep.subr.mxu0 0.0
      %1154 = vmatpush1.msra.mxu0 %v918
      %1155 = vmatprep.subr.mxu0 0.0
      %1156 = vmatpush1.msra.mxu0 %v917
      %1157 = vmatprep.subr.mxu0 0.0
      %1158 = vmatpush1.msra.mxu0 %v916
      %1159 = vmatprep.subr.mxu0 0.0
      %1160 = vmatpush1.msra.mxu0 %v915
      %1161 = vmatprep.subr.mxu0 0.0
      %1162 = vmatpush1.msra.mxu0 %v914
      %1163 = vmatprep.subr.mxu0 0.0
      %1164 = vmatpush1.msra.mxu0 %v913
      %1165 = vmatprep.subr.mxu0 0.0
      %1166 = vmatpush1.msra.mxu0 %v912
      %1167 = vmatprep.subr.mxu0 0.0
      %1168 = vmatpush1.msra.mxu0 %v911
      %1169 = vmatprep.subr.mxu0 0.0
      %1170 = vmatpush1.msra.mxu0 %v910
      %1171 = vmatprep.subr.mxu0 0.0
      %1172 = vmatpush1.msra.mxu0 %v909
      %1173 = vmatprep.subr.mxu0 0.0
      %1174 = vmatpush1.msra.mxu0 %v908
      %1175 = vmatprep.subr.mxu0 0.0
      %1176 = vmatpush1.msra.mxu0 %v907
      %1177 = vmatprep.subr.mxu0 0.0
      %1178 = vmatpush1.msra.mxu0 %v906
      %1179 = vmatprep.subr.mxu0 0.0
      %1180 = vmatpush2.msra.mxu0 0.0
      %1181 = vmatprep.subr.mxu0 0.0
      %1182 = vmatpush2.msra.mxu0 0.0
      %1183 = vmatprep.subr.mxu0 0.0
      %1184 = vmatpush2.msra.mxu0 0.0
      %1185 = vmatprep.subr.mxu0 0.0
      %1186 = vmatpush2.msra.mxu0 0.0
      %1187 = vmatprep.subr.mxu0 0.0
      %1188 = vmatpush2.msra.mxu0 0.0
      %1189 = vmatprep.subr.mxu0 0.0
      %1190 = vmatpush2.msra.mxu0 0.0
      %1191 = vmatprep.subr.mxu0 0.0
      %1192 = vmatpush2.msra.mxu0 0.0
      %1193 = vmatprep.subr.mxu0 0.0
      %1194 = vmatpush2.msra.mxu0 0.0
      %1195 = vmatprep.subr.mxu0 0.0
      %1196 = vmatpush2.msra.mxu0 0.0
      %1197 = vmatprep.subr.mxu0 0.0
      %1198 = vmatpush2.msra.mxu0 0.0
      %1199 = vmatprep.subr.mxu0 0.0
      %1200 = vmatpush2.msra.mxu0 0.0
      %1201 = vmatprep.subr.mxu0 0.0
      %1202 = vmatpush2.msra.mxu0 0.0
      %1203 = vmatprep.subr.mxu0 0.0
      %1204 = vmatpush2.msra.mxu0 0.0
      %1205 = vmatprep.subr.mxu0 0.0
      %1206 = vmatpush2.msra.mxu0 0.0
      %1207 = vmatprep.subr.mxu0 0.0
      %1208 = vmatpush2.msra.mxu0 0.0
      %1209 = vmatprep.subr.mxu0 0.0
      %1210 = vmatpush2.msra.mxu0 0.0
      %1211 = vmatprep.mubr.f32.mxu0 0.0
      %1212 = vmatmul.mubr.f32.gmra.mxu0 %v763
      %v1213 = vpop.f32.mrf.mxu0
      %v1214 = vadd.f32 %v989, %v1213
      %v1215 = vpop.f32.mrf.mxu0
      %1216 = vmatprep.mubr.f32.mxu0 0.0
      %1217 = vmatmul.mubr.f32.gmra.mxu0 %v765
      %v1218 = vpop.f32.mrf.mxu0
      %v1219 = vadd.f32 %v994, %v1218
      %v1220 = vpop.f32.mrf.mxu0
      %1221 = vmatprep.mubr.f32.mxu0 0.0
      %1222 = vmatmul.mubr.f32.gmra.mxu0 %v768
      %v1223 = vpop.f32.mrf.mxu0
      %v1224 = vadd.f32 %v999, %v1223
      %v1225 = vpop.f32.mrf.mxu0
      %1226 = vmatprep.mubr.f32.mxu0 0.0
      %1227 = vmatmul.mubr.f32.gmra.mxu0 %v770
      %v1228 = vpop.f32.mrf.mxu0
      %v1229 = vadd.f32 %v1004, %v1228
      %v1230 = vpop.f32.mrf.mxu0
      %1231 = vmatprep.mubr.f32.mxu0 0.0
      %1232 = vmatmul.mubr.f32.gmra.mxu0 %v773
      %v1233 = vpop.f32.mrf.mxu0
      %v1234 = vadd.f32 %v1009, %v1233
      %v1235 = vpop.f32.mrf.mxu0
      %1236 = vmatprep.mubr.f32.mxu0 0.0
      %1237 = vmatmul.mubr.f32.gmra.mxu0 %v775
      %v1238 = vpop.f32.mrf.mxu0
      %v1239 = vadd.f32 %v1014, %v1238
      %v1240 = vpop.f32.mrf.mxu0
      %1241 = vmatprep.mubr.f32.mxu0 0.0
      %1242 = vmatmul.mubr.f32.gmra.mxu0 %v778
      %v1243 = vpop.f32.mrf.mxu0
      %v1244 = vadd.f32 %v1019, %v1243
      %v1245 = vpop.f32.mrf.mxu0
      %1246 = vmatprep.mubr.f32.mxu0 0.0
      %1247 = vmatmul.mubr.f32.gmra.mxu0 %v780
      %v1248 = vpop.f32.mrf.mxu0
      %v1249 = vadd.f32 %v1024, %v1248
      %v1250 = vpop.f32.mrf.mxu0
      %1251 = vmatprep.mubr.f32.mxu0 0.0
      %1252 = vmatmul.mubr.f32.gmra.mxu0 %v783
      %v1253 = vpop.f32.mrf.mxu0
      %v1254 = vadd.f32 %v1029, %v1253
      %v1255 = vpop.f32.mrf.mxu0
      %1256 = vmatprep.mubr.f32.mxu0 0.0
      %1257 = vmatmul.mubr.f32.gmra.mxu0 %v785
      %v1258 = vpop.f32.mrf.mxu0
      %v1259 = vadd.f32 %v1034, %v1258
      %v1260 = vpop.f32.mrf.mxu0
      %1261 = vmatprep.mubr.f32.mxu0 0.0
      %1262 = vmatmul.mubr.f32.gmra.mxu0 %v788
      %v1263 = vpop.f32.mrf.mxu0
      %v1264 = vadd.f32 %v1039, %v1263
      %v1265 = vpop.f32.mrf.mxu0
      %1266 = vmatprep.mubr.f32.mxu0 0.0
      %1267 = vmatmul.mubr.f32.gmra.mxu0 %v790
      %v1268 = vpop.f32.mrf.mxu0
      %v1269 = vadd.f32 %v1044, %v1268
      %v1270 = vpop.f32.mrf.mxu0
      %1271 = vmatprep.mubr.f32.mxu0 0.0
      %1272 = vmatmul.mubr.f32.gmra.mxu0 %v793
      %v1273 = vpop.f32.mrf.mxu0
      %v1274 = vadd.f32 %v1049, %v1273
      %v1275 = vpop.f32.mrf.mxu0
      %1276 = vmatprep.mubr.f32.mxu0 0.0
      %1277 = vmatmul.mubr.f32.gmra.mxu0 %v795
      %v1278 = vpop.f32.mrf.mxu0
      %v1279 = vadd.f32 %v1054, %v1278
      %v1280 = vpop.f32.mrf.mxu0
      %1281 = vmatprep.mubr.f32.mxu0 0.0
      %1282 = vmatmul.mubr.f32.gmra.mxu0 %v798
      %v1283 = vpop.f32.mrf.mxu0
      %v1284 = vadd.f32 %v1059, %v1283
      %v1285 = vpop.f32.mrf.mxu0
      %1286 = vmatprep.mubr.f32.mxu0 0.0
      %1287 = vmatmul.mubr.f32.gmra.mxu0 %v800
      %v1288 = vpop.f32.mrf.mxu0
      %v1289 = vadd.f32 %v1064, %v1288
      %v1290 = vpop.f32.mrf.mxu0
      %1291 = vmatprep.mubr.f32.mxu0 0.0
      %1292 = vmatmul.mubr.f32.gmra.mxu0 %v803
      %v1293 = vpop.f32.mrf.mxu0
      %v1294 = vadd.f32 %v1069, %v1293
      %v1295 = vpop.f32.mrf.mxu0
      %1296 = vmatprep.mubr.f32.mxu0 0.0
      %1297 = vmatmul.mubr.f32.gmra.mxu0 %v805
      %v1298 = vpop.f32.mrf.mxu0
      %v1299 = vadd.f32 %v1074, %v1298
      %v1300 = vpop.f32.mrf.mxu0
      %1301 = vmatprep.mubr.f32.mxu0 0.0
      %1302 = vmatmul.mubr.f32.gmra.mxu0 %v808
      %v1303 = vpop.f32.mrf.mxu0
      %v1304 = vadd.f32 %v1079, %v1303
      %v1305 = vpop.f32.mrf.mxu0
      %1306 = vmatprep.mubr.f32.mxu0 0.0
      %1307 = vmatmul.mubr.f32.gmra.mxu0 %v810
      %v1308 = vpop.f32.mrf.mxu0
      %v1309 = vadd.f32 %v1084, %v1308
      %v1310 = vpop.f32.mrf.mxu0
      %1311 = vmatprep.mubr.f32.mxu0 0.0
      %1312 = vmatmul.mubr.f32.gmra.mxu0 %v813
      %v1313 = vpop.f32.mrf.mxu0
      %v1314 = vadd.f32 %v1089, %v1313
      %v1315 = vpop.f32.mrf.mxu0
      %1316 = vmatprep.mubr.f32.mxu0 0.0
      %1317 = vmatmul.mubr.f32.gmra.mxu0 %v815
      %v1318 = vpop.f32.mrf.mxu0
      %v1319 = vadd.f32 %v1094, %v1318
      %v1320 = vpop.f32.mrf.mxu0
      %1321 = vmatprep.mubr.f32.mxu0 0.0
      %1322 = vmatmul.mubr.f32.gmra.mxu0 %v818
      %v1323 = vpop.f32.mrf.mxu0
      %v1324 = vadd.f32 %v1099, %v1323
      %v1325 = vpop.f32.mrf.mxu0
      %1326 = vmatprep.mubr.f32.mxu0 0.0
      %1327 = vmatmul.mubr.f32.gmra.mxu0 %v820
      %v1328 = vpop.f32.mrf.mxu0
      %v1329 = vadd.f32 %v1104, %v1328
      %v1330 = vpop.f32.mrf.mxu0
      %1331 = vmatprep.mubr.f32.mxu0 0.0
      %1332 = vmatmul.mubr.f32.gmra.mxu0 %v823
      %v1333 = vpop.f32.mrf.mxu0
      %v1334 = vadd.f32 %v1109, %v1333
      %v1335 = vpop.f32.mrf.mxu0
      %1336 = vmatprep.mubr.f32.mxu0 0.0
      %1337 = vmatmul.mubr.f32.gmra.mxu0 %v825
      %v1338 = vpop.f32.mrf.mxu0
      %v1339 = vadd.f32 %v1114, %v1338
      %v1340 = vpop.f32.mrf.mxu0
      %1341 = vmatprep.mubr.f32.mxu0 0.0
      %1342 = vmatmul.mubr.f32.gmra.mxu0 %v828
      %v1343 = vpop.f32.mrf.mxu0
      %v1344 = vadd.f32 %v1119, %v1343
      %v1345 = vpop.f32.mrf.mxu0
      %1346 = vmatprep.mubr.f32.mxu0 0.0
      %1347 = vmatmul.mubr.f32.gmra.mxu0 %v830
      %v1348 = vpop.f32.mrf.mxu0
      %v1349 = vadd.f32 %v1124, %v1348
      %v1350 = vpop.f32.mrf.mxu0
      %1351 = vmatprep.mubr.f32.mxu0 0.0
      %1352 = vmatmul.mubr.f32.gmra.mxu0 %v833
      %v1353 = vpop.f32.mrf.mxu0
      %v1354 = vadd.f32 %v1129, %v1353
      %v1355 = vpop.f32.mrf.mxu0
      %1356 = vmatprep.mubr.f32.mxu0 0.0
      %1357 = vmatmul.mubr.f32.gmra.mxu0 %v835
      %v1358 = vpop.f32.mrf.mxu0
      %v1359 = vadd.f32 %v1134, %v1358
      %v1360 = vpop.f32.mrf.mxu0
      %1361 = vmatprep.mubr.f32.mxu0 0.0
      %1362 = vmatmul.mubr.f32.gmra.mxu0 %v838
      %v1363 = vpop.f32.mrf.mxu0
      %v1364 = vadd.f32 %v1139, %v1363
      %v1365 = vpop.f32.mrf.mxu0
      %1366 = vmatprep.mubr.f32.mxu0 0.0
      %1367 = vmatmul.mubr.f32.gmra.mxu0 %v840
      %v1368 = vpop.f32.mrf.mxu0
      %v1369 = vadd.f32 %v1144, %v1368
      %v1370 = vpop.f32.mrf.mxu0
      %1371 = vdwg.mxu0
      %1372 = vmatprep.subr.mxu0 0.0
      %1373 = vmatpush1.msra.mxu0 %v519
      %1374 = vmatprep.subr.mxu0 0.0
      %1375 = vmatpush1.msra.mxu0 %v518
      %1376 = vmatprep.subr.mxu0 0.0
      %1377 = vmatpush1.msra.mxu0 %v517
      %1378 = vmatprep.subr.mxu0 0.0
      %1379 = vmatpush1.msra.mxu0 %v516
      %1380 = vmatprep.subr.mxu0 0.0
      %1381 = vmatpush1.msra.mxu0 %v515
      %1382 = vmatprep.subr.mxu0 0.0
      %1383 = vmatpush1.msra.mxu0 %v514
      %1384 = vmatprep.subr.mxu0 0.0
      %1385 = vmatpush1.msra.mxu0 %v513
      %1386 = vmatprep.subr.mxu0 0.0
      %1387 = vmatpush1.msra.mxu0 %v512
      %1388 = vmatprep.subr.mxu0 0.0
      %1389 = vmatpush1.msra.mxu0 %v511
      %1390 = vmatprep.subr.mxu0 0.0
      %1391 = vmatpush1.msra.mxu0 %v510
      %1392 = vmatprep.subr.mxu0 0.0
      %1393 = vmatpush1.msra.mxu0 %v509
      %1394 = vmatprep.subr.mxu0 0.0
      %1395 = vmatpush1.msra.mxu0 %v508
      %1396 = vmatprep.subr.mxu0 0.0
      %1397 = vmatpush1.msra.mxu0 %v507
      %1398 = vmatprep.subr.mxu0 0.0
      %1399 = vmatpush1.msra.mxu0 %v506
      %1400 = vmatprep.subr.mxu0 0.0
      %1401 = vmatpush1.msra.mxu0 %v505
      %1402 = vmatprep.subr.mxu0 0.0
      %1403 = vmatpush1.msra.mxu0 %v504
      %1404 = vmatprep.subr.mxu0 0.0
      %1405 = vmatpush2.msra.mxu0 %v535
      %1406 = vmatprep.subr.mxu0 0.0
      %1407 = vmatpush2.msra.mxu0 %v534
      %1408 = vmatprep.subr.mxu0 0.0
      %1409 = vmatpush2.msra.mxu0 %v533
      %1410 = vmatprep.subr.mxu0 0.0
      %1411 = vmatpush2.msra.mxu0 %v532
      %1412 = vmatprep.subr.mxu0 0.0
      %1413 = vmatpush2.msra.mxu0 %v531
      %1414 = vmatprep.subr.mxu0 0.0
      %1415 = vmatpush2.msra.mxu0 %v530
      %1416 = vmatprep.subr.mxu0 0.0
      %1417 = vmatpush2.msra.mxu0 %v529
      %1418 = vmatprep.subr.mxu0 0.0
      %1419 = vmatpush2.msra.mxu0 %v528
      %1420 = vmatprep.subr.mxu0 0.0
      %1421 = vmatpush2.msra.mxu0 %v527
      %1422 = vmatprep.subr.mxu0 0.0
      %1423 = vmatpush2.msra.mxu0 %v526
      %1424 = vmatprep.subr.mxu0 0.0
      %1425 = vmatpush2.msra.mxu0 %v525
      %1426 = vmatprep.subr.mxu0 0.0
      %1427 = vmatpush2.msra.mxu0 %v524
      %1428 = vmatprep.subr.mxu0 0.0
      %1429 = vmatpush2.msra.mxu0 %v523
      %1430 = vmatprep.subr.mxu0 0.0
      %1431 = vmatpush2.msra.mxu0 %v522
      %1432 = vmatprep.subr.mxu0 0.0
      %1433 = vmatpush2.msra.mxu0 %v521
      %1434 = vmatprep.subr.mxu0 0.0
      %1435 = vmatpush2.msra.mxu0 %v520
      %1436 = vmatprep.mubr.f32.mxu0 %v281
      %1437 = vmatmul.mubr.f32.gmra.mxu0 %v182
      %v1438 = vpop.f32.mrf.mxu0
      %v1439 = vadd.f32 %v1214, %v1438
      %v1440 = vpop.f32.mrf.mxu0
      %1441 = vmatprep.mubr.f32.mxu0 %v283
      %1442 = vmatmul.mubr.f32.gmra.mxu0 %v183
      %v1443 = vpop.f32.mrf.mxu0
      %v1444 = vadd.f32 %v1219, %v1443
      %v1445 = vpop.f32.mrf.mxu0
      %1446 = vmatprep.mubr.f32.mxu0 %v286
      %1447 = vmatmul.mubr.f32.gmra.mxu0 %v185
      %v1448 = vpop.f32.mrf.mxu0
      %v1449 = vadd.f32 %v1224, %v1448
      %v1450 = vpop.f32.mrf.mxu0
      %1451 = vmatprep.mubr.f32.mxu0 %v288
      %1452 = vmatmul.mubr.f32.gmra.mxu0 %v186
      %v1453 = vpop.f32.mrf.mxu0
      %v1454 = vadd.f32 %v1229, %v1453
      %v1455 = vpop.f32.mrf.mxu0
      %1456 = vmatprep.mubr.f32.mxu0 %v291
      %1457 = vmatmul.mubr.f32.gmra.mxu0 %v188
      %v1458 = vpop.f32.mrf.mxu0
      %v1459 = vadd.f32 %v1234, %v1458
      %v1460 = vpop.f32.mrf.mxu0
      %1461 = vmatprep.mubr.f32.mxu0 %v293
      %1462 = vmatmul.mubr.f32.gmra.mxu0 %v189
      %v1463 = vpop.f32.mrf.mxu0
      %v1464 = vadd.f32 %v1239, %v1463
      %v1465 = vpop.f32.mrf.mxu0
      %1466 = vmatprep.mubr.f32.mxu0 %v296
      %1467 = vmatmul.mubr.f32.gmra.mxu0 %v191
      %v1468 = vpop.f32.mrf.mxu0
      %v1469 = vadd.f32 %v1244, %v1468
      %v1470 = vpop.f32.mrf.mxu0
      %1471 = vmatprep.mubr.f32.mxu0 %v298
      %1472 = vmatmul.mubr.f32.gmra.mxu0 %v192
      %v1473 = vpop.f32.mrf.mxu0
      %v1474 = vadd.f32 %v1249, %v1473
      %v1475 = vpop.f32.mrf.mxu0
      %1476 = vmatprep.mubr.f32.mxu0 %v301
      %1477 = vmatmul.mubr.f32.gmra.mxu0 %v194
      %v1478 = vpop.f32.mrf.mxu0
      %v1479 = vadd.f32 %v1254, %v1478
      %v1480 = vpop.f32.mrf.mxu0
      %1481 = vmatprep.mubr.f32.mxu0 %v303
      %1482 = vmatmul.mubr.f32.gmra.mxu0 %v195
      %v1483 = vpop.f32.mrf.mxu0
      %v1484 = vadd.f32 %v1259, %v1483
      %v1485 = vpop.f32.mrf.mxu0
      %1486 = vmatprep.mubr.f32.mxu0 %v306
      %1487 = vmatmul.mubr.f32.gmra.mxu0 %v197
      %v1488 = vpop.f32.mrf.mxu0
      %v1489 = vadd.f32 %v1264, %v1488
      %v1490 = vpop.f32.mrf.mxu0
      %1491 = vmatprep.mubr.f32.mxu0 %v308
      %1492 = vmatmul.mubr.f32.gmra.mxu0 %v198
      %v1493 = vpop.f32.mrf.mxu0
      %v1494 = vadd.f32 %v1269, %v1493
      %v1495 = vpop.f32.mrf.mxu0
      %1496 = vmatprep.mubr.f32.mxu0 %v311
      %1497 = vmatmul.mubr.f32.gmra.mxu0 %v200
      %v1498 = vpop.f32.mrf.mxu0
      %v1499 = vadd.f32 %v1274, %v1498
      %v1500 = vpop.f32.mrf.mxu0
      %1501 = vmatprep.mubr.f32.mxu0 %v313
      %1502 = vmatmul.mubr.f32.gmra.mxu0 %v201
      %v1503 = vpop.f32.mrf.mxu0
      %v1504 = vadd.f32 %v1279, %v1503
      %v1505 = vpop.f32.mrf.mxu0
      %1506 = vmatprep.mubr.f32.mxu0 %v316
      %1507 = vmatmul.mubr.f32.gmra.mxu0 %v203
      %v1508 = vpop.f32.mrf.mxu0
      %v1509 = vadd.f32 %v1284, %v1508
      %v1510 = vpop.f32.mrf.mxu0
      %1511 = vmatprep.mubr.f32.mxu0 %v318
      %1512 = vmatmul.mubr.f32.gmra.mxu0 %v204
      %v1513 = vpop.f32.mrf.mxu0
      %v1514 = vadd.f32 %v1289, %v1513
      %v1515 = vpop.f32.mrf.mxu0
      %1516 = vmatprep.mubr.f32.mxu0 %v321
      %1517 = vmatmul.mubr.f32.gmra.mxu0 %v206
      %v1518 = vpop.f32.mrf.mxu0
      %v1519 = vadd.f32 %v1294, %v1518
      %v1520 = vpop.f32.mrf.mxu0
      %1521 = vmatprep.mubr.f32.mxu0 %v323
      %1522 = vmatmul.mubr.f32.gmra.mxu0 %v207
      %v1523 = vpop.f32.mrf.mxu0
      %v1524 = vadd.f32 %v1299, %v1523
      %v1525 = vpop.f32.mrf.mxu0
      %1526 = vmatprep.mubr.f32.mxu0 %v326
      %1527 = vmatmul.mubr.f32.gmra.mxu0 %v209
      %v1528 = vpop.f32.mrf.mxu0
      %v1529 = vadd.f32 %v1304, %v1528
      %v1530 = vpop.f32.mrf.mxu0
      %1531 = vmatprep.mubr.f32.mxu0 %v328
      %1532 = vmatmul.mubr.f32.gmra.mxu0 %v210
      %v1533 = vpop.f32.mrf.mxu0
      %v1534 = vadd.f32 %v1309, %v1533
      %v1535 = vpop.f32.mrf.mxu0
      %1536 = vmatprep.mubr.f32.mxu0 %v331
      %1537 = vmatmul.mubr.f32.gmra.mxu0 %v212
      %v1538 = vpop.f32.mrf.mxu0
      %v1539 = vadd.f32 %v1314, %v1538
      %v1540 = vpop.f32.mrf.mxu0
      %1541 = vmatprep.mubr.f32.mxu0 %v333
      %1542 = vmatmul.mubr.f32.gmra.mxu0 %v213
      %v1543 = vpop.f32.mrf.mxu0
      %v1544 = vadd.f32 %v1319, %v1543
      %v1545 = vpop.f32.mrf.mxu0
      %1546 = vmatprep.mubr.f32.mxu0 %v336
      %1547 = vmatmul.mubr.f32.gmra.mxu0 %v215
      %v1548 = vpop.f32.mrf.mxu0
      %v1549 = vadd.f32 %v1324, %v1548
      %v1550 = vpop.f32.mrf.mxu0
      %1551 = vmatprep.mubr.f32.mxu0 %v338
      %1552 = vmatmul.mubr.f32.gmra.mxu0 %v216
      %v1553 = vpop.f32.mrf.mxu0
      %v1554 = vadd.f32 %v1329, %v1553
      %v1555 = vpop.f32.mrf.mxu0
      %1556 = vmatprep.mubr.f32.mxu0 %v341
      %1557 = vmatmul.mubr.f32.gmra.mxu0 %v218
      %v1558 = vpop.f32.mrf.mxu0
      %v1559 = vadd.f32 %v1334, %v1558
      %v1560 = vpop.f32.mrf.mxu0
      %1561 = vmatprep.mubr.f32.mxu0 %v343
      %1562 = vmatmul.mubr.f32.gmra.mxu0 %v219
      %v1563 = vpop.f32.mrf.mxu0
      %v1564 = vadd.f32 %v1339, %v1563
      %v1565 = vpop.f32.mrf.mxu0
      %1566 = vmatprep.mubr.f32.mxu0 %v346
      %1567 = vmatmul.mubr.f32.gmra.mxu0 %v221
      %v1568 = vpop.f32.mrf.mxu0
      %v1569 = vadd.f32 %v1344, %v1568
      %v1570 = vpop.f32.mrf.mxu0
      %1571 = vmatprep.mubr.f32.mxu0 %v348
      %1572 = vmatmul.mubr.f32.gmra.mxu0 %v222
      %v1573 = vpop.f32.mrf.mxu0
      %v1574 = vadd.f32 %v1349, %v1573
      %v1575 = vpop.f32.mrf.mxu0
      %1576 = vmatprep.mubr.f32.mxu0 %v351
      %1577 = vmatmul.mubr.f32.gmra.mxu0 %v224
      %v1578 = vpop.f32.mrf.mxu0
      %v1579 = vadd.f32 %v1354, %v1578
      %v1580 = vpop.f32.mrf.mxu0
      %1581 = vmatprep.mubr.f32.mxu0 %v353
      %1582 = vmatmul.mubr.f32.gmra.mxu0 %v225
      %v1583 = vpop.f32.mrf.mxu0
      %v1584 = vadd.f32 %v1359, %v1583
      %v1585 = vpop.f32.mrf.mxu0
      %1586 = vmatprep.mubr.f32.mxu0 %v356
      %1587 = vmatmul.mubr.f32.gmra.mxu0 %v227
      %v1588 = vpop.f32.mrf.mxu0
      %v1589 = vadd.f32 %v1364, %v1588
      %v1590 = vpop.f32.mrf.mxu0
      %1591 = vmatprep.mubr.f32.mxu0 %v358
      %1592 = vmatmul.mubr.f32.gmra.mxu0 %v228
      %v1593 = vpop.f32.mrf.mxu0
      %v1594 = vadd.f32 %v1369, %v1593
      %v1595 = vpop.f32.mrf.mxu0
      %1596 = vdwg.mxu0
      %1597 = vmatprep.subr.mxu0 0.0
      %1598 = vmatpush1.msra.mxu0 %v551
      %1599 = vmatprep.subr.mxu0 0.0
      %1600 = vmatpush1.msra.mxu0 %v550
      %1601 = vmatprep.subr.mxu0 0.0
      %1602 = vmatpush1.msra.mxu0 %v549
      %1603 = vmatprep.subr.mxu0 0.0
      %1604 = vmatpush1.msra.mxu0 %v548
      %1605 = vmatprep.subr.mxu0 0.0
      %1606 = vmatpush1.msra.mxu0 %v547
      %1607 = vmatprep.subr.mxu0 0.0
      %1608 = vmatpush1.msra.mxu0 %v546
      %1609 = vmatprep.subr.mxu0 0.0
      %1610 = vmatpush1.msra.mxu0 %v545
      %1611 = vmatprep.subr.mxu0 0.0
      %1612 = vmatpush1.msra.mxu0 %v544
      %1613 = vmatprep.subr.mxu0 0.0
      %1614 = vmatpush1.msra.mxu0 %v543
      %1615 = vmatprep.subr.mxu0 0.0
      %1616 = vmatpush1.msra.mxu0 %v542
      %1617 = vmatprep.subr.mxu0 0.0
      %1618 = vmatpush1.msra.mxu0 %v541
      %1619 = vmatprep.subr.mxu0 0.0
      %1620 = vmatpush1.msra.mxu0 %v540
      %1621 = vmatprep.subr.mxu0 0.0
      %1622 = vmatpush1.msra.mxu0 %v539
      %1623 = vmatprep.subr.mxu0 0.0
      %1624 = vmatpush1.msra.mxu0 %v538
      %1625 = vmatprep.subr.mxu0 0.0
      %1626 = vmatpush1.msra.mxu0 %v537
      %1627 = vmatprep.subr.mxu0 0.0
      %1628 = vmatpush1.msra.mxu0 %v536
      %1629 = vmatprep.subr.mxu0 0.0
      %1630 = vmatpush2.msra.mxu0 0.0
      %1631 = vmatprep.subr.mxu0 0.0
      %1632 = vmatpush2.msra.mxu0 0.0
      %1633 = vmatprep.subr.mxu0 0.0
      %1634 = vmatpush2.msra.mxu0 0.0
      %1635 = vmatprep.subr.mxu0 0.0
      %1636 = vmatpush2.msra.mxu0 0.0
      %1637 = vmatprep.subr.mxu0 0.0
      %1638 = vmatpush2.msra.mxu0 0.0
      %1639 = vmatprep.subr.mxu0 0.0
      %1640 = vmatpush2.msra.mxu0 0.0
      %1641 = vmatprep.subr.mxu0 0.0
      %1642 = vmatpush2.msra.mxu0 0.0
      %1643 = vmatprep.subr.mxu0 0.0
      %1644 = vmatpush2.msra.mxu0 0.0
      %1645 = vmatprep.subr.mxu0 0.0
      %1646 = vmatpush2.msra.mxu0 0.0
      %1647 = vmatprep.subr.mxu0 0.0
      %1648 = vmatpush2.msra.mxu0 0.0
      %1649 = vmatprep.subr.mxu0 0.0
      %1650 = vmatpush2.msra.mxu0 0.0
      %1651 = vmatprep.subr.mxu0 0.0
      %1652 = vmatpush2.msra.mxu0 0.0
      %1653 = vmatprep.subr.mxu0 0.0
      %1654 = vmatpush2.msra.mxu0 0.0
      %1655 = vmatprep.subr.mxu0 0.0
      %1656 = vmatpush2.msra.mxu0 0.0
      %1657 = vmatprep.subr.mxu0 0.0
      %1658 = vmatpush2.msra.mxu0 0.0
      %1659 = vmatprep.subr.mxu0 0.0
      %1660 = vmatpush2.msra.mxu0 0.0
      %1661 = vmatprep.mubr.f32.mxu0 0.0
      %1662 = vmatmul.mubr.f32.gmra.mxu0 %v394
      %v1663 = vpop.f32.mrf.mxu0
      %v1664 = vadd.f32 %v1439, %v1663
      %v1665 = vpop.f32.mrf.mxu0
      %1666 = vmatprep.mubr.f32.mxu0 0.0
      %1667 = vmatmul.mubr.f32.gmra.mxu0 %v396
      %v1668 = vpop.f32.mrf.mxu0
      %v1669 = vadd.f32 %v1444, %v1668
      %v1670 = vpop.f32.mrf.mxu0
      %1671 = vmatprep.mubr.f32.mxu0 0.0
      %1672 = vmatmul.mubr.f32.gmra.mxu0 %v399
      %v1673 = vpop.f32.mrf.mxu0
      %v1674 = vadd.f32 %v1449, %v1673
      %v1675 = vpop.f32.mrf.mxu0
      %1676 = vmatprep.mubr.f32.mxu0 0.0
      %1677 = vmatmul.mubr.f32.gmra.mxu0 %v401
      %v1678 = vpop.f32.mrf.mxu0
      %v1679 = vadd.f32 %v1454, %v1678
      %v1680 = vpop.f32.mrf.mxu0
      %1681 = vmatprep.mubr.f32.mxu0 0.0
      %1682 = vmatmul.mubr.f32.gmra.mxu0 %v404
      %v1683 = vpop.f32.mrf.mxu0
      %v1684 = vadd.f32 %v1459, %v1683
      %v1685 = vpop.f32.mrf.mxu0
      %1686 = vmatprep.mubr.f32.mxu0 0.0
      %1687 = vmatmul.mubr.f32.gmra.mxu0 %v406
      %v1688 = vpop.f32.mrf.mxu0
      %v1689 = vadd.f32 %v1464, %v1688
      %v1690 = vpop.f32.mrf.mxu0
      %1691 = vmatprep.mubr.f32.mxu0 0.0
      %1692 = vmatmul.mubr.f32.gmra.mxu0 %v409
      %v1693 = vpop.f32.mrf.mxu0
      %v1694 = vadd.f32 %v1469, %v1693
      %v1695 = vpop.f32.mrf.mxu0
      %1696 = vmatprep.mubr.f32.mxu0 0.0
      %1697 = vmatmul.mubr.f32.gmra.mxu0 %v411
      %v1698 = vpop.f32.mrf.mxu0
      %v1699 = vadd.f32 %v1474, %v1698
      %v1700 = vpop.f32.mrf.mxu0
      %1701 = vmatprep.mubr.f32.mxu0 0.0
      %1702 = vmatmul.mubr.f32.gmra.mxu0 %v414
      %v1703 = vpop.f32.mrf.mxu0
      %v1704 = vadd.f32 %v1479, %v1703
      %v1705 = vpop.f32.mrf.mxu0
      %1706 = vmatprep.mubr.f32.mxu0 0.0
      %1707 = vmatmul.mubr.f32.gmra.mxu0 %v416
      %v1708 = vpop.f32.mrf.mxu0
      %v1709 = vadd.f32 %v1484, %v1708
      %v1710 = vpop.f32.mrf.mxu0
      %1711 = vmatprep.mubr.f32.mxu0 0.0
      %1712 = vmatmul.mubr.f32.gmra.mxu0 %v419
      %v1713 = vpop.f32.mrf.mxu0
      %v1714 = vadd.f32 %v1489, %v1713
      %v1715 = vpop.f32.mrf.mxu0
      %1716 = vmatprep.mubr.f32.mxu0 0.0
      %1717 = vmatmul.mubr.f32.gmra.mxu0 %v421
      %v1718 = vpop.f32.mrf.mxu0
      %v1719 = vadd.f32 %v1494, %v1718
      %v1720 = vpop.f32.mrf.mxu0
      %1721 = vmatprep.mubr.f32.mxu0 0.0
      %1722 = vmatmul.mubr.f32.gmra.mxu0 %v424
      %v1723 = vpop.f32.mrf.mxu0
      %v1724 = vadd.f32 %v1499, %v1723
      %v1725 = vpop.f32.mrf.mxu0
      %1726 = vmatprep.mubr.f32.mxu0 0.0
      %1727 = vmatmul.mubr.f32.gmra.mxu0 %v426
      %v1728 = vpop.f32.mrf.mxu0
      %v1729 = vadd.f32 %v1504, %v1728
      %v1730 = vpop.f32.mrf.mxu0
      %1731 = vmatprep.mubr.f32.mxu0 0.0
      %1732 = vmatmul.mubr.f32.gmra.mxu0 %v429
      %v1733 = vpop.f32.mrf.mxu0
      %v1734 = vadd.f32 %v1509, %v1733
      %v1735 = vpop.f32.mrf.mxu0
      %1736 = vmatprep.mubr.f32.mxu0 0.0
      %1737 = vmatmul.mubr.f32.gmra.mxu0 %v431
      %v1738 = vpop.f32.mrf.mxu0
      %v1739 = vadd.f32 %v1514, %v1738
      %v1740 = vpop.f32.mrf.mxu0
      %1741 = vmatprep.mubr.f32.mxu0 0.0
      %1742 = vmatmul.mubr.f32.gmra.mxu0 %v434
      %v1743 = vpop.f32.mrf.mxu0
      %v1744 = vadd.f32 %v1519, %v1743
      %v1745 = vpop.f32.mrf.mxu0
      %1746 = vmatprep.mubr.f32.mxu0 0.0
      %1747 = vmatmul.mubr.f32.gmra.mxu0 %v436
      %v1748 = vpop.f32.mrf.mxu0
      %v1749 = vadd.f32 %v1524, %v1748
      %v1750 = vpop.f32.mrf.mxu0
      %1751 = vmatprep.mubr.f32.mxu0 0.0
      %1752 = vmatmul.mubr.f32.gmra.mxu0 %v439
      %v1753 = vpop.f32.mrf.mxu0
      %v1754 = vadd.f32 %v1529, %v1753
      %v1755 = vpop.f32.mrf.mxu0
      %1756 = vmatprep.mubr.f32.mxu0 0.0
      %1757 = vmatmul.mubr.f32.gmra.mxu0 %v441
      %v1758 = vpop.f32.mrf.mxu0
      %v1759 = vadd.f32 %v1534, %v1758
      %v1760 = vpop.f32.mrf.mxu0
      %1761 = vmatprep.mubr.f32.mxu0 0.0
      %1762 = vmatmul.mubr.f32.gmra.mxu0 %v444
      %v1763 = vpop.f32.mrf.mxu0
      %v1764 = vadd.f32 %v1539, %v1763
      %v1765 = vpop.f32.mrf.mxu0
      %1766 = vmatprep.mubr.f32.mxu0 0.0
      %1767 = vmatmul.mubr.f32.gmra.mxu0 %v446
      %v1768 = vpop.f32.mrf.mxu0
      %v1769 = vadd.f32 %v1544, %v1768
      %v1770 = vpop.f32.mrf.mxu0
      %1771 = vmatprep.mubr.f32.mxu0 0.0
      %1772 = vmatmul.mubr.f32.gmra.mxu0 %v449
      %v1773 = vpop.f32.mrf.mxu0
      %v1774 = vadd.f32 %v1549, %v1773
      %v1775 = vpop.f32.mrf.mxu0
      %1776 = vmatprep.mubr.f32.mxu0 0.0
      %1777 = vmatmul.mubr.f32.gmra.mxu0 %v451
      %v1778 = vpop.f32.mrf.mxu0
      %v1779 = vadd.f32 %v1554, %v1778
      %v1780 = vpop.f32.mrf.mxu0
      %1781 = vmatprep.mubr.f32.mxu0 0.0
      %1782 = vmatmul.mubr.f32.gmra.mxu0 %v454
      %v1783 = vpop.f32.mrf.mxu0
      %v1784 = vadd.f32 %v1559, %v1783
      %v1785 = vpop.f32.mrf.mxu0
      %1786 = vmatprep.mubr.f32.mxu0 0.0
      %1787 = vmatmul.mubr.f32.gmra.mxu0 %v456
      %v1788 = vpop.f32.mrf.mxu0
      %v1789 = vadd.f32 %v1564, %v1788
      %v1790 = vpop.f32.mrf.mxu0
      %1791 = vmatprep.mubr.f32.mxu0 0.0
      %1792 = vmatmul.mubr.f32.gmra.mxu0 %v459
      %v1793 = vpop.f32.mrf.mxu0
      %v1794 = vadd.f32 %v1569, %v1793
      %v1795 = vpop.f32.mrf.mxu0
      %1796 = vmatprep.mubr.f32.mxu0 0.0
      %1797 = vmatmul.mubr.f32.gmra.mxu0 %v461
      %v1798 = vpop.f32.mrf.mxu0
      %v1799 = vadd.f32 %v1574, %v1798
      %v1800 = vpop.f32.mrf.mxu0
      %1801 = vmatprep.mubr.f32.mxu0 0.0
      %1802 = vmatmul.mubr.f32.gmra.mxu0 %v464
      %v1803 = vpop.f32.mrf.mxu0
      %v1804 = vadd.f32 %v1579, %v1803
      %v1805 = vpop.f32.mrf.mxu0
      %1806 = vmatprep.mubr.f32.mxu0 0.0
      %1807 = vmatmul.mubr.f32.gmra.mxu0 %v466
      %v1808 = vpop.f32.mrf.mxu0
      %v1809 = vadd.f32 %v1584, %v1808
      %v1810 = vpop.f32.mrf.mxu0
      %1811 = vmatprep.mubr.f32.mxu0 0.0
      %1812 = vmatmul.mubr.f32.gmra.mxu0 %v469
      %v1813 = vpop.f32.mrf.mxu0
      %v1814 = vadd.f32 %v1589, %v1813
      %v1815 = vpop.f32.mrf.mxu0
      %1816 = vmatprep.mubr.f32.mxu0 0.0
      %1817 = vmatmul.mubr.f32.gmra.mxu0 %v471
      %v1818 = vpop.f32.mrf.mxu0
      %v1819 = vadd.f32 %v1594, %v1818
      %v1820 = vpop.f32.mrf.mxu0
      %1821 = vdwg.mxu0
      %s1822 = scalar_lea.vmem %s172, 48
      %v1823 = vld [vmem:[%s1822] sm:$0xff]
      %v1824 = vld [vmem:[%s1822 + $0x8] sm:$0xff]
      %v1825 = vld [vmem:[%s1822 + $0x10] sm:$0x3]
      %v1826 = vld [vmem:[%s1822 + $0x18] sm:$0xff]
      %v1827 = vld [vmem:[%s1822 + $0x20] sm:$0xff]
      %v1828 = vld [vmem:[%s1822 + $0x28] sm:$0x3]
      %v1829 = vld [vmem:[%s1822 + $0x30] sm:$0xff]
      %v1830 = vld [vmem:[%s1822 + $0x38] sm:$0xff]
      %v1831 = vld [vmem:[%s1822 + $0x40] sm:$0x3]
      %v1832 = vld [vmem:[%s1822 + $0x48] sm:$0xff]
      %v1833 = vld [vmem:[%s1822 + $0x50] sm:$0xff]
      %v1834 = vld [vmem:[%s1822 + $0x58] sm:$0x3]
      %v1835 = vld [vmem:[%s1822 + $0x60] sm:$0xff]
      %v1836 = vld [vmem:[%s1822 + $0x68] sm:$0xff]
      %v1837 = vld [vmem:[%s1822 + $0x70] sm:$0x3]
      %v1838 = vld [vmem:[%s1822 + $0x78] sm:$0xff]
      %v1839 = vld [vmem:[%s1822 + $0x80] sm:$0xff]
      %v1840 = vld [vmem:[%s1822 + $0x88] sm:$0x3]
      %v1841 = vld [vmem:[%s1822 + $0x90] sm:$0xff]
      %v1842 = vld [vmem:[%s1822 + $0x98] sm:$0xff]
      %v1843 = vld [vmem:[%s1822 + $0xa0] sm:$0x3]
      %v1844 = vld [vmem:[%s1822 + $0xa8] sm:$0xff]
      %v1845 = vld [vmem:[%s1822 + $0xb0] sm:$0xff]
      %v1846 = vld [vmem:[%s1822 + $0xb8] sm:$0x3]
      %v1847 = vld [vmem:[%s1822 + $0xc0] sm:$0xff]
      %v1848 = vld [vmem:[%s1822 + $0xc8] sm:$0xff]
      %v1849 = vld [vmem:[%s1822 + $0xd0] sm:$0x3]
      %v1850 = vld [vmem:[%s1822 + $0xd8] sm:$0xff]
      %v1851 = vld [vmem:[%s1822 + $0xe0] sm:$0xff]
      %v1852 = vld [vmem:[%s1822 + $0xe8] sm:$0x3]
      %v1853 = vld [vmem:[%s1822 + $0xf0] sm:$0xff]
      %v1854 = vld [vmem:[%s1822 + $0xf8] sm:$0xff]
      %v1855 = vld [vmem:[%s1822 + $0x100] sm:$0x3]
      %v1856 = vld [vmem:[%s1822 + $0x108] sm:$0xff]
      %v1857 = vld [vmem:[%s1822 + $0x110] sm:$0xff]
      %v1858 = vld [vmem:[%s1822 + $0x118] sm:$0x3]
      %v1859 = vld [vmem:[%s1822 + $0x120] sm:$0xff]
      %v1860 = vld [vmem:[%s1822 + $0x128] sm:$0xff]
      %v1861 = vld [vmem:[%s1822 + $0x130] sm:$0x3]
      %v1862 = vld [vmem:[%s1822 + $0x138] sm:$0xff]
      %v1863 = vld [vmem:[%s1822 + $0x140] sm:$0xff]
      %v1864 = vld [vmem:[%s1822 + $0x148] sm:$0x3]
      %v1865 = vld [vmem:[%s1822 + $0x150] sm:$0xff]
      %v1866 = vld [vmem:[%s1822 + $0x158] sm:$0xff]
      %v1867 = vld [vmem:[%s1822 + $0x160] sm:$0x3]
      %v1868 = vld [vmem:[%s1822 + $0x168] sm:$0xff]
      %v1869 = vld [vmem:[%s1822 + $0x170] sm:$0xff]
      %v1870 = vld [vmem:[%s1822 + $0x178] sm:$0x3]
      %v1919 = vrot.slane %v1823, 1
      %v1920 = vrot.slane %v1824, 1
      %v1921 = vsel %vm278, %v1919, %v1920
      %v1922 = vrot.slane %v1825, 1
      %v1923 = vsel %vm278, %v1920, %v1922
      %v1924 = vrot.slane %v1826, 1
      %v1925 = vrot.slane %v1827, 1
      %v1926 = vsel %vm278, %v1924, %v1925
      %v1927 = vrot.slane %v1828, 1
      %v1928 = vsel %vm278, %v1925, %v1927
      %v1929 = vrot.slane %v1829, 1
      %v1930 = vrot.slane %v1830, 1
      %v1931 = vsel %vm278, %v1929, %v1930
      %v1932 = vrot.slane %v1831, 1
      %v1933 = vsel %vm278, %v1930, %v1932
      %v1934 = vrot.slane %v1832, 1
      %v1935 = vrot.slane %v1833, 1
      %v1936 = vsel %vm278, %v1934, %v1935
      %v1937 = vrot.slane %v1834, 1
      %v1938 = vsel %vm278, %v1935, %v1937
      %v1939 = vrot.slane %v1835, 1
      %v1940 = vrot.slane %v1836, 1
      %v1941 = vsel %vm278, %v1939, %v1940
      %v1942 = vrot.slane %v1837, 1
      %v1943 = vsel %vm278, %v1940, %v1942
      %v1944 = vrot.slane %v1838, 1
      %v1945 = vrot.slane %v1839, 1
      %v1946 = vsel %vm278, %v1944, %v1945
      %v1947 = vrot.slane %v1840, 1
      %v1948 = vsel %vm278, %v1945, %v1947
      %v1949 = vrot.slane %v1841, 1
      %v1950 = vrot.slane %v1842, 1
      %v1951 = vsel %vm278, %v1949, %v1950
      %v1952 = vrot.slane %v1843, 1
      %v1953 = vsel %vm278, %v1950, %v1952
      %v1954 = vrot.slane %v1844, 1
      %v1955 = vrot.slane %v1845, 1
      %v1956 = vsel %vm278, %v1954, %v1955
      %v1957 = vrot.slane %v1846, 1
      %v1958 = vsel %vm278, %v1955, %v1957
      %v1959 = vrot.slane %v1847, 1
      %v1960 = vrot.slane %v1848, 1
      %v1961 = vsel %vm278, %v1959, %v1960
      %v1962 = vrot.slane %v1849, 1
      %v1963 = vsel %vm278, %v1960, %v1962
      %v1964 = vrot.slane %v1850, 1
      %v1965 = vrot.slane %v1851, 1
      %v1966 = vsel %vm278, %v1964, %v1965
      %v1967 = vrot.slane %v1852, 1
      %v1968 = vsel %vm278, %v1965, %v1967
      %v1969 = vrot.slane %v1853, 1
      %v1970 = vrot.slane %v1854, 1
      %v1971 = vsel %vm278, %v1969, %v1970
      %v1972 = vrot.slane %v1855, 1
      %v1973 = vsel %vm278, %v1970, %v1972
      %v1974 = vrot.slane %v1856, 1
      %v1975 = vrot.slane %v1857, 1
      %v1976 = vsel %vm278, %v1974, %v1975
      %v1977 = vrot.slane %v1858, 1
      %v1978 = vsel %vm278, %v1975, %v1977
      %v1979 = vrot.slane %v1859, 1
      %v1980 = vrot.slane %v1860, 1
      %v1981 = vsel %vm278, %v1979, %v1980
      %v1982 = vrot.slane %v1861, 1
      %v1983 = vsel %vm278, %v1980, %v1982
      %v1984 = vrot.slane %v1862, 1
      %v1985 = vrot.slane %v1863, 1
      %v1986 = vsel %vm278, %v1984, %v1985
      %v1987 = vrot.slane %v1864, 1
      %v1988 = vsel %vm278, %v1985, %v1987
      %v1989 = vrot.slane %v1865, 1
      %v1990 = vrot.slane %v1866, 1
      %v1991 = vsel %vm278, %v1989, %v1990
      %v1992 = vrot.slane %v1867, 1
      %v1993 = vsel %vm278, %v1990, %v1992
      %v1994 = vrot.slane %v1868, 1
      %v1995 = vrot.slane %v1869, 1
      %v1996 = vsel %vm278, %v1994, %v1995
      %v1997 = vrot.slane %v1870, 1
      %v1998 = vsel %vm278, %v1995, %v1997
      %v2031 = vrot.slane %v1823, 2
      %v2032 = vrot.slane %v1824, 2
      %v2033 = vsel %vm391, %v2031, %v2032
      %v2034 = vrot.slane %v1825, 2
      %v2035 = vsel %vm391, %v2032, %v2034
      %v2036 = vrot.slane %v1826, 2
      %v2037 = vrot.slane %v1827, 2
      %v2038 = vsel %vm391, %v2036, %v2037
      %v2039 = vrot.slane %v1828, 2
      %v2040 = vsel %vm391, %v2037, %v2039
      %v2041 = vrot.slane %v1829, 2
      %v2042 = vrot.slane %v1830, 2
      %v2043 = vsel %vm391, %v2041, %v2042
      %v2044 = vrot.slane %v1831, 2
      %v2045 = vsel %vm391, %v2042, %v2044
      %v2046 = vrot.slane %v1832, 2
      %v2047 = vrot.slane %v1833, 2
      %v2048 = vsel %vm391, %v2046, %v2047
      %v2049 = vrot.slane %v1834, 2
      %v2050 = vsel %vm391, %v2047, %v2049
      %v2051 = vrot.slane %v1835, 2
      %v2052 = vrot.slane %v1836, 2
      %v2053 = vsel %vm391, %v2051, %v2052
      %v2054 = vrot.slane %v1837, 2
      %v2055 = vsel %vm391, %v2052, %v2054
      %v2056 = vrot.slane %v1838, 2
      %v2057 = vrot.slane %v1839, 2
      %v2058 = vsel %vm391, %v2056, %v2057
      %v2059 = vrot.slane %v1840, 2
      %v2060 = vsel %vm391, %v2057, %v2059
      %v2061 = vrot.slane %v1841, 2
      %v2062 = vrot.slane %v1842, 2
      %v2063 = vsel %vm391, %v2061, %v2062
      %v2064 = vrot.slane %v1843, 2
      %v2065 = vsel %vm391, %v2062, %v2064
      %v2066 = vrot.slane %v1844, 2
      %v2067 = vrot.slane %v1845, 2
      %v2068 = vsel %vm391, %v2066, %v2067
      %v2069 = vrot.slane %v1846, 2
      %v2070 = vsel %vm391, %v2067, %v2069
      %v2071 = vrot.slane %v1847, 2
      %v2072 = vrot.slane %v1848, 2
      %v2073 = vsel %vm391, %v2071, %v2072
      %v2074 = vrot.slane %v1849, 2
      %v2075 = vsel %vm391, %v2072, %v2074
      %v2076 = vrot.slane %v1850, 2
      %v2077 = vrot.slane %v1851, 2
      %v2078 = vsel %vm391, %v2076, %v2077
      %v2079 = vrot.slane %v1852, 2
      %v2080 = vsel %vm391, %v2077, %v2079
      %v2081 = vrot.slane %v1853, 2
      %v2082 = vrot.slane %v1854, 2
      %v2083 = vsel %vm391, %v2081, %v2082
      %v2084 = vrot.slane %v1855, 2
      %v2085 = vsel %vm391, %v2082, %v2084
      %v2086 = vrot.slane %v1856, 2
      %v2087 = vrot.slane %v1857, 2
      %v2088 = vsel %vm391, %v2086, %v2087
      %v2089 = vrot.slane %v1858, 2
      %v2090 = vsel %vm391, %v2087, %v2089
      %v2091 = vrot.slane %v1859, 2
      %v2092 = vrot.slane %v1860, 2
      %v2093 = vsel %vm391, %v2091, %v2092
      %v2094 = vrot.slane %v1861, 2
      %v2095 = vsel %vm391, %v2092, %v2094
      %v2096 = vrot.slane %v1862, 2
      %v2097 = vrot.slane %v1863, 2
      %v2098 = vsel %vm391, %v2096, %v2097
      %v2099 = vrot.slane %v1864, 2
      %v2100 = vsel %vm391, %v2097, %v2099
      %v2101 = vrot.slane %v1865, 2
      %v2102 = vrot.slane %v1866, 2
      %v2103 = vsel %vm391, %v2101, %v2102
      %v2104 = vrot.slane %v1867, 2
      %v2105 = vsel %vm391, %v2102, %v2104
      %v2106 = vrot.slane %v1868, 2
      %v2107 = vrot.slane %v1869, 2
      %v2108 = vsel %vm391, %v2106, %v2107
      %v2109 = vrot.slane %v1870, 2
      %v2110 = vsel %vm391, %v2107, %v2109
      %s2143 = scalar_lea.vmem %s1, 768
      %v2144 = vld [vmem:[%s2143] sm:$0xff]
      %v2145 = vld [vmem:[%s2143 + $0x8] sm:$0xff]
      %v2146 = vld [vmem:[%s2143 + $0x10] sm:$0xff]
      %v2147 = vld [vmem:[%s2143 + $0x18] sm:$0xff]
      %v2148 = vld [vmem:[%s2143 + $0x20] sm:$0xff]
      %v2149 = vld [vmem:[%s2143 + $0x28] sm:$0xff]
      %v2150 = vld [vmem:[%s2143 + $0x30] sm:$0xff]
      %v2151 = vld [vmem:[%s2143 + $0x38] sm:$0xff]
      %v2152 = vld [vmem:[%s2143 + $0x40] sm:$0xff]
      %v2153 = vld [vmem:[%s2143 + $0x48] sm:$0xff]
      %v2154 = vld [vmem:[%s2143 + $0x50] sm:$0xff]
      %v2155 = vld [vmem:[%s2143 + $0x58] sm:$0xff]
      %v2156 = vld [vmem:[%s2143 + $0x60] sm:$0xff]
      %v2157 = vld [vmem:[%s2143 + $0x68] sm:$0xff]
      %v2158 = vld [vmem:[%s2143 + $0x70] sm:$0xff]
      %v2159 = vld [vmem:[%s2143 + $0x78] sm:$0xff]
      %v2160 = vld [vmem:[%s2143 + $0x80] sm:$0xff]
      %v2161 = vld [vmem:[%s2143 + $0x88] sm:$0xff]
      %v2162 = vld [vmem:[%s2143 + $0x90] sm:$0xff]
      %v2163 = vld [vmem:[%s2143 + $0x98] sm:$0xff]
      %v2164 = vld [vmem:[%s2143 + $0xa0] sm:$0xff]
      %v2165 = vld [vmem:[%s2143 + $0xa8] sm:$0xff]
      %v2166 = vld [vmem:[%s2143 + $0xb0] sm:$0xff]
      %v2167 = vld [vmem:[%s2143 + $0xb8] sm:$0xff]
      %v2168 = vld [vmem:[%s2143 + $0xc0] sm:$0xff]
      %v2169 = vld [vmem:[%s2143 + $0xc8] sm:$0xff]
      %v2170 = vld [vmem:[%s2143 + $0xd0] sm:$0xff]
      %v2171 = vld [vmem:[%s2143 + $0xd8] sm:$0xff]
      %v2172 = vld [vmem:[%s2143 + $0xe0] sm:$0xff]
      %v2173 = vld [vmem:[%s2143 + $0xe8] sm:$0xff]
      %v2174 = vld [vmem:[%s2143 + $0xf0] sm:$0xff]
      %v2175 = vld [vmem:[%s2143 + $0xf8] sm:$0xff]
      %v2176 = vld [vmem:[%s2143 + $0x100] sm:$0xff]
      %v2177 = vld [vmem:[%s2143 + $0x108] sm:$0xff]
      %v2178 = vld [vmem:[%s2143 + $0x110] sm:$0xff]
      %v2179 = vld [vmem:[%s2143 + $0x118] sm:$0xff]
      %v2180 = vld [vmem:[%s2143 + $0x120] sm:$0xff]
      %v2181 = vld [vmem:[%s2143 + $0x128] sm:$0xff]
      %v2182 = vld [vmem:[%s2143 + $0x130] sm:$0xff]
      %v2183 = vld [vmem:[%s2143 + $0x138] sm:$0xff]
      %v2184 = vld [vmem:[%s2143 + $0x140] sm:$0xff]
      %v2185 = vld [vmem:[%s2143 + $0x148] sm:$0xff]
      %v2186 = vld [vmem:[%s2143 + $0x150] sm:$0xff]
      %v2187 = vld [vmem:[%s2143 + $0x158] sm:$0xff]
      %v2188 = vld [vmem:[%s2143 + $0x160] sm:$0xff]
      %v2189 = vld [vmem:[%s2143 + $0x168] sm:$0xff]
      %v2190 = vld [vmem:[%s2143 + $0x170] sm:$0xff]
      %v2191 = vld [vmem:[%s2143 + $0x178] sm:$0xff]
      %2192 = vmatprep.subr.mxu0 0.0
      %2193 = vmatpush1.msra.mxu0 %v2159
      %2194 = vmatprep.subr.mxu0 0.0
      %2195 = vmatpush1.msra.mxu0 %v2158
      %2196 = vmatprep.subr.mxu0 0.0
      %2197 = vmatpush1.msra.mxu0 %v2157
      %2198 = vmatprep.subr.mxu0 0.0
      %2199 = vmatpush1.msra.mxu0 %v2156
      %2200 = vmatprep.subr.mxu0 0.0
      %2201 = vmatpush1.msra.mxu0 %v2155
      %2202 = vmatprep.subr.mxu0 0.0
      %2203 = vmatpush1.msra.mxu0 %v2154
      %2204 = vmatprep.subr.mxu0 0.0
      %2205 = vmatpush1.msra.mxu0 %v2153
      %2206 = vmatprep.subr.mxu0 0.0
      %2207 = vmatpush1.msra.mxu0 %v2152
      %2208 = vmatprep.subr.mxu0 0.0
      %2209 = vmatpush1.msra.mxu0 %v2151
      %2210 = vmatprep.subr.mxu0 0.0
      %2211 = vmatpush1.msra.mxu0 %v2150
      %2212 = vmatprep.subr.mxu0 0.0
      %2213 = vmatpush1.msra.mxu0 %v2149
      %2214 = vmatprep.subr.mxu0 0.0
      %2215 = vmatpush1.msra.mxu0 %v2148
      %2216 = vmatprep.subr.mxu0 0.0
      %2217 = vmatpush1.msra.mxu0 %v2147
      %2218 = vmatprep.subr.mxu0 0.0
      %2219 = vmatpush1.msra.mxu0 %v2146
      %2220 = vmatprep.subr.mxu0 0.0
      %2221 = vmatpush1.msra.mxu0 %v2145
      %2222 = vmatprep.subr.mxu0 0.0
      %2223 = vmatpush1.msra.mxu0 %v2144
      %2224 = vmatprep.subr.mxu0 0.0
      %2225 = vmatpush2.msra.mxu0 %v2175
      %2226 = vmatprep.subr.mxu0 0.0
      %2227 = vmatpush2.msra.mxu0 %v2174
      %2228 = vmatprep.subr.mxu0 0.0
      %2229 = vmatpush2.msra.mxu0 %v2173
      %2230 = vmatprep.subr.mxu0 0.0
      %2231 = vmatpush2.msra.mxu0 %v2172
      %2232 = vmatprep.subr.mxu0 0.0
      %2233 = vmatpush2.msra.mxu0 %v2171
      %2234 = vmatprep.subr.mxu0 0.0
      %2235 = vmatpush2.msra.mxu0 %v2170
      %2236 = vmatprep.subr.mxu0 0.0
      %2237 = vmatpush2.msra.mxu0 %v2169
      %2238 = vmatprep.subr.mxu0 0.0
      %2239 = vmatpush2.msra.mxu0 %v2168
      %2240 = vmatprep.subr.mxu0 0.0
      %2241 = vmatpush2.msra.mxu0 %v2167
      %2242 = vmatprep.subr.mxu0 0.0
      %2243 = vmatpush2.msra.mxu0 %v2166
      %2244 = vmatprep.subr.mxu0 0.0
      %2245 = vmatpush2.msra.mxu0 %v2165
      %2246 = vmatprep.subr.mxu0 0.0
      %2247 = vmatpush2.msra.mxu0 %v2164
      %2248 = vmatprep.subr.mxu0 0.0
      %2249 = vmatpush2.msra.mxu0 %v2163
      %2250 = vmatprep.subr.mxu0 0.0
      %2251 = vmatpush2.msra.mxu0 %v2162
      %2252 = vmatprep.subr.mxu0 0.0
      %2253 = vmatpush2.msra.mxu0 %v2161
      %2254 = vmatprep.subr.mxu0 0.0
      %2255 = vmatpush2.msra.mxu0 %v2160
      %2256 = vmatprep.mubr.f32.mxu0 %v1921
      %2257 = vmatmul.mubr.f32.gmra.mxu0 %v1823
      %v2258 = vpop.f32.mrf.mxu0
      %v2259 = vadd.f32 0.0, %v2258
      %v2260 = vpop.f32.mrf.mxu0
      %2261 = vmatprep.mubr.f32.mxu0 %v1923
      %2262 = vmatmul.mubr.f32.gmra.mxu0 %v1824
      %v2263 = vpop.f32.mrf.mxu0
      %v2264 = vadd.f32 0.0, %v2263
      %v2265 = vpop.f32.mrf.mxu0
      %2266 = vmatprep.mubr.f32.mxu0 %v1926
      %2267 = vmatmul.mubr.f32.gmra.mxu0 %v1826
      %v2268 = vpop.f32.mrf.mxu0
      %v2269 = vadd.f32 0.0, %v2268
      %v2270 = vpop.f32.mrf.mxu0
      %2271 = vmatprep.mubr.f32.mxu0 %v1928
      %2272 = vmatmul.mubr.f32.gmra.mxu0 %v1827
      %v2273 = vpop.f32.mrf.mxu0
      %v2274 = vadd.f32 0.0, %v2273
      %v2275 = vpop.f32.mrf.mxu0
      %2276 = vmatprep.mubr.f32.mxu0 %v1931
      %2277 = vmatmul.mubr.f32.gmra.mxu0 %v1829
      %v2278 = vpop.f32.mrf.mxu0
      %v2279 = vadd.f32 0.0, %v2278
      %v2280 = vpop.f32.mrf.mxu0
      %2281 = vmatprep.mubr.f32.mxu0 %v1933
      %2282 = vmatmul.mubr.f32.gmra.mxu0 %v1830
      %v2283 = vpop.f32.mrf.mxu0
      %v2284 = vadd.f32 0.0, %v2283
      %v2285 = vpop.f32.mrf.mxu0
      %2286 = vmatprep.mubr.f32.mxu0 %v1936
      %2287 = vmatmul.mubr.f32.gmra.mxu0 %v1832
      %v2288 = vpop.f32.mrf.mxu0
      %v2289 = vadd.f32 0.0, %v2288
      %v2290 = vpop.f32.mrf.mxu0
      %2291 = vmatprep.mubr.f32.mxu0 %v1938
      %2292 = vmatmul.mubr.f32.gmra.mxu0 %v1833
      %v2293 = vpop.f32.mrf.mxu0
      %v2294 = vadd.f32 0.0, %v2293
      %v2295 = vpop.f32.mrf.mxu0
      %2296 = vmatprep.mubr.f32.mxu0 %v1941
      %2297 = vmatmul.mubr.f32.gmra.mxu0 %v1835
      %v2298 = vpop.f32.mrf.mxu0
      %v2299 = vadd.f32 0.0, %v2298
      %v2300 = vpop.f32.mrf.mxu0
      %2301 = vmatprep.mubr.f32.mxu0 %v1943
      %2302 = vmatmul.mubr.f32.gmra.mxu0 %v1836
      %v2303 = vpop.f32.mrf.mxu0
      %v2304 = vadd.f32 0.0, %v2303
      %v2305 = vpop.f32.mrf.mxu0
      %2306 = vmatprep.mubr.f32.mxu0 %v1946
      %2307 = vmatmul.mubr.f32.gmra.mxu0 %v1838
      %v2308 = vpop.f32.mrf.mxu0
      %v2309 = vadd.f32 0.0, %v2308
      %v2310 = vpop.f32.mrf.mxu0
      %2311 = vmatprep.mubr.f32.mxu0 %v1948
      %2312 = vmatmul.mubr.f32.gmra.mxu0 %v1839
      %v2313 = vpop.f32.mrf.mxu0
      %v2314 = vadd.f32 0.0, %v2313
      %v2315 = vpop.f32.mrf.mxu0
      %2316 = vmatprep.mubr.f32.mxu0 %v1951
      %2317 = vmatmul.mubr.f32.gmra.mxu0 %v1841
      %v2318 = vpop.f32.mrf.mxu0
      %v2319 = vadd.f32 0.0, %v2318
      %v2320 = vpop.f32.mrf.mxu0
      %2321 = vmatprep.mubr.f32.mxu0 %v1953
      %2322 = vmatmul.mubr.f32.gmra.mxu0 %v1842
      %v2323 = vpop.f32.mrf.mxu0
      %v2324 = vadd.f32 0.0, %v2323
      %v2325 = vpop.f32.mrf.mxu0
      %2326 = vmatprep.mubr.f32.mxu0 %v1956
      %2327 = vmatmul.mubr.f32.gmra.mxu0 %v1844
      %v2328 = vpop.f32.mrf.mxu0
      %v2329 = vadd.f32 0.0, %v2328
      %v2330 = vpop.f32.mrf.mxu0
      %2331 = vmatprep.mubr.f32.mxu0 %v1958
      %2332 = vmatmul.mubr.f32.gmra.mxu0 %v1845
      %v2333 = vpop.f32.mrf.mxu0
      %v2334 = vadd.f32 0.0, %v2333
      %v2335 = vpop.f32.mrf.mxu0
      %2336 = vmatprep.mubr.f32.mxu0 %v1961
      %2337 = vmatmul.mubr.f32.gmra.mxu0 %v1847
      %v2338 = vpop.f32.mrf.mxu0
      %v2339 = vadd.f32 0.0, %v2338
      %v2340 = vpop.f32.mrf.mxu0
      %2341 = vmatprep.mubr.f32.mxu0 %v1963
      %2342 = vmatmul.mubr.f32.gmra.mxu0 %v1848
      %v2343 = vpop.f32.mrf.mxu0
      %v2344 = vadd.f32 0.0, %v2343
      %v2345 = vpop.f32.mrf.mxu0
      %2346 = vmatprep.mubr.f32.mxu0 %v1966
      %2347 = vmatmul.mubr.f32.gmra.mxu0 %v1850
      %v2348 = vpop.f32.mrf.mxu0
      %v2349 = vadd.f32 0.0, %v2348
      %v2350 = vpop.f32.mrf.mxu0
      %2351 = vmatprep.mubr.f32.mxu0 %v1968
      %2352 = vmatmul.mubr.f32.gmra.mxu0 %v1851
      %v2353 = vpop.f32.mrf.mxu0
      %v2354 = vadd.f32 0.0, %v2353
      %v2355 = vpop.f32.mrf.mxu0
      %2356 = vmatprep.mubr.f32.mxu0 %v1971
      %2357 = vmatmul.mubr.f32.gmra.mxu0 %v1853
      %v2358 = vpop.f32.mrf.mxu0
      %v2359 = vadd.f32 0.0, %v2358
      %v2360 = vpop.f32.mrf.mxu0
      %2361 = vmatprep.mubr.f32.mxu0 %v1973
      %2362 = vmatmul.mubr.f32.gmra.mxu0 %v1854
      %v2363 = vpop.f32.mrf.mxu0
      %v2364 = vadd.f32 0.0, %v2363
      %v2365 = vpop.f32.mrf.mxu0
      %2366 = vmatprep.mubr.f32.mxu0 %v1976
      %2367 = vmatmul.mubr.f32.gmra.mxu0 %v1856
      %v2368 = vpop.f32.mrf.mxu0
      %v2369 = vadd.f32 0.0, %v2368
      %v2370 = vpop.f32.mrf.mxu0
      %2371 = vmatprep.mubr.f32.mxu0 %v1978
      %2372 = vmatmul.mubr.f32.gmra.mxu0 %v1857
      %v2373 = vpop.f32.mrf.mxu0
      %v2374 = vadd.f32 0.0, %v2373
      %v2375 = vpop.f32.mrf.mxu0
      %2376 = vmatprep.mubr.f32.mxu0 %v1981
      %2377 = vmatmul.mubr.f32.gmra.mxu0 %v1859
      %v2378 = vpop.f32.mrf.mxu0
      %v2379 = vadd.f32 0.0, %v2378
      %v2380 = vpop.f32.mrf.mxu0
      %2381 = vmatprep.mubr.f32.mxu0 %v1983
      %2382 = vmatmul.mubr.f32.gmra.mxu0 %v1860
      %v2383 = vpop.f32.mrf.mxu0
      %v2384 = vadd.f32 0.0, %v2383
      %v2385 = vpop.f32.mrf.mxu0
      %2386 = vmatprep.mubr.f32.mxu0 %v1986
      %2387 = vmatmul.mubr.f32.gmra.mxu0 %v1862
      %v2388 = vpop.f32.mrf.mxu0
      %v2389 = vadd.f32 0.0, %v2388
      %v2390 = vpop.f32.mrf.mxu0
      %2391 = vmatprep.mubr.f32.mxu0 %v1988
      %2392 = vmatmul.mubr.f32.gmra.mxu0 %v1863
      %v2393 = vpop.f32.mrf.mxu0
      %v2394 = vadd.f32 0.0, %v2393
      %v2395 = vpop.f32.mrf.mxu0
      %2396 = vmatprep.mubr.f32.mxu0 %v1991
      %2397 = vmatmul.mubr.f32.gmra.mxu0 %v1865
      %v2398 = vpop.f32.mrf.mxu0
      %v2399 = vadd.f32 0.0, %v2398
      %v2400 = vpop.f32.mrf.mxu0
      %2401 = vmatprep.mubr.f32.mxu0 %v1993
      %2402 = vmatmul.mubr.f32.gmra.mxu0 %v1866
      %v2403 = vpop.f32.mrf.mxu0
      %v2404 = vadd.f32 0.0, %v2403
      %v2405 = vpop.f32.mrf.mxu0
      %2406 = vmatprep.mubr.f32.mxu0 %v1996
      %2407 = vmatmul.mubr.f32.gmra.mxu0 %v1868
      %v2408 = vpop.f32.mrf.mxu0
      %v2409 = vadd.f32 0.0, %v2408
      %v2410 = vpop.f32.mrf.mxu0
      %2411 = vmatprep.mubr.f32.mxu0 %v1998
      %2412 = vmatmul.mubr.f32.gmra.mxu0 %v1869
      %v2413 = vpop.f32.mrf.mxu0
      %v2414 = vadd.f32 0.0, %v2413
      %v2415 = vpop.f32.mrf.mxu0
      %2416 = vdwg.mxu0
      %2417 = vmatprep.subr.mxu0 0.0
      %2418 = vmatpush1.msra.mxu0 %v2191
      %2419 = vmatprep.subr.mxu0 0.0
      %2420 = vmatpush1.msra.mxu0 %v2190
      %2421 = vmatprep.subr.mxu0 0.0
      %2422 = vmatpush1.msra.mxu0 %v2189
      %2423 = vmatprep.subr.mxu0 0.0
      %2424 = vmatpush1.msra.mxu0 %v2188
      %2425 = vmatprep.subr.mxu0 0.0
      %2426 = vmatpush1.msra.mxu0 %v2187
      %2427 = vmatprep.subr.mxu0 0.0
      %2428 = vmatpush1.msra.mxu0 %v2186
      %2429 = vmatprep.subr.mxu0 0.0
      %2430 = vmatpush1.msra.mxu0 %v2185
      %2431 = vmatprep.subr.mxu0 0.0
      %2432 = vmatpush1.msra.mxu0 %v2184
      %2433 = vmatprep.subr.mxu0 0.0
      %2434 = vmatpush1.msra.mxu0 %v2183
      %2435 = vmatprep.subr.mxu0 0.0
      %2436 = vmatpush1.msra.mxu0 %v2182
      %2437 = vmatprep.subr.mxu0 0.0
      %2438 = vmatpush1.msra.mxu0 %v2181
      %2439 = vmatprep.subr.mxu0 0.0
      %2440 = vmatpush1.msra.mxu0 %v2180
      %2441 = vmatprep.subr.mxu0 0.0
      %2442 = vmatpush1.msra.mxu0 %v2179
      %2443 = vmatprep.subr.mxu0 0.0
      %2444 = vmatpush1.msra.mxu0 %v2178
      %2445 = vmatprep.subr.mxu0 0.0
      %2446 = vmatpush1.msra.mxu0 %v2177
      %2447 = vmatprep.subr.mxu0 0.0
      %2448 = vmatpush1.msra.mxu0 %v2176
      %2449 = vmatprep.subr.mxu0 0.0
      %2450 = vmatpush2.msra.mxu0 0.0
      %2451 = vmatprep.subr.mxu0 0.0
      %2452 = vmatpush2.msra.mxu0 0.0
      %2453 = vmatprep.subr.mxu0 0.0
      %2454 = vmatpush2.msra.mxu0 0.0
      %2455 = vmatprep.subr.mxu0 0.0
      %2456 = vmatpush2.msra.mxu0 0.0
      %2457 = vmatprep.subr.mxu0 0.0
      %2458 = vmatpush2.msra.mxu0 0.0
      %2459 = vmatprep.subr.mxu0 0.0
      %2460 = vmatpush2.msra.mxu0 0.0
      %2461 = vmatprep.subr.mxu0 0.0
      %2462 = vmatpush2.msra.mxu0 0.0
      %2463 = vmatprep.subr.mxu0 0.0
      %2464 = vmatpush2.msra.mxu0 0.0
      %2465 = vmatprep.subr.mxu0 0.0
      %2466 = vmatpush2.msra.mxu0 0.0
      %2467 = vmatprep.subr.mxu0 0.0
      %2468 = vmatpush2.msra.mxu0 0.0
      %2469 = vmatprep.subr.mxu0 0.0
      %2470 = vmatpush2.msra.mxu0 0.0
      %2471 = vmatprep.subr.mxu0 0.0
      %2472 = vmatpush2.msra.mxu0 0.0
      %2473 = vmatprep.subr.mxu0 0.0
      %2474 = vmatpush2.msra.mxu0 0.0
      %2475 = vmatprep.subr.mxu0 0.0
      %2476 = vmatpush2.msra.mxu0 0.0
      %2477 = vmatprep.subr.mxu0 0.0
      %2478 = vmatpush2.msra.mxu0 0.0
      %2479 = vmatprep.subr.mxu0 0.0
      %2480 = vmatpush2.msra.mxu0 0.0
      %2481 = vmatprep.mubr.f32.mxu0 0.0
      %2482 = vmatmul.mubr.f32.gmra.mxu0 %v2033
      %v2483 = vpop.f32.mrf.mxu0
      %v2484 = vadd.f32 %v2259, %v2483
      %v2485 = vpop.f32.mrf.mxu0
      %2486 = vmatprep.mubr.f32.mxu0 0.0
      %2487 = vmatmul.mubr.f32.gmra.mxu0 %v2035
      %v2488 = vpop.f32.mrf.mxu0
      %v2489 = vadd.f32 %v2264, %v2488
      %v2490 = vpop.f32.mrf.mxu0
      %2491 = vmatprep.mubr.f32.mxu0 0.0
      %2492 = vmatmul.mubr.f32.gmra.mxu0 %v2038
      %v2493 = vpop.f32.mrf.mxu0
      %v2494 = vadd.f32 %v2269, %v2493
      %v2495 = vpop.f32.mrf.mxu0
      %2496 = vmatprep.mubr.f32.mxu0 0.0
      %2497 = vmatmul.mubr.f32.gmra.mxu0 %v2040
      %v2498 = vpop.f32.mrf.mxu0
      %v2499 = vadd.f32 %v2274, %v2498
      %v2500 = vpop.f32.mrf.mxu0
      %2501 = vmatprep.mubr.f32.mxu0 0.0
      %2502 = vmatmul.mubr.f32.gmra.mxu0 %v2043
      %v2503 = vpop.f32.mrf.mxu0
      %v2504 = vadd.f32 %v2279, %v2503
      %v2505 = vpop.f32.mrf.mxu0
      %2506 = vmatprep.mubr.f32.mxu0 0.0
      %2507 = vmatmul.mubr.f32.gmra.mxu0 %v2045
      %v2508 = vpop.f32.mrf.mxu0
      %v2509 = vadd.f32 %v2284, %v2508
      %v2510 = vpop.f32.mrf.mxu0
      %2511 = vmatprep.mubr.f32.mxu0 0.0
      %2512 = vmatmul.mubr.f32.gmra.mxu0 %v2048
      %v2513 = vpop.f32.mrf.mxu0
      %v2514 = vadd.f32 %v2289, %v2513
      %v2515 = vpop.f32.mrf.mxu0
      %2516 = vmatprep.mubr.f32.mxu0 0.0
      %2517 = vmatmul.mubr.f32.gmra.mxu0 %v2050
      %v2518 = vpop.f32.mrf.mxu0
      %v2519 = vadd.f32 %v2294, %v2518
      %v2520 = vpop.f32.mrf.mxu0
      %2521 = vmatprep.mubr.f32.mxu0 0.0
      %2522 = vmatmul.mubr.f32.gmra.mxu0 %v2053
      %v2523 = vpop.f32.mrf.mxu0
      %v2524 = vadd.f32 %v2299, %v2523
      %v2525 = vpop.f32.mrf.mxu0
      %2526 = vmatprep.mubr.f32.mxu0 0.0
      %2527 = vmatmul.mubr.f32.gmra.mxu0 %v2055
      %v2528 = vpop.f32.mrf.mxu0
      %v2529 = vadd.f32 %v2304, %v2528
      %v2530 = vpop.f32.mrf.mxu0
      %2531 = vmatprep.mubr.f32.mxu0 0.0
      %2532 = vmatmul.mubr.f32.gmra.mxu0 %v2058
      %v2533 = vpop.f32.mrf.mxu0
      %v2534 = vadd.f32 %v2309, %v2533
      %v2535 = vpop.f32.mrf.mxu0
      %2536 = vmatprep.mubr.f32.mxu0 0.0
      %2537 = vmatmul.mubr.f32.gmra.mxu0 %v2060
      %v2538 = vpop.f32.mrf.mxu0
      %v2539 = vadd.f32 %v2314, %v2538
      %v2540 = vpop.f32.mrf.mxu0
      %2541 = vmatprep.mubr.f32.mxu0 0.0
      %2542 = vmatmul.mubr.f32.gmra.mxu0 %v2063
      %v2543 = vpop.f32.mrf.mxu0
      %v2544 = vadd.f32 %v2319, %v2543
      %v2545 = vpop.f32.mrf.mxu0
      %2546 = vmatprep.mubr.f32.mxu0 0.0
      %2547 = vmatmul.mubr.f32.gmra.mxu0 %v2065
      %v2548 = vpop.f32.mrf.mxu0
      %v2549 = vadd.f32 %v2324, %v2548
      %v2550 = vpop.f32.mrf.mxu0
      %2551 = vmatprep.mubr.f32.mxu0 0.0
      %2552 = vmatmul.mubr.f32.gmra.mxu0 %v2068
      %v2553 = vpop.f32.mrf.mxu0
      %v2554 = vadd.f32 %v2329, %v2553
      %v2555 = vpop.f32.mrf.mxu0
      %2556 = vmatprep.mubr.f32.mxu0 0.0
      %2557 = vmatmul.mubr.f32.gmra.mxu0 %v2070
      %v2558 = vpop.f32.mrf.mxu0
      %v2559 = vadd.f32 %v2334, %v2558
      %v2560 = vpop.f32.mrf.mxu0
      %2561 = vmatprep.mubr.f32.mxu0 0.0
      %2562 = vmatmul.mubr.f32.gmra.mxu0 %v2073
      %v2563 = vpop.f32.mrf.mxu0
      %v2564 = vadd.f32 %v2339, %v2563
      %v2565 = vpop.f32.mrf.mxu0
      %2566 = vmatprep.mubr.f32.mxu0 0.0
      %2567 = vmatmul.mubr.f32.gmra.mxu0 %v2075
      %v2568 = vpop.f32.mrf.mxu0
      %v2569 = vadd.f32 %v2344, %v2568
      %v2570 = vpop.f32.mrf.mxu0
      %2571 = vmatprep.mubr.f32.mxu0 0.0
      %2572 = vmatmul.mubr.f32.gmra.mxu0 %v2078
      %v2573 = vpop.f32.mrf.mxu0
      %v2574 = vadd.f32 %v2349, %v2573
      %v2575 = vpop.f32.mrf.mxu0
      %2576 = vmatprep.mubr.f32.mxu0 0.0
      %2577 = vmatmul.mubr.f32.gmra.mxu0 %v2080
      %v2578 = vpop.f32.mrf.mxu0
      %v2579 = vadd.f32 %v2354, %v2578
      %v2580 = vpop.f32.mrf.mxu0
      %2581 = vmatprep.mubr.f32.mxu0 0.0
      %2582 = vmatmul.mubr.f32.gmra.mxu0 %v2083
      %v2583 = vpop.f32.mrf.mxu0
      %v2584 = vadd.f32 %v2359, %v2583
      %v2585 = vpop.f32.mrf.mxu0
      %2586 = vmatprep.mubr.f32.mxu0 0.0
      %2587 = vmatmul.mubr.f32.gmra.mxu0 %v2085
      %v2588 = vpop.f32.mrf.mxu0
      %v2589 = vadd.f32 %v2364, %v2588
      %v2590 = vpop.f32.mrf.mxu0
      %2591 = vmatprep.mubr.f32.mxu0 0.0
      %2592 = vmatmul.mubr.f32.gmra.mxu0 %v2088
      %v2593 = vpop.f32.mrf.mxu0
      %v2594 = vadd.f32 %v2369, %v2593
      %v2595 = vpop.f32.mrf.mxu0
      %2596 = vmatprep.mubr.f32.mxu0 0.0
      %2597 = vmatmul.mubr.f32.gmra.mxu0 %v2090
      %v2598 = vpop.f32.mrf.mxu0
      %v2599 = vadd.f32 %v2374, %v2598
      %v2600 = vpop.f32.mrf.mxu0
      %2601 = vmatprep.mubr.f32.mxu0 0.0
      %2602 = vmatmul.mubr.f32.gmra.mxu0 %v2093
      %v2603 = vpop.f32.mrf.mxu0
      %v2604 = vadd.f32 %v2379, %v2603
      %v2605 = vpop.f32.mrf.mxu0
      %2606 = vmatprep.mubr.f32.mxu0 0.0
      %2607 = vmatmul.mubr.f32.gmra.mxu0 %v2095
      %v2608 = vpop.f32.mrf.mxu0
      %v2609 = vadd.f32 %v2384, %v2608
      %v2610 = vpop.f32.mrf.mxu0
      %2611 = vmatprep.mubr.f32.mxu0 0.0
      %2612 = vmatmul.mubr.f32.gmra.mxu0 %v2098
      %v2613 = vpop.f32.mrf.mxu0
      %v2614 = vadd.f32 %v2389, %v2613
      %v2615 = vpop.f32.mrf.mxu0
      %2616 = vmatprep.mubr.f32.mxu0 0.0
      %2617 = vmatmul.mubr.f32.gmra.mxu0 %v2100
      %v2618 = vpop.f32.mrf.mxu0
      %v2619 = vadd.f32 %v2394, %v2618
      %v2620 = vpop.f32.mrf.mxu0
      %2621 = vmatprep.mubr.f32.mxu0 0.0
      %2622 = vmatmul.mubr.f32.gmra.mxu0 %v2103
      %v2623 = vpop.f32.mrf.mxu0
      %v2624 = vadd.f32 %v2399, %v2623
      %v2625 = vpop.f32.mrf.mxu0
      %2626 = vmatprep.mubr.f32.mxu0 0.0
      %2627 = vmatmul.mubr.f32.gmra.mxu0 %v2105
      %v2628 = vpop.f32.mrf.mxu0
      %v2629 = vadd.f32 %v2404, %v2628
      %v2630 = vpop.f32.mrf.mxu0
      %2631 = vmatprep.mubr.f32.mxu0 0.0
      %2632 = vmatmul.mubr.f32.gmra.mxu0 %v2108
      %v2633 = vpop.f32.mrf.mxu0
      %v2634 = vadd.f32 %v2409, %v2633
      %v2635 = vpop.f32.mrf.mxu0
      %2636 = vmatprep.mubr.f32.mxu0 0.0
      %2637 = vmatmul.mubr.f32.gmra.mxu0 %v2110
      %v2638 = vpop.f32.mrf.mxu0
      %v2639 = vadd.f32 %v2414, %v2638
      %v2640 = vpop.f32.mrf.mxu0
      %2641 = vdwg.mxu0
      %v2642 = vadd.f32 %v1664, %v2484
      %v2643 = vadd.f32 %v1669, %v2489
      %v2644 = vadd.f32 %v1674, %v2494
      %v2645 = vadd.f32 %v1679, %v2499
      %v2646 = vadd.f32 %v1684, %v2504
      %v2647 = vadd.f32 %v1689, %v2509
      %v2648 = vadd.f32 %v1694, %v2514
      %v2649 = vadd.f32 %v1699, %v2519
      %v2650 = vadd.f32 %v1704, %v2524
      %v2651 = vadd.f32 %v1709, %v2529
      %v2652 = vadd.f32 %v1714, %v2534
      %v2653 = vadd.f32 %v1719, %v2539
      %v2654 = vadd.f32 %v1724, %v2544
      %v2655 = vadd.f32 %v1729, %v2549
      %v2656 = vadd.f32 %v1734, %v2554
      %v2657 = vadd.f32 %v1739, %v2559
      %v2658 = vadd.f32 %v1744, %v2564
      %v2659 = vadd.f32 %v1749, %v2569
      %v2660 = vadd.f32 %v1754, %v2574
      %v2661 = vadd.f32 %v1759, %v2579
      %v2662 = vadd.f32 %v1764, %v2584
      %v2663 = vadd.f32 %v1769, %v2589
      %v2664 = vadd.f32 %v1774, %v2594
      %v2665 = vadd.f32 %v1779, %v2599
      %v2666 = vadd.f32 %v1784, %v2604
      %v2667 = vadd.f32 %v1789, %v2609
      %v2668 = vadd.f32 %v1794, %v2614
      %v2669 = vadd.f32 %v1799, %v2619
      %v2670 = vadd.f32 %v1804, %v2624
      %v2671 = vadd.f32 %v1809, %v2629
      %v2672 = vadd.f32 %v1814, %v2634
      %v2673 = vadd.f32 %v1819, %v2639
      %2674 = vst [vmem:[%s177] sm:$0xff] %v2642
      %2675 = vst [vmem:[%s177 + $0x8] sm:$0xff] %v2643
      %2676 = vst [vmem:[%s177 + $0x10] sm:$0xff] %v2644
      %2677 = vst [vmem:[%s177 + $0x18] sm:$0xff] %v2645
      %2678 = vst [vmem:[%s177 + $0x20] sm:$0xff] %v2646
      %2679 = vst [vmem:[%s177 + $0x28] sm:$0xff] %v2647
      %2680 = vst [vmem:[%s177 + $0x30] sm:$0xff] %v2648
      %2681 = vst [vmem:[%s177 + $0x38] sm:$0xff] %v2649
      %2682 = vst [vmem:[%s177 + $0x40] sm:$0xff] %v2650
      %2683 = vst [vmem:[%s177 + $0x48] sm:$0xff] %v2651
      %2684 = vst [vmem:[%s177 + $0x50] sm:$0xff] %v2652
      %2685 = vst [vmem:[%s177 + $0x58] sm:$0xff] %v2653
      %2686 = vst [vmem:[%s177 + $0x60] sm:$0xff] %v2654
      %2687 = vst [vmem:[%s177 + $0x68] sm:$0xff] %v2655
      %2688 = vst [vmem:[%s177 + $0x70] sm:$0xff] %v2656
      %2689 = vst [vmem:[%s177 + $0x78] sm:$0xff] %v2657
      %2690 = vst [vmem:[%s177 + $0x80] sm:$0xff] %v2658
      %2691 = vst [vmem:[%s177 + $0x88] sm:$0xff] %v2659
      %2692 = vst [vmem:[%s177 + $0x90] sm:$0xff] %v2660
      %2693 = vst [vmem:[%s177 + $0x98] sm:$0xff] %v2661
      %2694 = vst [vmem:[%s177 + $0xa0] sm:$0xff] %v2662
      %2695 = vst [vmem:[%s177 + $0xa8] sm:$0xff] %v2663
      %2696 = vst [vmem:[%s177 + $0xb0] sm:$0xff] %v2664
      %2697 = vst [vmem:[%s177 + $0xb8] sm:$0xff] %v2665
      %2698 = vst [vmem:[%s177 + $0xc0] sm:$0xff] %v2666
      %2699 = vst [vmem:[%s177 + $0xc8] sm:$0xff] %v2667
      %2700 = vst [vmem:[%s177 + $0xd0] sm:$0xff] %v2668
      %2701 = vst [vmem:[%s177 + $0xd8] sm:$0xff] %v2669
      %2702 = vst [vmem:[%s177 + $0xe0] sm:$0xff] %v2670
      %2703 = vst [vmem:[%s177 + $0xe8] sm:$0xff] %v2671
      %2704 = vst [vmem:[%s177 + $0xf0] sm:$0xff] %v2672
      %2705 = vst [vmem:[%s177 + $0xf8] sm:$0xff] %v2673
      %v2706 = vadd.f32 %v2642, %v2643
      %v2707 = vadd.f32 %v2706, %v2644
      %v2708 = vadd.f32 %v2707, %v2645
      %v2709 = vadd.f32 %v2708, %v2646
      %v2710 = vadd.f32 %v2709, %v2647
      %v2711 = vadd.f32 %v2710, %v2648
      %v2712 = vadd.f32 %v2711, %v2649
      %v2713 = vadd.f32 %v2712, %v2650
      %v2714 = vadd.f32 %v2713, %v2651
      %v2715 = vadd.f32 %v2714, %v2652
      %v2716 = vadd.f32 %v2715, %v2653
      %v2717 = vadd.f32 %v2716, %v2654
      %v2718 = vadd.f32 %v2717, %v2655
      %v2719 = vadd.f32 %v2718, %v2656
      %v2720 = vadd.f32 %v2719, %v2657
      %v2721 = vadd.f32 %v2720, %v2658
      %v2722 = vadd.f32 %v2721, %v2659
      %v2723 = vadd.f32 %v2722, %v2660
      %v2724 = vadd.f32 %v2723, %v2661
      %v2725 = vadd.f32 %v2724, %v2662
      %v2726 = vadd.f32 %v2725, %v2663
      %v2727 = vadd.f32 %v2726, %v2664
      %v2728 = vadd.f32 %v2727, %v2665
      %v2729 = vadd.f32 %v2728, %v2666
      %v2730 = vadd.f32 %v2729, %v2667
      %v2731 = vadd.f32 %v2730, %v2668
      %v2732 = vadd.f32 %v2731, %v2669
      %v2733 = vadd.f32 %v2732, %v2670
      %v2734 = vadd.f32 %v2733, %v2671
      %v2735 = vadd.f32 %v2734, %v2672
      %v2736 = vadd.f32 %v2735, %v2673
      %v2737 = vrot.slane %v2736, 4
      %v2738 = vadd.f32 %v2736, %v2737
      %v2739 = vrot.slane %v2738, 2
      %v2740 = vadd.f32 %v2738, %v2739
      %v2741 = vrot.slane %v2740, 1
      %v2742 = vadd.f32 %v2740, %v2741
      %v2743 = vmul.f32 %v2642, %v2642
      %v2744 = vmul.f32 %v2643, %v2643
      %v2745 = vmul.f32 %v2644, %v2644
      %v2746 = vmul.f32 %v2645, %v2645
      %v2747 = vmul.f32 %v2646, %v2646
      %v2748 = vmul.f32 %v2647, %v2647
      %v2749 = vmul.f32 %v2648, %v2648
      %v2750 = vmul.f32 %v2649, %v2649
      %v2751 = vmul.f32 %v2650, %v2650
      %v2752 = vmul.f32 %v2651, %v2651
      %v2753 = vmul.f32 %v2652, %v2652
      %v2754 = vmul.f32 %v2653, %v2653
      %v2755 = vmul.f32 %v2654, %v2654
      %v2756 = vmul.f32 %v2655, %v2655
      %v2757 = vmul.f32 %v2656, %v2656
      %v2758 = vmul.f32 %v2657, %v2657
      %v2759 = vmul.f32 %v2658, %v2658
      %v2760 = vmul.f32 %v2659, %v2659
      %v2761 = vmul.f32 %v2660, %v2660
      %v2762 = vmul.f32 %v2661, %v2661
      %v2763 = vmul.f32 %v2662, %v2662
      %v2764 = vmul.f32 %v2663, %v2663
      %v2765 = vmul.f32 %v2664, %v2664
      %v2766 = vmul.f32 %v2665, %v2665
      %v2767 = vmul.f32 %v2666, %v2666
      %v2768 = vmul.f32 %v2667, %v2667
      %v2769 = vmul.f32 %v2668, %v2668
      %v2770 = vmul.f32 %v2669, %v2669
      %v2771 = vmul.f32 %v2670, %v2670
      %v2772 = vmul.f32 %v2671, %v2671
      %v2773 = vmul.f32 %v2672, %v2672
      %v2774 = vmul.f32 %v2673, %v2673
      %v2775 = vadd.f32 %v2743, %v2744
      %v2776 = vadd.f32 %v2775, %v2745
      %v2777 = vadd.f32 %v2776, %v2746
      %v2778 = vadd.f32 %v2777, %v2747
      %v2779 = vadd.f32 %v2778, %v2748
      %v2780 = vadd.f32 %v2779, %v2749
      %v2781 = vadd.f32 %v2780, %v2750
      %v2782 = vadd.f32 %v2781, %v2751
      %v2783 = vadd.f32 %v2782, %v2752
      %v2784 = vadd.f32 %v2783, %v2753
      %v2785 = vadd.f32 %v2784, %v2754
      %v2786 = vadd.f32 %v2785, %v2755
      %v2787 = vadd.f32 %v2786, %v2756
      %v2788 = vadd.f32 %v2787, %v2757
      %v2789 = vadd.f32 %v2788, %v2758
      %v2790 = vadd.f32 %v2789, %v2759
      %v2791 = vadd.f32 %v2790, %v2760
      %v2792 = vadd.f32 %v2791, %v2761
      %v2793 = vadd.f32 %v2792, %v2762
      %v2794 = vadd.f32 %v2793, %v2763
      %v2795 = vadd.f32 %v2794, %v2764
      %v2796 = vadd.f32 %v2795, %v2765
      %v2797 = vadd.f32 %v2796, %v2766
      %v2798 = vadd.f32 %v2797, %v2767
      %v2799 = vadd.f32 %v2798, %v2768
      %v2800 = vadd.f32 %v2799, %v2769
      %v2801 = vadd.f32 %v2800, %v2770
      %v2802 = vadd.f32 %v2801, %v2771
      %v2803 = vadd.f32 %v2802, %v2772
      %v2804 = vadd.f32 %v2803, %v2773
      %v2805 = vadd.f32 %v2804, %v2774
      %v2806 = vrot.slane %v2805, 4
      %v2807 = vadd.f32 %v2805, %v2806
      %v2808 = vrot.slane %v2807, 2
      %v2809 = vadd.f32 %v2807, %v2808
      %v2810 = vrot.slane %v2809, 1
      %v2811 = vadd.f32 %v2809, %v2810
      %vm2812 = vcmask 1040384
      %v2813 = vsel %vm2812, %v2742, %v2811
      %2814 = vst [vmem:[%s181] sm:$0x3] %v2813
      %p2815 = scmp.lt.s32.totalorder %s15, 1
      %s2816 = scalar_select %p2815, %s15, 1
      %s2817 = smul.addr %s2816, 32
      %s2818 = smul.addr %s2817, 8
      %s2819 = scalar_lea.vmem %s2, %s2818
      %p2820 = scmp.lt.s32.totalorder %s15, 1
      %s2821 = scalar_select %p2820, %s15, 1
      %s2822 = smul.addr %s2821, 2
      %s2823 = scalar_lea.vmem %s3, %s2822
      // Predicated region
      $region29: #{basic_block_pallas.3} parent=27 // pred_check
        %p2824 = pneg %p80
      $region30: #{basic_block_pallas.3} parent=27 // pred_check_branch
        %2826 = sbr.rel (%p2824) target = $region32
      $region31: #{basic_block_pallas.3} parent=27 // pred_region
        _
      $region32: #{basic_block_pallas.3} parent=27 // pred_fallthru
        _
      // Predicated region
      $region33: #{basic_block_pallas.3} parent=27 // pred_check
        %p2827 = pneg %p106
      $region34: #{basic_block_pallas.3} parent=27 // pred_check_branch
        %2829 = sbr.rel (%p2827) target = $region36
      $region35: #{basic_block_pallas.3} parent=27 // pred_region
        _
      $region36: #{basic_block_pallas.3} parent=27 // pred_fallthru
        _
    $region28: #{basic_block_pallas.3} parent=5 // pred_fallthru
      _
    %p2830 = scmp.le.s32.totalorder 2, %s10
    // Predicated region
    $region37: #{basic_block_pallas.3} parent=5 // pred_check
      %p2831 = pneg %p2830
    $region38: #{basic_block_pallas.3} parent=5 // pred_check_branch
      %2833 = sbr.rel (%p2831) target = $region40
    $region39: #{basic_block_pallas.3} parent=5 // pred_region
      %s2834 = ssub.s32 %s10, 2
      // Predicated region
      $region41: #{basic_block_pallas.3} parent=39 // pred_check
        %p2835 = pneg %p86
      $region42: #{basic_block_pallas.3} parent=39 // pred_check_branch
        %2837 = sbr.rel (%p2835) target = $region44
      $region43: #{basic_block_pallas.3} parent=39 // pred_region
        %p2838 = scmp.lt.s32.totalorder %s16, 1
        %s2839 = scalar_select %p2838, %s16, 1
        %s2840 = smul.addr %s2839, 32
        %s2841 = smul.addr %s2840, 8
        %s2842 = scalar_lea.vmem %s2, %s2841
      $region44: #{basic_block_pallas.3} parent=39 // pred_fallthru
        _
      // Predicated region
      $region45: #{basic_block_pallas.3} parent=39 // pred_check
        %p2843 = pneg %p112
      $region46: #{basic_block_pallas.3} parent=39 // pred_check_branch
        %2845 = sbr.rel (%p2843) target = $region48
      $region47: #{basic_block_pallas.3} parent=39 // pred_region
        %p2846 = scmp.lt.s32.totalorder %s16, 1
        %s2847 = scalar_select %p2846, %s16, 1
        %s2848 = smul.addr %s2847, 2
        %s2849 = scalar_lea.vmem %s3, %s2848
      $region48: #{basic_block_pallas.3} parent=39 // pred_fallthru
        _
    $region40: #{basic_block_pallas.3} parent=5 // pred_fallthru
      _
  $region6: #{basic_block_pallas.3} parent=0 // loop_footer
    %s14 = sadd.s32 1, %s10
  $region7: #{basic_block_pallas.3} parent=0 // loop_footer_branch
    %9 = sbr.rel target = $region3
  $region8: #{basic_block_pallas.3} parent=0 // loop_exit
    _

// kernel: basic_block_pallas.4
$region0: #{basic_block_pallas.4}
  #allocation0 [shape = 'u32[]', space=smem, size = 0x4, offset = 0x4, fixed_abs, tag = 'smem constant byte address 0x4 - core index']
  #allocation1 [shape = 'u32[144,128]{1,0:T(1,128)}', space=vmem, size = 0x12000, scoped, tag = 'internal scratch']
  #allocation2 [shape = 'f32[1,18,18,128]{3,2,1,0:T(8,128)}', space=vmem, size = 0x36000, scoped, tag = 'scratch operand']
  %s0 = inlined_call_operand.vmem [shape: f32[2,16,16,128], index: 0, kind: input, shape index: {}]
  %s1 = inlined_call_operand.vmem [shape: f32[1,128], index: 1, kind: input, shape index: {}]
  %s2 = inlined_call_operand.vmem [shape: f32[1,128], index: 2, kind: input, shape index: {}]
  %s3 = inlined_call_operand.vmem [shape: f32[3,384,128], index: 3, kind: input, shape index: {}]
  %s4 = inlined_call_operand.vmem [shape: f32[2,16,16,128], index: 4, kind: output, shape index: {0}]
  %s5 = inlined_call_operand.vmem [shape: f32[2,2,128], index: 5, kind: output, shape index: {1}]
  %6 = xla_tuple %s4, %s5
  %s7 = sld [smem:[#allocation0]]
  $region57: #{basic_block_pallas.4} parent=0
    _
  %s9 = ssub.s32 1, %s7
  %s10 = scalar_select 0, %s9, %s7
  loop: start=0, step=1, limit=4
  $region2: #{basic_block_pallas.4} parent=0 // loop_pre_header
    _
  $region3: #{basic_block_pallas.4} parent=0 // loop_header
    %s12 = sphi 0, %s16
    %p13 = scmp.ge.s32.totalorder %s12, 4
    %s22 = sphi 0, %s24
    %s25 = sphi 0, %s22
    %s26 = sphi 0, %s25
    %s42 = sphi 0, %s26
    %s46 = sphi 0, %s46
    %s48 = sphi 0, %s46
    %s49 = sphi 0, %s48
    %s63 = sphi 0, %s49
    %s67 = sphi 0, %s67
    %s69 = sphi 0, %s67
    %s70 = sphi 0, %s69
    %s84 = sphi 0, %s70
    %s88 = sphi 0, %s88
    %s90 = sphi 0, %s88
    %s91 = sphi 0, %s90
    %s105 = sphi 0, %s91
    %s111 = sphi 0, %s113
    %s114 = sphi 0, %s111
    %s115 = sphi 0, %s114
    %s131 = sphi 0, %s115
    %s137 = sphi 0, %s139
    %s140 = sphi 0, %s137
    %s141 = sphi 0, %s140
    %s157 = sphi 0, %s141
  $region4: #{basic_block_pallas.4} parent=0 // loop_header_branch
    %15 = sbr.rel (%p13) target = $region8
  $region5: #{basic_block_pallas.4} parent=0 // loop_body
    %s17 = ssub.s32 %s12, 1
    %s18 = ssub.s32 %s12, 2
    %s19 = sadd.s32 %s12, 1
    %s20 = ssub.s32 %s12, %s19
    %p21 = scmp.eq.s32.totalorder %s20, 0
    %s23 = sadd.s32 %s22, 1
    %s24 = scalar_select %p21, %s22, %s23
    %p27 = pneg %p21
    %p28 = scmp.eq.s32.totalorder %s12, 1
    %p29 = por %p27, %p28
    %p30 = scmp.ne.s32.totalorder %s22, %s25
    %p31 = scmp.eq.s32.totalorder %s12, 0
    %p32 = por %p30, %p31
    %p33 = scmp.ne.s32.totalorder %s22, %s25
    %p34 = scmp.eq.s32.totalorder %s17, 1
    %p35 = por %p33, %p34
    %p36 = scmp.ne.s32.totalorder %s25, %s26
    %p37 = scmp.eq.s32.totalorder %s17, 0
    %p38 = por %p36, %p37
    %p39 = scmp.ne.s32.totalorder %s25, %s26
    %p40 = scmp.eq.s32.totalorder %s18, 1
    %p41 = por %p39, %p40
    %p43 = scmp.ne.s32.totalorder %s26, %s42
    %p44 = scmp.eq.s32.totalorder %s18, 0
    %p45 = por %p43, %p44
    %s47 = sadd.s32 %s46, 1
    %p50 = scmp.eq.s32.totalorder %s12, 1
    %p51 = scmp.ne.s32.totalorder %s46, %s48
    %p52 = scmp.eq.s32.totalorder %s12, 0
    %p53 = por %p51, %p52
    %p54 = scmp.ne.s32.totalorder %s46, %s48
    %p55 = scmp.eq.s32.totalorder %s17, 1
    %p56 = por %p54, %p55
    %p57 = scmp.ne.s32.totalorder %s48, %s49
    %p58 = scmp.eq.s32.totalorder %s17, 0
    %p59 = por %p57, %p58
    %p60 = scmp.ne.s32.totalorder %s48, %s49
    %p61 = scmp.eq.s32.totalorder %s18, 1
    %p62 = por %p60, %p61
    %p64 = scmp.ne.s32.totalorder %s49, %s63
    %p65 = scmp.eq.s32.totalorder %s18, 0
    %p66 = por %p64, %p65
    %s68 = sadd.s32 %s67, 1
    %p71 = scmp.eq.s32.totalorder %s12, 1
    %p72 = scmp.ne.s32.totalorder %s67, %s69
    %p73 = scmp.eq.s32.totalorder %s12, 0
    %p74 = por %p72, %p73
    %p75 = scmp.ne.s32.totalorder %s67, %s69
    %p76 = scmp.eq.s32.totalorder %s17, 1
    %p77 = por %p75, %p76
    %p78 = scmp.ne.s32.totalorder %s69, %s70
    %p79 = scmp.eq.s32.totalorder %s17, 0
    %p80 = por %p78, %p79
    %p81 = scmp.ne.s32.totalorder %s69, %s70
    %p82 = scmp.eq.s32.totalorder %s18, 1
    %p83 = por %p81, %p82
    %p85 = scmp.ne.s32.totalorder %s70, %s84
    %p86 = scmp.eq.s32.totalorder %s18, 0
    %p87 = por %p85, %p86
    %s89 = sadd.s32 %s88, 1
    %p92 = scmp.eq.s32.totalorder %s12, 1
    %p93 = scmp.ne.s32.totalorder %s88, %s90
    %p94 = scmp.eq.s32.totalorder %s12, 0
    %p95 = por %p93, %p94
    %p96 = scmp.ne.s32.totalorder %s88, %s90
    %p97 = scmp.eq.s32.totalorder %s17, 1
    %p98 = por %p96, %p97
    %p99 = scmp.ne.s32.totalorder %s90, %s91
    %p100 = scmp.eq.s32.totalorder %s17, 0
    %p101 = por %p99, %p100
    %p102 = scmp.ne.s32.totalorder %s90, %s91
    %p103 = scmp.eq.s32.totalorder %s18, 1
    %p104 = por %p102, %p103
    %p106 = scmp.ne.s32.totalorder %s91, %s105
    %p107 = scmp.eq.s32.totalorder %s18, 0
    %p108 = por %p106, %p107
    %s109 = ssub.s32 %s12, %s19
    %p110 = scmp.eq.s32.totalorder %s109, 0
    %s112 = sadd.s32 %s111, 1
    %s113 = scalar_select %p110, %s111, %s112
    %p116 = pneg %p110
    %p117 = scmp.eq.s32.totalorder %s12, 1
    %p118 = por %p116, %p117
    %p119 = scmp.ne.s32.totalorder %s111, %s114
    %p120 = scmp.eq.s32.totalorder %s12, 0
    %p121 = por %p119, %p120
    %p122 = scmp.ne.s32.totalorder %s111, %s114
    %p123 = scmp.eq.s32.totalorder %s17, 1
    %p124 = por %p122, %p123
    %p125 = scmp.ne.s32.totalorder %s114, %s115
    %p126 = scmp.eq.s32.totalorder %s17, 0
    %p127 = por %p125, %p126
    %p128 = scmp.ne.s32.totalorder %s114, %s115
    %p129 = scmp.eq.s32.totalorder %s18, 1
    %p130 = por %p128, %p129
    %p132 = scmp.ne.s32.totalorder %s115, %s131
    %p133 = scmp.eq.s32.totalorder %s18, 0
    %p134 = por %p132, %p133
    %s135 = ssub.s32 %s12, %s19
    %p136 = scmp.eq.s32.totalorder %s135, 0
    %s138 = sadd.s32 %s137, 1
    %s139 = scalar_select %p136, %s137, %s138
    %p142 = pneg %p136
    %p143 = scmp.eq.s32.totalorder %s12, 1
    %p144 = por %p142, %p143
    %p145 = scmp.ne.s32.totalorder %s137, %s140
    %p146 = scmp.eq.s32.totalorder %s12, 0
    %p147 = por %p145, %p146
    %p148 = scmp.ne.s32.totalorder %s137, %s140
    %p149 = scmp.eq.s32.totalorder %s17, 1
    %p150 = por %p148, %p149
    %p151 = scmp.ne.s32.totalorder %s140, %s141
    %p152 = scmp.eq.s32.totalorder %s17, 0
    %p153 = por %p151, %p152
    %p154 = scmp.ne.s32.totalorder %s140, %s141
    %p155 = scmp.eq.s32.totalorder %s18, 1
    %p156 = por %p154, %p155
    %p158 = scmp.ne.s32.totalorder %s141, %s157
    %p159 = scmp.eq.s32.totalorder %s18, 0
    %p160 = por %p158, %p159
    %p161 = scmp.le.s32.totalorder 1, %s12
    %p162 = scmp.lt.s32.totalorder %s12, 3
    %p163 = pnand %p161, %p162
    %p164 = pneg %p163
    // Predicated region
    $region9: #{basic_block_pallas.4} parent=5 // pred_check
      _
    $region10: #{basic_block_pallas.4} parent=5 // pred_check_branch
      %166 = sbr.rel (%p163) target = $region12
    $region11: #{basic_block_pallas.4} parent=5 // pred_region
      %s167 = ssub.s32 %s12, 1
      // Predicated region
      $region13: #{basic_block_pallas.4} parent=11 // pred_check
        %p168 = pneg %p59
      $region14: #{basic_block_pallas.4} parent=11 // pred_check_branch
        %170 = sbr.rel (%p168) target = $region16
      $region15: #{basic_block_pallas.4} parent=11 // pred_region
        _
      $region16: #{basic_block_pallas.4} parent=11 // pred_fallthru
        _
      // Predicated region
      $region17: #{basic_block_pallas.4} parent=11 // pred_check
        %p171 = pneg %p80
      $region18: #{basic_block_pallas.4} parent=11 // pred_check_branch
        %173 = sbr.rel (%p171) target = $region20
      $region19: #{basic_block_pallas.4} parent=11 // pred_region
        _
      $region20: #{basic_block_pallas.4} parent=11 // pred_fallthru
        _
      // Predicated region
      $region21: #{basic_block_pallas.4} parent=11 // pred_check
        %p174 = pneg %p101
      $region22: #{basic_block_pallas.4} parent=11 // pred_check_branch
        %176 = sbr.rel (%p174) target = $region24
      $region23: #{basic_block_pallas.4} parent=11 // pred_region
        _
      $region24: #{basic_block_pallas.4} parent=11 // pred_fallthru
        _
    $region12: #{basic_block_pallas.4} parent=5 // pred_fallthru
      _
    %p177 = scmp.lt.s32.totalorder %s12, 2
    // Predicated region
    $region25: #{basic_block_pallas.4} parent=5 // pred_check
      %p178 = pneg %p177
    $region26: #{basic_block_pallas.4} parent=5 // pred_check_branch
      %180 = sbr.rel (%p178) target = $region28
    $region27: #{basic_block_pallas.4} parent=5 // pred_region
      // Predicated region
      $region29: #{basic_block_pallas.4} parent=27 // pred_check
        %p181 = pneg %p32
      $region30: #{basic_block_pallas.4} parent=27 // pred_check_branch
        %183 = sbr.rel (%p181) target = $region32
      $region31: #{basic_block_pallas.4} parent=27 // pred_region
        %p184 = scmp.lt.s32.totalorder %s12, 1
        %s185 = scalar_select %p184, %s12, 1
        %s186 = smul.addr %s185, 32
        %s187 = smul.addr %s186, 8
        %s188 = scalar_lea.vmem %s0, %s187
      $region32: #{basic_block_pallas.4} parent=27 // pred_fallthru
        _
    $region28: #{basic_block_pallas.4} parent=5 // pred_fallthru
      _
    %p189 = scmp.le.s32.totalorder 1, %s12
    %p190 = scmp.lt.s32.totalorder %s12, 3
    %p191 = pnand %p189, %p190
    %p192 = pneg %p191
    // Predicated region
    $region33: #{basic_block_pallas.4} parent=5 // pred_check
      _
    $region34: #{basic_block_pallas.4} parent=5 // pred_check_branch
      %194 = sbr.rel (%p191) target = $region36
    $region35: #{basic_block_pallas.4} parent=5 // pred_region
      %s195 = ssub.s32 %s12, 1
      %p196 = scmp.lt.s32.totalorder %s17, 1
      %s197 = scalar_select %p196, %s17, 1
      %s198 = smul.addr %s197, 32
      %s199 = smul.addr %s198, 8
      %s200 = scalar_lea.vmem %s0, %s199
      %p201 = pneg %p38
      %p202 = pneg %p35
      %p203 = pneg %p59
      %p204 = pneg %p56
      %p205 = pneg %p80
      %p206 = pneg %p77
      %p207 = pneg %p101
      %p208 = pneg %p98
      %p209 = pneg %p127
      %p210 = pneg %p124
      %p211 = scmp.lt.s32.totalorder %s17, 1
      %s212 = scalar_select %p211, %s17, 1
      %s213 = smul.addr %s212, 32
      %s214 = smul.addr %s213, 8
      %s215 = scalar_lea.vmem %s4, %s214
      %p216 = pneg %p153
      %p217 = pneg %p150
      %p218 = scmp.lt.s32.totalorder %s17, 1
      %s219 = scalar_select %p218, %s17, 1
      %s220 = smul.addr %s219, 2
      %s221 = scalar_lea.vmem %s5, %s220
      %p222 = scmp.lt.s32.totalorder %s17, 1
      %s223 = scalar_select %p222, %s17, 1
      %s224 = smul.addr %s223, 32
      %s225 = smul.addr %s224, 8
      %s226 = scalar_lea.vmem %s0, %s225
      %p227 = scmp.lt.s32.totalorder %s17, 1
      %s228 = scalar_select %p227, %s17, 1
      %s229 = smul.addr %s228, 32
      %s230 = smul.addr %s229, 8
      %s231 = scalar_lea.vmem %s4, %s230
      %p232 = scmp.lt.s32.totalorder %s17, 1
      %s233 = scalar_select %p232, %s17, 1
      %s234 = smul.addr %s233, 2
      %s235 = scalar_lea.vmem %s5, %s234
      %v236 = vld [vmem:[%s226] sm:$0xff]
      %v237 = vld [vmem:[%s226 + $0x8] sm:$0xff]
      %v238 = vld [vmem:[%s226 + $0x10] sm:$0xff]
      %v239 = vld [vmem:[%s226 + $0x18] sm:$0xff]
      %v240 = vld [vmem:[%s226 + $0x20] sm:$0xff]
      %v241 = vld [vmem:[%s226 + $0x28] sm:$0xff]
      %v242 = vld [vmem:[%s226 + $0x30] sm:$0xff]
      %v243 = vld [vmem:[%s226 + $0x38] sm:$0xff]
      %v244 = vld [vmem:[%s226 + $0x40] sm:$0xff]
      %v245 = vld [vmem:[%s226 + $0x48] sm:$0xff]
      %v246 = vld [vmem:[%s226 + $0x50] sm:$0xff]
      %v247 = vld [vmem:[%s226 + $0x58] sm:$0xff]
      %v248 = vld [vmem:[%s226 + $0x60] sm:$0xff]
      %v249 = vld [vmem:[%s226 + $0x68] sm:$0xff]
      %v250 = vld [vmem:[%s226 + $0x70] sm:$0xff]
      %v251 = vld [vmem:[%s226 + $0x78] sm:$0xff]
      %v252 = vld [vmem:[%s226 + $0x80] sm:$0xff]
      %v253 = vld [vmem:[%s226 + $0x88] sm:$0xff]
      %v254 = vld [vmem:[%s226 + $0x90] sm:$0xff]
      %v255 = vld [vmem:[%s226 + $0x98] sm:$0xff]
      %v256 = vld [vmem:[%s226 + $0xa0] sm:$0xff]
      %v257 = vld [vmem:[%s226 + $0xa8] sm:$0xff]
      %v258 = vld [vmem:[%s226 + $0xb0] sm:$0xff]
      %v259 = vld [vmem:[%s226 + $0xb8] sm:$0xff]
      %v260 = vld [vmem:[%s226 + $0xc0] sm:$0xff]
      %v261 = vld [vmem:[%s226 + $0xc8] sm:$0xff]
      %v262 = vld [vmem:[%s226 + $0xd0] sm:$0xff]
      %v263 = vld [vmem:[%s226 + $0xd8] sm:$0xff]
      %v264 = vld [vmem:[%s226 + $0xe0] sm:$0xff]
      %v265 = vld [vmem:[%s226 + $0xe8] sm:$0xff]
      %v266 = vld [vmem:[%s226 + $0xf0] sm:$0xff]
      %v267 = vld [vmem:[%s226 + $0xf8] sm:$0xff]
      %v268 = vld [vmem:[%s1] sm:$0x1]
      %v270 = vlaneseq
      %v271 = vshrl.u32 %v270, 7
      %v272 = vsub.s32 0, %v271
      %v273 = vrot.slane %v268, %v272
      %v275 = vmul.f32 %v236, %v273
      %v276 = vmul.f32 %v237, %v273
      %v277 = vmul.f32 %v238, %v273
      %v278 = vmul.f32 %v239, %v273
      %v279 = vmul.f32 %v240, %v273
      %v280 = vmul.f32 %v241, %v273
      %v281 = vmul.f32 %v242, %v273
      %v282 = vmul.f32 %v243, %v273
      %v283 = vmul.f32 %v244, %v273
      %v284 = vmul.f32 %v245, %v273
      %v285 = vmul.f32 %v246, %v273
      %v286 = vmul.f32 %v247, %v273
      %v287 = vmul.f32 %v248, %v273
      %v288 = vmul.f32 %v249, %v273
      %v289 = vmul.f32 %v250, %v273
      %v290 = vmul.f32 %v251, %v273
      %v291 = vmul.f32 %v252, %v273
      %v292 = vmul.f32 %v253, %v273
      %v293 = vmul.f32 %v254, %v273
      %v294 = vmul.f32 %v255, %v273
      %v295 = vmul.f32 %v256, %v273
      %v296 = vmul.f32 %v257, %v273
      %v297 = vmul.f32 %v258, %v273
      %v298 = vmul.f32 %v259, %v273
      %v299 = vmul.f32 %v260, %v273
      %v300 = vmul.f32 %v261, %v273
      %v301 = vmul.f32 %v262, %v273
      %v302 = vmul.f32 %v263, %v273
      %v303 = vmul.f32 %v264, %v273
      %v304 = vmul.f32 %v265, %v273
      %v305 = vmul.f32 %v266, %v273
      %v306 = vmul.f32 %v267, %v273
      %v307 = vld [vmem:[%s2] sm:$0x1]
      %v309 = vlaneseq
      %v310 = vshrl.u32 %v309, 7
      %v311 = vsub.s32 0, %v310
      %v312 = vrot.slane %v307, %v311
      %v314 = vadd.f32 %v275, %v312
      %v315 = vadd.f32 %v276, %v312
      %v316 = vadd.f32 %v277, %v312
      %v317 = vadd.f32 %v278, %v312
      %v318 = vadd.f32 %v279, %v312
      %v319 = vadd.f32 %v280, %v312
      %v320 = vadd.f32 %v281, %v312
      %v321 = vadd.f32 %v282, %v312
      %v322 = vadd.f32 %v283, %v312
      %v323 = vadd.f32 %v284, %v312
      %v324 = vadd.f32 %v285, %v312
      %v325 = vadd.f32 %v286, %v312
      %v326 = vadd.f32 %v287, %v312
      %v327 = vadd.f32 %v288, %v312
      %v328 = vadd.f32 %v289, %v312
      %v329 = vadd.f32 %v290, %v312
      %v330 = vadd.f32 %v291, %v312
      %v331 = vadd.f32 %v292, %v312
      %v332 = vadd.f32 %v293, %v312
      %v333 = vadd.f32 %v294, %v312
      %v334 = vadd.f32 %v295, %v312
      %v335 = vadd.f32 %v296, %v312
      %v336 = vadd.f32 %v297, %v312
      %v337 = vadd.f32 %v298, %v312
      %v338 = vadd.f32 %v299, %v312
      %v339 = vadd.f32 %v300, %v312
      %v340 = vadd.f32 %v301, %v312
      %v341 = vadd.f32 %v302, %v312
      %v342 = vadd.f32 %v303, %v312
      %v343 = vadd.f32 %v304, %v312
      %v344 = vadd.f32 %v305, %v312
      %v345 = vadd.f32 %v306, %v312
      %v346 = vmax.f32 %v314, 0.0
      %v347 = vmax.f32 %v315, 0.0
      %v348 = vmax.f32 %v316, 0.0
      %v349 = vmax.f32 %v317, 0.0
      %v350 = vmax.f32 %v318, 0.0
      %v351 = vmax.f32 %v319, 0.0
      %v352 = vmax.f32 %v320, 0.0
      %v353 = vmax.f32 %v321, 0.0
      %v354 = vmax.f32 %v322, 0.0
      %v355 = vmax.f32 %v323, 0.0
      %v356 = vmax.f32 %v324, 0.0
      %v357 = vmax.f32 %v325, 0.0
      %v358 = vmax.f32 %v326, 0.0
      %v359 = vmax.f32 %v327, 0.0
      %v360 = vmax.f32 %v328, 0.0
      %v361 = vmax.f32 %v329, 0.0
      %v362 = vmax.f32 %v330, 0.0
      %v363 = vmax.f32 %v331, 0.0
      %v364 = vmax.f32 %v332, 0.0
      %v365 = vmax.f32 %v333, 0.0
      %v366 = vmax.f32 %v334, 0.0
      %v367 = vmax.f32 %v335, 0.0
      %v368 = vmax.f32 %v336, 0.0
      %v369 = vmax.f32 %v337, 0.0
      %v370 = vmax.f32 %v338, 0.0
      %v371 = vmax.f32 %v339, 0.0
      %v372 = vmax.f32 %v340, 0.0
      %v373 = vmax.f32 %v341, 0.0
      %v374 = vmax.f32 %v342, 0.0
      %v375 = vmax.f32 %v343, 0.0
      %v376 = vmax.f32 %v344, 0.0
      %v377 = vmax.f32 %v345, 0.0
      %378 = vst [vmem:[#allocation2] sm:$0xff] 0.0
      %379 = vst [vmem:[#allocation2 + $0x8] sm:$0xff] 0.0
      %380 = vst [vmem:[#allocation2 + $0x10] sm:$0x3] 0.0
      %s381 = scalar_lea.vmem [#allocation2], 408
      %382 = vst [vmem:[%s381] sm:$0xff] 0.0
      %383 = vst [vmem:[%s381 + $0x8] sm:$0xff] 0.0
      %384 = vst [vmem:[%s381 + $0x10] sm:$0x3] 0.0
      %385 = vst [vmem:[#allocation2] sm:$0x1] 0.0
      %386 = vst [vmem:[#allocation2 + $0x18] sm:$0x1] 0.0
      %387 = vst [vmem:[#allocation2 + $0x30] sm:$0x1] 0.0
      %388 = vst [vmem:[#allocation2 + $0x48] sm:$0x1] 0.0
      %389 = vst [vmem:[#allocation2 + $0x60] sm:$0x1] 0.0
      %390 = vst [vmem:[#allocation2 + $0x78] sm:$0x1] 0.0
      %391 = vst [vmem:[#allocation2 + $0x90] sm:$0x1] 0.0
      %392 = vst [vmem:[#allocation2 + $0xa8] sm:$0x1] 0.0
      %393 = vst [vmem:[#allocation2 + $0xc0] sm:$0x1] 0.0
      %394 = vst [vmem:[#allocation2 + $0xd8] sm:$0x1] 0.0
      %395 = vst [vmem:[#allocation2 + $0xf0] sm:$0x1] 0.0
      %396 = vst [vmem:[#allocation2 + $0x108] sm:$0x1] 0.0
      %397 = vst [vmem:[#allocation2 + $0x120] sm:$0x1] 0.0
      %398 = vst [vmem:[#allocation2 + $0x138] sm:$0x1] 0.0
      %399 = vst [vmem:[#allocation2 + $0x150] sm:$0x1] 0.0
      %400 = vst [vmem:[#allocation2 + $0x168] sm:$0x1] 0.0
      %401 = vst [vmem:[#allocation2 + $0x180] sm:$0x1] 0.0
      %402 = vst [vmem:[#allocation2 + $0x198] sm:$0x1] 0.0
      %403 = vst [vmem:[#allocation2 + $0x11] sm:$0x1] 0.0
      %404 = vst [vmem:[#allocation2 + $0x29] sm:$0x1] 0.0
      %405 = vst [vmem:[#allocation2 + $0x41] sm:$0x1] 0.0
      %406 = vst [vmem:[#allocation2 + $0x59] sm:$0x1] 0.0
      %407 = vst [vmem:[#allocation2 + $0x71] sm:$0x1] 0.0
      %408 = vst [vmem:[#allocation2 + $0x89] sm:$0x1] 0.0
      %409 = vst [vmem:[#allocation2 + $0xa1] sm:$0x1] 0.0
      %410 = vst [vmem:[#allocation2 + $0xb9] sm:$0x1] 0.0
      %411 = vst [vmem:[#allocation2 + $0xd1] sm:$0x1] 0.0
      %412 = vst [vmem:[#allocation2 + $0xe9] sm:$0x1] 0.0
      %413 = vst [vmem:[#allocation2 + $0x101] sm:$0x1] 0.0
      %414 = vst [vmem:[#allocation2 + $0x119] sm:$0x1] 0.0
      %415 = vst [vmem:[#allocation2 + $0x131] sm:$0x1] 0.0
      %416 = vst [vmem:[#allocation2 + $0x149] sm:$0x1] 0.0
      %417 = vst [vmem:[#allocation2 + $0x161] sm:$0x1] 0.0
      %418 = vst [vmem:[#allocation2 + $0x179] sm:$0x1] 0.0
      %419 = vst [vmem:[#allocation2 + $0x191] sm:$0x1] 0.0
      %420 = vst [vmem:[#allocation2 + $0x1a9] sm:$0x1] 0.0
      %s421 = scalar_lea.vmem [#allocation2], 24
      %422 = vst [vmem:[%s421 + $0x1] sm:$0xff] %v346
      %423 = vst [vmem:[%s421 + $0x9] sm:$0xff] %v347
      %424 = vst [vmem:[%s421 + $0x19] sm:$0xff] %v348
      %425 = vst [vmem:[%s421 + $0x21] sm:$0xff] %v349
      %426 = vst [vmem:[%s421 + $0x31] sm:$0xff] %v350
      %427 = vst [vmem:[%s421 + $0x39] sm:$0xff] %v351
      %428 = vst [vmem:[%s421 + $0x49] sm:$0xff] %v352
      %429 = vst [vmem:[%s421 + $0x51] sm:$0xff] %v353
      %430 = vst [vmem:[%s421 + $0x61] sm:$0xff] %v354
      %431 = vst [vmem:[%s421 + $0x69] sm:$0xff] %v355
      %432 = vst [vmem:[%s421 + $0x79] sm:$0xff] %v356
      %433 = vst [vmem:[%s421 + $0x81] sm:$0xff] %v357
      %434 = vst [vmem:[%s421 + $0x91] sm:$0xff] %v358
      %435 = vst [vmem:[%s421 + $0x99] sm:$0xff] %v359
      %436 = vst [vmem:[%s421 + $0xa9] sm:$0xff] %v360
      %437 = vst [vmem:[%s421 + $0xb1] sm:$0xff] %v361
      %438 = vst [vmem:[%s421 + $0xc1] sm:$0xff] %v362
      %439 = vst [vmem:[%s421 + $0xc9] sm:$0xff] %v363
      %440 = vst [vmem:[%s421 + $0xd9] sm:$0xff] %v364
      %441 = vst [vmem:[%s421 + $0xe1] sm:$0xff] %v365
      %442 = vst [vmem:[%s421 + $0xf1] sm:$0xff] %v366
      %443 = vst [vmem:[%s421 + $0xf9] sm:$0xff] %v367
      %444 = vst [vmem:[%s421 + $0x109] sm:$0xff] %v368
      %445 = vst [vmem:[%s421 + $0x111] sm:$0xff] %v369
      %446 = vst [vmem:[%s421 + $0x121] sm:$0xff] %v370
      %447 = vst [vmem:[%s421 + $0x129] sm:$0xff] %v371
      %448 = vst [vmem:[%s421 + $0x139] sm:$0xff] %v372
      %449 = vst [vmem:[%s421 + $0x141] sm:$0xff] %v373
      %450 = vst [vmem:[%s421 + $0x151] sm:$0xff] %v374
      %451 = vst [vmem:[%s421 + $0x159] sm:$0xff] %v375
      %452 = vst [vmem:[%s421 + $0x169] sm:$0xff] %v376
      %453 = vst [vmem:[%s421 + $0x171] sm:$0xff] %v377
      %v454 = vld [vmem:[#allocation2] sm:$0xff]
      %v455 = vld [vmem:[#allocation2 + $0x8] sm:$0xff]
      %v456 = vld [vmem:[#allocation2 + $0x10] sm:$0x3]
      %v457 = vld [vmem:[#allocation2 + $0x18] sm:$0xff]
      %v458 = vld [vmem:[#allocation2 + $0x20] sm:$0xff]
      %v459 = vld [vmem:[#allocation2 + $0x28] sm:$0x3]
      %v460 = vld [vmem:[#allocation2 + $0x30] sm:$0xff]
      %v461 = vld [vmem:[#allocation2 + $0x38] sm:$0xff]
      %v462 = vld [vmem:[#allocation2 + $0x40] sm:$0x3]
      %v463 = vld [vmem:[#allocation2 + $0x48] sm:$0xff]
      %v464 = vld [vmem:[#allocation2 + $0x50] sm:$0xff]
      %v465 = vld [vmem:[#allocation2 + $0x58] sm:$0x3]
      %v466 = vld [vmem:[#allocation2 + $0x60] sm:$0xff]
      %v467 = vld [vmem:[#allocation2 + $0x68] sm:$0xff]
      %v468 = vld [vmem:[#allocation2 + $0x70] sm:$0x3]
      %v469 = vld [vmem:[#allocation2 + $0x78] sm:$0xff]
      %v470 = vld [vmem:[#allocation2 + $0x80] sm:$0xff]
      %v471 = vld [vmem:[#allocation2 + $0x88] sm:$0x3]
      %v472 = vld [vmem:[#allocation2 + $0x90] sm:$0xff]
      %v473 = vld [vmem:[#allocation2 + $0x98] sm:$0xff]
      %v474 = vld [vmem:[#allocation2 + $0xa0] sm:$0x3]
      %v475 = vld [vmem:[#allocation2 + $0xa8] sm:$0xff]
      %v476 = vld [vmem:[#allocation2 + $0xb0] sm:$0xff]
      %v477 = vld [vmem:[#allocation2 + $0xb8] sm:$0x3]
      %v478 = vld [vmem:[#allocation2 + $0xc0] sm:$0xff]
      %v479 = vld [vmem:[#allocation2 + $0xc8] sm:$0xff]
      %v480 = vld [vmem:[#allocation2 + $0xd0] sm:$0x3]
      %v481 = vld [vmem:[#allocation2 + $0xd8] sm:$0xff]
      %v482 = vld [vmem:[#allocation2 + $0xe0] sm:$0xff]
      %v483 = vld [vmem:[#allocation2 + $0xe8] sm:$0x3]
      %v484 = vld [vmem:[#allocation2 + $0xf0] sm:$0xff]
      %v485 = vld [vmem:[#allocation2 + $0xf8] sm:$0xff]
      %v486 = vld [vmem:[#allocation2 + $0x100] sm:$0x3]
      %v487 = vld [vmem:[#allocation2 + $0x108] sm:$0xff]
      %v488 = vld [vmem:[#allocation2 + $0x110] sm:$0xff]
      %v489 = vld [vmem:[#allocation2 + $0x118] sm:$0x3]
      %v490 = vld [vmem:[#allocation2 + $0x120] sm:$0xff]
      %v491 = vld [vmem:[#allocation2 + $0x128] sm:$0xff]
      %v492 = vld [vmem:[#allocation2 + $0x130] sm:$0x3]
      %v493 = vld [vmem:[#allocation2 + $0x138] sm:$0xff]
      %v494 = vld [vmem:[#allocation2 + $0x140] sm:$0xff]
      %v495 = vld [vmem:[#allocation2 + $0x148] sm:$0x3]
      %v496 = vld [vmem:[#allocation2 + $0x150] sm:$0xff]
      %v497 = vld [vmem:[#allocation2 + $0x158] sm:$0xff]
      %v498 = vld [vmem:[#allocation2 + $0x160] sm:$0x3]
      %v499 = vld [vmem:[#allocation2 + $0x168] sm:$0xff]
      %v500 = vld [vmem:[#allocation2 + $0x170] sm:$0xff]
      %v501 = vld [vmem:[#allocation2 + $0x178] sm:$0x3]
      %vm550 = vcmask 1046528
      %v551 = vrot.slane %v454, 1
      %v552 = vrot.slane %v455, 1
      %v553 = vsel %vm550, %v551, %v552
      %v554 = vrot.slane %v456, 1
      %v555 = vsel %vm550, %v552, %v554
      %v556 = vrot.slane %v457, 1
      %v557 = vrot.slane %v458, 1
      %v558 = vsel %vm550, %v556, %v557
      %v559 = vrot.slane %v459, 1
      %v560 = vsel %vm550, %v557, %v559
      %v561 = vrot.slane %v460, 1
      %v562 = vrot.slane %v461, 1
      %v563 = vsel %vm550, %v561, %v562
      %v564 = vrot.slane %v462, 1
      %v565 = vsel %vm550, %v562, %v564
      %v566 = vrot.slane %v463, 1
      %v567 = vrot.slane %v464, 1
      %v568 = vsel %vm550, %v566, %v567
      %v569 = vrot.slane %v465, 1
      %v570 = vsel %vm550, %v567, %v569
      %v571 = vrot.slane %v466, 1
      %v572 = vrot.slane %v467, 1
      %v573 = vsel %vm550, %v571, %v572
      %v574 = vrot.slane %v468, 1
      %v575 = vsel %vm550, %v572, %v574
      %v576 = vrot.slane %v469, 1
      %v577 = vrot.slane %v470, 1
      %v578 = vsel %vm550, %v576, %v577
      %v579 = vrot.slane %v471, 1
      %v580 = vsel %vm550, %v577, %v579
      %v581 = vrot.slane %v472, 1
      %v582 = vrot.slane %v473, 1
      %v583 = vsel %vm550, %v581, %v582
      %v584 = vrot.slane %v474, 1
      %v585 = vsel %vm550, %v582, %v584
      %v586 = vrot.slane %v475, 1
      %v587 = vrot.slane %v476, 1
      %v588 = vsel %vm550, %v586, %v587
      %v589 = vrot.slane %v477, 1
      %v590 = vsel %vm550, %v587, %v589
      %v591 = vrot.slane %v478, 1
      %v592 = vrot.slane %v479, 1
      %v593 = vsel %vm550, %v591, %v592
      %v594 = vrot.slane %v480, 1
      %v595 = vsel %vm550, %v592, %v594
      %v596 = vrot.slane %v481, 1
      %v597 = vrot.slane %v482, 1
      %v598 = vsel %vm550, %v596, %v597
      %v599 = vrot.slane %v483, 1
      %v600 = vsel %vm550, %v597, %v599
      %v601 = vrot.slane %v484, 1
      %v602 = vrot.slane %v485, 1
      %v603 = vsel %vm550, %v601, %v602
      %v604 = vrot.slane %v486, 1
      %v605 = vsel %vm550, %v602, %v604
      %v606 = vrot.slane %v487, 1
      %v607 = vrot.slane %v488, 1
      %v608 = vsel %vm550, %v606, %v607
      %v609 = vrot.slane %v489, 1
      %v610 = vsel %vm550, %v607, %v609
      %v611 = vrot.slane %v490, 1
      %v612 = vrot.slane %v491, 1
      %v613 = vsel %vm550, %v611, %v612
      %v614 = vrot.slane %v492, 1
      %v615 = vsel %vm550, %v612, %v614
      %v616 = vrot.slane %v493, 1
      %v617 = vrot.slane %v494, 1
      %v618 = vsel %vm550, %v616, %v617
      %v619 = vrot.slane %v495, 1
      %v620 = vsel %vm550, %v617, %v619
      %v621 = vrot.slane %v496, 1
      %v622 = vrot.slane %v497, 1
      %v623 = vsel %vm550, %v621, %v622
      %v624 = vrot.slane %v498, 1
      %v625 = vsel %vm550, %v622, %v624
      %v626 = vrot.slane %v499, 1
      %v627 = vrot.slane %v500, 1
      %v628 = vsel %vm550, %v626, %v627
      %v629 = vrot.slane %v501, 1
      %v630 = vsel %vm550, %v627, %v629
      %vm663 = vcmask 1045504
      %v664 = vrot.slane %v454, 2
      %v665 = vrot.slane %v455, 2
      %v666 = vsel %vm663, %v664, %v665
      %v667 = vrot.slane %v456, 2
      %v668 = vsel %vm663, %v665, %v667
      %v669 = vrot.slane %v457, 2
      %v670 = vrot.slane %v458, 2
      %v671 = vsel %vm663, %v669, %v670
      %v672 = vrot.slane %v459, 2
      %v673 = vsel %vm663, %v670, %v672
      %v674 = vrot.slane %v460, 2
      %v675 = vrot.slane %v461, 2
      %v676 = vsel %vm663, %v674, %v675
      %v677 = vrot.slane %v462, 2
      %v678 = vsel %vm663, %v675, %v677
      %v679 = vrot.slane %v463, 2
      %v680 = vrot.slane %v464, 2
      %v681 = vsel %vm663, %v679, %v680
      %v682 = vrot.slane %v465, 2
      %v683 = vsel %vm663, %v680, %v682
      %v684 = vrot.slane %v466, 2
      %v685 = vrot.slane %v467, 2
      %v686 = vsel %vm663, %v684, %v685
      %v687 = vrot.slane %v468, 2
      %v688 = vsel %vm663, %v685, %v687
      %v689 = vrot.slane %v469, 2
      %v690 = vrot.slane %v470, 2
      %v691 = vsel %vm663, %v689, %v690
      %v692 = vrot.slane %v471, 2
      %v693 = vsel %vm663, %v690, %v692
      %v694 = vrot.slane %v472, 2
      %v695 = vrot.slane %v473, 2
      %v696 = vsel %vm663, %v694, %v695
      %v697 = vrot.slane %v474, 2
      %v698 = vsel %vm663, %v695, %v697
      %v699 = vrot.slane %v475, 2
      %v700 = vrot.slane %v476, 2
      %v701 = vsel %vm663, %v699, %v700
      %v702 = vrot.slane %v477, 2
      %v703 = vsel %vm663, %v700, %v702
      %v704 = vrot.slane %v478, 2
      %v705 = vrot.slane %v479, 2
      %v706 = vsel %vm663, %v704, %v705
      %v707 = vrot.slane %v480, 2
      %v708 = vsel %vm663, %v705, %v707
      %v709 = vrot.slane %v481, 2
      %v710 = vrot.slane %v482, 2
      %v711 = vsel %vm663, %v709, %v710
      %v712 = vrot.slane %v483, 2
      %v713 = vsel %vm663, %v710, %v712
      %v714 = vrot.slane %v484, 2
      %v715 = vrot.slane %v485, 2
      %v716 = vsel %vm663, %v714, %v715
      %v717 = vrot.slane %v486, 2
      %v718 = vsel %vm663, %v715, %v717
      %v719 = vrot.slane %v487, 2
      %v720 = vrot.slane %v488, 2
      %v721 = vsel %vm663, %v719, %v720
      %v722 = vrot.slane %v489, 2
      %v723 = vsel %vm663, %v720, %v722
      %v724 = vrot.slane %v490, 2
      %v725 = vrot.slane %v491, 2
      %v726 = vsel %vm663, %v724, %v725
      %v727 = vrot.slane %v492, 2
      %v728 = vsel %vm663, %v725, %v727
      %v729 = vrot.slane %v493, 2
      %v730 = vrot.slane %v494, 2
      %v731 = vsel %vm663, %v729, %v730
      %v732 = vrot.slane %v495, 2
      %v733 = vsel %vm663, %v730, %v732
      %v734 = vrot.slane %v496, 2
      %v735 = vrot.slane %v497, 2
      %v736 = vsel %vm663, %v734, %v735
      %v737 = vrot.slane %v498, 2
      %v738 = vsel %vm663, %v735, %v737
      %v739 = vrot.slane %v499, 2
      %v740 = vrot.slane %v500, 2
      %v741 = vsel %vm663, %v739, %v740
      %v742 = vrot.slane %v501, 2
      %v743 = vsel %vm663, %v740, %v742
      %v776 = vld [vmem:[%s3] sm:$0xff]
      %v777 = vld [vmem:[%s3 + $0x8] sm:$0xff]
      %v778 = vld [vmem:[%s3 + $0x10] sm:$0xff]
      %v779 = vld [vmem:[%s3 + $0x18] sm:$0xff]
      %v780 = vld [vmem:[%s3 + $0x20] sm:$0xff]
      %v781 = vld [vmem:[%s3 + $0x28] sm:$0xff]
      %v782 = vld [vmem:[%s3 + $0x30] sm:$0xff]
      %v783 = vld [vmem:[%s3 + $0x38] sm:$0xff]
      %v784 = vld [vmem:[%s3 + $0x40] sm:$0xff]
      %v785 = vld [vmem:[%s3 + $0x48] sm:$0xff]
      %v786 = vld [vmem:[%s3 + $0x50] sm:$0xff]
      %v787 = vld [vmem:[%s3 + $0x58] sm:$0xff]
      %v788 = vld [vmem:[%s3 + $0x60] sm:$0xff]
      %v789 = vld [vmem:[%s3 + $0x68] sm:$0xff]
      %v790 = vld [vmem:[%s3 + $0x70] sm:$0xff]
      %v791 = vld [vmem:[%s3 + $0x78] sm:$0xff]
      %v792 = vld [vmem:[%s3 + $0x80] sm:$0xff]
      %v793 = vld [vmem:[%s3 + $0x88] sm:$0xff]
      %v794 = vld [vmem:[%s3 + $0x90] sm:$0xff]
      %v795 = vld [vmem:[%s3 + $0x98] sm:$0xff]
      %v796 = vld [vmem:[%s3 + $0xa0] sm:$0xff]
      %v797 = vld [vmem:[%s3 + $0xa8] sm:$0xff]
      %v798 = vld [vmem:[%s3 + $0xb0] sm:$0xff]
      %v799 = vld [vmem:[%s3 + $0xb8] sm:$0xff]
      %v800 = vld [vmem:[%s3 + $0xc0] sm:$0xff]
      %v801 = vld [vmem:[%s3 + $0xc8] sm:$0xff]
      %v802 = vld [vmem:[%s3 + $0xd0] sm:$0xff]
      %v803 = vld [vmem:[%s3 + $0xd8] sm:$0xff]
      %v804 = vld [vmem:[%s3 + $0xe0] sm:$0xff]
      %v805 = vld [vmem:[%s3 + $0xe8] sm:$0xff]
      %v806 = vld [vmem:[%s3 + $0xf0] sm:$0xff]
      %v807 = vld [vmem:[%s3 + $0xf8] sm:$0xff]
      %v808 = vld [vmem:[%s3 + $0x100] sm:$0xff]
      %v809 = vld [vmem:[%s3 + $0x108] sm:$0xff]
      %v810 = vld [vmem:[%s3 + $0x110] sm:$0xff]
      %v811 = vld [vmem:[%s3 + $0x118] sm:$0xff]
      %v812 = vld [vmem:[%s3 + $0x120] sm:$0xff]
      %v813 = vld [vmem:[%s3 + $0x128] sm:$0xff]
      %v814 = vld [vmem:[%s3 + $0x130] sm:$0xff]
      %v815 = vld [vmem:[%s3 + $0x138] sm:$0xff]
      %v816 = vld [vmem:[%s3 + $0x140] sm:$0xff]
      %v817 = vld [vmem:[%s3 + $0x148] sm:$0xff]
      %v818 = vld [vmem:[%s3 + $0x150] sm:$0xff]
      %v819 = vld [vmem:[%s3 + $0x158] sm:$0xff]
      %v820 = vld [vmem:[%s3 + $0x160] sm:$0xff]
      %v821 = vld [vmem:[%s3 + $0x168] sm:$0xff]
      %v822 = vld [vmem:[%s3 + $0x170] sm:$0xff]
      %v823 = vld [vmem:[%s3 + $0x178] sm:$0xff]
      %v824 = vld [vmem:[%s421] sm:$0xff]
      %v825 = vld [vmem:[%s421 + $0x8] sm:$0xff]
      %v826 = vld [vmem:[%s421 + $0x10] sm:$0x3]
      %v827 = vld [vmem:[%s421 + $0x18] sm:$0xff]
      %v828 = vld [vmem:[%s421 + $0x20] sm:$0xff]
      %v829 = vld [vmem:[%s421 + $0x28] sm:$0x3]
      %v830 = vld [vmem:[%s421 + $0x30] sm:$0xff]
      %v831 = vld [vmem:[%s421 + $0x38] sm:$0xff]
      %v832 = vld [vmem:[%s421 + $0x40] sm:$0x3]
      %v833 = vld [vmem:[%s421 + $0x48] sm:$0xff]
      %v834 = vld [vmem:[%s421 + $0x50] sm:$0xff]
      %v835 = vld [vmem:[%s421 + $0x58] sm:$0x3]
      %v836 = vld [vmem:[%s421 + $0x60] sm:$0xff]
      %v837 = vld [vmem:[%s421 + $0x68] sm:$0xff]
      %v838 = vld [vmem:[%s421 + $0x70] sm:$0x3]
      %v839 = vld [vmem:[%s421 + $0x78] sm:$0xff]
      %v840 = vld [vmem:[%s421 + $0x80] sm:$0xff]
      %v841 = vld [vmem:[%s421 + $0x88] sm:$0x3]
      %v842 = vld [vmem:[%s421 + $0x90] sm:$0xff]
      %v843 = vld [vmem:[%s421 + $0x98] sm:$0xff]
      %v844 = vld [vmem:[%s421 + $0xa0] sm:$0x3]
      %v845 = vld [vmem:[%s421 + $0xa8] sm:$0xff]
      %v846 = vld [vmem:[%s421 + $0xb0] sm:$0xff]
      %v847 = vld [vmem:[%s421 + $0xb8] sm:$0x3]
      %v848 = vld [vmem:[%s421 + $0xc0] sm:$0xff]
      %v849 = vld [vmem:[%s421 + $0xc8] sm:$0xff]
      %v850 = vld [vmem:[%s421 + $0xd0] sm:$0x3]
      %v851 = vld [vmem:[%s421 + $0xd8] sm:$0xff]
      %v852 = vld [vmem:[%s421 + $0xe0] sm:$0xff]
      %v853 = vld [vmem:[%s421 + $0xe8] sm:$0x3]
      %v854 = vld [vmem:[%s421 + $0xf0] sm:$0xff]
      %v855 = vld [vmem:[%s421 + $0xf8] sm:$0xff]
      %v856 = vld [vmem:[%s421 + $0x100] sm:$0x3]
      %v857 = vld [vmem:[%s421 + $0x108] sm:$0xff]
      %v858 = vld [vmem:[%s421 + $0x110] sm:$0xff]
      %v859 = vld [vmem:[%s421 + $0x118] sm:$0x3]
      %v860 = vld [vmem:[%s421 + $0x120] sm:$0xff]
      %v861 = vld [vmem:[%s421 + $0x128] sm:$0xff]
      %v862 = vld [vmem:[%s421 + $0x130] sm:$0x3]
      %v863 = vld [vmem:[%s421 + $0x138] sm:$0xff]
      %v864 = vld [vmem:[%s421 + $0x140] sm:$0xff]
      %v865 = vld [vmem:[%s421 + $0x148] sm:$0x3]
      %v866 = vld [vmem:[%s421 + $0x150] sm:$0xff]
      %v867 = vld [vmem:[%s421 + $0x158] sm:$0xff]
      %v868 = vld [vmem:[%s421 + $0x160] sm:$0x3]
      %v869 = vld [vmem:[%s421 + $0x168] sm:$0xff]
      %v870 = vld [vmem:[%s421 + $0x170] sm:$0xff]
      %v871 = vld [vmem:[%s421 + $0x178] sm:$0x3]
      %v920 = vrot.slane %v824, 1
      %v921 = vrot.slane %v825, 1
      %v922 = vsel %vm550, %v920, %v921
      %v923 = vrot.slane %v826, 1
      %v924 = vsel %vm550, %v921, %v923
      %v925 = vrot.slane %v827, 1
      %v926 = vrot.slane %v828, 1
      %v927 = vsel %vm550, %v925, %v926
      %v928 = vrot.slane %v829, 1
      %v929 = vsel %vm550, %v926, %v928
      %v930 = vrot.slane %v830, 1
      %v931 = vrot.slane %v831, 1
      %v932 = vsel %vm550, %v930, %v931
      %v933 = vrot.slane %v832, 1
      %v934 = vsel %vm550, %v931, %v933
      %v935 = vrot.slane %v833, 1
      %v936 = vrot.slane %v834, 1
      %v937 = vsel %vm550, %v935, %v936
      %v938 = vrot.slane %v835, 1
      %v939 = vsel %vm550, %v936, %v938
      %v940 = vrot.slane %v836, 1
      %v941 = vrot.slane %v837, 1
      %v942 = vsel %vm550, %v940, %v941
      %v943 = vrot.slane %v838, 1
      %v944 = vsel %vm550, %v941, %v943
      %v945 = vrot.slane %v839, 1
      %v946 = vrot.slane %v840, 1
      %v947 = vsel %vm550, %v945, %v946
      %v948 = vrot.slane %v841, 1
      %v949 = vsel %vm550, %v946, %v948
      %v950 = vrot.slane %v842, 1
      %v951 = vrot.slane %v843, 1
      %v952 = vsel %vm550, %v950, %v951
      %v953 = vrot.slane %v844, 1
      %v954 = vsel %vm550, %v951, %v953
      %v955 = vrot.slane %v845, 1
      %v956 = vrot.slane %v846, 1
      %v957 = vsel %vm550, %v955, %v956
      %v958 = vrot.slane %v847, 1
      %v959 = vsel %vm550, %v956, %v958
      %v960 = vrot.slane %v848, 1
      %v961 = vrot.slane %v849, 1
      %v962 = vsel %vm550, %v960, %v961
      %v963 = vrot.slane %v850, 1
      %v964 = vsel %vm550, %v961, %v963
      %v965 = vrot.slane %v851, 1
      %v966 = vrot.slane %v852, 1
      %v967 = vsel %vm550, %v965, %v966
      %v968 = vrot.slane %v853, 1
      %v969 = vsel %vm550, %v966, %v968
      %v970 = vrot.slane %v854, 1
      %v971 = vrot.slane %v855, 1
      %v972 = vsel %vm550, %v970, %v971
      %v973 = vrot.slane %v856, 1
      %v974 = vsel %vm550, %v971, %v973
      %v975 = vrot.slane %v857, 1
      %v976 = vrot.slane %v858, 1
      %v977 = vsel %vm550, %v975, %v976
      %v978 = vrot.slane %v859, 1
      %v979 = vsel %vm550, %v976, %v978
      %v980 = vrot.slane %v860, 1
      %v981 = vrot.slane %v861, 1
      %v982 = vsel %vm550, %v980, %v981
      %v983 = vrot.slane %v862, 1
      %v984 = vsel %vm550, %v981, %v983
      %v985 = vrot.slane %v863, 1
      %v986 = vrot.slane %v864, 1
      %v987 = vsel %vm550, %v985, %v986
      %v988 = vrot.slane %v865, 1
      %v989 = vsel %vm550, %v986, %v988
      %v990 = vrot.slane %v866, 1
      %v991 = vrot.slane %v867, 1
      %v992 = vsel %vm550, %v990, %v991
      %v993 = vrot.slane %v868, 1
      %v994 = vsel %vm550, %v991, %v993
      %v995 = vrot.slane %v869, 1
      %v996 = vrot.slane %v870, 1
      %v997 = vsel %vm550, %v995, %v996
      %v998 = vrot.slane %v871, 1
      %v999 = vsel %vm550, %v996, %v998
      %v1032 = vrot.slane %v824, 2
      %v1033 = vrot.slane %v825, 2
      %v1034 = vsel %vm663, %v1032, %v1033
      %v1035 = vrot.slane %v826, 2
      %v1036 = vsel %vm663, %v1033, %v1035
      %v1037 = vrot.slane %v827, 2
      %v1038 = vrot.slane %v828, 2
      %v1039 = vsel %vm663, %v1037, %v1038
      %v1040 = vrot.slane %v829, 2
      %v1041 = vsel %vm663, %v1038, %v1040
      %v1042 = vrot.slane %v830, 2
      %v1043 = vrot.slane %v831, 2
      %v1044 = vsel %vm663, %v1042, %v1043
      %v1045 = vrot.slane %v832, 2
      %v1046 = vsel %vm663, %v1043, %v1045
      %v1047 = vrot.slane %v833, 2
      %v1048 = vrot.slane %v834, 2
      %v1049 = vsel %vm663, %v1047, %v1048
      %v1050 = vrot.slane %v835, 2
      %v1051 = vsel %vm663, %v1048, %v1050
      %v1052 = vrot.slane %v836, 2
      %v1053 = vrot.slane %v837, 2
      %v1054 = vsel %vm663, %v1052, %v1053
      %v1055 = vrot.slane %v838, 2
      %v1056 = vsel %vm663, %v1053, %v1055
      %v1057 = vrot.slane %v839, 2
      %v1058 = vrot.slane %v840, 2
      %v1059 = vsel %vm663, %v1057, %v1058
      %v1060 = vrot.slane %v841, 2
      %v1061 = vsel %vm663, %v1058, %v1060
      %v1062 = vrot.slane %v842, 2
      %v1063 = vrot.slane %v843, 2
      %v1064 = vsel %vm663, %v1062, %v1063
      %v1065 = vrot.slane %v844, 2
      %v1066 = vsel %vm663, %v1063, %v1065
      %v1067 = vrot.slane %v845, 2
      %v1068 = vrot.slane %v846, 2
      %v1069 = vsel %vm663, %v1067, %v1068
      %v1070 = vrot.slane %v847, 2
      %v1071 = vsel %vm663, %v1068, %v1070
      %v1072 = vrot.slane %v848, 2
      %v1073 = vrot.slane %v849, 2
      %v1074 = vsel %vm663, %v1072, %v1073
      %v1075 = vrot.slane %v850, 2
      %v1076 = vsel %vm663, %v1073, %v1075
      %v1077 = vrot.slane %v851, 2
      %v1078 = vrot.slane %v852, 2
      %v1079 = vsel %vm663, %v1077, %v1078
      %v1080 = vrot.slane %v853, 2
      %v1081 = vsel %vm663, %v1078, %v1080
      %v1082 = vrot.slane %v854, 2
      %v1083 = vrot.slane %v855, 2
      %v1084 = vsel %vm663, %v1082, %v1083
      %v1085 = vrot.slane %v856, 2
      %v1086 = vsel %vm663, %v1083, %v1085
      %v1087 = vrot.slane %v857, 2
      %v1088 = vrot.slane %v858, 2
      %v1089 = vsel %vm663, %v1087, %v1088
      %v1090 = vrot.slane %v859, 2
      %v1091 = vsel %vm663, %v1088, %v1090
      %v1092 = vrot.slane %v860, 2
      %v1093 = vrot.slane %v861, 2
      %v1094 = vsel %vm663, %v1092, %v1093
      %v1095 = vrot.slane %v862, 2
      %v1096 = vsel %vm663, %v1093, %v1095
      %v1097 = vrot.slane %v863, 2
      %v1098 = vrot.slane %v864, 2
      %v1099 = vsel %vm663, %v1097, %v1098
      %v1100 = vrot.slane %v865, 2
      %v1101 = vsel %vm663, %v1098, %v1100
      %v1102 = vrot.slane %v866, 2
      %v1103 = vrot.slane %v867, 2
      %v1104 = vsel %vm663, %v1102, %v1103
      %v1105 = vrot.slane %v868, 2
      %v1106 = vsel %vm663, %v1103, %v1105
      %v1107 = vrot.slane %v869, 2
      %v1108 = vrot.slane %v870, 2
      %v1109 = vsel %vm663, %v1107, %v1108
      %v1110 = vrot.slane %v871, 2
      %v1111 = vsel %vm663, %v1108, %v1110
      %s1144 = scalar_lea.vmem %s3, 384
      %v1145 = vld [vmem:[%s1144] sm:$0xff]
      %v1146 = vld [vmem:[%s1144 + $0x8] sm:$0xff]
      %v1147 = vld [vmem:[%s1144 + $0x10] sm:$0xff]
      %v1148 = vld [vmem:[%s1144 + $0x18] sm:$0xff]
      %v1149 = vld [vmem:[%s1144 + $0x20] sm:$0xff]
      %v1150 = vld [vmem:[%s1144 + $0x28] sm:$0xff]
      %v1151 = vld [vmem:[%s1144 + $0x30] sm:$0xff]
      %v1152 = vld [vmem:[%s1144 + $0x38] sm:$0xff]
      %v1153 = vld [vmem:[%s1144 + $0x40] sm:$0xff]
      %v1154 = vld [vmem:[%s1144 + $0x48] sm:$0xff]
      %v1155 = vld [vmem:[%s1144 + $0x50] sm:$0xff]
      %v1156 = vld [vmem:[%s1144 + $0x58] sm:$0xff]
      %v1157 = vld [vmem:[%s1144 + $0x60] sm:$0xff]
      %v1158 = vld [vmem:[%s1144 + $0x68] sm:$0xff]
      %v1159 = vld [vmem:[%s1144 + $0x70] sm:$0xff]
      %v1160 = vld [vmem:[%s1144 + $0x78] sm:$0xff]
      %v1161 = vld [vmem:[%s1144 + $0x80] sm:$0xff]
      %v1162 = vld [vmem:[%s1144 + $0x88] sm:$0xff]
      %v1163 = vld [vmem:[%s1144 + $0x90] sm:$0xff]
      %v1164 = vld [vmem:[%s1144 + $0x98] sm:$0xff]
      %v1165 = vld [vmem:[%s1144 + $0xa0] sm:$0xff]
      %v1166 = vld [vmem:[%s1144 + $0xa8] sm:$0xff]
      %v1167 = vld [vmem:[%s1144 + $0xb0] sm:$0xff]
      %v1168 = vld [vmem:[%s1144 + $0xb8] sm:$0xff]
      %v1169 = vld [vmem:[%s1144 + $0xc0] sm:$0xff]
      %v1170 = vld [vmem:[%s1144 + $0xc8] sm:$0xff]
      %v1171 = vld [vmem:[%s1144 + $0xd0] sm:$0xff]
      %v1172 = vld [vmem:[%s1144 + $0xd8] sm:$0xff]
      %v1173 = vld [vmem:[%s1144 + $0xe0] sm:$0xff]
      %v1174 = vld [vmem:[%s1144 + $0xe8] sm:$0xff]
      %v1175 = vld [vmem:[%s1144 + $0xf0] sm:$0xff]
      %v1176 = vld [vmem:[%s1144 + $0xf8] sm:$0xff]
      %v1177 = vld [vmem:[%s1144 + $0x100] sm:$0xff]
      %v1178 = vld [vmem:[%s1144 + $0x108] sm:$0xff]
      %v1179 = vld [vmem:[%s1144 + $0x110] sm:$0xff]
      %v1180 = vld [vmem:[%s1144 + $0x118] sm:$0xff]
      %v1181 = vld [vmem:[%s1144 + $0x120] sm:$0xff]
      %v1182 = vld [vmem:[%s1144 + $0x128] sm:$0xff]
      %v1183 = vld [vmem:[%s1144 + $0x130] sm:$0xff]
      %v1184 = vld [vmem:[%s1144 + $0x138] sm:$0xff]
      %v1185 = vld [vmem:[%s1144 + $0x140] sm:$0xff]
      %v1186 = vld [vmem:[%s1144 + $0x148] sm:$0xff]
      %v1187 = vld [vmem:[%s1144 + $0x150] sm:$0xff]
      %v1188 = vld [vmem:[%s1144 + $0x158] sm:$0xff]
      %v1189 = vld [vmem:[%s1144 + $0x160] sm:$0xff]
      %v1190 = vld [vmem:[%s1144 + $0x168] sm:$0xff]
      %v1191 = vld [vmem:[%s1144 + $0x170] sm:$0xff]
      %v1192 = vld [vmem:[%s1144 + $0x178] sm:$0xff]
      %1193 = vmatprep.subr.mxu0 0.0
      %1194 = vmatpush1.msra.mxu0 %v1160
      %1195 = vmatprep.subr.mxu0 0.0
      %1196 = vmatpush1.msra.mxu0 %v1159
      %1197 = vmatprep.subr.mxu0 0.0
      %1198 = vmatpush1.msra.mxu0 %v1158
      %1199 = vmatprep.subr.mxu0 0.0
      %1200 = vmatpush1.msra.mxu0 %v1157
      %1201 = vmatprep.subr.mxu0 0.0
      %1202 = vmatpush1.msra.mxu0 %v1156
      %1203 = vmatprep.subr.mxu0 0.0
      %1204 = vmatpush1.msra.mxu0 %v1155
      %1205 = vmatprep.subr.mxu0 0.0
      %1206 = vmatpush1.msra.mxu0 %v1154
      %1207 = vmatprep.subr.mxu0 0.0
      %1208 = vmatpush1.msra.mxu0 %v1153
      %1209 = vmatprep.subr.mxu0 0.0
      %1210 = vmatpush1.msra.mxu0 %v1152
      %1211 = vmatprep.subr.mxu0 0.0
      %1212 = vmatpush1.msra.mxu0 %v1151
      %1213 = vmatprep.subr.mxu0 0.0
      %1214 = vmatpush1.msra.mxu0 %v1150
      %1215 = vmatprep.subr.mxu0 0.0
      %1216 = vmatpush1.msra.mxu0 %v1149
      %1217 = vmatprep.subr.mxu0 0.0
      %1218 = vmatpush1.msra.mxu0 %v1148
      %1219 = vmatprep.subr.mxu0 0.0
      %1220 = vmatpush1.msra.mxu0 %v1147
      %1221 = vmatprep.subr.mxu0 0.0
      %1222 = vmatpush1.msra.mxu0 %v1146
      %1223 = vmatprep.subr.mxu0 0.0
      %1224 = vmatpush1.msra.mxu0 %v1145
      %1225 = vmatprep.subr.mxu0 0.0
      %1226 = vmatpush2.msra.mxu0 %v1176
      %1227 = vmatprep.subr.mxu0 0.0
      %1228 = vmatpush2.msra.mxu0 %v1175
      %1229 = vmatprep.subr.mxu0 0.0
      %1230 = vmatpush2.msra.mxu0 %v1174
      %1231 = vmatprep.subr.mxu0 0.0
      %1232 = vmatpush2.msra.mxu0 %v1173
      %1233 = vmatprep.subr.mxu0 0.0
      %1234 = vmatpush2.msra.mxu0 %v1172
      %1235 = vmatprep.subr.mxu0 0.0
      %1236 = vmatpush2.msra.mxu0 %v1171
      %1237 = vmatprep.subr.mxu0 0.0
      %1238 = vmatpush2.msra.mxu0 %v1170
      %1239 = vmatprep.subr.mxu0 0.0
      %1240 = vmatpush2.msra.mxu0 %v1169
      %1241 = vmatprep.subr.mxu0 0.0
      %1242 = vmatpush2.msra.mxu0 %v1168
      %1243 = vmatprep.subr.mxu0 0.0
      %1244 = vmatpush2.msra.mxu0 %v1167
      %1245 = vmatprep.subr.mxu0 0.0
      %1246 = vmatpush2.msra.mxu0 %v1166
      %1247 = vmatprep.subr.mxu0 0.0
      %1248 = vmatpush2.msra.mxu0 %v1165
      %1249 = vmatprep.subr.mxu0 0.0
      %1250 = vmatpush2.msra.mxu0 %v1164
      %1251 = vmatprep.subr.mxu0 0.0
      %1252 = vmatpush2.msra.mxu0 %v1163
      %1253 = vmatprep.subr.mxu0 0.0
      %1254 = vmatpush2.msra.mxu0 %v1162
      %1255 = vmatprep.subr.mxu0 0.0
      %1256 = vmatpush2.msra.mxu0 %v1161
      %1257 = vmatprep.mubr.f32.mxu0 %v922
      %1258 = vmatmul.mubr.f32.gmra.mxu0 %v824
      %v1259 = vpop.f32.mrf.mxu0
      %v1260 = vadd.f32 0.0, %v1259
      %v1261 = vpop.f32.mrf.mxu0
      %1262 = vmatprep.mubr.f32.mxu0 %v924
      %1263 = vmatmul.mubr.f32.gmra.mxu0 %v825
      %v1264 = vpop.f32.mrf.mxu0
      %v1265 = vadd.f32 0.0, %v1264
      %v1266 = vpop.f32.mrf.mxu0
      %1267 = vmatprep.mubr.f32.mxu0 %v927
      %1268 = vmatmul.mubr.f32.gmra.mxu0 %v827
      %v1269 = vpop.f32.mrf.mxu0
      %v1270 = vadd.f32 0.0, %v1269
      %v1271 = vpop.f32.mrf.mxu0
      %1272 = vmatprep.mubr.f32.mxu0 %v929
      %1273 = vmatmul.mubr.f32.gmra.mxu0 %v828
      %v1274 = vpop.f32.mrf.mxu0
      %v1275 = vadd.f32 0.0, %v1274
      %v1276 = vpop.f32.mrf.mxu0
      %1277 = vmatprep.mubr.f32.mxu0 %v932
      %1278 = vmatmul.mubr.f32.gmra.mxu0 %v830
      %v1279 = vpop.f32.mrf.mxu0
      %v1280 = vadd.f32 0.0, %v1279
      %v1281 = vpop.f32.mrf.mxu0
      %1282 = vmatprep.mubr.f32.mxu0 %v934
      %1283 = vmatmul.mubr.f32.gmra.mxu0 %v831
      %v1284 = vpop.f32.mrf.mxu0
      %v1285 = vadd.f32 0.0, %v1284
      %v1286 = vpop.f32.mrf.mxu0
      %1287 = vmatprep.mubr.f32.mxu0 %v937
      %1288 = vmatmul.mubr.f32.gmra.mxu0 %v833
      %v1289 = vpop.f32.mrf.mxu0
      %v1290 = vadd.f32 0.0, %v1289
      %v1291 = vpop.f32.mrf.mxu0
      %1292 = vmatprep.mubr.f32.mxu0 %v939
      %1293 = vmatmul.mubr.f32.gmra.mxu0 %v834
      %v1294 = vpop.f32.mrf.mxu0
      %v1295 = vadd.f32 0.0, %v1294
      %v1296 = vpop.f32.mrf.mxu0
      %1297 = vmatprep.mubr.f32.mxu0 %v942
      %1298 = vmatmul.mubr.f32.gmra.mxu0 %v836
      %v1299 = vpop.f32.mrf.mxu0
      %v1300 = vadd.f32 0.0, %v1299
      %v1301 = vpop.f32.mrf.mxu0
      %1302 = vmatprep.mubr.f32.mxu0 %v944
      %1303 = vmatmul.mubr.f32.gmra.mxu0 %v837
      %v1304 = vpop.f32.mrf.mxu0
      %v1305 = vadd.f32 0.0, %v1304
      %v1306 = vpop.f32.mrf.mxu0
      %1307 = vmatprep.mubr.f32.mxu0 %v947
      %1308 = vmatmul.mubr.f32.gmra.mxu0 %v839
      %v1309 = vpop.f32.mrf.mxu0
      %v1310 = vadd.f32 0.0, %v1309
      %v1311 = vpop.f32.mrf.mxu0
      %1312 = vmatprep.mubr.f32.mxu0 %v949
      %1313 = vmatmul.mubr.f32.gmra.mxu0 %v840
      %v1314 = vpop.f32.mrf.mxu0
      %v1315 = vadd.f32 0.0, %v1314
      %v1316 = vpop.f32.mrf.mxu0
      %1317 = vmatprep.mubr.f32.mxu0 %v952
      %1318 = vmatmul.mubr.f32.gmra.mxu0 %v842
      %v1319 = vpop.f32.mrf.mxu0
      %v1320 = vadd.f32 0.0, %v1319
      %v1321 = vpop.f32.mrf.mxu0
      %1322 = vmatprep.mubr.f32.mxu0 %v954
      %1323 = vmatmul.mubr.f32.gmra.mxu0 %v843
      %v1324 = vpop.f32.mrf.mxu0
      %v1325 = vadd.f32 0.0, %v1324
      %v1326 = vpop.f32.mrf.mxu0
      %1327 = vmatprep.mubr.f32.mxu0 %v957
      %1328 = vmatmul.mubr.f32.gmra.mxu0 %v845
      %v1329 = vpop.f32.mrf.mxu0
      %v1330 = vadd.f32 0.0, %v1329
      %v1331 = vpop.f32.mrf.mxu0
      %1332 = vmatprep.mubr.f32.mxu0 %v959
      %1333 = vmatmul.mubr.f32.gmra.mxu0 %v846
      %v1334 = vpop.f32.mrf.mxu0
      %v1335 = vadd.f32 0.0, %v1334
      %v1336 = vpop.f32.mrf.mxu0
      %1337 = vmatprep.mubr.f32.mxu0 %v962
      %1338 = vmatmul.mubr.f32.gmra.mxu0 %v848
      %v1339 = vpop.f32.mrf.mxu0
      %v1340 = vadd.f32 0.0, %v1339
      %v1341 = vpop.f32.mrf.mxu0
      %1342 = vmatprep.mubr.f32.mxu0 %v964
      %1343 = vmatmul.mubr.f32.gmra.mxu0 %v849
      %v1344 = vpop.f32.mrf.mxu0
      %v1345 = vadd.f32 0.0, %v1344
      %v1346 = vpop.f32.mrf.mxu0
      %1347 = vmatprep.mubr.f32.mxu0 %v967
      %1348 = vmatmul.mubr.f32.gmra.mxu0 %v851
      %v1349 = vpop.f32.mrf.mxu0
      %v1350 = vadd.f32 0.0, %v1349
      %v1351 = vpop.f32.mrf.mxu0
      %1352 = vmatprep.mubr.f32.mxu0 %v969
      %1353 = vmatmul.mubr.f32.gmra.mxu0 %v852
      %v1354 = vpop.f32.mrf.mxu0
      %v1355 = vadd.f32 0.0, %v1354
      %v1356 = vpop.f32.mrf.mxu0
      %1357 = vmatprep.mubr.f32.mxu0 %v972
      %1358 = vmatmul.mubr.f32.gmra.mxu0 %v854
      %v1359 = vpop.f32.mrf.mxu0
      %v1360 = vadd.f32 0.0, %v1359
      %v1361 = vpop.f32.mrf.mxu0
      %1362 = vmatprep.mubr.f32.mxu0 %v974
      %1363 = vmatmul.mubr.f32.gmra.mxu0 %v855
      %v1364 = vpop.f32.mrf.mxu0
      %v1365 = vadd.f32 0.0, %v1364
      %v1366 = vpop.f32.mrf.mxu0
      %1367 = vmatprep.mubr.f32.mxu0 %v977
      %1368 = vmatmul.mubr.f32.gmra.mxu0 %v857
      %v1369 = vpop.f32.mrf.mxu0
      %v1370 = vadd.f32 0.0, %v1369
      %v1371 = vpop.f32.mrf.mxu0
      %1372 = vmatprep.mubr.f32.mxu0 %v979
      %1373 = vmatmul.mubr.f32.gmra.mxu0 %v858
      %v1374 = vpop.f32.mrf.mxu0
      %v1375 = vadd.f32 0.0, %v1374
      %v1376 = vpop.f32.mrf.mxu0
      %1377 = vmatprep.mubr.f32.mxu0 %v982
      %1378 = vmatmul.mubr.f32.gmra.mxu0 %v860
      %v1379 = vpop.f32.mrf.mxu0
      %v1380 = vadd.f32 0.0, %v1379
      %v1381 = vpop.f32.mrf.mxu0
      %1382 = vmatprep.mubr.f32.mxu0 %v984
      %1383 = vmatmul.mubr.f32.gmra.mxu0 %v861
      %v1384 = vpop.f32.mrf.mxu0
      %v1385 = vadd.f32 0.0, %v1384
      %v1386 = vpop.f32.mrf.mxu0
      %1387 = vmatprep.mubr.f32.mxu0 %v987
      %1388 = vmatmul.mubr.f32.gmra.mxu0 %v863
      %v1389 = vpop.f32.mrf.mxu0
      %v1390 = vadd.f32 0.0, %v1389
      %v1391 = vpop.f32.mrf.mxu0
      %1392 = vmatprep.mubr.f32.mxu0 %v989
      %1393 = vmatmul.mubr.f32.gmra.mxu0 %v864
      %v1394 = vpop.f32.mrf.mxu0
      %v1395 = vadd.f32 0.0, %v1394
      %v1396 = vpop.f32.mrf.mxu0
      %1397 = vmatprep.mubr.f32.mxu0 %v992
      %1398 = vmatmul.mubr.f32.gmra.mxu0 %v866
      %v1399 = vpop.f32.mrf.mxu0
      %v1400 = vadd.f32 0.0, %v1399
      %v1401 = vpop.f32.mrf.mxu0
      %1402 = vmatprep.mubr.f32.mxu0 %v994
      %1403 = vmatmul.mubr.f32.gmra.mxu0 %v867
      %v1404 = vpop.f32.mrf.mxu0
      %v1405 = vadd.f32 0.0, %v1404
      %v1406 = vpop.f32.mrf.mxu0
      %1407 = vmatprep.mubr.f32.mxu0 %v997
      %1408 = vmatmul.mubr.f32.gmra.mxu0 %v869
      %v1409 = vpop.f32.mrf.mxu0
      %v1410 = vadd.f32 0.0, %v1409
      %v1411 = vpop.f32.mrf.mxu0
      %1412 = vmatprep.mubr.f32.mxu0 %v999
      %1413 = vmatmul.mubr.f32.gmra.mxu0 %v870
      %v1414 = vpop.f32.mrf.mxu0
      %v1415 = vadd.f32 0.0, %v1414
      %v1416 = vpop.f32.mrf.mxu0
      %1417 = vdwg.mxu0
      %1418 = vmatprep.subr.mxu0 0.0
      %1419 = vmatpush1.msra.mxu0 %v1192
      %1420 = vmatprep.subr.mxu0 0.0
      %1421 = vmatpush1.msra.mxu0 %v1191
      %1422 = vmatprep.subr.mxu0 0.0
      %1423 = vmatpush1.msra.mxu0 %v1190
      %1424 = vmatprep.subr.mxu0 0.0
      %1425 = vmatpush1.msra.mxu0 %v1189
      %1426 = vmatprep.subr.mxu0 0.0
      %1427 = vmatpush1.msra.mxu0 %v1188
      %1428 = vmatprep.subr.mxu0 0.0
      %1429 = vmatpush1.msra.mxu0 %v1187
      %1430 = vmatprep.subr.mxu0 0.0
      %1431 = vmatpush1.msra.mxu0 %v1186
      %1432 = vmatprep.subr.mxu0 0.0
      %1433 = vmatpush1.msra.mxu0 %v1185
      %1434 = vmatprep.subr.mxu0 0.0
      %1435 = vmatpush1.msra.mxu0 %v1184
      %1436 = vmatprep.subr.mxu0 0.0
      %1437 = vmatpush1.msra.mxu0 %v1183
      %1438 = vmatprep.subr.mxu0 0.0
      %1439 = vmatpush1.msra.mxu0 %v1182
      %1440 = vmatprep.subr.mxu0 0.0
      %1441 = vmatpush1.msra.mxu0 %v1181
      %1442 = vmatprep.subr.mxu0 0.0
      %1443 = vmatpush1.msra.mxu0 %v1180
      %1444 = vmatprep.subr.mxu0 0.0
      %1445 = vmatpush1.msra.mxu0 %v1179
      %1446 = vmatprep.subr.mxu0 0.0
      %1447 = vmatpush1.msra.mxu0 %v1178
      %1448 = vmatprep.subr.mxu0 0.0
      %1449 = vmatpush1.msra.mxu0 %v1177
      %1450 = vmatprep.subr.mxu0 0.0
      %1451 = vmatpush2.msra.mxu0 0.0
      %1452 = vmatprep.subr.mxu0 0.0
      %1453 = vmatpush2.msra.mxu0 0.0
      %1454 = vmatprep.subr.mxu0 0.0
      %1455 = vmatpush2.msra.mxu0 0.0
      %1456 = vmatprep.subr.mxu0 0.0
      %1457 = vmatpush2.msra.mxu0 0.0
      %1458 = vmatprep.subr.mxu0 0.0
      %1459 = vmatpush2.msra.mxu0 0.0
      %1460 = vmatprep.subr.mxu0 0.0
      %1461 = vmatpush2.msra.mxu0 0.0
      %1462 = vmatprep.subr.mxu0 0.0
      %1463 = vmatpush2.msra.mxu0 0.0
      %1464 = vmatprep.subr.mxu0 0.0
      %1465 = vmatpush2.msra.mxu0 0.0
      %1466 = vmatprep.subr.mxu0 0.0
      %1467 = vmatpush2.msra.mxu0 0.0
      %1468 = vmatprep.subr.mxu0 0.0
      %1469 = vmatpush2.msra.mxu0 0.0
      %1470 = vmatprep.subr.mxu0 0.0
      %1471 = vmatpush2.msra.mxu0 0.0
      %1472 = vmatprep.subr.mxu0 0.0
      %1473 = vmatpush2.msra.mxu0 0.0
      %1474 = vmatprep.subr.mxu0 0.0
      %1475 = vmatpush2.msra.mxu0 0.0
      %1476 = vmatprep.subr.mxu0 0.0
      %1477 = vmatpush2.msra.mxu0 0.0
      %1478 = vmatprep.subr.mxu0 0.0
      %1479 = vmatpush2.msra.mxu0 0.0
      %1480 = vmatprep.subr.mxu0 0.0
      %1481 = vmatpush2.msra.mxu0 0.0
      %1482 = vmatprep.mubr.f32.mxu0 0.0
      %1483 = vmatmul.mubr.f32.gmra.mxu0 %v1034
      %v1484 = vpop.f32.mrf.mxu0
      %v1485 = vadd.f32 %v1260, %v1484
      %v1486 = vpop.f32.mrf.mxu0
      %1487 = vmatprep.mubr.f32.mxu0 0.0
      %1488 = vmatmul.mubr.f32.gmra.mxu0 %v1036
      %v1489 = vpop.f32.mrf.mxu0
      %v1490 = vadd.f32 %v1265, %v1489
      %v1491 = vpop.f32.mrf.mxu0
      %1492 = vmatprep.mubr.f32.mxu0 0.0
      %1493 = vmatmul.mubr.f32.gmra.mxu0 %v1039
      %v1494 = vpop.f32.mrf.mxu0
      %v1495 = vadd.f32 %v1270, %v1494
      %v1496 = vpop.f32.mrf.mxu0
      %1497 = vmatprep.mubr.f32.mxu0 0.0
      %1498 = vmatmul.mubr.f32.gmra.mxu0 %v1041
      %v1499 = vpop.f32.mrf.mxu0
      %v1500 = vadd.f32 %v1275, %v1499
      %v1501 = vpop.f32.mrf.mxu0
      %1502 = vmatprep.mubr.f32.mxu0 0.0
      %1503 = vmatmul.mubr.f32.gmra.mxu0 %v1044
      %v1504 = vpop.f32.mrf.mxu0
      %v1505 = vadd.f32 %v1280, %v1504
      %v1506 = vpop.f32.mrf.mxu0
      %1507 = vmatprep.mubr.f32.mxu0 0.0
      %1508 = vmatmul.mubr.f32.gmra.mxu0 %v1046
      %v1509 = vpop.f32.mrf.mxu0
      %v1510 = vadd.f32 %v1285, %v1509
      %v1511 = vpop.f32.mrf.mxu0
      %1512 = vmatprep.mubr.f32.mxu0 0.0
      %1513 = vmatmul.mubr.f32.gmra.mxu0 %v1049
      %v1514 = vpop.f32.mrf.mxu0
      %v1515 = vadd.f32 %v1290, %v1514
      %v1516 = vpop.f32.mrf.mxu0
      %1517 = vmatprep.mubr.f32.mxu0 0.0
      %1518 = vmatmul.mubr.f32.gmra.mxu0 %v1051
      %v1519 = vpop.f32.mrf.mxu0
      %v1520 = vadd.f32 %v1295, %v1519
      %v1521 = vpop.f32.mrf.mxu0
      %1522 = vmatprep.mubr.f32.mxu0 0.0
      %1523 = vmatmul.mubr.f32.gmra.mxu0 %v1054
      %v1524 = vpop.f32.mrf.mxu0
      %v1525 = vadd.f32 %v1300, %v1524
      %v1526 = vpop.f32.mrf.mxu0
      %1527 = vmatprep.mubr.f32.mxu0 0.0
      %1528 = vmatmul.mubr.f32.gmra.mxu0 %v1056
      %v1529 = vpop.f32.mrf.mxu0
      %v1530 = vadd.f32 %v1305, %v1529
      %v1531 = vpop.f32.mrf.mxu0
      %1532 = vmatprep.mubr.f32.mxu0 0.0
      %1533 = vmatmul.mubr.f32.gmra.mxu0 %v1059
      %v1534 = vpop.f32.mrf.mxu0
      %v1535 = vadd.f32 %v1310, %v1534
      %v1536 = vpop.f32.mrf.mxu0
      %1537 = vmatprep.mubr.f32.mxu0 0.0
      %1538 = vmatmul.mubr.f32.gmra.mxu0 %v1061
      %v1539 = vpop.f32.mrf.mxu0
      %v1540 = vadd.f32 %v1315, %v1539
      %v1541 = vpop.f32.mrf.mxu0
      %1542 = vmatprep.mubr.f32.mxu0 0.0
      %1543 = vmatmul.mubr.f32.gmra.mxu0 %v1064
      %v1544 = vpop.f32.mrf.mxu0
      %v1545 = vadd.f32 %v1320, %v1544
      %v1546 = vpop.f32.mrf.mxu0
      %1547 = vmatprep.mubr.f32.mxu0 0.0
      %1548 = vmatmul.mubr.f32.gmra.mxu0 %v1066
      %v1549 = vpop.f32.mrf.mxu0
      %v1550 = vadd.f32 %v1325, %v1549
      %v1551 = vpop.f32.mrf.mxu0
      %1552 = vmatprep.mubr.f32.mxu0 0.0
      %1553 = vmatmul.mubr.f32.gmra.mxu0 %v1069
      %v1554 = vpop.f32.mrf.mxu0
      %v1555 = vadd.f32 %v1330, %v1554
      %v1556 = vpop.f32.mrf.mxu0
      %1557 = vmatprep.mubr.f32.mxu0 0.0
      %1558 = vmatmul.mubr.f32.gmra.mxu0 %v1071
      %v1559 = vpop.f32.mrf.mxu0
      %v1560 = vadd.f32 %v1335, %v1559
      %v1561 = vpop.f32.mrf.mxu0
      %1562 = vmatprep.mubr.f32.mxu0 0.0
      %1563 = vmatmul.mubr.f32.gmra.mxu0 %v1074
      %v1564 = vpop.f32.mrf.mxu0
      %v1565 = vadd.f32 %v1340, %v1564
      %v1566 = vpop.f32.mrf.mxu0
      %1567 = vmatprep.mubr.f32.mxu0 0.0
      %1568 = vmatmul.mubr.f32.gmra.mxu0 %v1076
      %v1569 = vpop.f32.mrf.mxu0
      %v1570 = vadd.f32 %v1345, %v1569
      %v1571 = vpop.f32.mrf.mxu0
      %1572 = vmatprep.mubr.f32.mxu0 0.0
      %1573 = vmatmul.mubr.f32.gmra.mxu0 %v1079
      %v1574 = vpop.f32.mrf.mxu0
      %v1575 = vadd.f32 %v1350, %v1574
      %v1576 = vpop.f32.mrf.mxu0
      %1577 = vmatprep.mubr.f32.mxu0 0.0
      %1578 = vmatmul.mubr.f32.gmra.mxu0 %v1081
      %v1579 = vpop.f32.mrf.mxu0
      %v1580 = vadd.f32 %v1355, %v1579
      %v1581 = vpop.f32.mrf.mxu0
      %1582 = vmatprep.mubr.f32.mxu0 0.0
      %1583 = vmatmul.mubr.f32.gmra.mxu0 %v1084
      %v1584 = vpop.f32.mrf.mxu0
      %v1585 = vadd.f32 %v1360, %v1584
      %v1586 = vpop.f32.mrf.mxu0
      %1587 = vmatprep.mubr.f32.mxu0 0.0
      %1588 = vmatmul.mubr.f32.gmra.mxu0 %v1086
      %v1589 = vpop.f32.mrf.mxu0
      %v1590 = vadd.f32 %v1365, %v1589
      %v1591 = vpop.f32.mrf.mxu0
      %1592 = vmatprep.mubr.f32.mxu0 0.0
      %1593 = vmatmul.mubr.f32.gmra.mxu0 %v1089
      %v1594 = vpop.f32.mrf.mxu0
      %v1595 = vadd.f32 %v1370, %v1594
      %v1596 = vpop.f32.mrf.mxu0
      %1597 = vmatprep.mubr.f32.mxu0 0.0
      %1598 = vmatmul.mubr.f32.gmra.mxu0 %v1091
      %v1599 = vpop.f32.mrf.mxu0
      %v1600 = vadd.f32 %v1375, %v1599
      %v1601 = vpop.f32.mrf.mxu0
      %1602 = vmatprep.mubr.f32.mxu0 0.0
      %1603 = vmatmul.mubr.f32.gmra.mxu0 %v1094
      %v1604 = vpop.f32.mrf.mxu0
      %v1605 = vadd.f32 %v1380, %v1604
      %v1606 = vpop.f32.mrf.mxu0
      %1607 = vmatprep.mubr.f32.mxu0 0.0
      %1608 = vmatmul.mubr.f32.gmra.mxu0 %v1096
      %v1609 = vpop.f32.mrf.mxu0
      %v1610 = vadd.f32 %v1385, %v1609
      %v1611 = vpop.f32.mrf.mxu0
      %1612 = vmatprep.mubr.f32.mxu0 0.0
      %1613 = vmatmul.mubr.f32.gmra.mxu0 %v1099
      %v1614 = vpop.f32.mrf.mxu0
      %v1615 = vadd.f32 %v1390, %v1614
      %v1616 = vpop.f32.mrf.mxu0
      %1617 = vmatprep.mubr.f32.mxu0 0.0
      %1618 = vmatmul.mubr.f32.gmra.mxu0 %v1101
      %v1619 = vpop.f32.mrf.mxu0
      %v1620 = vadd.f32 %v1395, %v1619
      %v1621 = vpop.f32.mrf.mxu0
      %1622 = vmatprep.mubr.f32.mxu0 0.0
      %1623 = vmatmul.mubr.f32.gmra.mxu0 %v1104
      %v1624 = vpop.f32.mrf.mxu0
      %v1625 = vadd.f32 %v1400, %v1624
      %v1626 = vpop.f32.mrf.mxu0
      %1627 = vmatprep.mubr.f32.mxu0 0.0
      %1628 = vmatmul.mubr.f32.gmra.mxu0 %v1106
      %v1629 = vpop.f32.mrf.mxu0
      %v1630 = vadd.f32 %v1405, %v1629
      %v1631 = vpop.f32.mrf.mxu0
      %1632 = vmatprep.mubr.f32.mxu0 0.0
      %1633 = vmatmul.mubr.f32.gmra.mxu0 %v1109
      %v1634 = vpop.f32.mrf.mxu0
      %v1635 = vadd.f32 %v1410, %v1634
      %v1636 = vpop.f32.mrf.mxu0
      %1637 = vmatprep.mubr.f32.mxu0 0.0
      %1638 = vmatmul.mubr.f32.gmra.mxu0 %v1111
      %v1639 = vpop.f32.mrf.mxu0
      %v1640 = vadd.f32 %v1415, %v1639
      %v1641 = vpop.f32.mrf.mxu0
      %1642 = vdwg.mxu0
      %1643 = vmatprep.subr.mxu0 0.0
      %1644 = vmatpush1.msra.mxu0 %v791
      %1645 = vmatprep.subr.mxu0 0.0
      %1646 = vmatpush1.msra.mxu0 %v790
      %1647 = vmatprep.subr.mxu0 0.0
      %1648 = vmatpush1.msra.mxu0 %v789
      %1649 = vmatprep.subr.mxu0 0.0
      %1650 = vmatpush1.msra.mxu0 %v788
      %1651 = vmatprep.subr.mxu0 0.0
      %1652 = vmatpush1.msra.mxu0 %v787
      %1653 = vmatprep.subr.mxu0 0.0
      %1654 = vmatpush1.msra.mxu0 %v786
      %1655 = vmatprep.subr.mxu0 0.0
      %1656 = vmatpush1.msra.mxu0 %v785
      %1657 = vmatprep.subr.mxu0 0.0
      %1658 = vmatpush1.msra.mxu0 %v784
      %1659 = vmatprep.subr.mxu0 0.0
      %1660 = vmatpush1.msra.mxu0 %v783
      %1661 = vmatprep.subr.mxu0 0.0
      %1662 = vmatpush1.msra.mxu0 %v782
      %1663 = vmatprep.subr.mxu0 0.0
      %1664 = vmatpush1.msra.mxu0 %v781
      %1665 = vmatprep.subr.mxu0 0.0
      %1666 = vmatpush1.msra.mxu0 %v780
      %1667 = vmatprep.subr.mxu0 0.0
      %1668 = vmatpush1.msra.mxu0 %v779
      %1669 = vmatprep.subr.mxu0 0.0
      %1670 = vmatpush1.msra.mxu0 %v778
      %1671 = vmatprep.subr.mxu0 0.0
      %1672 = vmatpush1.msra.mxu0 %v777
      %1673 = vmatprep.subr.mxu0 0.0
      %1674 = vmatpush1.msra.mxu0 %v776
      %1675 = vmatprep.subr.mxu0 0.0
      %1676 = vmatpush2.msra.mxu0 %v807
      %1677 = vmatprep.subr.mxu0 0.0
      %1678 = vmatpush2.msra.mxu0 %v806
      %1679 = vmatprep.subr.mxu0 0.0
      %1680 = vmatpush2.msra.mxu0 %v805
      %1681 = vmatprep.subr.mxu0 0.0
      %1682 = vmatpush2.msra.mxu0 %v804
      %1683 = vmatprep.subr.mxu0 0.0
      %1684 = vmatpush2.msra.mxu0 %v803
      %1685 = vmatprep.subr.mxu0 0.0
      %1686 = vmatpush2.msra.mxu0 %v802
      %1687 = vmatprep.subr.mxu0 0.0
      %1688 = vmatpush2.msra.mxu0 %v801
      %1689 = vmatprep.subr.mxu0 0.0
      %1690 = vmatpush2.msra.mxu0 %v800
      %1691 = vmatprep.subr.mxu0 0.0
      %1692 = vmatpush2.msra.mxu0 %v799
      %1693 = vmatprep.subr.mxu0 0.0
      %1694 = vmatpush2.msra.mxu0 %v798
      %1695 = vmatprep.subr.mxu0 0.0
      %1696 = vmatpush2.msra.mxu0 %v797
      %1697 = vmatprep.subr.mxu0 0.0
      %1698 = vmatpush2.msra.mxu0 %v796
      %1699 = vmatprep.subr.mxu0 0.0
      %1700 = vmatpush2.msra.mxu0 %v795
      %1701 = vmatprep.subr.mxu0 0.0
      %1702 = vmatpush2.msra.mxu0 %v794
      %1703 = vmatprep.subr.mxu0 0.0
      %1704 = vmatpush2.msra.mxu0 %v793
      %1705 = vmatprep.subr.mxu0 0.0
      %1706 = vmatpush2.msra.mxu0 %v792
      %1707 = vmatprep.mubr.f32.mxu0 %v553
      %1708 = vmatmul.mubr.f32.gmra.mxu0 %v454
      %v1709 = vpop.f32.mrf.mxu0
      %v1710 = vadd.f32 %v1485, %v1709
      %v1711 = vpop.f32.mrf.mxu0
      %1712 = vmatprep.mubr.f32.mxu0 %v555
      %1713 = vmatmul.mubr.f32.gmra.mxu0 %v455
      %v1714 = vpop.f32.mrf.mxu0
      %v1715 = vadd.f32 %v1490, %v1714
      %v1716 = vpop.f32.mrf.mxu0
      %1717 = vmatprep.mubr.f32.mxu0 %v558
      %1718 = vmatmul.mubr.f32.gmra.mxu0 %v457
      %v1719 = vpop.f32.mrf.mxu0
      %v1720 = vadd.f32 %v1495, %v1719
      %v1721 = vpop.f32.mrf.mxu0
      %1722 = vmatprep.mubr.f32.mxu0 %v560
      %1723 = vmatmul.mubr.f32.gmra.mxu0 %v458
      %v1724 = vpop.f32.mrf.mxu0
      %v1725 = vadd.f32 %v1500, %v1724
      %v1726 = vpop.f32.mrf.mxu0
      %1727 = vmatprep.mubr.f32.mxu0 %v563
      %1728 = vmatmul.mubr.f32.gmra.mxu0 %v460
      %v1729 = vpop.f32.mrf.mxu0
      %v1730 = vadd.f32 %v1505, %v1729
      %v1731 = vpop.f32.mrf.mxu0
      %1732 = vmatprep.mubr.f32.mxu0 %v565
      %1733 = vmatmul.mubr.f32.gmra.mxu0 %v461
      %v1734 = vpop.f32.mrf.mxu0
      %v1735 = vadd.f32 %v1510, %v1734
      %v1736 = vpop.f32.mrf.mxu0
      %1737 = vmatprep.mubr.f32.mxu0 %v568
      %1738 = vmatmul.mubr.f32.gmra.mxu0 %v463
      %v1739 = vpop.f32.mrf.mxu0
      %v1740 = vadd.f32 %v1515, %v1739
      %v1741 = vpop.f32.mrf.mxu0
      %1742 = vmatprep.mubr.f32.mxu0 %v570
      %1743 = vmatmul.mubr.f32.gmra.mxu0 %v464
      %v1744 = vpop.f32.mrf.mxu0
      %v1745 = vadd.f32 %v1520, %v1744
      %v1746 = vpop.f32.mrf.mxu0
      %1747 = vmatprep.mubr.f32.mxu0 %v573
      %1748 = vmatmul.mubr.f32.gmra.mxu0 %v466
      %v1749 = vpop.f32.mrf.mxu0
      %v1750 = vadd.f32 %v1525, %v1749
      %v1751 = vpop.f32.mrf.mxu0
      %1752 = vmatprep.mubr.f32.mxu0 %v575
      %1753 = vmatmul.mubr.f32.gmra.mxu0 %v467
      %v1754 = vpop.f32.mrf.mxu0
      %v1755 = vadd.f32 %v1530, %v1754
      %v1756 = vpop.f32.mrf.mxu0
      %1757 = vmatprep.mubr.f32.mxu0 %v578
      %1758 = vmatmul.mubr.f32.gmra.mxu0 %v469
      %v1759 = vpop.f32.mrf.mxu0
      %v1760 = vadd.f32 %v1535, %v1759
      %v1761 = vpop.f32.mrf.mxu0
      %1762 = vmatprep.mubr.f32.mxu0 %v580
      %1763 = vmatmul.mubr.f32.gmra.mxu0 %v470
      %v1764 = vpop.f32.mrf.mxu0
      %v1765 = vadd.f32 %v1540, %v1764
      %v1766 = vpop.f32.mrf.mxu0
      %1767 = vmatprep.mubr.f32.mxu0 %v583
      %1768 = vmatmul.mubr.f32.gmra.mxu0 %v472
      %v1769 = vpop.f32.mrf.mxu0
      %v1770 = vadd.f32 %v1545, %v1769
      %v1771 = vpop.f32.mrf.mxu0
      %1772 = vmatprep.mubr.f32.mxu0 %v585
      %1773 = vmatmul.mubr.f32.gmra.mxu0 %v473
      %v1774 = vpop.f32.mrf.mxu0
      %v1775 = vadd.f32 %v1550, %v1774
      %v1776 = vpop.f32.mrf.mxu0
      %1777 = vmatprep.mubr.f32.mxu0 %v588
      %1778 = vmatmul.mubr.f32.gmra.mxu0 %v475
      %v1779 = vpop.f32.mrf.mxu0
      %v1780 = vadd.f32 %v1555, %v1779
      %v1781 = vpop.f32.mrf.mxu0
      %1782 = vmatprep.mubr.f32.mxu0 %v590
      %1783 = vmatmul.mubr.f32.gmra.mxu0 %v476
      %v1784 = vpop.f32.mrf.mxu0
      %v1785 = vadd.f32 %v1560, %v1784
      %v1786 = vpop.f32.mrf.mxu0
      %1787 = vmatprep.mubr.f32.mxu0 %v593
      %1788 = vmatmul.mubr.f32.gmra.mxu0 %v478
      %v1789 = vpop.f32.mrf.mxu0
      %v1790 = vadd.f32 %v1565, %v1789
      %v1791 = vpop.f32.mrf.mxu0
      %1792 = vmatprep.mubr.f32.mxu0 %v595
      %1793 = vmatmul.mubr.f32.gmra.mxu0 %v479
      %v1794 = vpop.f32.mrf.mxu0
      %v1795 = vadd.f32 %v1570, %v1794
      %v1796 = vpop.f32.mrf.mxu0
      %1797 = vmatprep.mubr.f32.mxu0 %v598
      %1798 = vmatmul.mubr.f32.gmra.mxu0 %v481
      %v1799 = vpop.f32.mrf.mxu0
      %v1800 = vadd.f32 %v1575, %v1799
      %v1801 = vpop.f32.mrf.mxu0
      %1802 = vmatprep.mubr.f32.mxu0 %v600
      %1803 = vmatmul.mubr.f32.gmra.mxu0 %v482
      %v1804 = vpop.f32.mrf.mxu0
      %v1805 = vadd.f32 %v1580, %v1804
      %v1806 = vpop.f32.mrf.mxu0
      %1807 = vmatprep.mubr.f32.mxu0 %v603
      %1808 = vmatmul.mubr.f32.gmra.mxu0 %v484
      %v1809 = vpop.f32.mrf.mxu0
      %v1810 = vadd.f32 %v1585, %v1809
      %v1811 = vpop.f32.mrf.mxu0
      %1812 = vmatprep.mubr.f32.mxu0 %v605
      %1813 = vmatmul.mubr.f32.gmra.mxu0 %v485
      %v1814 = vpop.f32.mrf.mxu0
      %v1815 = vadd.f32 %v1590, %v1814
      %v1816 = vpop.f32.mrf.mxu0
      %1817 = vmatprep.mubr.f32.mxu0 %v608
      %1818 = vmatmul.mubr.f32.gmra.mxu0 %v487
      %v1819 = vpop.f32.mrf.mxu0
      %v1820 = vadd.f32 %v1595, %v1819
      %v1821 = vpop.f32.mrf.mxu0
      %1822 = vmatprep.mubr.f32.mxu0 %v610
      %1823 = vmatmul.mubr.f32.gmra.mxu0 %v488
      %v1824 = vpop.f32.mrf.mxu0
      %v1825 = vadd.f32 %v1600, %v1824
      %v1826 = vpop.f32.mrf.mxu0
      %1827 = vmatprep.mubr.f32.mxu0 %v613
      %1828 = vmatmul.mubr.f32.gmra.mxu0 %v490
      %v1829 = vpop.f32.mrf.mxu0
      %v1830 = vadd.f32 %v1605, %v1829
      %v1831 = vpop.f32.mrf.mxu0
      %1832 = vmatprep.mubr.f32.mxu0 %v615
      %1833 = vmatmul.mubr.f32.gmra.mxu0 %v491
      %v1834 = vpop.f32.mrf.mxu0
      %v1835 = vadd.f32 %v1610, %v1834
      %v1836 = vpop.f32.mrf.mxu0
      %1837 = vmatprep.mubr.f32.mxu0 %v618
      %1838 = vmatmul.mubr.f32.gmra.mxu0 %v493
      %v1839 = vpop.f32.mrf.mxu0
      %v1840 = vadd.f32 %v1615, %v1839
      %v1841 = vpop.f32.mrf.mxu0
      %1842 = vmatprep.mubr.f32.mxu0 %v620
      %1843 = vmatmul.mubr.f32.gmra.mxu0 %v494
      %v1844 = vpop.f32.mrf.mxu0
      %v1845 = vadd.f32 %v1620, %v1844
      %v1846 = vpop.f32.mrf.mxu0
      %1847 = vmatprep.mubr.f32.mxu0 %v623
      %1848 = vmatmul.mubr.f32.gmra.mxu0 %v496
      %v1849 = vpop.f32.mrf.mxu0
      %v1850 = vadd.f32 %v1625, %v1849
      %v1851 = vpop.f32.mrf.mxu0
      %1852 = vmatprep.mubr.f32.mxu0 %v625
      %1853 = vmatmul.mubr.f32.gmra.mxu0 %v497
      %v1854 = vpop.f32.mrf.mxu0
      %v1855 = vadd.f32 %v1630, %v1854
      %v1856 = vpop.f32.mrf.mxu0
      %1857 = vmatprep.mubr.f32.mxu0 %v628
      %1858 = vmatmul.mubr.f32.gmra.mxu0 %v499
      %v1859 = vpop.f32.mrf.mxu0
      %v1860 = vadd.f32 %v1635, %v1859
      %v1861 = vpop.f32.mrf.mxu0
      %1862 = vmatprep.mubr.f32.mxu0 %v630
      %1863 = vmatmul.mubr.f32.gmra.mxu0 %v500
      %v1864 = vpop.f32.mrf.mxu0
      %v1865 = vadd.f32 %v1640, %v1864
      %v1866 = vpop.f32.mrf.mxu0
      %1867 = vdwg.mxu0
      %1868 = vmatprep.subr.mxu0 0.0
      %1869 = vmatpush1.msra.mxu0 %v823
      %1870 = vmatprep.subr.mxu0 0.0
      %1871 = vmatpush1.msra.mxu0 %v822
      %1872 = vmatprep.subr.mxu0 0.0
      %1873 = vmatpush1.msra.mxu0 %v821
      %1874 = vmatprep.subr.mxu0 0.0
      %1875 = vmatpush1.msra.mxu0 %v820
      %1876 = vmatprep.subr.mxu0 0.0
      %1877 = vmatpush1.msra.mxu0 %v819
      %1878 = vmatprep.subr.mxu0 0.0
      %1879 = vmatpush1.msra.mxu0 %v818
      %1880 = vmatprep.subr.mxu0 0.0
      %1881 = vmatpush1.msra.mxu0 %v817
      %1882 = vmatprep.subr.mxu0 0.0
      %1883 = vmatpush1.msra.mxu0 %v816
      %1884 = vmatprep.subr.mxu0 0.0
      %1885 = vmatpush1.msra.mxu0 %v815
      %1886 = vmatprep.subr.mxu0 0.0
      %1887 = vmatpush1.msra.mxu0 %v814
      %1888 = vmatprep.subr.mxu0 0.0
      %1889 = vmatpush1.msra.mxu0 %v813
      %1890 = vmatprep.subr.mxu0 0.0
      %1891 = vmatpush1.msra.mxu0 %v812
      %1892 = vmatprep.subr.mxu0 0.0
      %1893 = vmatpush1.msra.mxu0 %v811
      %1894 = vmatprep.subr.mxu0 0.0
      %1895 = vmatpush1.msra.mxu0 %v810
      %1896 = vmatprep.subr.mxu0 0.0
      %1897 = vmatpush1.msra.mxu0 %v809
      %1898 = vmatprep.subr.mxu0 0.0
      %1899 = vmatpush1.msra.mxu0 %v808
      %1900 = vmatprep.subr.mxu0 0.0
      %1901 = vmatpush2.msra.mxu0 0.0
      %1902 = vmatprep.subr.mxu0 0.0
      %1903 = vmatpush2.msra.mxu0 0.0
      %1904 = vmatprep.subr.mxu0 0.0
      %1905 = vmatpush2.msra.mxu0 0.0
      %1906 = vmatprep.subr.mxu0 0.0
      %1907 = vmatpush2.msra.mxu0 0.0
      %1908 = vmatprep.subr.mxu0 0.0
      %1909 = vmatpush2.msra.mxu0 0.0
      %1910 = vmatprep.subr.mxu0 0.0
      %1911 = vmatpush2.msra.mxu0 0.0
      %1912 = vmatprep.subr.mxu0 0.0
      %1913 = vmatpush2.msra.mxu0 0.0
      %1914 = vmatprep.subr.mxu0 0.0
      %1915 = vmatpush2.msra.mxu0 0.0
      %1916 = vmatprep.subr.mxu0 0.0
      %1917 = vmatpush2.msra.mxu0 0.0
      %1918 = vmatprep.subr.mxu0 0.0
      %1919 = vmatpush2.msra.mxu0 0.0
      %1920 = vmatprep.subr.mxu0 0.0
      %1921 = vmatpush2.msra.mxu0 0.0
      %1922 = vmatprep.subr.mxu0 0.0
      %1923 = vmatpush2.msra.mxu0 0.0
      %1924 = vmatprep.subr.mxu0 0.0
      %1925 = vmatpush2.msra.mxu0 0.0
      %1926 = vmatprep.subr.mxu0 0.0
      %1927 = vmatpush2.msra.mxu0 0.0
      %1928 = vmatprep.subr.mxu0 0.0
      %1929 = vmatpush2.msra.mxu0 0.0
      %1930 = vmatprep.subr.mxu0 0.0
      %1931 = vmatpush2.msra.mxu0 0.0
      %1932 = vmatprep.mubr.f32.mxu0 0.0
      %1933 = vmatmul.mubr.f32.gmra.mxu0 %v666
      %v1934 = vpop.f32.mrf.mxu0
      %v1935 = vadd.f32 %v1710, %v1934
      %v1936 = vpop.f32.mrf.mxu0
      %1937 = vmatprep.mubr.f32.mxu0 0.0
      %1938 = vmatmul.mubr.f32.gmra.mxu0 %v668
      %v1939 = vpop.f32.mrf.mxu0
      %v1940 = vadd.f32 %v1715, %v1939
      %v1941 = vpop.f32.mrf.mxu0
      %1942 = vmatprep.mubr.f32.mxu0 0.0
      %1943 = vmatmul.mubr.f32.gmra.mxu0 %v671
      %v1944 = vpop.f32.mrf.mxu0
      %v1945 = vadd.f32 %v1720, %v1944
      %v1946 = vpop.f32.mrf.mxu0
      %1947 = vmatprep.mubr.f32.mxu0 0.0
      %1948 = vmatmul.mubr.f32.gmra.mxu0 %v673
      %v1949 = vpop.f32.mrf.mxu0
      %v1950 = vadd.f32 %v1725, %v1949
      %v1951 = vpop.f32.mrf.mxu0
      %1952 = vmatprep.mubr.f32.mxu0 0.0
      %1953 = vmatmul.mubr.f32.gmra.mxu0 %v676
      %v1954 = vpop.f32.mrf.mxu0
      %v1955 = vadd.f32 %v1730, %v1954
      %v1956 = vpop.f32.mrf.mxu0
      %1957 = vmatprep.mubr.f32.mxu0 0.0
      %1958 = vmatmul.mubr.f32.gmra.mxu0 %v678
      %v1959 = vpop.f32.mrf.mxu0
      %v1960 = vadd.f32 %v1735, %v1959
      %v1961 = vpop.f32.mrf.mxu0
      %1962 = vmatprep.mubr.f32.mxu0 0.0
      %1963 = vmatmul.mubr.f32.gmra.mxu0 %v681
      %v1964 = vpop.f32.mrf.mxu0
      %v1965 = vadd.f32 %v1740, %v1964
      %v1966 = vpop.f32.mrf.mxu0
      %1967 = vmatprep.mubr.f32.mxu0 0.0
      %1968 = vmatmul.mubr.f32.gmra.mxu0 %v683
      %v1969 = vpop.f32.mrf.mxu0
      %v1970 = vadd.f32 %v1745, %v1969
      %v1971 = vpop.f32.mrf.mxu0
      %1972 = vmatprep.mubr.f32.mxu0 0.0
      %1973 = vmatmul.mubr.f32.gmra.mxu0 %v686
      %v1974 = vpop.f32.mrf.mxu0
      %v1975 = vadd.f32 %v1750, %v1974
      %v1976 = vpop.f32.mrf.mxu0
      %1977 = vmatprep.mubr.f32.mxu0 0.0
      %1978 = vmatmul.mubr.f32.gmra.mxu0 %v688
      %v1979 = vpop.f32.mrf.mxu0
      %v1980 = vadd.f32 %v1755, %v1979
      %v1981 = vpop.f32.mrf.mxu0
      %1982 = vmatprep.mubr.f32.mxu0 0.0
      %1983 = vmatmul.mubr.f32.gmra.mxu0 %v691
      %v1984 = vpop.f32.mrf.mxu0
      %v1985 = vadd.f32 %v1760, %v1984
      %v1986 = vpop.f32.mrf.mxu0
      %1987 = vmatprep.mubr.f32.mxu0 0.0
      %1988 = vmatmul.mubr.f32.gmra.mxu0 %v693
      %v1989 = vpop.f32.mrf.mxu0
      %v1990 = vadd.f32 %v1765, %v1989
      %v1991 = vpop.f32.mrf.mxu0
      %1992 = vmatprep.mubr.f32.mxu0 0.0
      %1993 = vmatmul.mubr.f32.gmra.mxu0 %v696
      %v1994 = vpop.f32.mrf.mxu0
      %v1995 = vadd.f32 %v1770, %v1994
      %v1996 = vpop.f32.mrf.mxu0
      %1997 = vmatprep.mubr.f32.mxu0 0.0
      %1998 = vmatmul.mubr.f32.gmra.mxu0 %v698
      %v1999 = vpop.f32.mrf.mxu0
      %v2000 = vadd.f32 %v1775, %v1999
      %v2001 = vpop.f32.mrf.mxu0
      %2002 = vmatprep.mubr.f32.mxu0 0.0
      %2003 = vmatmul.mubr.f32.gmra.mxu0 %v701
      %v2004 = vpop.f32.mrf.mxu0
      %v2005 = vadd.f32 %v1780, %v2004
      %v2006 = vpop.f32.mrf.mxu0
      %2007 = vmatprep.mubr.f32.mxu0 0.0
      %2008 = vmatmul.mubr.f32.gmra.mxu0 %v703
      %v2009 = vpop.f32.mrf.mxu0
      %v2010 = vadd.f32 %v1785, %v2009
      %v2011 = vpop.f32.mrf.mxu0
      %2012 = vmatprep.mubr.f32.mxu0 0.0
      %2013 = vmatmul.mubr.f32.gmra.mxu0 %v706
      %v2014 = vpop.f32.mrf.mxu0
      %v2015 = vadd.f32 %v1790, %v2014
      %v2016 = vpop.f32.mrf.mxu0
      %2017 = vmatprep.mubr.f32.mxu0 0.0
      %2018 = vmatmul.mubr.f32.gmra.mxu0 %v708
      %v2019 = vpop.f32.mrf.mxu0
      %v2020 = vadd.f32 %v1795, %v2019
      %v2021 = vpop.f32.mrf.mxu0
      %2022 = vmatprep.mubr.f32.mxu0 0.0
      %2023 = vmatmul.mubr.f32.gmra.mxu0 %v711
      %v2024 = vpop.f32.mrf.mxu0
      %v2025 = vadd.f32 %v1800, %v2024
      %v2026 = vpop.f32.mrf.mxu0
      %2027 = vmatprep.mubr.f32.mxu0 0.0
      %2028 = vmatmul.mubr.f32.gmra.mxu0 %v713
      %v2029 = vpop.f32.mrf.mxu0
      %v2030 = vadd.f32 %v1805, %v2029
      %v2031 = vpop.f32.mrf.mxu0
      %2032 = vmatprep.mubr.f32.mxu0 0.0
      %2033 = vmatmul.mubr.f32.gmra.mxu0 %v716
      %v2034 = vpop.f32.mrf.mxu0
      %v2035 = vadd.f32 %v1810, %v2034
      %v2036 = vpop.f32.mrf.mxu0
      %2037 = vmatprep.mubr.f32.mxu0 0.0
      %2038 = vmatmul.mubr.f32.gmra.mxu0 %v718
      %v2039 = vpop.f32.mrf.mxu0
      %v2040 = vadd.f32 %v1815, %v2039
      %v2041 = vpop.f32.mrf.mxu0
      %2042 = vmatprep.mubr.f32.mxu0 0.0
      %2043 = vmatmul.mubr.f32.gmra.mxu0 %v721
      %v2044 = vpop.f32.mrf.mxu0
      %v2045 = vadd.f32 %v1820, %v2044
      %v2046 = vpop.f32.mrf.mxu0
      %2047 = vmatprep.mubr.f32.mxu0 0.0
      %2048 = vmatmul.mubr.f32.gmra.mxu0 %v723
      %v2049 = vpop.f32.mrf.mxu0
      %v2050 = vadd.f32 %v1825, %v2049
      %v2051 = vpop.f32.mrf.mxu0
      %2052 = vmatprep.mubr.f32.mxu0 0.0
      %2053 = vmatmul.mubr.f32.gmra.mxu0 %v726
      %v2054 = vpop.f32.mrf.mxu0
      %v2055 = vadd.f32 %v1830, %v2054
      %v2056 = vpop.f32.mrf.mxu0
      %2057 = vmatprep.mubr.f32.mxu0 0.0
      %2058 = vmatmul.mubr.f32.gmra.mxu0 %v728
      %v2059 = vpop.f32.mrf.mxu0
      %v2060 = vadd.f32 %v1835, %v2059
      %v2061 = vpop.f32.mrf.mxu0
      %2062 = vmatprep.mubr.f32.mxu0 0.0
      %2063 = vmatmul.mubr.f32.gmra.mxu0 %v731
      %v2064 = vpop.f32.mrf.mxu0
      %v2065 = vadd.f32 %v1840, %v2064
      %v2066 = vpop.f32.mrf.mxu0
      %2067 = vmatprep.mubr.f32.mxu0 0.0
      %2068 = vmatmul.mubr.f32.gmra.mxu0 %v733
      %v2069 = vpop.f32.mrf.mxu0
      %v2070 = vadd.f32 %v1845, %v2069
      %v2071 = vpop.f32.mrf.mxu0
      %2072 = vmatprep.mubr.f32.mxu0 0.0
      %2073 = vmatmul.mubr.f32.gmra.mxu0 %v736
      %v2074 = vpop.f32.mrf.mxu0
      %v2075 = vadd.f32 %v1850, %v2074
      %v2076 = vpop.f32.mrf.mxu0
      %2077 = vmatprep.mubr.f32.mxu0 0.0
      %2078 = vmatmul.mubr.f32.gmra.mxu0 %v738
      %v2079 = vpop.f32.mrf.mxu0
      %v2080 = vadd.f32 %v1855, %v2079
      %v2081 = vpop.f32.mrf.mxu0
      %2082 = vmatprep.mubr.f32.mxu0 0.0
      %2083 = vmatmul.mubr.f32.gmra.mxu0 %v741
      %v2084 = vpop.f32.mrf.mxu0
      %v2085 = vadd.f32 %v1860, %v2084
      %v2086 = vpop.f32.mrf.mxu0
      %2087 = vmatprep.mubr.f32.mxu0 0.0
      %2088 = vmatmul.mubr.f32.gmra.mxu0 %v743
      %v2089 = vpop.f32.mrf.mxu0
      %v2090 = vadd.f32 %v1865, %v2089
      %v2091 = vpop.f32.mrf.mxu0
      %2092 = vdwg.mxu0
      %s2093 = scalar_lea.vmem [#allocation2], 48
      %v2094 = vld [vmem:[%s2093] sm:$0xff]
      %v2095 = vld [vmem:[%s2093 + $0x8] sm:$0xff]
      %v2096 = vld [vmem:[%s2093 + $0x10] sm:$0x3]
      %v2097 = vld [vmem:[%s2093 + $0x18] sm:$0xff]
      %v2098 = vld [vmem:[%s2093 + $0x20] sm:$0xff]
      %v2099 = vld [vmem:[%s2093 + $0x28] sm:$0x3]
      %v2100 = vld [vmem:[%s2093 + $0x30] sm:$0xff]
      %v2101 = vld [vmem:[%s2093 + $0x38] sm:$0xff]
      %v2102 = vld [vmem:[%s2093 + $0x40] sm:$0x3]
      %v2103 = vld [vmem:[%s2093 + $0x48] sm:$0xff]
      %v2104 = vld [vmem:[%s2093 + $0x50] sm:$0xff]
      %v2105 = vld [vmem:[%s2093 + $0x58] sm:$0x3]
      %v2106 = vld [vmem:[%s2093 + $0x60] sm:$0xff]
      %v2107 = vld [vmem:[%s2093 + $0x68] sm:$0xff]
      %v2108 = vld [vmem:[%s2093 + $0x70] sm:$0x3]
      %v2109 = vld [vmem:[%s2093 + $0x78] sm:$0xff]
      %v2110 = vld [vmem:[%s2093 + $0x80] sm:$0xff]
      %v2111 = vld [vmem:[%s2093 + $0x88] sm:$0x3]
      %v2112 = vld [vmem:[%s2093 + $0x90] sm:$0xff]
      %v2113 = vld [vmem:[%s2093 + $0x98] sm:$0xff]
      %v2114 = vld [vmem:[%s2093 + $0xa0] sm:$0x3]
      %v2115 = vld [vmem:[%s2093 + $0xa8] sm:$0xff]
      %v2116 = vld [vmem:[%s2093 + $0xb0] sm:$0xff]
      %v2117 = vld [vmem:[%s2093 + $0xb8] sm:$0x3]
      %v2118 = vld [vmem:[%s2093 + $0xc0] sm:$0xff]
      %v2119 = vld [vmem:[%s2093 + $0xc8] sm:$0xff]
      %v2120 = vld [vmem:[%s2093 + $0xd0] sm:$0x3]
      %v2121 = vld [vmem:[%s2093 + $0xd8] sm:$0xff]
      %v2122 = vld [vmem:[%s2093 + $0xe0] sm:$0xff]
      %v2123 = vld [vmem:[%s2093 + $0xe8] sm:$0x3]
      %v2124 = vld [vmem:[%s2093 + $0xf0] sm:$0xff]
      %v2125 = vld [vmem:[%s2093 + $0xf8] sm:$0xff]
      %v2126 = vld [vmem:[%s2093 + $0x100] sm:$0x3]
      %v2127 = vld [vmem:[%s2093 + $0x108] sm:$0xff]
      %v2128 = vld [vmem:[%s2093 + $0x110] sm:$0xff]
      %v2129 = vld [vmem:[%s2093 + $0x118] sm:$0x3]
      %v2130 = vld [vmem:[%s2093 + $0x120] sm:$0xff]
      %v2131 = vld [vmem:[%s2093 + $0x128] sm:$0xff]
      %v2132 = vld [vmem:[%s2093 + $0x130] sm:$0x3]
      %v2133 = vld [vmem:[%s2093 + $0x138] sm:$0xff]
      %v2134 = vld [vmem:[%s2093 + $0x140] sm:$0xff]
      %v2135 = vld [vmem:[%s2093 + $0x148] sm:$0x3]
      %v2136 = vld [vmem:[%s2093 + $0x150] sm:$0xff]
      %v2137 = vld [vmem:[%s2093 + $0x158] sm:$0xff]
      %v2138 = vld [vmem:[%s2093 + $0x160] sm:$0x3]
      %v2139 = vld [vmem:[%s2093 + $0x168] sm:$0xff]
      %v2140 = vld [vmem:[%s2093 + $0x170] sm:$0xff]
      %v2141 = vld [vmem:[%s2093 + $0x178] sm:$0x3]
      %v2190 = vrot.slane %v2094, 1
      %v2191 = vrot.slane %v2095, 1
      %v2192 = vsel %vm550, %v2190, %v2191
      %v2193 = vrot.slane %v2096, 1
      %v2194 = vsel %vm550, %v2191, %v2193
      %v2195 = vrot.slane %v2097, 1
      %v2196 = vrot.slane %v2098, 1
      %v2197 = vsel %vm550, %v2195, %v2196
      %v2198 = vrot.slane %v2099, 1
      %v2199 = vsel %vm550, %v2196, %v2198
      %v2200 = vrot.slane %v2100, 1
      %v2201 = vrot.slane %v2101, 1
      %v2202 = vsel %vm550, %v2200, %v2201
      %v2203 = vrot.slane %v2102, 1
      %v2204 = vsel %vm550, %v2201, %v2203
      %v2205 = vrot.slane %v2103, 1
      %v2206 = vrot.slane %v2104, 1
      %v2207 = vsel %vm550, %v2205, %v2206
      %v2208 = vrot.slane %v2105, 1
      %v2209 = vsel %vm550, %v2206, %v2208
      %v2210 = vrot.slane %v2106, 1
      %v2211 = vrot.slane %v2107, 1
      %v2212 = vsel %vm550, %v2210, %v2211
      %v2213 = vrot.slane %v2108, 1
      %v2214 = vsel %vm550, %v2211, %v2213
      %v2215 = vrot.slane %v2109, 1
      %v2216 = vrot.slane %v2110, 1
      %v2217 = vsel %vm550, %v2215, %v2216
      %v2218 = vrot.slane %v2111, 1
      %v2219 = vsel %vm550, %v2216, %v2218
      %v2220 = vrot.slane %v2112, 1
      %v2221 = vrot.slane %v2113, 1
      %v2222 = vsel %vm550, %v2220, %v2221
      %v2223 = vrot.slane %v2114, 1
      %v2224 = vsel %vm550, %v2221, %v2223
      %v2225 = vrot.slane %v2115, 1
      %v2226 = vrot.slane %v2116, 1
      %v2227 = vsel %vm550, %v2225, %v2226
      %v2228 = vrot.slane %v2117, 1
      %v2229 = vsel %vm550, %v2226, %v2228
      %v2230 = vrot.slane %v2118, 1
      %v2231 = vrot.slane %v2119, 1
      %v2232 = vsel %vm550, %v2230, %v2231
      %v2233 = vrot.slane %v2120, 1
      %v2234 = vsel %vm550, %v2231, %v2233
      %v2235 = vrot.slane %v2121, 1
      %v2236 = vrot.slane %v2122, 1
      %v2237 = vsel %vm550, %v2235, %v2236
      %v2238 = vrot.slane %v2123, 1
      %v2239 = vsel %vm550, %v2236, %v2238
      %v2240 = vrot.slane %v2124, 1
      %v2241 = vrot.slane %v2125, 1
      %v2242 = vsel %vm550, %v2240, %v2241
      %v2243 = vrot.slane %v2126, 1
      %v2244 = vsel %vm550, %v2241, %v2243
      %v2245 = vrot.slane %v2127, 1
      %v2246 = vrot.slane %v2128, 1
      %v2247 = vsel %vm550, %v2245, %v2246
      %v2248 = vrot.slane %v2129, 1
      %v2249 = vsel %vm550, %v2246, %v2248
      %v2250 = vrot.slane %v2130, 1
      %v2251 = vrot.slane %v2131, 1
      %v2252 = vsel %vm550, %v2250, %v2251
      %v2253 = vrot.slane %v2132, 1
      %v2254 = vsel %vm550, %v2251, %v2253
      %v2255 = vrot.slane %v2133, 1
      %v2256 = vrot.slane %v2134, 1
      %v2257 = vsel %vm550, %v2255, %v2256
      %v2258 = vrot.slane %v2135, 1
      %v2259 = vsel %vm550, %v2256, %v2258
      %v2260 = vrot.slane %v2136, 1
      %v2261 = vrot.slane %v2137, 1
      %v2262 = vsel %vm550, %v2260, %v2261
      %v2263 = vrot.slane %v2138, 1
      %v2264 = vsel %vm550, %v2261, %v2263
      %v2265 = vrot.slane %v2139, 1
      %v2266 = vrot.slane %v2140, 1
      %v2267 = vsel %vm550, %v2265, %v2266
      %v2268 = vrot.slane %v2141, 1
      %v2269 = vsel %vm550, %v2266, %v2268
      %v2302 = vrot.slane %v2094, 2
      %v2303 = vrot.slane %v2095, 2
      %v2304 = vsel %vm663, %v2302, %v2303
      %v2305 = vrot.slane %v2096, 2
      %v2306 = vsel %vm663, %v2303, %v2305
      %v2307 = vrot.slane %v2097, 2
      %v2308 = vrot.slane %v2098, 2
      %v2309 = vsel %vm663, %v2307, %v2308
      %v2310 = vrot.slane %v2099, 2
      %v2311 = vsel %vm663, %v2308, %v2310
      %v2312 = vrot.slane %v2100, 2
      %v2313 = vrot.slane %v2101, 2
      %v2314 = vsel %vm663, %v2312, %v2313
      %v2315 = vrot.slane %v2102, 2
      %v2316 = vsel %vm663, %v2313, %v2315
      %v2317 = vrot.slane %v2103, 2
      %v2318 = vrot.slane %v2104, 2
      %v2319 = vsel %vm663, %v2317, %v2318
      %v2320 = vrot.slane %v2105, 2
      %v2321 = vsel %vm663, %v2318, %v2320
      %v2322 = vrot.slane %v2106, 2
      %v2323 = vrot.slane %v2107, 2
      %v2324 = vsel %vm663, %v2322, %v2323
      %v2325 = vrot.slane %v2108, 2
      %v2326 = vsel %vm663, %v2323, %v2325
      %v2327 = vrot.slane %v2109, 2
      %v2328 = vrot.slane %v2110, 2
      %v2329 = vsel %vm663, %v2327, %v2328
      %v2330 = vrot.slane %v2111, 2
      %v2331 = vsel %vm663, %v2328, %v2330
      %v2332 = vrot.slane %v2112, 2
      %v2333 = vrot.slane %v2113, 2
      %v2334 = vsel %vm663, %v2332, %v2333
      %v2335 = vrot.slane %v2114, 2
      %v2336 = vsel %vm663, %v2333, %v2335
      %v2337 = vrot.slane %v2115, 2
      %v2338 = vrot.slane %v2116, 2
      %v2339 = vsel %vm663, %v2337, %v2338
      %v2340 = vrot.slane %v2117, 2
      %v2341 = vsel %vm663, %v2338, %v2340
      %v2342 = vrot.slane %v2118, 2
      %v2343 = vrot.slane %v2119, 2
      %v2344 = vsel %vm663, %v2342, %v2343
      %v2345 = vrot.slane %v2120, 2
      %v2346 = vsel %vm663, %v2343, %v2345
      %v2347 = vrot.slane %v2121, 2
      %v2348 = vrot.slane %v2122, 2
      %v2349 = vsel %vm663, %v2347, %v2348
      %v2350 = vrot.slane %v2123, 2
      %v2351 = vsel %vm663, %v2348, %v2350
      %v2352 = vrot.slane %v2124, 2
      %v2353 = vrot.slane %v2125, 2
      %v2354 = vsel %vm663, %v2352, %v2353
      %v2355 = vrot.slane %v2126, 2
      %v2356 = vsel %vm663, %v2353, %v2355
      %v2357 = vrot.slane %v2127, 2
      %v2358 = vrot.slane %v2128, 2
      %v2359 = vsel %vm663, %v2357, %v2358
      %v2360 = vrot.slane %v2129, 2
      %v2361 = vsel %vm663, %v2358, %v2360
      %v2362 = vrot.slane %v2130, 2
      %v2363 = vrot.slane %v2131, 2
      %v2364 = vsel %vm663, %v2362, %v2363
      %v2365 = vrot.slane %v2132, 2
      %v2366 = vsel %vm663, %v2363, %v2365
      %v2367 = vrot.slane %v2133, 2
      %v2368 = vrot.slane %v2134, 2
      %v2369 = vsel %vm663, %v2367, %v2368
      %v2370 = vrot.slane %v2135, 2
      %v2371 = vsel %vm663, %v2368, %v2370
      %v2372 = vrot.slane %v2136, 2
      %v2373 = vrot.slane %v2137, 2
      %v2374 = vsel %vm663, %v2372, %v2373
      %v2375 = vrot.slane %v2138, 2
      %v2376 = vsel %vm663, %v2373, %v2375
      %v2377 = vrot.slane %v2139, 2
      %v2378 = vrot.slane %v2140, 2
      %v2379 = vsel %vm663, %v2377, %v2378
      %v2380 = vrot.slane %v2141, 2
      %v2381 = vsel %vm663, %v2378, %v2380
      %s2414 = scalar_lea.vmem %s3, 768
      %v2415 = vld [vmem:[%s2414] sm:$0xff]
      %v2416 = vld [vmem:[%s2414 + $0x8] sm:$0xff]
      %v2417 = vld [vmem:[%s2414 + $0x10] sm:$0xff]
      %v2418 = vld [vmem:[%s2414 + $0x18] sm:$0xff]
      %v2419 = vld [vmem:[%s2414 + $0x20] sm:$0xff]
      %v2420 = vld [vmem:[%s2414 + $0x28] sm:$0xff]
      %v2421 = vld [vmem:[%s2414 + $0x30] sm:$0xff]
      %v2422 = vld [vmem:[%s2414 + $0x38] sm:$0xff]
      %v2423 = vld [vmem:[%s2414 + $0x40] sm:$0xff]
      %v2424 = vld [vmem:[%s2414 + $0x48] sm:$0xff]
      %v2425 = vld [vmem:[%s2414 + $0x50] sm:$0xff]
      %v2426 = vld [vmem:[%s2414 + $0x58] sm:$0xff]
      %v2427 = vld [vmem:[%s2414 + $0x60] sm:$0xff]
      %v2428 = vld [vmem:[%s2414 + $0x68] sm:$0xff]
      %v2429 = vld [vmem:[%s2414 + $0x70] sm:$0xff]
      %v2430 = vld [vmem:[%s2414 + $0x78] sm:$0xff]
      %v2431 = vld [vmem:[%s2414 + $0x80] sm:$0xff]
      %v2432 = vld [vmem:[%s2414 + $0x88] sm:$0xff]
      %v2433 = vld [vmem:[%s2414 + $0x90] sm:$0xff]
      %v2434 = vld [vmem:[%s2414 + $0x98] sm:$0xff]
      %v2435 = vld [vmem:[%s2414 + $0xa0] sm:$0xff]
      %v2436 = vld [vmem:[%s2414 + $0xa8] sm:$0xff]
      %v2437 = vld [vmem:[%s2414 + $0xb0] sm:$0xff]
      %v2438 = vld [vmem:[%s2414 + $0xb8] sm:$0xff]
      %v2439 = vld [vmem:[%s2414 + $0xc0] sm:$0xff]
      %v2440 = vld [vmem:[%s2414 + $0xc8] sm:$0xff]
      %v2441 = vld [vmem:[%s2414 + $0xd0] sm:$0xff]
      %v2442 = vld [vmem:[%s2414 + $0xd8] sm:$0xff]
      %v2443 = vld [vmem:[%s2414 + $0xe0] sm:$0xff]
      %v2444 = vld [vmem:[%s2414 + $0xe8] sm:$0xff]
      %v2445 = vld [vmem:[%s2414 + $0xf0] sm:$0xff]
      %v2446 = vld [vmem:[%s2414 + $0xf8] sm:$0xff]
      %v2447 = vld [vmem:[%s2414 + $0x100] sm:$0xff]
      %v2448 = vld [vmem:[%s2414 + $0x108] sm:$0xff]
      %v2449 = vld [vmem:[%s2414 + $0x110] sm:$0xff]
      %v2450 = vld [vmem:[%s2414 + $0x118] sm:$0xff]
      %v2451 = vld [vmem:[%s2414 + $0x120] sm:$0xff]
      %v2452 = vld [vmem:[%s2414 + $0x128] sm:$0xff]
      %v2453 = vld [vmem:[%s2414 + $0x130] sm:$0xff]
      %v2454 = vld [vmem:[%s2414 + $0x138] sm:$0xff]
      %v2455 = vld [vmem:[%s2414 + $0x140] sm:$0xff]
      %v2456 = vld [vmem:[%s2414 + $0x148] sm:$0xff]
      %v2457 = vld [vmem:[%s2414 + $0x150] sm:$0xff]
      %v2458 = vld [vmem:[%s2414 + $0x158] sm:$0xff]
      %v2459 = vld [vmem:[%s2414 + $0x160] sm:$0xff]
      %v2460 = vld [vmem:[%s2414 + $0x168] sm:$0xff]
      %v2461 = vld [vmem:[%s2414 + $0x170] sm:$0xff]
      %v2462 = vld [vmem:[%s2414 + $0x178] sm:$0xff]
      %2463 = vmatprep.subr.mxu0 0.0
      %2464 = vmatpush1.msra.mxu0 %v2430
      %2465 = vmatprep.subr.mxu0 0.0
      %2466 = vmatpush1.msra.mxu0 %v2429
      %2467 = vmatprep.subr.mxu0 0.0
      %2468 = vmatpush1.msra.mxu0 %v2428
      %2469 = vmatprep.subr.mxu0 0.0
      %2470 = vmatpush1.msra.mxu0 %v2427
      %2471 = vmatprep.subr.mxu0 0.0
      %2472 = vmatpush1.msra.mxu0 %v2426
      %2473 = vmatprep.subr.mxu0 0.0
      %2474 = vmatpush1.msra.mxu0 %v2425
      %2475 = vmatprep.subr.mxu0 0.0
      %2476 = vmatpush1.msra.mxu0 %v2424
      %2477 = vmatprep.subr.mxu0 0.0
      %2478 = vmatpush1.msra.mxu0 %v2423
      %2479 = vmatprep.subr.mxu0 0.0
      %2480 = vmatpush1.msra.mxu0 %v2422
      %2481 = vmatprep.subr.mxu0 0.0
      %2482 = vmatpush1.msra.mxu0 %v2421
      %2483 = vmatprep.subr.mxu0 0.0
      %2484 = vmatpush1.msra.mxu0 %v2420
      %2485 = vmatprep.subr.mxu0 0.0
      %2486 = vmatpush1.msra.mxu0 %v2419
      %2487 = vmatprep.subr.mxu0 0.0
      %2488 = vmatpush1.msra.mxu0 %v2418
      %2489 = vmatprep.subr.mxu0 0.0
      %2490 = vmatpush1.msra.mxu0 %v2417
      %2491 = vmatprep.subr.mxu0 0.0
      %2492 = vmatpush1.msra.mxu0 %v2416
      %2493 = vmatprep.subr.mxu0 0.0
      %2494 = vmatpush1.msra.mxu0 %v2415
      %2495 = vmatprep.subr.mxu0 0.0
      %2496 = vmatpush2.msra.mxu0 %v2446
      %2497 = vmatprep.subr.mxu0 0.0
      %2498 = vmatpush2.msra.mxu0 %v2445
      %2499 = vmatprep.subr.mxu0 0.0
      %2500 = vmatpush2.msra.mxu0 %v2444
      %2501 = vmatprep.subr.mxu0 0.0
      %2502 = vmatpush2.msra.mxu0 %v2443
      %2503 = vmatprep.subr.mxu0 0.0
      %2504 = vmatpush2.msra.mxu0 %v2442
      %2505 = vmatprep.subr.mxu0 0.0
      %2506 = vmatpush2.msra.mxu0 %v2441
      %2507 = vmatprep.subr.mxu0 0.0
      %2508 = vmatpush2.msra.mxu0 %v2440
      %2509 = vmatprep.subr.mxu0 0.0
      %2510 = vmatpush2.msra.mxu0 %v2439
      %2511 = vmatprep.subr.mxu0 0.0
      %2512 = vmatpush2.msra.mxu0 %v2438
      %2513 = vmatprep.subr.mxu0 0.0
      %2514 = vmatpush2.msra.mxu0 %v2437
      %2515 = vmatprep.subr.mxu0 0.0
      %2516 = vmatpush2.msra.mxu0 %v2436
      %2517 = vmatprep.subr.mxu0 0.0
      %2518 = vmatpush2.msra.mxu0 %v2435
      %2519 = vmatprep.subr.mxu0 0.0
      %2520 = vmatpush2.msra.mxu0 %v2434
      %2521 = vmatprep.subr.mxu0 0.0
      %2522 = vmatpush2.msra.mxu0 %v2433
      %2523 = vmatprep.subr.mxu0 0.0
      %2524 = vmatpush2.msra.mxu0 %v2432
      %2525 = vmatprep.subr.mxu0 0.0
      %2526 = vmatpush2.msra.mxu0 %v2431
      %2527 = vmatprep.mubr.f32.mxu0 %v2192
      %2528 = vmatmul.mubr.f32.gmra.mxu0 %v2094
      %v2529 = vpop.f32.mrf.mxu0
      %v2530 = vadd.f32 0.0, %v2529
      %v2531 = vpop.f32.mrf.mxu0
      %2532 = vmatprep.mubr.f32.mxu0 %v2194
      %2533 = vmatmul.mubr.f32.gmra.mxu0 %v2095
      %v2534 = vpop.f32.mrf.mxu0
      %v2535 = vadd.f32 0.0, %v2534
      %v2536 = vpop.f32.mrf.mxu0
      %2537 = vmatprep.mubr.f32.mxu0 %v2197
      %2538 = vmatmul.mubr.f32.gmra.mxu0 %v2097
      %v2539 = vpop.f32.mrf.mxu0
      %v2540 = vadd.f32 0.0, %v2539
      %v2541 = vpop.f32.mrf.mxu0
      %2542 = vmatprep.mubr.f32.mxu0 %v2199
      %2543 = vmatmul.mubr.f32.gmra.mxu0 %v2098
      %v2544 = vpop.f32.mrf.mxu0
      %v2545 = vadd.f32 0.0, %v2544
      %v2546 = vpop.f32.mrf.mxu0
      %2547 = vmatprep.mubr.f32.mxu0 %v2202
      %2548 = vmatmul.mubr.f32.gmra.mxu0 %v2100
      %v2549 = vpop.f32.mrf.mxu0
      %v2550 = vadd.f32 0.0, %v2549
      %v2551 = vpop.f32.mrf.mxu0
      %2552 = vmatprep.mubr.f32.mxu0 %v2204
      %2553 = vmatmul.mubr.f32.gmra.mxu0 %v2101
      %v2554 = vpop.f32.mrf.mxu0
      %v2555 = vadd.f32 0.0, %v2554
      %v2556 = vpop.f32.mrf.mxu0
      %2557 = vmatprep.mubr.f32.mxu0 %v2207
      %2558 = vmatmul.mubr.f32.gmra.mxu0 %v2103
      %v2559 = vpop.f32.mrf.mxu0
      %v2560 = vadd.f32 0.0, %v2559
      %v2561 = vpop.f32.mrf.mxu0
      %2562 = vmatprep.mubr.f32.mxu0 %v2209
      %2563 = vmatmul.mubr.f32.gmra.mxu0 %v2104
      %v2564 = vpop.f32.mrf.mxu0
      %v2565 = vadd.f32 0.0, %v2564
      %v2566 = vpop.f32.mrf.mxu0
      %2567 = vmatprep.mubr.f32.mxu0 %v2212
      %2568 = vmatmul.mubr.f32.gmra.mxu0 %v2106
      %v2569 = vpop.f32.mrf.mxu0
      %v2570 = vadd.f32 0.0, %v2569
      %v2571 = vpop.f32.mrf.mxu0
      %2572 = vmatprep.mubr.f32.mxu0 %v2214
      %2573 = vmatmul.mubr.f32.gmra.mxu0 %v2107
      %v2574 = vpop.f32.mrf.mxu0
      %v2575 = vadd.f32 0.0, %v2574
      %v2576 = vpop.f32.mrf.mxu0
      %2577 = vmatprep.mubr.f32.mxu0 %v2217
      %2578 = vmatmul.mubr.f32.gmra.mxu0 %v2109
      %v2579 = vpop.f32.mrf.mxu0
      %v2580 = vadd.f32 0.0, %v2579
      %v2581 = vpop.f32.mrf.mxu0
      %2582 = vmatprep.mubr.f32.mxu0 %v2219
      %2583 = vmatmul.mubr.f32.gmra.mxu0 %v2110
      %v2584 = vpop.f32.mrf.mxu0
      %v2585 = vadd.f32 0.0, %v2584
      %v2586 = vpop.f32.mrf.mxu0
      %2587 = vmatprep.mubr.f32.mxu0 %v2222
      %2588 = vmatmul.mubr.f32.gmra.mxu0 %v2112
      %v2589 = vpop.f32.mrf.mxu0
      %v2590 = vadd.f32 0.0, %v2589
      %v2591 = vpop.f32.mrf.mxu0
      %2592 = vmatprep.mubr.f32.mxu0 %v2224
      %2593 = vmatmul.mubr.f32.gmra.mxu0 %v2113
      %v2594 = vpop.f32.mrf.mxu0
      %v2595 = vadd.f32 0.0, %v2594
      %v2596 = vpop.f32.mrf.mxu0
      %2597 = vmatprep.mubr.f32.mxu0 %v2227
      %2598 = vmatmul.mubr.f32.gmra.mxu0 %v2115
      %v2599 = vpop.f32.mrf.mxu0
      %v2600 = vadd.f32 0.0, %v2599
      %v2601 = vpop.f32.mrf.mxu0
      %2602 = vmatprep.mubr.f32.mxu0 %v2229
      %2603 = vmatmul.mubr.f32.gmra.mxu0 %v2116
      %v2604 = vpop.f32.mrf.mxu0
      %v2605 = vadd.f32 0.0, %v2604
      %v2606 = vpop.f32.mrf.mxu0
      %2607 = vmatprep.mubr.f32.mxu0 %v2232
      %2608 = vmatmul.mubr.f32.gmra.mxu0 %v2118
      %v2609 = vpop.f32.mrf.mxu0
      %v2610 = vadd.f32 0.0, %v2609
      %v2611 = vpop.f32.mrf.mxu0
      %2612 = vmatprep.mubr.f32.mxu0 %v2234
      %2613 = vmatmul.mubr.f32.gmra.mxu0 %v2119
      %v2614 = vpop.f32.mrf.mxu0
      %v2615 = vadd.f32 0.0, %v2614
      %v2616 = vpop.f32.mrf.mxu0
      %2617 = vmatprep.mubr.f32.mxu0 %v2237
      %2618 = vmatmul.mubr.f32.gmra.mxu0 %v2121
      %v2619 = vpop.f32.mrf.mxu0
      %v2620 = vadd.f32 0.0, %v2619
      %v2621 = vpop.f32.mrf.mxu0
      %2622 = vmatprep.mubr.f32.mxu0 %v2239
      %2623 = vmatmul.mubr.f32.gmra.mxu0 %v2122
      %v2624 = vpop.f32.mrf.mxu0
      %v2625 = vadd.f32 0.0, %v2624
      %v2626 = vpop.f32.mrf.mxu0
      %2627 = vmatprep.mubr.f32.mxu0 %v2242
      %2628 = vmatmul.mubr.f32.gmra.mxu0 %v2124
      %v2629 = vpop.f32.mrf.mxu0
      %v2630 = vadd.f32 0.0, %v2629
      %v2631 = vpop.f32.mrf.mxu0
      %2632 = vmatprep.mubr.f32.mxu0 %v2244
      %2633 = vmatmul.mubr.f32.gmra.mxu0 %v2125
      %v2634 = vpop.f32.mrf.mxu0
      %v2635 = vadd.f32 0.0, %v2634
      %v2636 = vpop.f32.mrf.mxu0
      %2637 = vmatprep.mubr.f32.mxu0 %v2247
      %2638 = vmatmul.mubr.f32.gmra.mxu0 %v2127
      %v2639 = vpop.f32.mrf.mxu0
      %v2640 = vadd.f32 0.0, %v2639
      %v2641 = vpop.f32.mrf.mxu0
      %2642 = vmatprep.mubr.f32.mxu0 %v2249
      %2643 = vmatmul.mubr.f32.gmra.mxu0 %v2128
      %v2644 = vpop.f32.mrf.mxu0
      %v2645 = vadd.f32 0.0, %v2644
      %v2646 = vpop.f32.mrf.mxu0
      %2647 = vmatprep.mubr.f32.mxu0 %v2252
      %2648 = vmatmul.mubr.f32.gmra.mxu0 %v2130
      %v2649 = vpop.f32.mrf.mxu0
      %v2650 = vadd.f32 0.0, %v2649
      %v2651 = vpop.f32.mrf.mxu0
      %2652 = vmatprep.mubr.f32.mxu0 %v2254
      %2653 = vmatmul.mubr.f32.gmra.mxu0 %v2131
      %v2654 = vpop.f32.mrf.mxu0
      %v2655 = vadd.f32 0.0, %v2654
      %v2656 = vpop.f32.mrf.mxu0
      %2657 = vmatprep.mubr.f32.mxu0 %v2257
      %2658 = vmatmul.mubr.f32.gmra.mxu0 %v2133
      %v2659 = vpop.f32.mrf.mxu0
      %v2660 = vadd.f32 0.0, %v2659
      %v2661 = vpop.f32.mrf.mxu0
      %2662 = vmatprep.mubr.f32.mxu0 %v2259
      %2663 = vmatmul.mubr.f32.gmra.mxu0 %v2134
      %v2664 = vpop.f32.mrf.mxu0
      %v2665 = vadd.f32 0.0, %v2664
      %v2666 = vpop.f32.mrf.mxu0
      %2667 = vmatprep.mubr.f32.mxu0 %v2262
      %2668 = vmatmul.mubr.f32.gmra.mxu0 %v2136
      %v2669 = vpop.f32.mrf.mxu0
      %v2670 = vadd.f32 0.0, %v2669
      %v2671 = vpop.f32.mrf.mxu0
      %2672 = vmatprep.mubr.f32.mxu0 %v2264
      %2673 = vmatmul.mubr.f32.gmra.mxu0 %v2137
      %v2674 = vpop.f32.mrf.mxu0
      %v2675 = vadd.f32 0.0, %v2674
      %v2676 = vpop.f32.mrf.mxu0
      %2677 = vmatprep.mubr.f32.mxu0 %v2267
      %2678 = vmatmul.mubr.f32.gmra.mxu0 %v2139
      %v2679 = vpop.f32.mrf.mxu0
      %v2680 = vadd.f32 0.0, %v2679
      %v2681 = vpop.f32.mrf.mxu0
      %2682 = vmatprep.mubr.f32.mxu0 %v2269
      %2683 = vmatmul.mubr.f32.gmra.mxu0 %v2140
      %v2684 = vpop.f32.mrf.mxu0
      %v2685 = vadd.f32 0.0, %v2684
      %v2686 = vpop.f32.mrf.mxu0
      %2687 = vdwg.mxu0
      %2688 = vmatprep.subr.mxu0 0.0
      %2689 = vmatpush1.msra.mxu0 %v2462
      %2690 = vmatprep.subr.mxu0 0.0
      %2691 = vmatpush1.msra.mxu0 %v2461
      %2692 = vmatprep.subr.mxu0 0.0
      %2693 = vmatpush1.msra.mxu0 %v2460
      %2694 = vmatprep.subr.mxu0 0.0
      %2695 = vmatpush1.msra.mxu0 %v2459
      %2696 = vmatprep.subr.mxu0 0.0
      %2697 = vmatpush1.msra.mxu0 %v2458
      %2698 = vmatprep.subr.mxu0 0.0
      %2699 = vmatpush1.msra.mxu0 %v2457
      %2700 = vmatprep.subr.mxu0 0.0
      %2701 = vmatpush1.msra.mxu0 %v2456
      %2702 = vmatprep.subr.mxu0 0.0
      %2703 = vmatpush1.msra.mxu0 %v2455
      %2704 = vmatprep.subr.mxu0 0.0
      %2705 = vmatpush1.msra.mxu0 %v2454
      %2706 = vmatprep.subr.mxu0 0.0
      %2707 = vmatpush1.msra.mxu0 %v2453
      %2708 = vmatprep.subr.mxu0 0.0
      %2709 = vmatpush1.msra.mxu0 %v2452
      %2710 = vmatprep.subr.mxu0 0.0
      %2711 = vmatpush1.msra.mxu0 %v2451
      %2712 = vmatprep.subr.mxu0 0.0
      %2713 = vmatpush1.msra.mxu0 %v2450
      %2714 = vmatprep.subr.mxu0 0.0
      %2715 = vmatpush1.msra.mxu0 %v2449
      %2716 = vmatprep.subr.mxu0 0.0
      %2717 = vmatpush1.msra.mxu0 %v2448
      %2718 = vmatprep.subr.mxu0 0.0
      %2719 = vmatpush1.msra.mxu0 %v2447
      %2720 = vmatprep.subr.mxu0 0.0
      %2721 = vmatpush2.msra.mxu0 0.0
      %2722 = vmatprep.subr.mxu0 0.0
      %2723 = vmatpush2.msra.mxu0 0.0
      %2724 = vmatprep.subr.mxu0 0.0
      %2725 = vmatpush2.msra.mxu0 0.0
      %2726 = vmatprep.subr.mxu0 0.0
      %2727 = vmatpush2.msra.mxu0 0.0
      %2728 = vmatprep.subr.mxu0 0.0
      %2729 = vmatpush2.msra.mxu0 0.0
      %2730 = vmatprep.subr.mxu0 0.0
      %2731 = vmatpush2.msra.mxu0 0.0
      %2732 = vmatprep.subr.mxu0 0.0
      %2733 = vmatpush2.msra.mxu0 0.0
      %2734 = vmatprep.subr.mxu0 0.0
      %2735 = vmatpush2.msra.mxu0 0.0
      %2736 = vmatprep.subr.mxu0 0.0
      %2737 = vmatpush2.msra.mxu0 0.0
      %2738 = vmatprep.subr.mxu0 0.0
      %2739 = vmatpush2.msra.mxu0 0.0
      %2740 = vmatprep.subr.mxu0 0.0
      %2741 = vmatpush2.msra.mxu0 0.0
      %2742 = vmatprep.subr.mxu0 0.0
      %2743 = vmatpush2.msra.mxu0 0.0
      %2744 = vmatprep.subr.mxu0 0.0
      %2745 = vmatpush2.msra.mxu0 0.0
      %2746 = vmatprep.subr.mxu0 0.0
      %2747 = vmatpush2.msra.mxu0 0.0
      %2748 = vmatprep.subr.mxu0 0.0
      %2749 = vmatpush2.msra.mxu0 0.0
      %2750 = vmatprep.subr.mxu0 0.0
      %2751 = vmatpush2.msra.mxu0 0.0
      %2752 = vmatprep.mubr.f32.mxu0 0.0
      %2753 = vmatmul.mubr.f32.gmra.mxu0 %v2304
      %v2754 = vpop.f32.mrf.mxu0
      %v2755 = vadd.f32 %v2530, %v2754
      %v2756 = vpop.f32.mrf.mxu0
      %2757 = vmatprep.mubr.f32.mxu0 0.0
      %2758 = vmatmul.mubr.f32.gmra.mxu0 %v2306
      %v2759 = vpop.f32.mrf.mxu0
      %v2760 = vadd.f32 %v2535, %v2759
      %v2761 = vpop.f32.mrf.mxu0
      %2762 = vmatprep.mubr.f32.mxu0 0.0
      %2763 = vmatmul.mubr.f32.gmra.mxu0 %v2309
      %v2764 = vpop.f32.mrf.mxu0
      %v2765 = vadd.f32 %v2540, %v2764
      %v2766 = vpop.f32.mrf.mxu0
      %2767 = vmatprep.mubr.f32.mxu0 0.0
      %2768 = vmatmul.mubr.f32.gmra.mxu0 %v2311
      %v2769 = vpop.f32.mrf.mxu0
      %v2770 = vadd.f32 %v2545, %v2769
      %v2771 = vpop.f32.mrf.mxu0
      %2772 = vmatprep.mubr.f32.mxu0 0.0
      %2773 = vmatmul.mubr.f32.gmra.mxu0 %v2314
      %v2774 = vpop.f32.mrf.mxu0
      %v2775 = vadd.f32 %v2550, %v2774
      %v2776 = vpop.f32.mrf.mxu0
      %2777 = vmatprep.mubr.f32.mxu0 0.0
      %2778 = vmatmul.mubr.f32.gmra.mxu0 %v2316
      %v2779 = vpop.f32.mrf.mxu0
      %v2780 = vadd.f32 %v2555, %v2779
      %v2781 = vpop.f32.mrf.mxu0
      %2782 = vmatprep.mubr.f32.mxu0 0.0
      %2783 = vmatmul.mubr.f32.gmra.mxu0 %v2319
      %v2784 = vpop.f32.mrf.mxu0
      %v2785 = vadd.f32 %v2560, %v2784
      %v2786 = vpop.f32.mrf.mxu0
      %2787 = vmatprep.mubr.f32.mxu0 0.0
      %2788 = vmatmul.mubr.f32.gmra.mxu0 %v2321
      %v2789 = vpop.f32.mrf.mxu0
      %v2790 = vadd.f32 %v2565, %v2789
      %v2791 = vpop.f32.mrf.mxu0
      %2792 = vmatprep.mubr.f32.mxu0 0.0
      %2793 = vmatmul.mubr.f32.gmra.mxu0 %v2324
      %v2794 = vpop.f32.mrf.mxu0
      %v2795 = vadd.f32 %v2570, %v2794
      %v2796 = vpop.f32.mrf.mxu0
      %2797 = vmatprep.mubr.f32.mxu0 0.0
      %2798 = vmatmul.mubr.f32.gmra.mxu0 %v2326
      %v2799 = vpop.f32.mrf.mxu0
      %v2800 = vadd.f32 %v2575, %v2799
      %v2801 = vpop.f32.mrf.mxu0
      %2802 = vmatprep.mubr.f32.mxu0 0.0
      %2803 = vmatmul.mubr.f32.gmra.mxu0 %v2329
      %v2804 = vpop.f32.mrf.mxu0
      %v2805 = vadd.f32 %v2580, %v2804
      %v2806 = vpop.f32.mrf.mxu0
      %2807 = vmatprep.mubr.f32.mxu0 0.0
      %2808 = vmatmul.mubr.f32.gmra.mxu0 %v2331
      %v2809 = vpop.f32.mrf.mxu0
      %v2810 = vadd.f32 %v2585, %v2809
      %v2811 = vpop.f32.mrf.mxu0
      %2812 = vmatprep.mubr.f32.mxu0 0.0
      %2813 = vmatmul.mubr.f32.gmra.mxu0 %v2334
      %v2814 = vpop.f32.mrf.mxu0
      %v2815 = vadd.f32 %v2590, %v2814
      %v2816 = vpop.f32.mrf.mxu0
      %2817 = vmatprep.mubr.f32.mxu0 0.0
      %2818 = vmatmul.mubr.f32.gmra.mxu0 %v2336
      %v2819 = vpop.f32.mrf.mxu0
      %v2820 = vadd.f32 %v2595, %v2819
      %v2821 = vpop.f32.mrf.mxu0
      %2822 = vmatprep.mubr.f32.mxu0 0.0
      %2823 = vmatmul.mubr.f32.gmra.mxu0 %v2339
      %v2824 = vpop.f32.mrf.mxu0
      %v2825 = vadd.f32 %v2600, %v2824
      %v2826 = vpop.f32.mrf.mxu0
      %2827 = vmatprep.mubr.f32.mxu0 0.0
      %2828 = vmatmul.mubr.f32.gmra.mxu0 %v2341
      %v2829 = vpop.f32.mrf.mxu0
      %v2830 = vadd.f32 %v2605, %v2829
      %v2831 = vpop.f32.mrf.mxu0
      %2832 = vmatprep.mubr.f32.mxu0 0.0
      %2833 = vmatmul.mubr.f32.gmra.mxu0 %v2344
      %v2834 = vpop.f32.mrf.mxu0
      %v2835 = vadd.f32 %v2610, %v2834
      %v2836 = vpop.f32.mrf.mxu0
      %2837 = vmatprep.mubr.f32.mxu0 0.0
      %2838 = vmatmul.mubr.f32.gmra.mxu0 %v2346
      %v2839 = vpop.f32.mrf.mxu0
      %v2840 = vadd.f32 %v2615, %v2839
      %v2841 = vpop.f32.mrf.mxu0
      %2842 = vmatprep.mubr.f32.mxu0 0.0
      %2843 = vmatmul.mubr.f32.gmra.mxu0 %v2349
      %v2844 = vpop.f32.mrf.mxu0
      %v2845 = vadd.f32 %v2620, %v2844
      %v2846 = vpop.f32.mrf.mxu0
      %2847 = vmatprep.mubr.f32.mxu0 0.0
      %2848 = vmatmul.mubr.f32.gmra.mxu0 %v2351
      %v2849 = vpop.f32.mrf.mxu0
      %v2850 = vadd.f32 %v2625, %v2849
      %v2851 = vpop.f32.mrf.mxu0
      %2852 = vmatprep.mubr.f32.mxu0 0.0
      %2853 = vmatmul.mubr.f32.gmra.mxu0 %v2354
      %v2854 = vpop.f32.mrf.mxu0
      %v2855 = vadd.f32 %v2630, %v2854
      %v2856 = vpop.f32.mrf.mxu0
      %2857 = vmatprep.mubr.f32.mxu0 0.0
      %2858 = vmatmul.mubr.f32.gmra.mxu0 %v2356
      %v2859 = vpop.f32.mrf.mxu0
      %v2860 = vadd.f32 %v2635, %v2859
      %v2861 = vpop.f32.mrf.mxu0
      %2862 = vmatprep.mubr.f32.mxu0 0.0
      %2863 = vmatmul.mubr.f32.gmra.mxu0 %v2359
      %v2864 = vpop.f32.mrf.mxu0
      %v2865 = vadd.f32 %v2640, %v2864
      %v2866 = vpop.f32.mrf.mxu0
      %2867 = vmatprep.mubr.f32.mxu0 0.0
      %2868 = vmatmul.mubr.f32.gmra.mxu0 %v2361
      %v2869 = vpop.f32.mrf.mxu0
      %v2870 = vadd.f32 %v2645, %v2869
      %v2871 = vpop.f32.mrf.mxu0
      %2872 = vmatprep.mubr.f32.mxu0 0.0
      %2873 = vmatmul.mubr.f32.gmra.mxu0 %v2364
      %v2874 = vpop.f32.mrf.mxu0
      %v2875 = vadd.f32 %v2650, %v2874
      %v2876 = vpop.f32.mrf.mxu0
      %2877 = vmatprep.mubr.f32.mxu0 0.0
      %2878 = vmatmul.mubr.f32.gmra.mxu0 %v2366
      %v2879 = vpop.f32.mrf.mxu0
      %v2880 = vadd.f32 %v2655, %v2879
      %v2881 = vpop.f32.mrf.mxu0
      %2882 = vmatprep.mubr.f32.mxu0 0.0
      %2883 = vmatmul.mubr.f32.gmra.mxu0 %v2369
      %v2884 = vpop.f32.mrf.mxu0
      %v2885 = vadd.f32 %v2660, %v2884
      %v2886 = vpop.f32.mrf.mxu0
      %2887 = vmatprep.mubr.f32.mxu0 0.0
      %2888 = vmatmul.mubr.f32.gmra.mxu0 %v2371
      %v2889 = vpop.f32.mrf.mxu0
      %v2890 = vadd.f32 %v2665, %v2889
      %v2891 = vpop.f32.mrf.mxu0
      %2892 = vmatprep.mubr.f32.mxu0 0.0
      %2893 = vmatmul.mubr.f32.gmra.mxu0 %v2374
      %v2894 = vpop.f32.mrf.mxu0
      %v2895 = vadd.f32 %v2670, %v2894
      %v2896 = vpop.f32.mrf.mxu0
      %2897 = vmatprep.mubr.f32.mxu0 0.0
      %2898 = vmatmul.mubr.f32.gmra.mxu0 %v2376
      %v2899 = vpop.f32.mrf.mxu0
      %v2900 = vadd.f32 %v2675, %v2899
      %v2901 = vpop.f32.mrf.mxu0
      %2902 = vmatprep.mubr.f32.mxu0 0.0
      %2903 = vmatmul.mubr.f32.gmra.mxu0 %v2379
      %v2904 = vpop.f32.mrf.mxu0
      %v2905 = vadd.f32 %v2680, %v2904
      %v2906 = vpop.f32.mrf.mxu0
      %2907 = vmatprep.mubr.f32.mxu0 0.0
      %2908 = vmatmul.mubr.f32.gmra.mxu0 %v2381
      %v2909 = vpop.f32.mrf.mxu0
      %v2910 = vadd.f32 %v2685, %v2909
      %v2911 = vpop.f32.mrf.mxu0
      %2912 = vdwg.mxu0
      %v2913 = vadd.f32 %v1935, %v2755
      %v2914 = vadd.f32 %v1940, %v2760
      %v2915 = vadd.f32 %v1945, %v2765
      %v2916 = vadd.f32 %v1950, %v2770
      %v2917 = vadd.f32 %v1955, %v2775
      %v2918 = vadd.f32 %v1960, %v2780
      %v2919 = vadd.f32 %v1965, %v2785
      %v2920 = vadd.f32 %v1970, %v2790
      %v2921 = vadd.f32 %v1975, %v2795
      %v2922 = vadd.f32 %v1980, %v2800
      %v2923 = vadd.f32 %v1985, %v2805
      %v2924 = vadd.f32 %v1990, %v2810
      %v2925 = vadd.f32 %v1995, %v2815
      %v2926 = vadd.f32 %v2000, %v2820
      %v2927 = vadd.f32 %v2005, %v2825
      %v2928 = vadd.f32 %v2010, %v2830
      %v2929 = vadd.f32 %v2015, %v2835
      %v2930 = vadd.f32 %v2020, %v2840
      %v2931 = vadd.f32 %v2025, %v2845
      %v2932 = vadd.f32 %v2030, %v2850
      %v2933 = vadd.f32 %v2035, %v2855
      %v2934 = vadd.f32 %v2040, %v2860
      %v2935 = vadd.f32 %v2045, %v2865
      %v2936 = vadd.f32 %v2050, %v2870
      %v2937 = vadd.f32 %v2055, %v2875
      %v2938 = vadd.f32 %v2060, %v2880
      %v2939 = vadd.f32 %v2065, %v2885
      %v2940 = vadd.f32 %v2070, %v2890
      %v2941 = vadd.f32 %v2075, %v2895
      %v2942 = vadd.f32 %v2080, %v2900
      %v2943 = vadd.f32 %v2085, %v2905
      %v2944 = vadd.f32 %v2090, %v2910
      %2945 = vst [vmem:[%s231] sm:$0xff] %v2913
      %2946 = vst [vmem:[%s231 + $0x8] sm:$0xff] %v2914
      %2947 = vst [vmem:[%s231 + $0x10] sm:$0xff] %v2915
      %2948 = vst [vmem:[%s231 + $0x18] sm:$0xff] %v2916
      %2949 = vst [vmem:[%s231 + $0x20] sm:$0xff] %v2917
      %2950 = vst [vmem:[%s231 + $0x28] sm:$0xff] %v2918
      %2951 = vst [vmem:[%s231 + $0x30] sm:$0xff] %v2919
      %2952 = vst [vmem:[%s231 + $0x38] sm:$0xff] %v2920
      %2953 = vst [vmem:[%s231 + $0x40] sm:$0xff] %v2921
      %2954 = vst [vmem:[%s231 + $0x48] sm:$0xff] %v2922
      %2955 = vst [vmem:[%s231 + $0x50] sm:$0xff] %v2923
      %2956 = vst [vmem:[%s231 + $0x58] sm:$0xff] %v2924
      %2957 = vst [vmem:[%s231 + $0x60] sm:$0xff] %v2925
      %2958 = vst [vmem:[%s231 + $0x68] sm:$0xff] %v2926
      %2959 = vst [vmem:[%s231 + $0x70] sm:$0xff] %v2927
      %2960 = vst [vmem:[%s231 + $0x78] sm:$0xff] %v2928
      %2961 = vst [vmem:[%s231 + $0x80] sm:$0xff] %v2929
      %2962 = vst [vmem:[%s231 + $0x88] sm:$0xff] %v2930
      %2963 = vst [vmem:[%s231 + $0x90] sm:$0xff] %v2931
      %2964 = vst [vmem:[%s231 + $0x98] sm:$0xff] %v2932
      %2965 = vst [vmem:[%s231 + $0xa0] sm:$0xff] %v2933
      %2966 = vst [vmem:[%s231 + $0xa8] sm:$0xff] %v2934
      %2967 = vst [vmem:[%s231 + $0xb0] sm:$0xff] %v2935
      %2968 = vst [vmem:[%s231 + $0xb8] sm:$0xff] %v2936
      %2969 = vst [vmem:[%s231 + $0xc0] sm:$0xff] %v2937
      %2970 = vst [vmem:[%s231 + $0xc8] sm:$0xff] %v2938
      %2971 = vst [vmem:[%s231 + $0xd0] sm:$0xff] %v2939
      %2972 = vst [vmem:[%s231 + $0xd8] sm:$0xff] %v2940
      %2973 = vst [vmem:[%s231 + $0xe0] sm:$0xff] %v2941
      %2974 = vst [vmem:[%s231 + $0xe8] sm:$0xff] %v2942
      %2975 = vst [vmem:[%s231 + $0xf0] sm:$0xff] %v2943
      %2976 = vst [vmem:[%s231 + $0xf8] sm:$0xff] %v2944
      %v2977 = vadd.f32 %v2913, %v2914
      %v2978 = vadd.f32 %v2977, %v2915
      %v2979 = vadd.f32 %v2978, %v2916
      %v2980 = vadd.f32 %v2979, %v2917
      %v2981 = vadd.f32 %v2980, %v2918
      %v2982 = vadd.f32 %v2981, %v2919
      %v2983 = vadd.f32 %v2982, %v2920
      %v2984 = vadd.f32 %v2983, %v2921
      %v2985 = vadd.f32 %v2984, %v2922
      %v2986 = vadd.f32 %v2985, %v2923
      %v2987 = vadd.f32 %v2986, %v2924
      %v2988 = vadd.f32 %v2987, %v2925
      %v2989 = vadd.f32 %v2988, %v2926
      %v2990 = vadd.f32 %v2989, %v2927
      %v2991 = vadd.f32 %v2990, %v2928
      %v2992 = vadd.f32 %v2991, %v2929
      %v2993 = vadd.f32 %v2992, %v2930
      %v2994 = vadd.f32 %v2993, %v2931
      %v2995 = vadd.f32 %v2994, %v2932
      %v2996 = vadd.f32 %v2995, %v2933
      %v2997 = vadd.f32 %v2996, %v2934
      %v2998 = vadd.f32 %v2997, %v2935
      %v2999 = vadd.f32 %v2998, %v2936
      %v3000 = vadd.f32 %v2999, %v2937
      %v3001 = vadd.f32 %v3000, %v2938
      %v3002 = vadd.f32 %v3001, %v2939
      %v3003 = vadd.f32 %v3002, %v2940
      %v3004 = vadd.f32 %v3003, %v2941
      %v3005 = vadd.f32 %v3004, %v2942
      %v3006 = vadd.f32 %v3005, %v2943
      %v3007 = vadd.f32 %v3006, %v2944
      %v3008 = vrot.slane %v3007, 4
      %v3009 = vadd.f32 %v3007, %v3008
      %v3010 = vrot.slane %v3009, 2
      %v3011 = vadd.f32 %v3009, %v3010
      %v3012 = vrot.slane %v3011, 1
      %v3013 = vadd.f32 %v3011, %v3012
      %v3014 = vmul.f32 %v2913, %v2913
      %v3015 = vmul.f32 %v2914, %v2914
      %v3016 = vmul.f32 %v2915, %v2915
      %v3017 = vmul.f32 %v2916, %v2916
      %v3018 = vmul.f32 %v2917, %v2917
      %v3019 = vmul.f32 %v2918, %v2918
      %v3020 = vmul.f32 %v2919, %v2919
      %v3021 = vmul.f32 %v2920, %v2920
      %v3022 = vmul.f32 %v2921, %v2921
      %v3023 = vmul.f32 %v2922, %v2922
      %v3024 = vmul.f32 %v2923, %v2923
      %v3025 = vmul.f32 %v2924, %v2924
      %v3026 = vmul.f32 %v2925, %v2925
      %v3027 = vmul.f32 %v2926, %v2926
      %v3028 = vmul.f32 %v2927, %v2927
      %v3029 = vmul.f32 %v2928, %v2928
      %v3030 = vmul.f32 %v2929, %v2929
      %v3031 = vmul.f32 %v2930, %v2930
      %v3032 = vmul.f32 %v2931, %v2931
      %v3033 = vmul.f32 %v2932, %v2932
      %v3034 = vmul.f32 %v2933, %v2933
      %v3035 = vmul.f32 %v2934, %v2934
      %v3036 = vmul.f32 %v2935, %v2935
      %v3037 = vmul.f32 %v2936, %v2936
      %v3038 = vmul.f32 %v2937, %v2937
      %v3039 = vmul.f32 %v2938, %v2938
      %v3040 = vmul.f32 %v2939, %v2939
      %v3041 = vmul.f32 %v2940, %v2940
      %v3042 = vmul.f32 %v2941, %v2941
      %v3043 = vmul.f32 %v2942, %v2942
      %v3044 = vmul.f32 %v2943, %v2943
      %v3045 = vmul.f32 %v2944, %v2944
      %v3046 = vadd.f32 %v3014, %v3015
      %v3047 = vadd.f32 %v3046, %v3016
      %v3048 = vadd.f32 %v3047, %v3017
      %v3049 = vadd.f32 %v3048, %v3018
      %v3050 = vadd.f32 %v3049, %v3019
      %v3051 = vadd.f32 %v3050, %v3020
      %v3052 = vadd.f32 %v3051, %v3021
      %v3053 = vadd.f32 %v3052, %v3022
      %v3054 = vadd.f32 %v3053, %v3023
      %v3055 = vadd.f32 %v3054, %v3024
      %v3056 = vadd.f32 %v3055, %v3025
      %v3057 = vadd.f32 %v3056, %v3026
      %v3058 = vadd.f32 %v3057, %v3027
      %v3059 = vadd.f32 %v3058, %v3028
      %v3060 = vadd.f32 %v3059, %v3029
      %v3061 = vadd.f32 %v3060, %v3030
      %v3062 = vadd.f32 %v3061, %v3031
      %v3063 = vadd.f32 %v3062, %v3032
      %v3064 = vadd.f32 %v3063, %v3033
      %v3065 = vadd.f32 %v3064, %v3034
      %v3066 = vadd.f32 %v3065, %v3035
      %v3067 = vadd.f32 %v3066, %v3036
      %v3068 = vadd.f32 %v3067, %v3037
      %v3069 = vadd.f32 %v3068, %v3038
      %v3070 = vadd.f32 %v3069, %v3039
      %v3071 = vadd.f32 %v3070, %v3040
      %v3072 = vadd.f32 %v3071, %v3041
      %v3073 = vadd.f32 %v3072, %v3042
      %v3074 = vadd.f32 %v3073, %v3043
      %v3075 = vadd.f32 %v3074, %v3044
      %v3076 = vadd.f32 %v3075, %v3045
      %v3077 = vrot.slane %v3076, 4
      %v3078 = vadd.f32 %v3076, %v3077
      %v3079 = vrot.slane %v3078, 2
      %v3080 = vadd.f32 %v3078, %v3079
      %v3081 = vrot.slane %v3080, 1
      %v3082 = vadd.f32 %v3080, %v3081
      %vm3083 = vcmask 1040384
      %v3084 = vsel %vm3083, %v3013, %v3082
      %3085 = vst [vmem:[%s235] sm:$0x3] %v3084
      %p3086 = scmp.lt.s32.totalorder %s17, 1
      %s3087 = scalar_select %p3086, %s17, 1
      %s3088 = smul.addr %s3087, 32
      %s3089 = smul.addr %s3088, 8
      %s3090 = scalar_lea.vmem %s4, %s3089
      %p3091 = scmp.lt.s32.totalorder %s17, 1
      %s3092 = scalar_select %p3091, %s17, 1
      %s3093 = smul.addr %s3092, 2
      %s3094 = scalar_lea.vmem %s5, %s3093
      // Predicated region
      $region37: #{basic_block_pallas.4} parent=35 // pred_check
        %p3095 = pneg %p124
      $region38: #{basic_block_pallas.4} parent=35 // pred_check_branch
        %3097 = sbr.rel (%p3095) target = $region40
      $region39: #{basic_block_pallas.4} parent=35 // pred_region
        _
      $region40: #{basic_block_pallas.4} parent=35 // pred_fallthru
        _
      // Predicated region
      $region41: #{basic_block_pallas.4} parent=35 // pred_check
        %p3098 = pneg %p150
      $region42: #{basic_block_pallas.4} parent=35 // pred_check_branch
        %3100 = sbr.rel (%p3098) target = $region44
      $region43: #{basic_block_pallas.4} parent=35 // pred_region
        _
      $region44: #{basic_block_pallas.4} parent=35 // pred_fallthru
        _
    $region36: #{basic_block_pallas.4} parent=5 // pred_fallthru
      _
    %p3101 = scmp.le.s32.totalorder 2, %s12
    // Predicated region
    $region45: #{basic_block_pallas.4} parent=5 // pred_check
      %p3102 = pneg %p3101
    $region46: #{basic_block_pallas.4} parent=5 // pred_check_branch
      %3104 = sbr.rel (%p3102) target = $region48
    $region47: #{basic_block_pallas.4} parent=5 // pred_region
      %s3105 = ssub.s32 %s12, 2
      // Predicated region
      $region49: #{basic_block_pallas.4} parent=47 // pred_check
        %p3106 = pneg %p130
      $region50: #{basic_block_pallas.4} parent=47 // pred_check_branch
        %3108 = sbr.rel (%p3106) target = $region52
      $region51: #{basic_block_pallas.4} parent=47 // pred_region
        %p3109 = scmp.lt.s32.totalorder %s18, 1
        %s3110 = scalar_select %p3109, %s18, 1
        %s3111 = smul.addr %s3110, 32
        %s3112 = smul.addr %s3111, 8
        %s3113 = scalar_lea.vmem %s4, %s3112
      $region52: #{basic_block_pallas.4} parent=47 // pred_fallthru
        _
      // Predicated region
      $region53: #{basic_block_pallas.4} parent=47 // pred_check
        %p3114 = pneg %p156
      $region54: #{basic_block_pallas.4} parent=47 // pred_check_branch
        %3116 = sbr.rel (%p3114) target = $region56
      $region55: #{basic_block_pallas.4} parent=47 // pred_region
        %p3117 = scmp.lt.s32.totalorder %s18, 1
        %s3118 = scalar_select %p3117, %s18, 1
        %s3119 = smul.addr %s3118, 2
        %s3120 = scalar_lea.vmem %s5, %s3119
      $region56: #{basic_block_pallas.4} parent=47 // pred_fallthru
        _
    $region48: #{basic_block_pallas.4} parent=5 // pred_fallthru
      _
  $region6: #{basic_block_pallas.4} parent=0 // loop_footer
    %s16 = sadd.s32 1, %s12
  $region7: #{basic_block_pallas.4} parent=0 // loop_footer_branch
    %11 = sbr.rel target = $region3
  $region8: #{basic_block_pallas.4} parent=0 // loop_exit
    _

</llo_original>
